<compile_context>
chip_gen: v7x
topology: tpu7x:2x2x1
jax: 0.10.0
libtpu: 0.0.40
codegen_flags: <defaults>
</compile_context>

<pallas_src>
import jax
import jax.numpy as jnp
from jax.experimental import pallas as pl
from jax.experimental.pallas import tpu as pltpu


# ---------------------------------------------------------------------------
# Model hyper-parameters (small, consistent with the module's forward pass)
# ---------------------------------------------------------------------------
VOCAB = 32
SEQ = 16                      # sequence length
EMB = 32                      # embedding dim
KERNEL_SIZES = (2, 3, 4)
CHANNELS = (8, 8, 16)         # extractor.channels
SUM_C = sum(CHANNELS)         # classifier input dim
KMAX = max(KERNEL_SIZES)

B_TILE = 128                  # examples per grid step; raise to 256-512 for big batches
                              # (v5e: stay <= 256 or raise vmem_limit_bytes)

assert KMAX * VOCAB == 128    # folded embed(x)conv K-dim fills the 128-lane vreg exactly


# ---------------------------------------------------------------------------
# Pallas kernel: B_TILE examples per grid step.
#   fused embedding+conv matmul -> (bias+validity) add -> max-over-time -> ReLU
#   -> linear head -> per-example BCE-with-logits (mean taken in the wrapper).
# ---------------------------------------------------------------------------
def _cnn_classifier_kernel(tok_ref,     # (KMAX, B_TILE, SEQ) int32  rolled tokens + j*VOCAB offset
                           m_ref,       # (KMAX*VOCAB, SUM_C)        folded embedding (x) conv weight
                           bm_ref,      # (SEQ, SUM_C)               bias where valid, -1e30 where not
                           wc_ref,      # (SUM_C, 1)                 classifier weight
                           bc_ref,      # (1,) SMEM                  classifier bias
                           tgt_ref,     # (1, B_TILE)                float targets
                           logits_ref,  # (1, B_TILE)                logits (lane-dense)
                           loss_ref):   # (1, B_TILE)                per-example BCE loss
    # ---- one-hot of all KMAX taps against ONE 128-lane iota, single int->float cast ----
    lane = jax.lax.broadcasted_iota(jnp.int32, (B_TILE, SEQ, KMAX * VOCAB), 2)
    hit = tok_ref[0][:, :, None] == lane               # tap offsets pre-added => disjoint lanes
    for j in range(1, KMAX):                           # static unroll over taps
        hit = hit | (tok_ref[j][:, :, None] == lane)
    onehot = hit.astype(jnp.float32)                   # (B_TILE, SEQ, 128), KMAX ones per (b, s)

    # ---- fused embedding + all conv widths: single MXU matmul ----
    conv = jnp.dot(onehot.reshape(B_TILE * SEQ, KMAX * VOCAB), m_ref[...],
                   preferred_element_type=jnp.float32)             # (B_TILE*SEQ, SUM_C)
    conv = conv.reshape(B_TILE, SEQ, SUM_C) + bm_ref[...][None, :, :]

    # ---- max over (valid) time, then ReLU on the reduced (B_TILE, SUM_C) result ----
    feat = jnp.maximum(jnp.max(conv, axis=1), 0.0)     # (B_TILE, SUM_C)

    # ---- classifier head as a reduce (no N=1 MXU pass); logits stay lane-dense ----
    featT = feat.T                                     # (SUM_C, B_TILE)
    z = jnp.sum(featT * wc_ref[...], axis=0, keepdims=True) + bc_ref[0]   # (1, B_TILE)
    logits_ref[...] = z

    # ---- numerically-stable per-example BCE-with-logits ----
    y = tgt_ref[...]
    loss_ref[...] = jnp.maximum(z, 0.0) - z * y + jnp.log1p(jnp.exp(-jnp.abs(z)))


# ---------------------------------------------------------------------------
# Weight folding (function of parameters only — standard inference-time fold)
# ---------------------------------------------------------------------------
def _fold_params(params):
    # packed conv weight: wbig[j*EMB + e, col(k)+c] = W_k[j, e, c], zero for taps j >= k
    wbig = jnp.zeros((KMAX * EMB, SUM_C), jnp.float32)
    col = 0
    for k, c, w in zip(KERNEL_SIZES, CHANNELS,
                       (params["w2"], params["w3"], params["w4"])):
        for j in range(k):
            wbig = wbig.at[j * EMB:(j + 1) * EMB, col:col + c].set(w[j])
        col += c
    # fold the embedding table in:  M[j*VOCAB + v, c] = emb[v, :] @ wbig[j*EMB:(j+1)*EMB, c]
    emb = params["emb"].astype(jnp.float32)
    m = jnp.concatenate(
        [emb @ wbig[j * EMB:(j + 1) * EMB, :] for j in range(KMAX)], axis=0)  # (KMAX*VOCAB, SUM_C)

    # conv bias and time-validity mask folded into one additive (SEQ, SUM_C) term:
    #   bm[t, c] = bias[c]  if t < SEQ - k(c) + 1   else  -1e30
    bias_cols = jnp.concatenate([params["b2"].reshape(-1),
                                 params["b3"].reshape(-1),
                                 params["b4"].reshape(-1)])                   # (SUM_C,)
    bound = jnp.concatenate([jnp.full((c,), SEQ - k + 1, jnp.int32)
                             for k, c in zip(KERNEL_SIZES, CHANNELS)])        # (SUM_C,)
    t_idx = jnp.arange(SEQ, dtype=jnp.int32)[:, None]                         # (SEQ, 1)
    bm = jnp.where(t_idx < bound[None, :], bias_cols[None, :], -1e30)
    bm = bm.astype(jnp.float32)                                               # (SEQ, SUM_C)

    return m, bm, params["wc"].reshape(SUM_C, 1), params["bc"].reshape(-1)    # bc: (1,) for SMEM


# ---------------------------------------------------------------------------
# Wrapper: mirrors CNNClassifier.forward(tokens, targets)
# ---------------------------------------------------------------------------
@jax.jit
def cnn_classifier_forward(tokens, targets, params):
    B = tokens.shape[0]
    m, bm, wc, bc = _fold_params(params)

    nb = pl.cdiv(B, B_TILE)           # keep nb >= 2 on v7x for large batches (2nd TensorCore)
    b_pad = nb * B_TILE
    pad = b_pad - B

    tok = jnp.pad(tokens.astype(jnp.int32), ((0, pad), (0, 0)))
    # tap-shifted token ids with the tap offset (j*VOCAB) pre-added — tiny int32 arrays;
    # replaces both the (B, S, E) activation round-trip and the in-kernel minor-dim concat.
    tok_shift = jnp.stack([jnp.roll(tok, -j, axis=1) + j * VOCAB for j in range(KMAX)], axis=0)

    tgt = jnp.pad(targets.astype(jnp.float32), ((0, pad),)).reshape(1, b_pad)

    grid_spec = pltpu.PrefetchScalarGridSpec(
        num_scalar_prefetch=0,
        grid=(nb,),
        in_specs=[
            pl.BlockSpec((KMAX, B_TILE, SEQ), lambda i: (0, i, 0)),   # shifted+offset token ids
            pl.BlockSpec((KMAX * VOCAB, SUM_C), lambda i: (0, 0)),    # folded embed(x)conv weight
            pl.BlockSpec((SEQ, SUM_C), lambda i: (0, 0)),             # bias + validity term
            pl.BlockSpec((SUM_C, 1), lambda i: (0, 0)),               # classifier weight
            pl.BlockSpec(memory_space=pltpu.MemorySpace.SMEM),        # classifier bias (scalar)
            pl.BlockSpec((1, B_TILE), lambda i: (0, i)),              # targets (lane-blocked)
        ],
        out_specs=[
            pl.BlockSpec((1, B_TILE), lambda i: (0, i)),              # logits (lane-dense)
            pl.BlockSpec((1, B_TILE), lambda i: (0, i)),              # per-example BCE loss
        ],
    )

    logits_blk, loss_blk = pl.pallas_call(
        _cnn_classifier_kernel,
        out_shape=(jax.ShapeDtypeStruct((1, b_pad), jnp.float32),
                   jax.ShapeDtypeStruct((1, b_pad), jnp.float32)),
        grid_spec=grid_spec,
        compiler_params=pltpu.CompilerParams(
            dimension_semantics=("parallel",),      # independent batch blocks (2 TCs on v7x)
        ),
    )(tok_shift, m, bm, wc, bc, tgt)

    logits = logits_blk[0, :B]                      # torch: logits.view(-1) when targets given
    loss = jnp.mean(loss_blk[0, :B])                # mean over real (non-padded) examples
    return {"output": logits, "loss": loss}


# ---------------------------------------------------------------------------
# Pure-JAX reference (sanity check of kernel semantics)
# ---------------------------------------------------------------------------
def reference_forward(tokens, targets, params):
    x = params["emb"][tokens].astype(jnp.float32)      # (B, S, E)
    feats = []
    for w, bb, k in ((params["w2"], params["b2"], 2),
                     (params["w3"], params["b3"], 3),
                     (params["w4"], params["b4"], 4)):
        t = SEQ - k + 1
        acc = jnp.zeros((x.shape[0], t, w.shape[2]), jnp.float32)
        for j in range(k):
            acc = acc + jnp.einsum("bte,ec->btc", x[:, j:j + t, :], w[j])
        acc = jax.nn.relu(acc + bb[0][None, None, :])
        feats.append(jnp.max(acc, axis=1))
    feat = jnp.concatenate(feats, axis=-1)              # (B, SUM_C)
    z = (feat @ params["wc"] + params["bc"]).reshape(-1)
    y = targets.astype(jnp.float32)
    loss = jnp.mean(jnp.maximum(z, 0.0) - z * y + jnp.log1p(jnp.exp(-jnp.abs(z))))
    return {"output": z, "loss": loss}


# ---------------------------------------------------------------------------
# Deterministic parameter init (synthetic; not a checkpoint load)
# ---------------------------------------------------------------------------
def init_params(key):
    ks = jax.random.split(key, 9)
    return {
        "emb": jax.random.normal(ks[0], (VOCAB, EMB), jnp.float32) * 0.1,
        "w2":  jax.random.normal(ks[1], (2, EMB, CHANNELS[0]), jnp.float32) * 0.1,
        "b2":  jax.random.normal(ks[2], (1, CHANNELS[0]), jnp.float32) * 0.01,
        "w3":  jax.random.normal(ks[3], (3, EMB, CHANNELS[1]), jnp.float32) * 0.1,
        "b3":  jax.random.normal(ks[4], (1, CHANNELS[1]), jnp.float32) * 0.01,
        "w4":  jax.random.normal(ks[5], (4, EMB, CHANNELS[2]), jnp.float32) * 0.1,
        "b4":  jax.random.normal(ks[6], (1, CHANNELS[2]), jnp.float32) * 0.01,
        "wc":  jax.random.normal(ks[7], (SUM_C, 1), jnp.float32) * 0.1,
        "bc":  jax.random.normal(ks[8], (1, 1), jnp.float32) * 0.01,
    }


if __name__ == "__main__":
    key = jax.random.PRNGKey(0)
    pkey, tkey, ykey = jax.random.split(key, 3)

    params = init_params(pkey)

    B = 2
    tokens = jax.random.randint(tkey, (B, SEQ), 0, VOCAB, dtype=jnp.int32)
    targets = jax.random.bernoulli(ykey, 0.5, (B,)).astype(jnp.float32)

    out = cnn_classifier_forward(tokens, targets, params)
    jax.block_until_ready(out["output"])
    jax.block_until_ready(out["loss"])

    ref = reference_forward(tokens, targets, params)
    assert jnp.allclose(out["output"], ref["output"], atol=1e-4, rtol=1e-4), "logits mismatch"
    assert jnp.allclose(out["loss"], ref["loss"], atol=1e-4, rtol=1e-4), "loss mismatch"

    print("KERNEL_OK")
</pallas_src>

<mosaic_0001>
module attributes {stable_mosaic.version = 11 : i64} {
  func.func @_cnn_classifier_kernel(%arg0: i32, %arg1: memref<4x128x16xi32, #tpu.memory_space<vmem>>, %arg2: memref<128x32xf32, #tpu.memory_space<vmem>>, %arg3: memref<16x32xf32, #tpu.memory_space<vmem>>, %arg4: memref<32x1xf32, #tpu.memory_space<vmem>>, %arg5: memref<1xf32, #tpu.memory_space<smem>>, %arg6: memref<1x128xf32, #tpu.memory_space<vmem>>, %arg7: memref<1x128xf32, #tpu.memory_space<vmem>>, %arg8: memref<1x128xf32, #tpu.memory_space<vmem>>) attributes {dimension_semantics = [#tpu.dimension_semantics<parallel>], iteration_bounds = array<i64: 1>, scalar_prefetch = 0 : i64, scratch_operands = 0 : i64, tpu.core_type = #tpu.core_type<tc>, window_params = [{transform_indices = @transform_0, window_bounds = array<i64: 4, 128, 16>}, {pipeline_mode = #tpu.pipeline_mode<synchronous>, transform_indices = @transform_1, window_bounds = array<i64: 128, 32>}, {pipeline_mode = #tpu.pipeline_mode<synchronous>, transform_indices = @transform_2, window_bounds = array<i64: 16, 32>}, {pipeline_mode = #tpu.pipeline_mode<synchronous>, transform_indices = @transform_3, window_bounds = array<i64: 32, 1>}, {transform_indices = @transform_4, window_bounds = array<i64: 1>}, {transform_indices = @transform_5, window_bounds = array<i64: 1, 128>}, {transform_indices = @transform_6, window_bounds = array<i64: 1, 128>}, {transform_indices = @transform_7, window_bounds = array<i64: 1, 128>}]} {
    %0 = tpu.iota {dimensions = array<i32: 2>} : vector<128x16x128xi32>
    %c0 = arith.constant 0 : index
    %c0_0 = arith.constant 0 : index
    %c0_1 = arith.constant 0 : index
    %1 = vector.load %arg1[%c0, %c0_0, %c0_1] : memref<4x128x16xi32, #tpu.memory_space<vmem>>, vector<1x128x16xi32>
    %2 = vector.shape_cast %1 : vector<1x128x16xi32> to vector<128x16xi32>
    %3 = vector.shape_cast %2 : vector<128x16xi32> to vector<128x16x1xi32>
    %4 = vector.broadcast %3 : vector<128x16x1xi32> to vector<128x16x128xi32>
    %5 = arith.cmpi eq, %4, %0 : vector<128x16x128xi32>
    %c1 = arith.constant 1 : index
    %c0_2 = arith.constant 0 : index
    %c0_3 = arith.constant 0 : index
    %6 = vector.load %arg1[%c1, %c0_2, %c0_3] : memref<4x128x16xi32, #tpu.memory_space<vmem>>, vector<1x128x16xi32>
    %7 = vector.shape_cast %6 : vector<1x128x16xi32> to vector<128x16xi32>
    %8 = vector.shape_cast %7 : vector<128x16xi32> to vector<128x16x1xi32>
    %9 = vector.broadcast %8 : vector<128x16x1xi32> to vector<128x16x128xi32>
    %10 = arith.cmpi eq, %9, %0 : vector<128x16x128xi32>
    %11 = arith.ori %5, %10 : vector<128x16x128xi1>
    %c2 = arith.constant 2 : index
    %c0_4 = arith.constant 0 : index
    %c0_5 = arith.constant 0 : index
    %12 = vector.load %arg1[%c2, %c0_4, %c0_5] : memref<4x128x16xi32, #tpu.memory_space<vmem>>, vector<1x128x16xi32>
    %13 = vector.shape_cast %12 : vector<1x128x16xi32> to vector<128x16xi32>
    %14 = vector.shape_cast %13 : vector<128x16xi32> to vector<128x16x1xi32>
    %15 = vector.broadcast %14 : vector<128x16x1xi32> to vector<128x16x128xi32>
    %16 = arith.cmpi eq, %15, %0 : vector<128x16x128xi32>
    %17 = arith.ori %11, %16 : vector<128x16x128xi1>
    %c3 = arith.constant 3 : index
    %c0_6 = arith.constant 0 : index
    %c0_7 = arith.constant 0 : index
    %18 = vector.load %arg1[%c3, %c0_6, %c0_7] : memref<4x128x16xi32, #tpu.memory_space<vmem>>, vector<1x128x16xi32>
    %19 = vector.shape_cast %18 : vector<1x128x16xi32> to vector<128x16xi32>
    %20 = vector.shape_cast %19 : vector<128x16xi32> to vector<128x16x1xi32>
    %21 = vector.broadcast %20 : vector<128x16x1xi32> to vector<128x16x128xi32>
    %22 = arith.cmpi eq, %21, %0 : vector<128x16x128xi32>
    %23 = arith.ori %17, %22 : vector<128x16x128xi1>
    %24 = arith.extui %23 : vector<128x16x128xi1> to vector<128x16x128xi32>
    %25 = arith.sitofp %24 : vector<128x16x128xi32> to vector<128x16x128xf32>
    %26 = vector.shape_cast %25 : vector<128x16x128xf32> to vector<2048x128xf32>
    %c0_8 = arith.constant 0 : index
    %c0_9 = arith.constant 0 : index
    %27 = vector.load %arg2[%c0_8, %c0_9] : memref<128x32xf32, #tpu.memory_space<vmem>>, vector<128x32xf32>
    %cst = arith.constant dense<0.000000e+00> : vector<2048x32xf32>
    %28 = tpu.matmul %26, %27, %cst {dimension_numbers = #tpu.dot_dimension_numbers<[1], [0], [0], [1], [0, 0, 1, 1], [], []>} : vector<2048x128xf32>, vector<128x32xf32>, vector<2048x32xf32> -> vector<2048x32xf32>
    %29 = vector.shape_cast %28 : vector<2048x32xf32> to vector<128x16x32xf32>
    %c0_10 = arith.constant 0 : index
    %c0_11 = arith.constant 0 : index
    %30 = vector.load %arg3[%c0_10, %c0_11] : memref<16x32xf32, #tpu.memory_space<vmem>>, vector<16x32xf32>
    %31 = vector.shape_cast %30 : vector<16x32xf32> to vector<1x16x32xf32>
    %32 = vector.broadcast %31 : vector<1x16x32xf32> to vector<128x16x32xf32>
    %33 = arith.addf %29, %32 : vector<128x16x32xf32>
    %cst_12 = arith.constant dense<0xFF800000> : vector<128x32xf32>
    %34 = vector.multi_reduction <maximumf>, %33, %cst_12 [1] : vector<128x16x32xf32> to vector<128x32xf32>
    %cst_13 = arith.constant 0.000000e+00 : f32
    %35 = vector.broadcast %cst_13 : f32 to vector<128x32xf32>
    %36 = arith.maximumf %34, %35 : vector<128x32xf32>
    %37 = tpu.transpose %36, [1, 0] : vector<128x32xf32> -> vector<32x128xf32>
    %c0_14 = arith.constant 0 : index
    %c0_15 = arith.constant 0 : index
    %38 = vector.load %arg4[%c0_14, %c0_15] : memref<32x1xf32, #tpu.memory_space<vmem>>, vector<32x1xf32>
    %39 = vector.broadcast %38 : vector<32x1xf32> to vector<32x128xf32>
    %40 = arith.mulf %37, %39 : vector<32x128xf32>
    %cst_16 = arith.constant dense<0.000000e+00> : vector<128xf32>
    %41 = vector.multi_reduction <add>, %40, %cst_16 [0] : vector<32x128xf32> to vector<128xf32>
    %42 = vector.shape_cast %41 : vector<128xf32> to vector<1x128xf32>
    %c0_17 = arith.constant 0 : index
    %43 = memref.load %arg5[%c0_17] : memref<1xf32, #tpu.memory_space<smem>>
    %44 = vector.broadcast %43 : f32 to vector<1x128xf32>
    %45 = arith.addf %42, %44 : vector<1x128xf32>
    %c0_18 = arith.constant 0 : index
    %c0_19 = arith.constant 0 : index
    %46 = vector.load %arg7[%c0_18, %c0_19] : memref<1x128xf32, #tpu.memory_space<vmem>>, vector<1x128xf32>
    tpu.vector_store %arg7[%c0_18, %c0_19], %45 {strides = array<i32>} : memref<1x128xf32, #tpu.memory_space<vmem>>, vector<1x128xf32>,
    %c0_20 = arith.constant 0 : index
    %c0_21 = arith.constant 0 : index
    %47 = vector.load %arg6[%c0_20, %c0_21] : memref<1x128xf32, #tpu.memory_space<vmem>>, vector<1x128xf32>
    %cst_22 = arith.constant 0.000000e+00 : f32
    %48 = vector.broadcast %cst_22 : f32 to vector<1x128xf32>
    %49 = arith.maximumf %45, %48 : vector<1x128xf32>
    %50 = arith.mulf %45, %47 : vector<1x128xf32>
    %51 = arith.subf %49, %50 : vector<1x128xf32>
    %52 = math.absf %45 : vector<1x128xf32>
    %cst_23 = arith.constant 0.000000e+00 : f32
    %53 = vector.broadcast %cst_23 : f32 to vector<1x128xf32>
    %54 = arith.subf %53, %52 : vector<1x128xf32>
    %55 = math.exp %54 : vector<1x128xf32>
    %56 = math.log1p %55 : vector<1x128xf32>
    %57 = arith.addf %51, %56 : vector<1x128xf32>
    %c0_24 = arith.constant 0 : index
    %c0_25 = arith.constant 0 : index
    %58 = vector.load %arg8[%c0_24, %c0_25] : memref<1x128xf32, #tpu.memory_space<vmem>>, vector<1x128xf32>
    tpu.vector_store %arg8[%c0_24, %c0_25], %57 {strides = array<i32>} : memref<1x128xf32, #tpu.memory_space<vmem>>, vector<1x128xf32>,
    return
  }
  func.func @transform_0(%arg0: i32) -> (i32, i32, i32) {
    %c0_i32 = arith.constant 0 : i32
    %c0_i32_0 = arith.constant 0 : i32
    %c0_i32_1 = arith.constant 0 : i32
    return %c0_i32, %arg0, %c0_i32_0 : i32, i32, i32
  }
  func.func @transform_1(%arg0: i32) -> (i32, i32) {
    %c0_i32 = arith.constant 0 : i32
    %c0_i32_0 = arith.constant 0 : i32
    %c0_i32_1 = arith.constant 0 : i32
    return %c0_i32, %c0_i32_0 : i32, i32
  }
  func.func @transform_2(%arg0: i32) -> (i32, i32) {
    %c0_i32 = arith.constant 0 : i32
    %c0_i32_0 = arith.constant 0 : i32
    %c0_i32_1 = arith.constant 0 : i32
    return %c0_i32, %c0_i32_0 : i32, i32
  }
  func.func @transform_3(%arg0: i32) -> (i32, i32) {
    %c0_i32 = arith.constant 0 : i32
    %c0_i32_0 = arith.constant 0 : i32
    %c0_i32_1 = arith.constant 0 : i32
    return %c0_i32, %c0_i32_0 : i32, i32
  }
  func.func @transform_4(%arg0: i32) -> i32 {
    %c0_i32 = arith.constant 0 : i32
    %c0_i32_0 = arith.constant 0 : i32
    return %c0_i32 : i32
  }
  func.func @transform_5(%arg0: i32) -> (i32, i32) {
    %c0_i32 = arith.constant 0 : i32
    %c0_i32_0 = arith.constant 0 : i32
    return %c0_i32, %arg0 : i32, i32
  }
  func.func @transform_6(%arg0: i32) -> (i32, i32) {
    %c0_i32 = arith.constant 0 : i32
    %c0_i32_0 = arith.constant 0 : i32
    return %c0_i32, %arg0 : i32, i32
  }
  func.func @transform_7(%arg0: i32) -> (i32, i32) {
    %c0_i32 = arith.constant 0 : i32
    %c0_i32_0 = arith.constant 0 : i32
    return %c0_i32, %arg0 : i32, i32
  }
}

</mosaic_0001>

<llo_original>
// kernel: cnn_classifier_forward.1
$region0: #{cnn_classifier_forward.1}
  #allocation0 [shape = 'u32[]', space=smem, size = 0x4, offset = 0x4, fixed_abs, tag = 'smem constant byte address 0x4 - core index']
  #allocation1 [shape = 'u32[144,128]{1,0:T(1,128)}', space=vmem, size = 0x12000, scoped, tag = 'internal scratch']
  #allocation2 [shape = 'f32[1]{0:T(128)S(6)}', space=smem, size = 0x200, scoped, tag = 'scoped memory for cnn_classifier_forward.1']
  %s0 = inlined_call_operand.vmem [shape: s32[4,128,16], index: 0, kind: input, shape index: {}]
  %s1 = inlined_call_operand.vmem [shape: f32[128,32], index: 1, kind: input, shape index: {}]
  %s2 = inlined_call_operand.vmem [shape: f32[16,32], index: 2, kind: input, shape index: {}]
  %s3 = inlined_call_operand.vmem [shape: f32[32,1], index: 3, kind: input, shape index: {}]
  %s4 = inlined_call_operand.<no memory space> [shape: f32[1], index: 4, kind: input, shape index: {}]
  %s5 = inlined_call_operand.vmem [shape: f32[1,128], index: 5, kind: input, shape index: {}]
  %s6 = inlined_call_operand.vmem [shape: f32[1,128], index: 6, kind: output, shape index: {0}]
  %s7 = inlined_call_operand.vmem [shape: f32[1,128], index: 7, kind: output, shape index: {1}]
  %8 = xla_tuple %s6, %s7
  %s9 = sld [smem:[#allocation0]]
  $region42: #{cnn_classifier_forward.1} parent=0
    _
  %s11 = ssub.s32 1, %s9
  %s12 = scalar_select 0, %s11, %s9
  %13 = sst [smem:[#allocation2]] %s4
  // Predicated region
  $region2: #{cnn_classifier_forward.1} parent=0 // pred_check
    _
  $region3: #{cnn_classifier_forward.1} parent=0 // pred_check_branch
    %15 = sbr.rel (0) target = $region5
  $region4: #{cnn_classifier_forward.1} parent=0 // pred_region
    _
  $region5: #{cnn_classifier_forward.1} parent=0 // pred_fallthru
    _
  // Predicated region
  $region6: #{cnn_classifier_forward.1} parent=0 // pred_check
    _
  $region7: #{cnn_classifier_forward.1} parent=0 // pred_check_branch
    %17 = sbr.rel (0) target = $region9
  $region8: #{cnn_classifier_forward.1} parent=0 // pred_region
    _
  $region9: #{cnn_classifier_forward.1} parent=0 // pred_fallthru
    _
  // Predicated region
  $region10: #{cnn_classifier_forward.1} parent=0 // pred_check
    _
  $region11: #{cnn_classifier_forward.1} parent=0 // pred_check_branch
    %19 = sbr.rel (0) target = $region13
  $region12: #{cnn_classifier_forward.1} parent=0 // pred_region
    _
  $region13: #{cnn_classifier_forward.1} parent=0 // pred_fallthru
    _
  // Predicated region
  $region14: #{cnn_classifier_forward.1} parent=0 // pred_check
    _
  $region15: #{cnn_classifier_forward.1} parent=0 // pred_check_branch
    %21 = sbr.rel (0) target = $region17
  $region16: #{cnn_classifier_forward.1} parent=0 // pred_region
    _
  $region17: #{cnn_classifier_forward.1} parent=0 // pred_fallthru
    _
  // Predicated region
  $region18: #{cnn_classifier_forward.1} parent=0 // pred_check
    _
  $region19: #{cnn_classifier_forward.1} parent=0 // pred_check_branch
    %23 = sbr.rel (0) target = $region21
  $region20: #{cnn_classifier_forward.1} parent=0 // pred_region
    _
  $region21: #{cnn_classifier_forward.1} parent=0 // pred_fallthru
    _
  // Predicated region
  $region22: #{cnn_classifier_forward.1} parent=0 // pred_check
    _
  $region23: #{cnn_classifier_forward.1} parent=0 // pred_check_branch
    %25 = sbr.rel (0) target = $region25
  $region24: #{cnn_classifier_forward.1} parent=0 // pred_region
    _
  $region25: #{cnn_classifier_forward.1} parent=0 // pred_fallthru
    _
  %v26 = vlaneseq
  %v27 = vand.u32 %v26, 127
  %v28 = vld [vmem:[%s0] sm:$0xff]
  %v29 = vld [vmem:[%s0 + $0x8] sm:$0xff]
  %v30 = vld [vmem:[%s0 + $0x10] sm:$0xff]
  %v31 = vld [vmem:[%s0 + $0x18] sm:$0xff]
  %v32 = vld [vmem:[%s0 + $0x20] sm:$0xff]
  %v33 = vld [vmem:[%s0 + $0x28] sm:$0xff]
  %v34 = vld [vmem:[%s0 + $0x30] sm:$0xff]
  %v35 = vld [vmem:[%s0 + $0x38] sm:$0xff]
  %v36 = vld [vmem:[%s0 + $0x40] sm:$0xff]
  %v37 = vld [vmem:[%s0 + $0x48] sm:$0xff]
  %v38 = vld [vmem:[%s0 + $0x50] sm:$0xff]
  %v39 = vld [vmem:[%s0 + $0x58] sm:$0xff]
  %v40 = vld [vmem:[%s0 + $0x60] sm:$0xff]
  %v41 = vld [vmem:[%s0 + $0x68] sm:$0xff]
  %v42 = vld [vmem:[%s0 + $0x70] sm:$0xff]
  %v43 = vld [vmem:[%s0 + $0x78] sm:$0xff]
  %v44 = vlaneseq
  %v45 = vshrl.u32 %v44, 7
  %v46 = vsub.s32 0, %v45
  %v47 = vrot.slane %v28, %v46
  %49 = vbcast.lane.b32.xlu0 %v47, 256
  %v50 = vpop.permute.xlu0 %49
  %s52 = sor.u32 256, 8
  %53 = vbcast.lane.b32.xlu0 %v47, %s52
  %v54 = vpop.permute.xlu0 %53
  %v55 = vlaneseq
  %v56 = vshrl.u32 %v55, 7
  %v57 = vsub.s32 1, %v56
  %v58 = vrot.slane %v28, %v57
  %60 = vbcast.lane.b32.xlu0 %v58, 256
  %v61 = vpop.permute.xlu0 %60
  %s63 = sor.u32 256, 8
  %64 = vbcast.lane.b32.xlu0 %v58, %s63
  %v65 = vpop.permute.xlu0 %64
  %v66 = vlaneseq
  %v67 = vshrl.u32 %v66, 7
  %v68 = vsub.s32 2, %v67
  %v69 = vrot.slane %v28, %v68
  %71 = vbcast.lane.b32.xlu0 %v69, 256
  %v72 = vpop.permute.xlu0 %71
  %s74 = sor.u32 256, 8
  %75 = vbcast.lane.b32.xlu0 %v69, %s74
  %v76 = vpop.permute.xlu0 %75
  %v77 = vlaneseq
  %v78 = vshrl.u32 %v77, 7
  %v79 = vsub.s32 3, %v78
  %v80 = vrot.slane %v28, %v79
  %82 = vbcast.lane.b32.xlu0 %v80, 256
  %v83 = vpop.permute.xlu0 %82
  %s85 = sor.u32 256, 8
  %86 = vbcast.lane.b32.xlu0 %v80, %s85
  %v87 = vpop.permute.xlu0 %86
  %v88 = vlaneseq
  %v89 = vshrl.u32 %v88, 7
  %v90 = vsub.s32 4, %v89
  %v91 = vrot.slane %v28, %v90
  %93 = vbcast.lane.b32.xlu0 %v91, 256
  %v94 = vpop.permute.xlu0 %93
  %s96 = sor.u32 256, 8
  %97 = vbcast.lane.b32.xlu0 %v91, %s96
  %v98 = vpop.permute.xlu0 %97
  %v99 = vlaneseq
  %v100 = vshrl.u32 %v99, 7
  %v101 = vsub.s32 5, %v100
  %v102 = vrot.slane %v28, %v101
  %104 = vbcast.lane.b32.xlu0 %v102, 256
  %v105 = vpop.permute.xlu0 %104
  %s107 = sor.u32 256, 8
  %108 = vbcast.lane.b32.xlu0 %v102, %s107
  %v109 = vpop.permute.xlu0 %108
  %v110 = vlaneseq
  %v111 = vshrl.u32 %v110, 7
  %v112 = vsub.s32 6, %v111
  %v113 = vrot.slane %v28, %v112
  %115 = vbcast.lane.b32.xlu0 %v113, 256
  %v116 = vpop.permute.xlu0 %115
  %s118 = sor.u32 256, 8
  %119 = vbcast.lane.b32.xlu0 %v113, %s118
  %v120 = vpop.permute.xlu0 %119
  %v121 = vlaneseq
  %v122 = vshrl.u32 %v121, 7
  %v123 = vsub.s32 7, %v122
  %v124 = vrot.slane %v28, %v123
  %126 = vbcast.lane.b32.xlu0 %v124, 256
  %v127 = vpop.permute.xlu0 %126
  %s129 = sor.u32 256, 8
  %130 = vbcast.lane.b32.xlu0 %v124, %s129
  %v131 = vpop.permute.xlu0 %130
  %v132 = vlaneseq
  %v133 = vshrl.u32 %v132, 7
  %v134 = vsub.s32 0, %v133
  %v135 = vrot.slane %v29, %v134
  %137 = vbcast.lane.b32.xlu0 %v135, 256
  %v138 = vpop.permute.xlu0 %137
  %s140 = sor.u32 256, 8
  %141 = vbcast.lane.b32.xlu0 %v135, %s140
  %v142 = vpop.permute.xlu0 %141
  %v143 = vlaneseq
  %v144 = vshrl.u32 %v143, 7
  %v145 = vsub.s32 1, %v144
  %v146 = vrot.slane %v29, %v145
  %148 = vbcast.lane.b32.xlu0 %v146, 256
  %v149 = vpop.permute.xlu0 %148
  %s151 = sor.u32 256, 8
  %152 = vbcast.lane.b32.xlu0 %v146, %s151
  %v153 = vpop.permute.xlu0 %152
  %v154 = vlaneseq
  %v155 = vshrl.u32 %v154, 7
  %v156 = vsub.s32 2, %v155
  %v157 = vrot.slane %v29, %v156
  %159 = vbcast.lane.b32.xlu0 %v157, 256
  %v160 = vpop.permute.xlu0 %159
  %s162 = sor.u32 256, 8
  %163 = vbcast.lane.b32.xlu0 %v157, %s162
  %v164 = vpop.permute.xlu0 %163
  %v165 = vlaneseq
  %v166 = vshrl.u32 %v165, 7
  %v167 = vsub.s32 3, %v166
  %v168 = vrot.slane %v29, %v167
  %170 = vbcast.lane.b32.xlu0 %v168, 256
  %v171 = vpop.permute.xlu0 %170
  %s173 = sor.u32 256, 8
  %174 = vbcast.lane.b32.xlu0 %v168, %s173
  %v175 = vpop.permute.xlu0 %174
  %v176 = vlaneseq
  %v177 = vshrl.u32 %v176, 7
  %v178 = vsub.s32 4, %v177
  %v179 = vrot.slane %v29, %v178
  %181 = vbcast.lane.b32.xlu0 %v179, 256
  %v182 = vpop.permute.xlu0 %181
  %s184 = sor.u32 256, 8
  %185 = vbcast.lane.b32.xlu0 %v179, %s184
  %v186 = vpop.permute.xlu0 %185
  %v187 = vlaneseq
  %v188 = vshrl.u32 %v187, 7
  %v189 = vsub.s32 5, %v188
  %v190 = vrot.slane %v29, %v189
  %192 = vbcast.lane.b32.xlu0 %v190, 256
  %v193 = vpop.permute.xlu0 %192
  %s195 = sor.u32 256, 8
  %196 = vbcast.lane.b32.xlu0 %v190, %s195
  %v197 = vpop.permute.xlu0 %196
  %v198 = vlaneseq
  %v199 = vshrl.u32 %v198, 7
  %v200 = vsub.s32 6, %v199
  %v201 = vrot.slane %v29, %v200
  %203 = vbcast.lane.b32.xlu0 %v201, 256
  %v204 = vpop.permute.xlu0 %203
  %s206 = sor.u32 256, 8
  %207 = vbcast.lane.b32.xlu0 %v201, %s206
  %v208 = vpop.permute.xlu0 %207
  %v209 = vlaneseq
  %v210 = vshrl.u32 %v209, 7
  %v211 = vsub.s32 7, %v210
  %v212 = vrot.slane %v29, %v211
  %214 = vbcast.lane.b32.xlu0 %v212, 256
  %v215 = vpop.permute.xlu0 %214
  %s217 = sor.u32 256, 8
  %218 = vbcast.lane.b32.xlu0 %v212, %s217
  %v219 = vpop.permute.xlu0 %218
  %v220 = vlaneseq
  %v221 = vshrl.u32 %v220, 7
  %v222 = vsub.s32 0, %v221
  %v223 = vrot.slane %v30, %v222
  %225 = vbcast.lane.b32.xlu0 %v223, 256
  %v226 = vpop.permute.xlu0 %225
  %s228 = sor.u32 256, 8
  %229 = vbcast.lane.b32.xlu0 %v223, %s228
  %v230 = vpop.permute.xlu0 %229
  %v231 = vlaneseq
  %v232 = vshrl.u32 %v231, 7
  %v233 = vsub.s32 1, %v232
  %v234 = vrot.slane %v30, %v233
  %236 = vbcast.lane.b32.xlu0 %v234, 256
  %v237 = vpop.permute.xlu0 %236
  %s239 = sor.u32 256, 8
  %240 = vbcast.lane.b32.xlu0 %v234, %s239
  %v241 = vpop.permute.xlu0 %240
  %v242 = vlaneseq
  %v243 = vshrl.u32 %v242, 7
  %v244 = vsub.s32 2, %v243
  %v245 = vrot.slane %v30, %v244
  %247 = vbcast.lane.b32.xlu0 %v245, 256
  %v248 = vpop.permute.xlu0 %247
  %s250 = sor.u32 256, 8
  %251 = vbcast.lane.b32.xlu0 %v245, %s250
  %v252 = vpop.permute.xlu0 %251
  %v253 = vlaneseq
  %v254 = vshrl.u32 %v253, 7
  %v255 = vsub.s32 3, %v254
  %v256 = vrot.slane %v30, %v255
  %258 = vbcast.lane.b32.xlu0 %v256, 256
  %v259 = vpop.permute.xlu0 %258
  %s261 = sor.u32 256, 8
  %262 = vbcast.lane.b32.xlu0 %v256, %s261
  %v263 = vpop.permute.xlu0 %262
  %v264 = vlaneseq
  %v265 = vshrl.u32 %v264, 7
  %v266 = vsub.s32 4, %v265
  %v267 = vrot.slane %v30, %v266
  %269 = vbcast.lane.b32.xlu0 %v267, 256
  %v270 = vpop.permute.xlu0 %269
  %s272 = sor.u32 256, 8
  %273 = vbcast.lane.b32.xlu0 %v267, %s272
  %v274 = vpop.permute.xlu0 %273
  %v275 = vlaneseq
  %v276 = vshrl.u32 %v275, 7
  %v277 = vsub.s32 5, %v276
  %v278 = vrot.slane %v30, %v277
  %280 = vbcast.lane.b32.xlu0 %v278, 256
  %v281 = vpop.permute.xlu0 %280
  %s283 = sor.u32 256, 8
  %284 = vbcast.lane.b32.xlu0 %v278, %s283
  %v285 = vpop.permute.xlu0 %284
  %v286 = vlaneseq
  %v287 = vshrl.u32 %v286, 7
  %v288 = vsub.s32 6, %v287
  %v289 = vrot.slane %v30, %v288
  %291 = vbcast.lane.b32.xlu0 %v289, 256
  %v292 = vpop.permute.xlu0 %291
  %s294 = sor.u32 256, 8
  %295 = vbcast.lane.b32.xlu0 %v289, %s294
  %v296 = vpop.permute.xlu0 %295
  %v297 = vlaneseq
  %v298 = vshrl.u32 %v297, 7
  %v299 = vsub.s32 7, %v298
  %v300 = vrot.slane %v30, %v299
  %302 = vbcast.lane.b32.xlu0 %v300, 256
  %v303 = vpop.permute.xlu0 %302
  %s305 = sor.u32 256, 8
  %306 = vbcast.lane.b32.xlu0 %v300, %s305
  %v307 = vpop.permute.xlu0 %306
  %v308 = vlaneseq
  %v309 = vshrl.u32 %v308, 7
  %v310 = vsub.s32 0, %v309
  %v311 = vrot.slane %v31, %v310
  %313 = vbcast.lane.b32.xlu0 %v311, 256
  %v314 = vpop.permute.xlu0 %313
  %s316 = sor.u32 256, 8
  %317 = vbcast.lane.b32.xlu0 %v311, %s316
  %v318 = vpop.permute.xlu0 %317
  %v319 = vlaneseq
  %v320 = vshrl.u32 %v319, 7
  %v321 = vsub.s32 1, %v320
  %v322 = vrot.slane %v31, %v321
  %324 = vbcast.lane.b32.xlu0 %v322, 256
  %v325 = vpop.permute.xlu0 %324
  %s327 = sor.u32 256, 8
  %328 = vbcast.lane.b32.xlu0 %v322, %s327
  %v329 = vpop.permute.xlu0 %328
  %v330 = vlaneseq
  %v331 = vshrl.u32 %v330, 7
  %v332 = vsub.s32 2, %v331
  %v333 = vrot.slane %v31, %v332
  %335 = vbcast.lane.b32.xlu0 %v333, 256
  %v336 = vpop.permute.xlu0 %335
  %s338 = sor.u32 256, 8
  %339 = vbcast.lane.b32.xlu0 %v333, %s338
  %v340 = vpop.permute.xlu0 %339
  %v341 = vlaneseq
  %v342 = vshrl.u32 %v341, 7
  %v343 = vsub.s32 3, %v342
  %v344 = vrot.slane %v31, %v343
  %346 = vbcast.lane.b32.xlu0 %v344, 256
  %v347 = vpop.permute.xlu0 %346
  %s349 = sor.u32 256, 8
  %350 = vbcast.lane.b32.xlu0 %v344, %s349
  %v351 = vpop.permute.xlu0 %350
  %v352 = vlaneseq
  %v353 = vshrl.u32 %v352, 7
  %v354 = vsub.s32 4, %v353
  %v355 = vrot.slane %v31, %v354
  %357 = vbcast.lane.b32.xlu0 %v355, 256
  %v358 = vpop.permute.xlu0 %357
  %s360 = sor.u32 256, 8
  %361 = vbcast.lane.b32.xlu0 %v355, %s360
  %v362 = vpop.permute.xlu0 %361
  %v363 = vlaneseq
  %v364 = vshrl.u32 %v363, 7
  %v365 = vsub.s32 5, %v364
  %v366 = vrot.slane %v31, %v365
  %368 = vbcast.lane.b32.xlu0 %v366, 256
  %v369 = vpop.permute.xlu0 %368
  %s371 = sor.u32 256, 8
  %372 = vbcast.lane.b32.xlu0 %v366, %s371
  %v373 = vpop.permute.xlu0 %372
  %v374 = vlaneseq
  %v375 = vshrl.u32 %v374, 7
  %v376 = vsub.s32 6, %v375
  %v377 = vrot.slane %v31, %v376
  %379 = vbcast.lane.b32.xlu0 %v377, 256
  %v380 = vpop.permute.xlu0 %379
  %s382 = sor.u32 256, 8
  %383 = vbcast.lane.b32.xlu0 %v377, %s382
  %v384 = vpop.permute.xlu0 %383
  %v385 = vlaneseq
  %v386 = vshrl.u32 %v385, 7
  %v387 = vsub.s32 7, %v386
  %v388 = vrot.slane %v31, %v387
  %390 = vbcast.lane.b32.xlu0 %v388, 256
  %v391 = vpop.permute.xlu0 %390
  %s393 = sor.u32 256, 8
  %394 = vbcast.lane.b32.xlu0 %v388, %s393
  %v395 = vpop.permute.xlu0 %394
  %v396 = vlaneseq
  %v397 = vshrl.u32 %v396, 7
  %v398 = vsub.s32 0, %v397
  %v399 = vrot.slane %v32, %v398
  %401 = vbcast.lane.b32.xlu0 %v399, 256
  %v402 = vpop.permute.xlu0 %401
  %s404 = sor.u32 256, 8
  %405 = vbcast.lane.b32.xlu0 %v399, %s404
  %v406 = vpop.permute.xlu0 %405
  %v407 = vlaneseq
  %v408 = vshrl.u32 %v407, 7
  %v409 = vsub.s32 1, %v408
  %v410 = vrot.slane %v32, %v409
  %412 = vbcast.lane.b32.xlu0 %v410, 256
  %v413 = vpop.permute.xlu0 %412
  %s415 = sor.u32 256, 8
  %416 = vbcast.lane.b32.xlu0 %v410, %s415
  %v417 = vpop.permute.xlu0 %416
  %v418 = vlaneseq
  %v419 = vshrl.u32 %v418, 7
  %v420 = vsub.s32 2, %v419
  %v421 = vrot.slane %v32, %v420
  %423 = vbcast.lane.b32.xlu0 %v421, 256
  %v424 = vpop.permute.xlu0 %423
  %s426 = sor.u32 256, 8
  %427 = vbcast.lane.b32.xlu0 %v421, %s426
  %v428 = vpop.permute.xlu0 %427
  %v429 = vlaneseq
  %v430 = vshrl.u32 %v429, 7
  %v431 = vsub.s32 3, %v430
  %v432 = vrot.slane %v32, %v431
  %434 = vbcast.lane.b32.xlu0 %v432, 256
  %v435 = vpop.permute.xlu0 %434
  %s437 = sor.u32 256, 8
  %438 = vbcast.lane.b32.xlu0 %v432, %s437
  %v439 = vpop.permute.xlu0 %438
  %v440 = vlaneseq
  %v441 = vshrl.u32 %v440, 7
  %v442 = vsub.s32 4, %v441
  %v443 = vrot.slane %v32, %v442
  %445 = vbcast.lane.b32.xlu0 %v443, 256
  %v446 = vpop.permute.xlu0 %445
  %s448 = sor.u32 256, 8
  %449 = vbcast.lane.b32.xlu0 %v443, %s448
  %v450 = vpop.permute.xlu0 %449
  %v451 = vlaneseq
  %v452 = vshrl.u32 %v451, 7
  %v453 = vsub.s32 5, %v452
  %v454 = vrot.slane %v32, %v453
  %456 = vbcast.lane.b32.xlu0 %v454, 256
  %v457 = vpop.permute.xlu0 %456
  %s459 = sor.u32 256, 8
  %460 = vbcast.lane.b32.xlu0 %v454, %s459
  %v461 = vpop.permute.xlu0 %460
  %v462 = vlaneseq
  %v463 = vshrl.u32 %v462, 7
  %v464 = vsub.s32 6, %v463
  %v465 = vrot.slane %v32, %v464
  %467 = vbcast.lane.b32.xlu0 %v465, 256
  %v468 = vpop.permute.xlu0 %467
  %s470 = sor.u32 256, 8
  %471 = vbcast.lane.b32.xlu0 %v465, %s470
  %v472 = vpop.permute.xlu0 %471
  %v473 = vlaneseq
  %v474 = vshrl.u32 %v473, 7
  %v475 = vsub.s32 7, %v474
  %v476 = vrot.slane %v32, %v475
  %478 = vbcast.lane.b32.xlu0 %v476, 256
  %v479 = vpop.permute.xlu0 %478
  %s481 = sor.u32 256, 8
  %482 = vbcast.lane.b32.xlu0 %v476, %s481
  %v483 = vpop.permute.xlu0 %482
  %v484 = vlaneseq
  %v485 = vshrl.u32 %v484, 7
  %v486 = vsub.s32 0, %v485
  %v487 = vrot.slane %v33, %v486
  %489 = vbcast.lane.b32.xlu0 %v487, 256
  %v490 = vpop.permute.xlu0 %489
  %s492 = sor.u32 256, 8
  %493 = vbcast.lane.b32.xlu0 %v487, %s492
  %v494 = vpop.permute.xlu0 %493
  %v495 = vlaneseq
  %v496 = vshrl.u32 %v495, 7
  %v497 = vsub.s32 1, %v496
  %v498 = vrot.slane %v33, %v497
  %500 = vbcast.lane.b32.xlu0 %v498, 256
  %v501 = vpop.permute.xlu0 %500
  %s503 = sor.u32 256, 8
  %504 = vbcast.lane.b32.xlu0 %v498, %s503
  %v505 = vpop.permute.xlu0 %504
  %v506 = vlaneseq
  %v507 = vshrl.u32 %v506, 7
  %v508 = vsub.s32 2, %v507
  %v509 = vrot.slane %v33, %v508
  %511 = vbcast.lane.b32.xlu0 %v509, 256
  %v512 = vpop.permute.xlu0 %511
  %s514 = sor.u32 256, 8
  %515 = vbcast.lane.b32.xlu0 %v509, %s514
  %v516 = vpop.permute.xlu0 %515
  %v517 = vlaneseq
  %v518 = vshrl.u32 %v517, 7
  %v519 = vsub.s32 3, %v518
  %v520 = vrot.slane %v33, %v519
  %522 = vbcast.lane.b32.xlu0 %v520, 256
  %v523 = vpop.permute.xlu0 %522
  %s525 = sor.u32 256, 8
  %526 = vbcast.lane.b32.xlu0 %v520, %s525
  %v527 = vpop.permute.xlu0 %526
  %v528 = vlaneseq
  %v529 = vshrl.u32 %v528, 7
  %v530 = vsub.s32 4, %v529
  %v531 = vrot.slane %v33, %v530
  %533 = vbcast.lane.b32.xlu0 %v531, 256
  %v534 = vpop.permute.xlu0 %533
  %s536 = sor.u32 256, 8
  %537 = vbcast.lane.b32.xlu0 %v531, %s536
  %v538 = vpop.permute.xlu0 %537
  %v539 = vlaneseq
  %v540 = vshrl.u32 %v539, 7
  %v541 = vsub.s32 5, %v540
  %v542 = vrot.slane %v33, %v541
  %544 = vbcast.lane.b32.xlu0 %v542, 256
  %v545 = vpop.permute.xlu0 %544
  %s547 = sor.u32 256, 8
  %548 = vbcast.lane.b32.xlu0 %v542, %s547
  %v549 = vpop.permute.xlu0 %548
  %v550 = vlaneseq
  %v551 = vshrl.u32 %v550, 7
  %v552 = vsub.s32 6, %v551
  %v553 = vrot.slane %v33, %v552
  %555 = vbcast.lane.b32.xlu0 %v553, 256
  %v556 = vpop.permute.xlu0 %555
  %s558 = sor.u32 256, 8
  %559 = vbcast.lane.b32.xlu0 %v553, %s558
  %v560 = vpop.permute.xlu0 %559
  %v561 = vlaneseq
  %v562 = vshrl.u32 %v561, 7
  %v563 = vsub.s32 7, %v562
  %v564 = vrot.slane %v33, %v563
  %566 = vbcast.lane.b32.xlu0 %v564, 256
  %v567 = vpop.permute.xlu0 %566
  %s569 = sor.u32 256, 8
  %570 = vbcast.lane.b32.xlu0 %v564, %s569
  %v571 = vpop.permute.xlu0 %570
  %v572 = vlaneseq
  %v573 = vshrl.u32 %v572, 7
  %v574 = vsub.s32 0, %v573
  %v575 = vrot.slane %v34, %v574
  %577 = vbcast.lane.b32.xlu0 %v575, 256
  %v578 = vpop.permute.xlu0 %577
  %s580 = sor.u32 256, 8
  %581 = vbcast.lane.b32.xlu0 %v575, %s580
  %v582 = vpop.permute.xlu0 %581
  %v583 = vlaneseq
  %v584 = vshrl.u32 %v583, 7
  %v585 = vsub.s32 1, %v584
  %v586 = vrot.slane %v34, %v585
  %588 = vbcast.lane.b32.xlu0 %v586, 256
  %v589 = vpop.permute.xlu0 %588
  %s591 = sor.u32 256, 8
  %592 = vbcast.lane.b32.xlu0 %v586, %s591
  %v593 = vpop.permute.xlu0 %592
  %v594 = vlaneseq
  %v595 = vshrl.u32 %v594, 7
  %v596 = vsub.s32 2, %v595
  %v597 = vrot.slane %v34, %v596
  %599 = vbcast.lane.b32.xlu0 %v597, 256
  %v600 = vpop.permute.xlu0 %599
  %s602 = sor.u32 256, 8
  %603 = vbcast.lane.b32.xlu0 %v597, %s602
  %v604 = vpop.permute.xlu0 %603
  %v605 = vlaneseq
  %v606 = vshrl.u32 %v605, 7
  %v607 = vsub.s32 3, %v606
  %v608 = vrot.slane %v34, %v607
  %610 = vbcast.lane.b32.xlu0 %v608, 256
  %v611 = vpop.permute.xlu0 %610
  %s613 = sor.u32 256, 8
  %614 = vbcast.lane.b32.xlu0 %v608, %s613
  %v615 = vpop.permute.xlu0 %614
  %v616 = vlaneseq
  %v617 = vshrl.u32 %v616, 7
  %v618 = vsub.s32 4, %v617
  %v619 = vrot.slane %v34, %v618
  %621 = vbcast.lane.b32.xlu0 %v619, 256
  %v622 = vpop.permute.xlu0 %621
  %s624 = sor.u32 256, 8
  %625 = vbcast.lane.b32.xlu0 %v619, %s624
  %v626 = vpop.permute.xlu0 %625
  %v627 = vlaneseq
  %v628 = vshrl.u32 %v627, 7
  %v629 = vsub.s32 5, %v628
  %v630 = vrot.slane %v34, %v629
  %632 = vbcast.lane.b32.xlu0 %v630, 256
  %v633 = vpop.permute.xlu0 %632
  %s635 = sor.u32 256, 8
  %636 = vbcast.lane.b32.xlu0 %v630, %s635
  %v637 = vpop.permute.xlu0 %636
  %v638 = vlaneseq
  %v639 = vshrl.u32 %v638, 7
  %v640 = vsub.s32 6, %v639
  %v641 = vrot.slane %v34, %v640
  %643 = vbcast.lane.b32.xlu0 %v641, 256
  %v644 = vpop.permute.xlu0 %643
  %s646 = sor.u32 256, 8
  %647 = vbcast.lane.b32.xlu0 %v641, %s646
  %v648 = vpop.permute.xlu0 %647
  %v649 = vlaneseq
  %v650 = vshrl.u32 %v649, 7
  %v651 = vsub.s32 7, %v650
  %v652 = vrot.slane %v34, %v651
  %654 = vbcast.lane.b32.xlu0 %v652, 256
  %v655 = vpop.permute.xlu0 %654
  %s657 = sor.u32 256, 8
  %658 = vbcast.lane.b32.xlu0 %v652, %s657
  %v659 = vpop.permute.xlu0 %658
  %v660 = vlaneseq
  %v661 = vshrl.u32 %v660, 7
  %v662 = vsub.s32 0, %v661
  %v663 = vrot.slane %v35, %v662
  %665 = vbcast.lane.b32.xlu0 %v663, 256
  %v666 = vpop.permute.xlu0 %665
  %s668 = sor.u32 256, 8
  %669 = vbcast.lane.b32.xlu0 %v663, %s668
  %v670 = vpop.permute.xlu0 %669
  %v671 = vlaneseq
  %v672 = vshrl.u32 %v671, 7
  %v673 = vsub.s32 1, %v672
  %v674 = vrot.slane %v35, %v673
  %676 = vbcast.lane.b32.xlu0 %v674, 256
  %v677 = vpop.permute.xlu0 %676
  %s679 = sor.u32 256, 8
  %680 = vbcast.lane.b32.xlu0 %v674, %s679
  %v681 = vpop.permute.xlu0 %680
  %v682 = vlaneseq
  %v683 = vshrl.u32 %v682, 7
  %v684 = vsub.s32 2, %v683
  %v685 = vrot.slane %v35, %v684
  %687 = vbcast.lane.b32.xlu0 %v685, 256
  %v688 = vpop.permute.xlu0 %687
  %s690 = sor.u32 256, 8
  %691 = vbcast.lane.b32.xlu0 %v685, %s690
  %v692 = vpop.permute.xlu0 %691
  %v693 = vlaneseq
  %v694 = vshrl.u32 %v693, 7
  %v695 = vsub.s32 3, %v694
  %v696 = vrot.slane %v35, %v695
  %698 = vbcast.lane.b32.xlu0 %v696, 256
  %v699 = vpop.permute.xlu0 %698
  %s701 = sor.u32 256, 8
  %702 = vbcast.lane.b32.xlu0 %v696, %s701
  %v703 = vpop.permute.xlu0 %702
  %v704 = vlaneseq
  %v705 = vshrl.u32 %v704, 7
  %v706 = vsub.s32 4, %v705
  %v707 = vrot.slane %v35, %v706
  %709 = vbcast.lane.b32.xlu0 %v707, 256
  %v710 = vpop.permute.xlu0 %709
  %s712 = sor.u32 256, 8
  %713 = vbcast.lane.b32.xlu0 %v707, %s712
  %v714 = vpop.permute.xlu0 %713
  %v715 = vlaneseq
  %v716 = vshrl.u32 %v715, 7
  %v717 = vsub.s32 5, %v716
  %v718 = vrot.slane %v35, %v717
  %720 = vbcast.lane.b32.xlu0 %v718, 256
  %v721 = vpop.permute.xlu0 %720
  %s723 = sor.u32 256, 8
  %724 = vbcast.lane.b32.xlu0 %v718, %s723
  %v725 = vpop.permute.xlu0 %724
  %v726 = vlaneseq
  %v727 = vshrl.u32 %v726, 7
  %v728 = vsub.s32 6, %v727
  %v729 = vrot.slane %v35, %v728
  %731 = vbcast.lane.b32.xlu0 %v729, 256
  %v732 = vpop.permute.xlu0 %731
  %s734 = sor.u32 256, 8
  %735 = vbcast.lane.b32.xlu0 %v729, %s734
  %v736 = vpop.permute.xlu0 %735
  %v737 = vlaneseq
  %v738 = vshrl.u32 %v737, 7
  %v739 = vsub.s32 7, %v738
  %v740 = vrot.slane %v35, %v739
  %742 = vbcast.lane.b32.xlu0 %v740, 256
  %v743 = vpop.permute.xlu0 %742
  %s745 = sor.u32 256, 8
  %746 = vbcast.lane.b32.xlu0 %v740, %s745
  %v747 = vpop.permute.xlu0 %746
  %v748 = vlaneseq
  %v749 = vshrl.u32 %v748, 7
  %v750 = vsub.s32 0, %v749
  %v751 = vrot.slane %v36, %v750
  %753 = vbcast.lane.b32.xlu0 %v751, 256
  %v754 = vpop.permute.xlu0 %753
  %s756 = sor.u32 256, 8
  %757 = vbcast.lane.b32.xlu0 %v751, %s756
  %v758 = vpop.permute.xlu0 %757
  %v759 = vlaneseq
  %v760 = vshrl.u32 %v759, 7
  %v761 = vsub.s32 1, %v760
  %v762 = vrot.slane %v36, %v761
  %764 = vbcast.lane.b32.xlu0 %v762, 256
  %v765 = vpop.permute.xlu0 %764
  %s767 = sor.u32 256, 8
  %768 = vbcast.lane.b32.xlu0 %v762, %s767
  %v769 = vpop.permute.xlu0 %768
  %v770 = vlaneseq
  %v771 = vshrl.u32 %v770, 7
  %v772 = vsub.s32 2, %v771
  %v773 = vrot.slane %v36, %v772
  %775 = vbcast.lane.b32.xlu0 %v773, 256
  %v776 = vpop.permute.xlu0 %775
  %s778 = sor.u32 256, 8
  %779 = vbcast.lane.b32.xlu0 %v773, %s778
  %v780 = vpop.permute.xlu0 %779
  %v781 = vlaneseq
  %v782 = vshrl.u32 %v781, 7
  %v783 = vsub.s32 3, %v782
  %v784 = vrot.slane %v36, %v783
  %786 = vbcast.lane.b32.xlu0 %v784, 256
  %v787 = vpop.permute.xlu0 %786
  %s789 = sor.u32 256, 8
  %790 = vbcast.lane.b32.xlu0 %v784, %s789
  %v791 = vpop.permute.xlu0 %790
  %v792 = vlaneseq
  %v793 = vshrl.u32 %v792, 7
  %v794 = vsub.s32 4, %v793
  %v795 = vrot.slane %v36, %v794
  %797 = vbcast.lane.b32.xlu0 %v795, 256
  %v798 = vpop.permute.xlu0 %797
  %s800 = sor.u32 256, 8
  %801 = vbcast.lane.b32.xlu0 %v795, %s800
  %v802 = vpop.permute.xlu0 %801
  %v803 = vlaneseq
  %v804 = vshrl.u32 %v803, 7
  %v805 = vsub.s32 5, %v804
  %v806 = vrot.slane %v36, %v805
  %808 = vbcast.lane.b32.xlu0 %v806, 256
  %v809 = vpop.permute.xlu0 %808
  %s811 = sor.u32 256, 8
  %812 = vbcast.lane.b32.xlu0 %v806, %s811
  %v813 = vpop.permute.xlu0 %812
  %v814 = vlaneseq
  %v815 = vshrl.u32 %v814, 7
  %v816 = vsub.s32 6, %v815
  %v817 = vrot.slane %v36, %v816
  %819 = vbcast.lane.b32.xlu0 %v817, 256
  %v820 = vpop.permute.xlu0 %819
  %s822 = sor.u32 256, 8
  %823 = vbcast.lane.b32.xlu0 %v817, %s822
  %v824 = vpop.permute.xlu0 %823
  %v825 = vlaneseq
  %v826 = vshrl.u32 %v825, 7
  %v827 = vsub.s32 7, %v826
  %v828 = vrot.slane %v36, %v827
  %830 = vbcast.lane.b32.xlu0 %v828, 256
  %v831 = vpop.permute.xlu0 %830
  %s833 = sor.u32 256, 8
  %834 = vbcast.lane.b32.xlu0 %v828, %s833
  %v835 = vpop.permute.xlu0 %834
  %v836 = vlaneseq
  %v837 = vshrl.u32 %v836, 7
  %v838 = vsub.s32 0, %v837
  %v839 = vrot.slane %v37, %v838
  %841 = vbcast.lane.b32.xlu0 %v839, 256
  %v842 = vpop.permute.xlu0 %841
  %s844 = sor.u32 256, 8
  %845 = vbcast.lane.b32.xlu0 %v839, %s844
  %v846 = vpop.permute.xlu0 %845
  %v847 = vlaneseq
  %v848 = vshrl.u32 %v847, 7
  %v849 = vsub.s32 1, %v848
  %v850 = vrot.slane %v37, %v849
  %852 = vbcast.lane.b32.xlu0 %v850, 256
  %v853 = vpop.permute.xlu0 %852
  %s855 = sor.u32 256, 8
  %856 = vbcast.lane.b32.xlu0 %v850, %s855
  %v857 = vpop.permute.xlu0 %856
  %v858 = vlaneseq
  %v859 = vshrl.u32 %v858, 7
  %v860 = vsub.s32 2, %v859
  %v861 = vrot.slane %v37, %v860
  %863 = vbcast.lane.b32.xlu0 %v861, 256
  %v864 = vpop.permute.xlu0 %863
  %s866 = sor.u32 256, 8
  %867 = vbcast.lane.b32.xlu0 %v861, %s866
  %v868 = vpop.permute.xlu0 %867
  %v869 = vlaneseq
  %v870 = vshrl.u32 %v869, 7
  %v871 = vsub.s32 3, %v870
  %v872 = vrot.slane %v37, %v871
  %874 = vbcast.lane.b32.xlu0 %v872, 256
  %v875 = vpop.permute.xlu0 %874
  %s877 = sor.u32 256, 8
  %878 = vbcast.lane.b32.xlu0 %v872, %s877
  %v879 = vpop.permute.xlu0 %878
  %v880 = vlaneseq
  %v881 = vshrl.u32 %v880, 7
  %v882 = vsub.s32 4, %v881
  %v883 = vrot.slane %v37, %v882
  %885 = vbcast.lane.b32.xlu0 %v883, 256
  %v886 = vpop.permute.xlu0 %885
  %s888 = sor.u32 256, 8
  %889 = vbcast.lane.b32.xlu0 %v883, %s888
  %v890 = vpop.permute.xlu0 %889
  %v891 = vlaneseq
  %v892 = vshrl.u32 %v891, 7
  %v893 = vsub.s32 5, %v892
  %v894 = vrot.slane %v37, %v893
  %896 = vbcast.lane.b32.xlu0 %v894, 256
  %v897 = vpop.permute.xlu0 %896
  %s899 = sor.u32 256, 8
  %900 = vbcast.lane.b32.xlu0 %v894, %s899
  %v901 = vpop.permute.xlu0 %900
  %v902 = vlaneseq
  %v903 = vshrl.u32 %v902, 7
  %v904 = vsub.s32 6, %v903
  %v905 = vrot.slane %v37, %v904
  %907 = vbcast.lane.b32.xlu0 %v905, 256
  %v908 = vpop.permute.xlu0 %907
  %s910 = sor.u32 256, 8
  %911 = vbcast.lane.b32.xlu0 %v905, %s910
  %v912 = vpop.permute.xlu0 %911
  %v913 = vlaneseq
  %v914 = vshrl.u32 %v913, 7
  %v915 = vsub.s32 7, %v914
  %v916 = vrot.slane %v37, %v915
  %918 = vbcast.lane.b32.xlu0 %v916, 256
  %v919 = vpop.permute.xlu0 %918
  %s921 = sor.u32 256, 8
  %922 = vbcast.lane.b32.xlu0 %v916, %s921
  %v923 = vpop.permute.xlu0 %922
  %v924 = vlaneseq
  %v925 = vshrl.u32 %v924, 7
  %v926 = vsub.s32 0, %v925
  %v927 = vrot.slane %v38, %v926
  %929 = vbcast.lane.b32.xlu0 %v927, 256
  %v930 = vpop.permute.xlu0 %929
  %s932 = sor.u32 256, 8
  %933 = vbcast.lane.b32.xlu0 %v927, %s932
  %v934 = vpop.permute.xlu0 %933
  %v935 = vlaneseq
  %v936 = vshrl.u32 %v935, 7
  %v937 = vsub.s32 1, %v936
  %v938 = vrot.slane %v38, %v937
  %940 = vbcast.lane.b32.xlu0 %v938, 256
  %v941 = vpop.permute.xlu0 %940
  %s943 = sor.u32 256, 8
  %944 = vbcast.lane.b32.xlu0 %v938, %s943
  %v945 = vpop.permute.xlu0 %944
  %v946 = vlaneseq
  %v947 = vshrl.u32 %v946, 7
  %v948 = vsub.s32 2, %v947
  %v949 = vrot.slane %v38, %v948
  %951 = vbcast.lane.b32.xlu0 %v949, 256
  %v952 = vpop.permute.xlu0 %951
  %s954 = sor.u32 256, 8
  %955 = vbcast.lane.b32.xlu0 %v949, %s954
  %v956 = vpop.permute.xlu0 %955
  %v957 = vlaneseq
  %v958 = vshrl.u32 %v957, 7
  %v959 = vsub.s32 3, %v958
  %v960 = vrot.slane %v38, %v959
  %962 = vbcast.lane.b32.xlu0 %v960, 256
  %v963 = vpop.permute.xlu0 %962
  %s965 = sor.u32 256, 8
  %966 = vbcast.lane.b32.xlu0 %v960, %s965
  %v967 = vpop.permute.xlu0 %966
  %v968 = vlaneseq
  %v969 = vshrl.u32 %v968, 7
  %v970 = vsub.s32 4, %v969
  %v971 = vrot.slane %v38, %v970
  %973 = vbcast.lane.b32.xlu0 %v971, 256
  %v974 = vpop.permute.xlu0 %973
  %s976 = sor.u32 256, 8
  %977 = vbcast.lane.b32.xlu0 %v971, %s976
  %v978 = vpop.permute.xlu0 %977
  %v979 = vlaneseq
  %v980 = vshrl.u32 %v979, 7
  %v981 = vsub.s32 5, %v980
  %v982 = vrot.slane %v38, %v981
  %984 = vbcast.lane.b32.xlu0 %v982, 256
  %v985 = vpop.permute.xlu0 %984
  %s987 = sor.u32 256, 8
  %988 = vbcast.lane.b32.xlu0 %v982, %s987
  %v989 = vpop.permute.xlu0 %988
  %v990 = vlaneseq
  %v991 = vshrl.u32 %v990, 7
  %v992 = vsub.s32 6, %v991
  %v993 = vrot.slane %v38, %v992
  %995 = vbcast.lane.b32.xlu0 %v993, 256
  %v996 = vpop.permute.xlu0 %995
  %s998 = sor.u32 256, 8
  %999 = vbcast.lane.b32.xlu0 %v993, %s998
  %v1000 = vpop.permute.xlu0 %999
  %v1001 = vlaneseq
  %v1002 = vshrl.u32 %v1001, 7
  %v1003 = vsub.s32 7, %v1002
  %v1004 = vrot.slane %v38, %v1003
  %1006 = vbcast.lane.b32.xlu0 %v1004, 256
  %v1007 = vpop.permute.xlu0 %1006
  %s1009 = sor.u32 256, 8
  %1010 = vbcast.lane.b32.xlu0 %v1004, %s1009
  %v1011 = vpop.permute.xlu0 %1010
  %v1012 = vlaneseq
  %v1013 = vshrl.u32 %v1012, 7
  %v1014 = vsub.s32 0, %v1013
  %v1015 = vrot.slane %v39, %v1014
  %1017 = vbcast.lane.b32.xlu0 %v1015, 256
  %v1018 = vpop.permute.xlu0 %1017
  %s1020 = sor.u32 256, 8
  %1021 = vbcast.lane.b32.xlu0 %v1015, %s1020
  %v1022 = vpop.permute.xlu0 %1021
  %v1023 = vlaneseq
  %v1024 = vshrl.u32 %v1023, 7
  %v1025 = vsub.s32 1, %v1024
  %v1026 = vrot.slane %v39, %v1025
  %1028 = vbcast.lane.b32.xlu0 %v1026, 256
  %v1029 = vpop.permute.xlu0 %1028
  %s1031 = sor.u32 256, 8
  %1032 = vbcast.lane.b32.xlu0 %v1026, %s1031
  %v1033 = vpop.permute.xlu0 %1032
  %v1034 = vlaneseq
  %v1035 = vshrl.u32 %v1034, 7
  %v1036 = vsub.s32 2, %v1035
  %v1037 = vrot.slane %v39, %v1036
  %1039 = vbcast.lane.b32.xlu0 %v1037, 256
  %v1040 = vpop.permute.xlu0 %1039
  %s1042 = sor.u32 256, 8
  %1043 = vbcast.lane.b32.xlu0 %v1037, %s1042
  %v1044 = vpop.permute.xlu0 %1043
  %v1045 = vlaneseq
  %v1046 = vshrl.u32 %v1045, 7
  %v1047 = vsub.s32 3, %v1046
  %v1048 = vrot.slane %v39, %v1047
  %1050 = vbcast.lane.b32.xlu0 %v1048, 256
  %v1051 = vpop.permute.xlu0 %1050
  %s1053 = sor.u32 256, 8
  %1054 = vbcast.lane.b32.xlu0 %v1048, %s1053
  %v1055 = vpop.permute.xlu0 %1054
  %v1056 = vlaneseq
  %v1057 = vshrl.u32 %v1056, 7
  %v1058 = vsub.s32 4, %v1057
  %v1059 = vrot.slane %v39, %v1058
  %1061 = vbcast.lane.b32.xlu0 %v1059, 256
  %v1062 = vpop.permute.xlu0 %1061
  %s1064 = sor.u32 256, 8
  %1065 = vbcast.lane.b32.xlu0 %v1059, %s1064
  %v1066 = vpop.permute.xlu0 %1065
  %v1067 = vlaneseq
  %v1068 = vshrl.u32 %v1067, 7
  %v1069 = vsub.s32 5, %v1068
  %v1070 = vrot.slane %v39, %v1069
  %1072 = vbcast.lane.b32.xlu0 %v1070, 256
  %v1073 = vpop.permute.xlu0 %1072
  %s1075 = sor.u32 256, 8
  %1076 = vbcast.lane.b32.xlu0 %v1070, %s1075
  %v1077 = vpop.permute.xlu0 %1076
  %v1078 = vlaneseq
  %v1079 = vshrl.u32 %v1078, 7
  %v1080 = vsub.s32 6, %v1079
  %v1081 = vrot.slane %v39, %v1080
  %1083 = vbcast.lane.b32.xlu0 %v1081, 256
  %v1084 = vpop.permute.xlu0 %1083
  %s1086 = sor.u32 256, 8
  %1087 = vbcast.lane.b32.xlu0 %v1081, %s1086
  %v1088 = vpop.permute.xlu0 %1087
  %v1089 = vlaneseq
  %v1090 = vshrl.u32 %v1089, 7
  %v1091 = vsub.s32 7, %v1090
  %v1092 = vrot.slane %v39, %v1091
  %1094 = vbcast.lane.b32.xlu0 %v1092, 256
  %v1095 = vpop.permute.xlu0 %1094
  %s1097 = sor.u32 256, 8
  %1098 = vbcast.lane.b32.xlu0 %v1092, %s1097
  %v1099 = vpop.permute.xlu0 %1098
  %v1100 = vlaneseq
  %v1101 = vshrl.u32 %v1100, 7
  %v1102 = vsub.s32 0, %v1101
  %v1103 = vrot.slane %v40, %v1102
  %1105 = vbcast.lane.b32.xlu0 %v1103, 256
  %v1106 = vpop.permute.xlu0 %1105
  %s1108 = sor.u32 256, 8
  %1109 = vbcast.lane.b32.xlu0 %v1103, %s1108
  %v1110 = vpop.permute.xlu0 %1109
  %v1111 = vlaneseq
  %v1112 = vshrl.u32 %v1111, 7
  %v1113 = vsub.s32 1, %v1112
  %v1114 = vrot.slane %v40, %v1113
  %1116 = vbcast.lane.b32.xlu0 %v1114, 256
  %v1117 = vpop.permute.xlu0 %1116
  %s1119 = sor.u32 256, 8
  %1120 = vbcast.lane.b32.xlu0 %v1114, %s1119
  %v1121 = vpop.permute.xlu0 %1120
  %v1122 = vlaneseq
  %v1123 = vshrl.u32 %v1122, 7
  %v1124 = vsub.s32 2, %v1123
  %v1125 = vrot.slane %v40, %v1124
  %1127 = vbcast.lane.b32.xlu0 %v1125, 256
  %v1128 = vpop.permute.xlu0 %1127
  %s1130 = sor.u32 256, 8
  %1131 = vbcast.lane.b32.xlu0 %v1125, %s1130
  %v1132 = vpop.permute.xlu0 %1131
  %v1133 = vlaneseq
  %v1134 = vshrl.u32 %v1133, 7
  %v1135 = vsub.s32 3, %v1134
  %v1136 = vrot.slane %v40, %v1135
  %1138 = vbcast.lane.b32.xlu0 %v1136, 256
  %v1139 = vpop.permute.xlu0 %1138
  %s1141 = sor.u32 256, 8
  %1142 = vbcast.lane.b32.xlu0 %v1136, %s1141
  %v1143 = vpop.permute.xlu0 %1142
  %v1144 = vlaneseq
  %v1145 = vshrl.u32 %v1144, 7
  %v1146 = vsub.s32 4, %v1145
  %v1147 = vrot.slane %v40, %v1146
  %1149 = vbcast.lane.b32.xlu0 %v1147, 256
  %v1150 = vpop.permute.xlu0 %1149
  %s1152 = sor.u32 256, 8
  %1153 = vbcast.lane.b32.xlu0 %v1147, %s1152
  %v1154 = vpop.permute.xlu0 %1153
  %v1155 = vlaneseq
  %v1156 = vshrl.u32 %v1155, 7
  %v1157 = vsub.s32 5, %v1156
  %v1158 = vrot.slane %v40, %v1157
  %1160 = vbcast.lane.b32.xlu0 %v1158, 256
  %v1161 = vpop.permute.xlu0 %1160
  %s1163 = sor.u32 256, 8
  %1164 = vbcast.lane.b32.xlu0 %v1158, %s1163
  %v1165 = vpop.permute.xlu0 %1164
  %v1166 = vlaneseq
  %v1167 = vshrl.u32 %v1166, 7
  %v1168 = vsub.s32 6, %v1167
  %v1169 = vrot.slane %v40, %v1168
  %1171 = vbcast.lane.b32.xlu0 %v1169, 256
  %v1172 = vpop.permute.xlu0 %1171
  %s1174 = sor.u32 256, 8
  %1175 = vbcast.lane.b32.xlu0 %v1169, %s1174
  %v1176 = vpop.permute.xlu0 %1175
  %v1177 = vlaneseq
  %v1178 = vshrl.u32 %v1177, 7
  %v1179 = vsub.s32 7, %v1178
  %v1180 = vrot.slane %v40, %v1179
  %1182 = vbcast.lane.b32.xlu0 %v1180, 256
  %v1183 = vpop.permute.xlu0 %1182
  %s1185 = sor.u32 256, 8
  %1186 = vbcast.lane.b32.xlu0 %v1180, %s1185
  %v1187 = vpop.permute.xlu0 %1186
  %v1188 = vlaneseq
  %v1189 = vshrl.u32 %v1188, 7
  %v1190 = vsub.s32 0, %v1189
  %v1191 = vrot.slane %v41, %v1190
  %1193 = vbcast.lane.b32.xlu0 %v1191, 256
  %v1194 = vpop.permute.xlu0 %1193
  %s1196 = sor.u32 256, 8
  %1197 = vbcast.lane.b32.xlu0 %v1191, %s1196
  %v1198 = vpop.permute.xlu0 %1197
  %v1199 = vlaneseq
  %v1200 = vshrl.u32 %v1199, 7
  %v1201 = vsub.s32 1, %v1200
  %v1202 = vrot.slane %v41, %v1201
  %1204 = vbcast.lane.b32.xlu0 %v1202, 256
  %v1205 = vpop.permute.xlu0 %1204
  %s1207 = sor.u32 256, 8
  %1208 = vbcast.lane.b32.xlu0 %v1202, %s1207
  %v1209 = vpop.permute.xlu0 %1208
  %v1210 = vlaneseq
  %v1211 = vshrl.u32 %v1210, 7
  %v1212 = vsub.s32 2, %v1211
  %v1213 = vrot.slane %v41, %v1212
  %1215 = vbcast.lane.b32.xlu0 %v1213, 256
  %v1216 = vpop.permute.xlu0 %1215
  %s1218 = sor.u32 256, 8
  %1219 = vbcast.lane.b32.xlu0 %v1213, %s1218
  %v1220 = vpop.permute.xlu0 %1219
  %v1221 = vlaneseq
  %v1222 = vshrl.u32 %v1221, 7
  %v1223 = vsub.s32 3, %v1222
  %v1224 = vrot.slane %v41, %v1223
  %1226 = vbcast.lane.b32.xlu0 %v1224, 256
  %v1227 = vpop.permute.xlu0 %1226
  %s1229 = sor.u32 256, 8
  %1230 = vbcast.lane.b32.xlu0 %v1224, %s1229
  %v1231 = vpop.permute.xlu0 %1230
  %v1232 = vlaneseq
  %v1233 = vshrl.u32 %v1232, 7
  %v1234 = vsub.s32 4, %v1233
  %v1235 = vrot.slane %v41, %v1234
  %1237 = vbcast.lane.b32.xlu0 %v1235, 256
  %v1238 = vpop.permute.xlu0 %1237
  %s1240 = sor.u32 256, 8
  %1241 = vbcast.lane.b32.xlu0 %v1235, %s1240
  %v1242 = vpop.permute.xlu0 %1241
  %v1243 = vlaneseq
  %v1244 = vshrl.u32 %v1243, 7
  %v1245 = vsub.s32 5, %v1244
  %v1246 = vrot.slane %v41, %v1245
  %1248 = vbcast.lane.b32.xlu0 %v1246, 256
  %v1249 = vpop.permute.xlu0 %1248
  %s1251 = sor.u32 256, 8
  %1252 = vbcast.lane.b32.xlu0 %v1246, %s1251
  %v1253 = vpop.permute.xlu0 %1252
  %v1254 = vlaneseq
  %v1255 = vshrl.u32 %v1254, 7
  %v1256 = vsub.s32 6, %v1255
  %v1257 = vrot.slane %v41, %v1256
  %1259 = vbcast.lane.b32.xlu0 %v1257, 256
  %v1260 = vpop.permute.xlu0 %1259
  %s1262 = sor.u32 256, 8
  %1263 = vbcast.lane.b32.xlu0 %v1257, %s1262
  %v1264 = vpop.permute.xlu0 %1263
  %v1265 = vlaneseq
  %v1266 = vshrl.u32 %v1265, 7
  %v1267 = vsub.s32 7, %v1266
  %v1268 = vrot.slane %v41, %v1267
  %1270 = vbcast.lane.b32.xlu0 %v1268, 256
  %v1271 = vpop.permute.xlu0 %1270
  %s1273 = sor.u32 256, 8
  %1274 = vbcast.lane.b32.xlu0 %v1268, %s1273
  %v1275 = vpop.permute.xlu0 %1274
  %v1276 = vlaneseq
  %v1277 = vshrl.u32 %v1276, 7
  %v1278 = vsub.s32 0, %v1277
  %v1279 = vrot.slane %v42, %v1278
  %1281 = vbcast.lane.b32.xlu0 %v1279, 256
  %v1282 = vpop.permute.xlu0 %1281
  %s1284 = sor.u32 256, 8
  %1285 = vbcast.lane.b32.xlu0 %v1279, %s1284
  %v1286 = vpop.permute.xlu0 %1285
  %v1287 = vlaneseq
  %v1288 = vshrl.u32 %v1287, 7
  %v1289 = vsub.s32 1, %v1288
  %v1290 = vrot.slane %v42, %v1289
  %1292 = vbcast.lane.b32.xlu0 %v1290, 256
  %v1293 = vpop.permute.xlu0 %1292
  %s1295 = sor.u32 256, 8
  %1296 = vbcast.lane.b32.xlu0 %v1290, %s1295
  %v1297 = vpop.permute.xlu0 %1296
  %v1298 = vlaneseq
  %v1299 = vshrl.u32 %v1298, 7
  %v1300 = vsub.s32 2, %v1299
  %v1301 = vrot.slane %v42, %v1300
  %1303 = vbcast.lane.b32.xlu0 %v1301, 256
  %v1304 = vpop.permute.xlu0 %1303
  %s1306 = sor.u32 256, 8
  %1307 = vbcast.lane.b32.xlu0 %v1301, %s1306
  %v1308 = vpop.permute.xlu0 %1307
  %v1309 = vlaneseq
  %v1310 = vshrl.u32 %v1309, 7
  %v1311 = vsub.s32 3, %v1310
  %v1312 = vrot.slane %v42, %v1311
  %1314 = vbcast.lane.b32.xlu0 %v1312, 256
  %v1315 = vpop.permute.xlu0 %1314
  %s1317 = sor.u32 256, 8
  %1318 = vbcast.lane.b32.xlu0 %v1312, %s1317
  %v1319 = vpop.permute.xlu0 %1318
  %v1320 = vlaneseq
  %v1321 = vshrl.u32 %v1320, 7
  %v1322 = vsub.s32 4, %v1321
  %v1323 = vrot.slane %v42, %v1322
  %1325 = vbcast.lane.b32.xlu0 %v1323, 256
  %v1326 = vpop.permute.xlu0 %1325
  %s1328 = sor.u32 256, 8
  %1329 = vbcast.lane.b32.xlu0 %v1323, %s1328
  %v1330 = vpop.permute.xlu0 %1329
  %v1331 = vlaneseq
  %v1332 = vshrl.u32 %v1331, 7
  %v1333 = vsub.s32 5, %v1332
  %v1334 = vrot.slane %v42, %v1333
  %1336 = vbcast.lane.b32.xlu0 %v1334, 256
  %v1337 = vpop.permute.xlu0 %1336
  %s1339 = sor.u32 256, 8
  %1340 = vbcast.lane.b32.xlu0 %v1334, %s1339
  %v1341 = vpop.permute.xlu0 %1340
  %v1342 = vlaneseq
  %v1343 = vshrl.u32 %v1342, 7
  %v1344 = vsub.s32 6, %v1343
  %v1345 = vrot.slane %v42, %v1344
  %1347 = vbcast.lane.b32.xlu0 %v1345, 256
  %v1348 = vpop.permute.xlu0 %1347
  %s1350 = sor.u32 256, 8
  %1351 = vbcast.lane.b32.xlu0 %v1345, %s1350
  %v1352 = vpop.permute.xlu0 %1351
  %v1353 = vlaneseq
  %v1354 = vshrl.u32 %v1353, 7
  %v1355 = vsub.s32 7, %v1354
  %v1356 = vrot.slane %v42, %v1355
  %1358 = vbcast.lane.b32.xlu0 %v1356, 256
  %v1359 = vpop.permute.xlu0 %1358
  %s1361 = sor.u32 256, 8
  %1362 = vbcast.lane.b32.xlu0 %v1356, %s1361
  %v1363 = vpop.permute.xlu0 %1362
  %v1364 = vlaneseq
  %v1365 = vshrl.u32 %v1364, 7
  %v1366 = vsub.s32 0, %v1365
  %v1367 = vrot.slane %v43, %v1366
  %1369 = vbcast.lane.b32.xlu0 %v1367, 256
  %v1370 = vpop.permute.xlu0 %1369
  %s1372 = sor.u32 256, 8
  %1373 = vbcast.lane.b32.xlu0 %v1367, %s1372
  %v1374 = vpop.permute.xlu0 %1373
  %v1375 = vlaneseq
  %v1376 = vshrl.u32 %v1375, 7
  %v1377 = vsub.s32 1, %v1376
  %v1378 = vrot.slane %v43, %v1377
  %1380 = vbcast.lane.b32.xlu0 %v1378, 256
  %v1381 = vpop.permute.xlu0 %1380
  %s1383 = sor.u32 256, 8
  %1384 = vbcast.lane.b32.xlu0 %v1378, %s1383
  %v1385 = vpop.permute.xlu0 %1384
  %v1386 = vlaneseq
  %v1387 = vshrl.u32 %v1386, 7
  %v1388 = vsub.s32 2, %v1387
  %v1389 = vrot.slane %v43, %v1388
  %1391 = vbcast.lane.b32.xlu0 %v1389, 256
  %v1392 = vpop.permute.xlu0 %1391
  %s1394 = sor.u32 256, 8
  %1395 = vbcast.lane.b32.xlu0 %v1389, %s1394
  %v1396 = vpop.permute.xlu0 %1395
  %v1397 = vlaneseq
  %v1398 = vshrl.u32 %v1397, 7
  %v1399 = vsub.s32 3, %v1398
  %v1400 = vrot.slane %v43, %v1399
  %1402 = vbcast.lane.b32.xlu0 %v1400, 256
  %v1403 = vpop.permute.xlu0 %1402
  %s1405 = sor.u32 256, 8
  %1406 = vbcast.lane.b32.xlu0 %v1400, %s1405
  %v1407 = vpop.permute.xlu0 %1406
  %v1408 = vlaneseq
  %v1409 = vshrl.u32 %v1408, 7
  %v1410 = vsub.s32 4, %v1409
  %v1411 = vrot.slane %v43, %v1410
  %1413 = vbcast.lane.b32.xlu0 %v1411, 256
  %v1414 = vpop.permute.xlu0 %1413
  %s1416 = sor.u32 256, 8
  %1417 = vbcast.lane.b32.xlu0 %v1411, %s1416
  %v1418 = vpop.permute.xlu0 %1417
  %v1419 = vlaneseq
  %v1420 = vshrl.u32 %v1419, 7
  %v1421 = vsub.s32 5, %v1420
  %v1422 = vrot.slane %v43, %v1421
  %1424 = vbcast.lane.b32.xlu0 %v1422, 256
  %v1425 = vpop.permute.xlu0 %1424
  %s1427 = sor.u32 256, 8
  %1428 = vbcast.lane.b32.xlu0 %v1422, %s1427
  %v1429 = vpop.permute.xlu0 %1428
  %v1430 = vlaneseq
  %v1431 = vshrl.u32 %v1430, 7
  %v1432 = vsub.s32 6, %v1431
  %v1433 = vrot.slane %v43, %v1432
  %1435 = vbcast.lane.b32.xlu0 %v1433, 256
  %v1436 = vpop.permute.xlu0 %1435
  %s1438 = sor.u32 256, 8
  %1439 = vbcast.lane.b32.xlu0 %v1433, %s1438
  %v1440 = vpop.permute.xlu0 %1439
  %v1441 = vlaneseq
  %v1442 = vshrl.u32 %v1441, 7
  %v1443 = vsub.s32 7, %v1442
  %v1444 = vrot.slane %v43, %v1443
  %1446 = vbcast.lane.b32.xlu0 %v1444, 256
  %v1447 = vpop.permute.xlu0 %1446
  %s1449 = sor.u32 256, 8
  %1450 = vbcast.lane.b32.xlu0 %v1444, %s1449
  %v1451 = vpop.permute.xlu0 %1450
  %vm1452 = vcmp.eq.s32.totalorder %v50, %v27
  %vm1453 = vcmp.eq.s32.totalorder %v54, %v27
  %vm1454 = vcmp.eq.s32.totalorder %v61, %v27
  %vm1455 = vcmp.eq.s32.totalorder %v65, %v27
  %vm1456 = vcmp.eq.s32.totalorder %v72, %v27
  %vm1457 = vcmp.eq.s32.totalorder %v76, %v27
  %vm1458 = vcmp.eq.s32.totalorder %v83, %v27
  %vm1459 = vcmp.eq.s32.totalorder %v87, %v27
  %vm1460 = vcmp.eq.s32.totalorder %v94, %v27
  %vm1461 = vcmp.eq.s32.totalorder %v98, %v27
  %vm1462 = vcmp.eq.s32.totalorder %v105, %v27
  %vm1463 = vcmp.eq.s32.totalorder %v109, %v27
  %vm1464 = vcmp.eq.s32.totalorder %v116, %v27
  %vm1465 = vcmp.eq.s32.totalorder %v120, %v27
  %vm1466 = vcmp.eq.s32.totalorder %v127, %v27
  %vm1467 = vcmp.eq.s32.totalorder %v131, %v27
  %vm1468 = vcmp.eq.s32.totalorder %v138, %v27
  %vm1469 = vcmp.eq.s32.totalorder %v142, %v27
  %vm1470 = vcmp.eq.s32.totalorder %v149, %v27
  %vm1471 = vcmp.eq.s32.totalorder %v153, %v27
  %vm1472 = vcmp.eq.s32.totalorder %v160, %v27
  %vm1473 = vcmp.eq.s32.totalorder %v164, %v27
  %vm1474 = vcmp.eq.s32.totalorder %v171, %v27
  %vm1475 = vcmp.eq.s32.totalorder %v175, %v27
  %vm1476 = vcmp.eq.s32.totalorder %v182, %v27
  %vm1477 = vcmp.eq.s32.totalorder %v186, %v27
  %vm1478 = vcmp.eq.s32.totalorder %v193, %v27
  %vm1479 = vcmp.eq.s32.totalorder %v197, %v27
  %vm1480 = vcmp.eq.s32.totalorder %v204, %v27
  %vm1481 = vcmp.eq.s32.totalorder %v208, %v27
  %vm1482 = vcmp.eq.s32.totalorder %v215, %v27
  %vm1483 = vcmp.eq.s32.totalorder %v219, %v27
  %vm1484 = vcmp.eq.s32.totalorder %v226, %v27
  %vm1485 = vcmp.eq.s32.totalorder %v230, %v27
  %vm1486 = vcmp.eq.s32.totalorder %v237, %v27
  %vm1487 = vcmp.eq.s32.totalorder %v241, %v27
  %vm1488 = vcmp.eq.s32.totalorder %v248, %v27
  %vm1489 = vcmp.eq.s32.totalorder %v252, %v27
  %vm1490 = vcmp.eq.s32.totalorder %v259, %v27
  %vm1491 = vcmp.eq.s32.totalorder %v263, %v27
  %vm1492 = vcmp.eq.s32.totalorder %v270, %v27
  %vm1493 = vcmp.eq.s32.totalorder %v274, %v27
  %vm1494 = vcmp.eq.s32.totalorder %v281, %v27
  %vm1495 = vcmp.eq.s32.totalorder %v285, %v27
  %vm1496 = vcmp.eq.s32.totalorder %v292, %v27
  %vm1497 = vcmp.eq.s32.totalorder %v296, %v27
  %vm1498 = vcmp.eq.s32.totalorder %v303, %v27
  %vm1499 = vcmp.eq.s32.totalorder %v307, %v27
  %vm1500 = vcmp.eq.s32.totalorder %v314, %v27
  %vm1501 = vcmp.eq.s32.totalorder %v318, %v27
  %vm1502 = vcmp.eq.s32.totalorder %v325, %v27
  %vm1503 = vcmp.eq.s32.totalorder %v329, %v27
  %vm1504 = vcmp.eq.s32.totalorder %v336, %v27
  %vm1505 = vcmp.eq.s32.totalorder %v340, %v27
  %vm1506 = vcmp.eq.s32.totalorder %v347, %v27
  %vm1507 = vcmp.eq.s32.totalorder %v351, %v27
  %vm1508 = vcmp.eq.s32.totalorder %v358, %v27
  %vm1509 = vcmp.eq.s32.totalorder %v362, %v27
  %vm1510 = vcmp.eq.s32.totalorder %v369, %v27
  %vm1511 = vcmp.eq.s32.totalorder %v373, %v27
  %vm1512 = vcmp.eq.s32.totalorder %v380, %v27
  %vm1513 = vcmp.eq.s32.totalorder %v384, %v27
  %vm1514 = vcmp.eq.s32.totalorder %v391, %v27
  %vm1515 = vcmp.eq.s32.totalorder %v395, %v27
  %vm1516 = vcmp.eq.s32.totalorder %v402, %v27
  %vm1517 = vcmp.eq.s32.totalorder %v406, %v27
  %vm1518 = vcmp.eq.s32.totalorder %v413, %v27
  %vm1519 = vcmp.eq.s32.totalorder %v417, %v27
  %vm1520 = vcmp.eq.s32.totalorder %v424, %v27
  %vm1521 = vcmp.eq.s32.totalorder %v428, %v27
  %vm1522 = vcmp.eq.s32.totalorder %v435, %v27
  %vm1523 = vcmp.eq.s32.totalorder %v439, %v27
  %vm1524 = vcmp.eq.s32.totalorder %v446, %v27
  %vm1525 = vcmp.eq.s32.totalorder %v450, %v27
  %vm1526 = vcmp.eq.s32.totalorder %v457, %v27
  %vm1527 = vcmp.eq.s32.totalorder %v461, %v27
  %vm1528 = vcmp.eq.s32.totalorder %v468, %v27
  %vm1529 = vcmp.eq.s32.totalorder %v472, %v27
  %vm1530 = vcmp.eq.s32.totalorder %v479, %v27
  %vm1531 = vcmp.eq.s32.totalorder %v483, %v27
  %vm1532 = vcmp.eq.s32.totalorder %v490, %v27
  %vm1533 = vcmp.eq.s32.totalorder %v494, %v27
  %vm1534 = vcmp.eq.s32.totalorder %v501, %v27
  %vm1535 = vcmp.eq.s32.totalorder %v505, %v27
  %vm1536 = vcmp.eq.s32.totalorder %v512, %v27
  %vm1537 = vcmp.eq.s32.totalorder %v516, %v27
  %vm1538 = vcmp.eq.s32.totalorder %v523, %v27
  %vm1539 = vcmp.eq.s32.totalorder %v527, %v27
  %vm1540 = vcmp.eq.s32.totalorder %v534, %v27
  %vm1541 = vcmp.eq.s32.totalorder %v538, %v27
  %vm1542 = vcmp.eq.s32.totalorder %v545, %v27
  %vm1543 = vcmp.eq.s32.totalorder %v549, %v27
  %vm1544 = vcmp.eq.s32.totalorder %v556, %v27
  %vm1545 = vcmp.eq.s32.totalorder %v560, %v27
  %vm1546 = vcmp.eq.s32.totalorder %v567, %v27
  %vm1547 = vcmp.eq.s32.totalorder %v571, %v27
  %vm1548 = vcmp.eq.s32.totalorder %v578, %v27
  %vm1549 = vcmp.eq.s32.totalorder %v582, %v27
  %vm1550 = vcmp.eq.s32.totalorder %v589, %v27
  %vm1551 = vcmp.eq.s32.totalorder %v593, %v27
  %vm1552 = vcmp.eq.s32.totalorder %v600, %v27
  %vm1553 = vcmp.eq.s32.totalorder %v604, %v27
  %vm1554 = vcmp.eq.s32.totalorder %v611, %v27
  %vm1555 = vcmp.eq.s32.totalorder %v615, %v27
  %vm1556 = vcmp.eq.s32.totalorder %v622, %v27
  %vm1557 = vcmp.eq.s32.totalorder %v626, %v27
  %vm1558 = vcmp.eq.s32.totalorder %v633, %v27
  %vm1559 = vcmp.eq.s32.totalorder %v637, %v27
  %vm1560 = vcmp.eq.s32.totalorder %v644, %v27
  %vm1561 = vcmp.eq.s32.totalorder %v648, %v27
  %vm1562 = vcmp.eq.s32.totalorder %v655, %v27
  %vm1563 = vcmp.eq.s32.totalorder %v659, %v27
  %vm1564 = vcmp.eq.s32.totalorder %v666, %v27
  %vm1565 = vcmp.eq.s32.totalorder %v670, %v27
  %vm1566 = vcmp.eq.s32.totalorder %v677, %v27
  %vm1567 = vcmp.eq.s32.totalorder %v681, %v27
  %vm1568 = vcmp.eq.s32.totalorder %v688, %v27
  %vm1569 = vcmp.eq.s32.totalorder %v692, %v27
  %vm1570 = vcmp.eq.s32.totalorder %v699, %v27
  %vm1571 = vcmp.eq.s32.totalorder %v703, %v27
  %vm1572 = vcmp.eq.s32.totalorder %v710, %v27
  %vm1573 = vcmp.eq.s32.totalorder %v714, %v27
  %vm1574 = vcmp.eq.s32.totalorder %v721, %v27
  %vm1575 = vcmp.eq.s32.totalorder %v725, %v27
  %vm1576 = vcmp.eq.s32.totalorder %v732, %v27
  %vm1577 = vcmp.eq.s32.totalorder %v736, %v27
  %vm1578 = vcmp.eq.s32.totalorder %v743, %v27
  %vm1579 = vcmp.eq.s32.totalorder %v747, %v27
  %vm1580 = vcmp.eq.s32.totalorder %v754, %v27
  %vm1581 = vcmp.eq.s32.totalorder %v758, %v27
  %vm1582 = vcmp.eq.s32.totalorder %v765, %v27
  %vm1583 = vcmp.eq.s32.totalorder %v769, %v27
  %vm1584 = vcmp.eq.s32.totalorder %v776, %v27
  %vm1585 = vcmp.eq.s32.totalorder %v780, %v27
  %vm1586 = vcmp.eq.s32.totalorder %v787, %v27
  %vm1587 = vcmp.eq.s32.totalorder %v791, %v27
  %vm1588 = vcmp.eq.s32.totalorder %v798, %v27
  %vm1589 = vcmp.eq.s32.totalorder %v802, %v27
  %vm1590 = vcmp.eq.s32.totalorder %v809, %v27
  %vm1591 = vcmp.eq.s32.totalorder %v813, %v27
  %vm1592 = vcmp.eq.s32.totalorder %v820, %v27
  %vm1593 = vcmp.eq.s32.totalorder %v824, %v27
  %vm1594 = vcmp.eq.s32.totalorder %v831, %v27
  %vm1595 = vcmp.eq.s32.totalorder %v835, %v27
  %vm1596 = vcmp.eq.s32.totalorder %v842, %v27
  %vm1597 = vcmp.eq.s32.totalorder %v846, %v27
  %vm1598 = vcmp.eq.s32.totalorder %v853, %v27
  %vm1599 = vcmp.eq.s32.totalorder %v857, %v27
  %vm1600 = vcmp.eq.s32.totalorder %v864, %v27
  %vm1601 = vcmp.eq.s32.totalorder %v868, %v27
  %vm1602 = vcmp.eq.s32.totalorder %v875, %v27
  %vm1603 = vcmp.eq.s32.totalorder %v879, %v27
  %vm1604 = vcmp.eq.s32.totalorder %v886, %v27
  %vm1605 = vcmp.eq.s32.totalorder %v890, %v27
  %vm1606 = vcmp.eq.s32.totalorder %v897, %v27
  %vm1607 = vcmp.eq.s32.totalorder %v901, %v27
  %vm1608 = vcmp.eq.s32.totalorder %v908, %v27
  %vm1609 = vcmp.eq.s32.totalorder %v912, %v27
  %vm1610 = vcmp.eq.s32.totalorder %v919, %v27
  %vm1611 = vcmp.eq.s32.totalorder %v923, %v27
  %vm1612 = vcmp.eq.s32.totalorder %v930, %v27
  %vm1613 = vcmp.eq.s32.totalorder %v934, %v27
  %vm1614 = vcmp.eq.s32.totalorder %v941, %v27
  %vm1615 = vcmp.eq.s32.totalorder %v945, %v27
  %vm1616 = vcmp.eq.s32.totalorder %v952, %v27
  %vm1617 = vcmp.eq.s32.totalorder %v956, %v27
  %vm1618 = vcmp.eq.s32.totalorder %v963, %v27
  %vm1619 = vcmp.eq.s32.totalorder %v967, %v27
  %vm1620 = vcmp.eq.s32.totalorder %v974, %v27
  %vm1621 = vcmp.eq.s32.totalorder %v978, %v27
  %vm1622 = vcmp.eq.s32.totalorder %v985, %v27
  %vm1623 = vcmp.eq.s32.totalorder %v989, %v27
  %vm1624 = vcmp.eq.s32.totalorder %v996, %v27
  %vm1625 = vcmp.eq.s32.totalorder %v1000, %v27
  %vm1626 = vcmp.eq.s32.totalorder %v1007, %v27
  %vm1627 = vcmp.eq.s32.totalorder %v1011, %v27
  %vm1628 = vcmp.eq.s32.totalorder %v1018, %v27
  %vm1629 = vcmp.eq.s32.totalorder %v1022, %v27
  %vm1630 = vcmp.eq.s32.totalorder %v1029, %v27
  %vm1631 = vcmp.eq.s32.totalorder %v1033, %v27
  %vm1632 = vcmp.eq.s32.totalorder %v1040, %v27
  %vm1633 = vcmp.eq.s32.totalorder %v1044, %v27
  %vm1634 = vcmp.eq.s32.totalorder %v1051, %v27
  %vm1635 = vcmp.eq.s32.totalorder %v1055, %v27
  %vm1636 = vcmp.eq.s32.totalorder %v1062, %v27
  %vm1637 = vcmp.eq.s32.totalorder %v1066, %v27
  %vm1638 = vcmp.eq.s32.totalorder %v1073, %v27
  %vm1639 = vcmp.eq.s32.totalorder %v1077, %v27
  %vm1640 = vcmp.eq.s32.totalorder %v1084, %v27
  %vm1641 = vcmp.eq.s32.totalorder %v1088, %v27
  %vm1642 = vcmp.eq.s32.totalorder %v1095, %v27
  %vm1643 = vcmp.eq.s32.totalorder %v1099, %v27
  %vm1644 = vcmp.eq.s32.totalorder %v1106, %v27
  %vm1645 = vcmp.eq.s32.totalorder %v1110, %v27
  %vm1646 = vcmp.eq.s32.totalorder %v1117, %v27
  %vm1647 = vcmp.eq.s32.totalorder %v1121, %v27
  %vm1648 = vcmp.eq.s32.totalorder %v1128, %v27
  %vm1649 = vcmp.eq.s32.totalorder %v1132, %v27
  %vm1650 = vcmp.eq.s32.totalorder %v1139, %v27
  %vm1651 = vcmp.eq.s32.totalorder %v1143, %v27
  %vm1652 = vcmp.eq.s32.totalorder %v1150, %v27
  %vm1653 = vcmp.eq.s32.totalorder %v1154, %v27
  %vm1654 = vcmp.eq.s32.totalorder %v1161, %v27
  %vm1655 = vcmp.eq.s32.totalorder %v1165, %v27
  %vm1656 = vcmp.eq.s32.totalorder %v1172, %v27
  %vm1657 = vcmp.eq.s32.totalorder %v1176, %v27
  %vm1658 = vcmp.eq.s32.totalorder %v1183, %v27
  %vm1659 = vcmp.eq.s32.totalorder %v1187, %v27
  %vm1660 = vcmp.eq.s32.totalorder %v1194, %v27
  %vm1661 = vcmp.eq.s32.totalorder %v1198, %v27
  %vm1662 = vcmp.eq.s32.totalorder %v1205, %v27
  %vm1663 = vcmp.eq.s32.totalorder %v1209, %v27
  %vm1664 = vcmp.eq.s32.totalorder %v1216, %v27
  %vm1665 = vcmp.eq.s32.totalorder %v1220, %v27
  %vm1666 = vcmp.eq.s32.totalorder %v1227, %v27
  %vm1667 = vcmp.eq.s32.totalorder %v1231, %v27
  %vm1668 = vcmp.eq.s32.totalorder %v1238, %v27
  %vm1669 = vcmp.eq.s32.totalorder %v1242, %v27
  %vm1670 = vcmp.eq.s32.totalorder %v1249, %v27
  %vm1671 = vcmp.eq.s32.totalorder %v1253, %v27
  %vm1672 = vcmp.eq.s32.totalorder %v1260, %v27
  %vm1673 = vcmp.eq.s32.totalorder %v1264, %v27
  %vm1674 = vcmp.eq.s32.totalorder %v1271, %v27
  %vm1675 = vcmp.eq.s32.totalorder %v1275, %v27
  %vm1676 = vcmp.eq.s32.totalorder %v1282, %v27
  %vm1677 = vcmp.eq.s32.totalorder %v1286, %v27
  %vm1678 = vcmp.eq.s32.totalorder %v1293, %v27
  %vm1679 = vcmp.eq.s32.totalorder %v1297, %v27
  %vm1680 = vcmp.eq.s32.totalorder %v1304, %v27
  %vm1681 = vcmp.eq.s32.totalorder %v1308, %v27
  %vm1682 = vcmp.eq.s32.totalorder %v1315, %v27
  %vm1683 = vcmp.eq.s32.totalorder %v1319, %v27
  %vm1684 = vcmp.eq.s32.totalorder %v1326, %v27
  %vm1685 = vcmp.eq.s32.totalorder %v1330, %v27
  %vm1686 = vcmp.eq.s32.totalorder %v1337, %v27
  %vm1687 = vcmp.eq.s32.totalorder %v1341, %v27
  %vm1688 = vcmp.eq.s32.totalorder %v1348, %v27
  %vm1689 = vcmp.eq.s32.totalorder %v1352, %v27
  %vm1690 = vcmp.eq.s32.totalorder %v1359, %v27
  %vm1691 = vcmp.eq.s32.totalorder %v1363, %v27
  %vm1692 = vcmp.eq.s32.totalorder %v1370, %v27
  %vm1693 = vcmp.eq.s32.totalorder %v1374, %v27
  %vm1694 = vcmp.eq.s32.totalorder %v1381, %v27
  %vm1695 = vcmp.eq.s32.totalorder %v1385, %v27
  %vm1696 = vcmp.eq.s32.totalorder %v1392, %v27
  %vm1697 = vcmp.eq.s32.totalorder %v1396, %v27
  %vm1698 = vcmp.eq.s32.totalorder %v1403, %v27
  %vm1699 = vcmp.eq.s32.totalorder %v1407, %v27
  %vm1700 = vcmp.eq.s32.totalorder %v1414, %v27
  %vm1701 = vcmp.eq.s32.totalorder %v1418, %v27
  %vm1702 = vcmp.eq.s32.totalorder %v1425, %v27
  %vm1703 = vcmp.eq.s32.totalorder %v1429, %v27
  %vm1704 = vcmp.eq.s32.totalorder %v1436, %v27
  %vm1705 = vcmp.eq.s32.totalorder %v1440, %v27
  %vm1706 = vcmp.eq.s32.totalorder %v1447, %v27
  %vm1707 = vcmp.eq.s32.totalorder %v1451, %v27
  %s1708 = scalar_lea.vmem %s0, 128
  %v1709 = vld [vmem:[%s1708] sm:$0xff]
  %v1710 = vld [vmem:[%s1708 + $0x8] sm:$0xff]
  %v1711 = vld [vmem:[%s1708 + $0x10] sm:$0xff]
  %v1712 = vld [vmem:[%s1708 + $0x18] sm:$0xff]
  %v1713 = vld [vmem:[%s1708 + $0x20] sm:$0xff]
  %v1714 = vld [vmem:[%s1708 + $0x28] sm:$0xff]
  %v1715 = vld [vmem:[%s1708 + $0x30] sm:$0xff]
  %v1716 = vld [vmem:[%s1708 + $0x38] sm:$0xff]
  %v1717 = vld [vmem:[%s1708 + $0x40] sm:$0xff]
  %v1718 = vld [vmem:[%s1708 + $0x48] sm:$0xff]
  %v1719 = vld [vmem:[%s1708 + $0x50] sm:$0xff]
  %v1720 = vld [vmem:[%s1708 + $0x58] sm:$0xff]
  %v1721 = vld [vmem:[%s1708 + $0x60] sm:$0xff]
  %v1722 = vld [vmem:[%s1708 + $0x68] sm:$0xff]
  %v1723 = vld [vmem:[%s1708 + $0x70] sm:$0xff]
  %v1724 = vld [vmem:[%s1708 + $0x78] sm:$0xff]
  %v1725 = vlaneseq
  %v1726 = vshrl.u32 %v1725, 7
  %v1727 = vsub.s32 0, %v1726
  %v1728 = vrot.slane %v1709, %v1727
  %1730 = vbcast.lane.b32.xlu0 %v1728, 256
  %v1731 = vpop.permute.xlu0 %1730
  %s1733 = sor.u32 256, 8
  %1734 = vbcast.lane.b32.xlu0 %v1728, %s1733
  %v1735 = vpop.permute.xlu0 %1734
  %v1736 = vlaneseq
  %v1737 = vshrl.u32 %v1736, 7
  %v1738 = vsub.s32 1, %v1737
  %v1739 = vrot.slane %v1709, %v1738
  %1741 = vbcast.lane.b32.xlu0 %v1739, 256
  %v1742 = vpop.permute.xlu0 %1741
  %s1744 = sor.u32 256, 8
  %1745 = vbcast.lane.b32.xlu0 %v1739, %s1744
  %v1746 = vpop.permute.xlu0 %1745
  %v1747 = vlaneseq
  %v1748 = vshrl.u32 %v1747, 7
  %v1749 = vsub.s32 2, %v1748
  %v1750 = vrot.slane %v1709, %v1749
  %1752 = vbcast.lane.b32.xlu0 %v1750, 256
  %v1753 = vpop.permute.xlu0 %1752
  %s1755 = sor.u32 256, 8
  %1756 = vbcast.lane.b32.xlu0 %v1750, %s1755
  %v1757 = vpop.permute.xlu0 %1756
  %v1758 = vlaneseq
  %v1759 = vshrl.u32 %v1758, 7
  %v1760 = vsub.s32 3, %v1759
  %v1761 = vrot.slane %v1709, %v1760
  %1763 = vbcast.lane.b32.xlu0 %v1761, 256
  %v1764 = vpop.permute.xlu0 %1763
  %s1766 = sor.u32 256, 8
  %1767 = vbcast.lane.b32.xlu0 %v1761, %s1766
  %v1768 = vpop.permute.xlu0 %1767
  %v1769 = vlaneseq
  %v1770 = vshrl.u32 %v1769, 7
  %v1771 = vsub.s32 4, %v1770
  %v1772 = vrot.slane %v1709, %v1771
  %1774 = vbcast.lane.b32.xlu0 %v1772, 256
  %v1775 = vpop.permute.xlu0 %1774
  %s1777 = sor.u32 256, 8
  %1778 = vbcast.lane.b32.xlu0 %v1772, %s1777
  %v1779 = vpop.permute.xlu0 %1778
  %v1780 = vlaneseq
  %v1781 = vshrl.u32 %v1780, 7
  %v1782 = vsub.s32 5, %v1781
  %v1783 = vrot.slane %v1709, %v1782
  %1785 = vbcast.lane.b32.xlu0 %v1783, 256
  %v1786 = vpop.permute.xlu0 %1785
  %s1788 = sor.u32 256, 8
  %1789 = vbcast.lane.b32.xlu0 %v1783, %s1788
  %v1790 = vpop.permute.xlu0 %1789
  %v1791 = vlaneseq
  %v1792 = vshrl.u32 %v1791, 7
  %v1793 = vsub.s32 6, %v1792
  %v1794 = vrot.slane %v1709, %v1793
  %1796 = vbcast.lane.b32.xlu0 %v1794, 256
  %v1797 = vpop.permute.xlu0 %1796
  %s1799 = sor.u32 256, 8
  %1800 = vbcast.lane.b32.xlu0 %v1794, %s1799
  %v1801 = vpop.permute.xlu0 %1800
  %v1802 = vlaneseq
  %v1803 = vshrl.u32 %v1802, 7
  %v1804 = vsub.s32 7, %v1803
  %v1805 = vrot.slane %v1709, %v1804
  %1807 = vbcast.lane.b32.xlu0 %v1805, 256
  %v1808 = vpop.permute.xlu0 %1807
  %s1810 = sor.u32 256, 8
  %1811 = vbcast.lane.b32.xlu0 %v1805, %s1810
  %v1812 = vpop.permute.xlu0 %1811
  %v1813 = vlaneseq
  %v1814 = vshrl.u32 %v1813, 7
  %v1815 = vsub.s32 0, %v1814
  %v1816 = vrot.slane %v1710, %v1815
  %1818 = vbcast.lane.b32.xlu0 %v1816, 256
  %v1819 = vpop.permute.xlu0 %1818
  %s1821 = sor.u32 256, 8
  %1822 = vbcast.lane.b32.xlu0 %v1816, %s1821
  %v1823 = vpop.permute.xlu0 %1822
  %v1824 = vlaneseq
  %v1825 = vshrl.u32 %v1824, 7
  %v1826 = vsub.s32 1, %v1825
  %v1827 = vrot.slane %v1710, %v1826
  %1829 = vbcast.lane.b32.xlu0 %v1827, 256
  %v1830 = vpop.permute.xlu0 %1829
  %s1832 = sor.u32 256, 8
  %1833 = vbcast.lane.b32.xlu0 %v1827, %s1832
  %v1834 = vpop.permute.xlu0 %1833
  %v1835 = vlaneseq
  %v1836 = vshrl.u32 %v1835, 7
  %v1837 = vsub.s32 2, %v1836
  %v1838 = vrot.slane %v1710, %v1837
  %1840 = vbcast.lane.b32.xlu0 %v1838, 256
  %v1841 = vpop.permute.xlu0 %1840
  %s1843 = sor.u32 256, 8
  %1844 = vbcast.lane.b32.xlu0 %v1838, %s1843
  %v1845 = vpop.permute.xlu0 %1844
  %v1846 = vlaneseq
  %v1847 = vshrl.u32 %v1846, 7
  %v1848 = vsub.s32 3, %v1847
  %v1849 = vrot.slane %v1710, %v1848
  %1851 = vbcast.lane.b32.xlu0 %v1849, 256
  %v1852 = vpop.permute.xlu0 %1851
  %s1854 = sor.u32 256, 8
  %1855 = vbcast.lane.b32.xlu0 %v1849, %s1854
  %v1856 = vpop.permute.xlu0 %1855
  %v1857 = vlaneseq
  %v1858 = vshrl.u32 %v1857, 7
  %v1859 = vsub.s32 4, %v1858
  %v1860 = vrot.slane %v1710, %v1859
  %1862 = vbcast.lane.b32.xlu0 %v1860, 256
  %v1863 = vpop.permute.xlu0 %1862
  %s1865 = sor.u32 256, 8
  %1866 = vbcast.lane.b32.xlu0 %v1860, %s1865
  %v1867 = vpop.permute.xlu0 %1866
  %v1868 = vlaneseq
  %v1869 = vshrl.u32 %v1868, 7
  %v1870 = vsub.s32 5, %v1869
  %v1871 = vrot.slane %v1710, %v1870
  %1873 = vbcast.lane.b32.xlu0 %v1871, 256
  %v1874 = vpop.permute.xlu0 %1873
  %s1876 = sor.u32 256, 8
  %1877 = vbcast.lane.b32.xlu0 %v1871, %s1876
  %v1878 = vpop.permute.xlu0 %1877
  %v1879 = vlaneseq
  %v1880 = vshrl.u32 %v1879, 7
  %v1881 = vsub.s32 6, %v1880
  %v1882 = vrot.slane %v1710, %v1881
  %1884 = vbcast.lane.b32.xlu0 %v1882, 256
  %v1885 = vpop.permute.xlu0 %1884
  %s1887 = sor.u32 256, 8
  %1888 = vbcast.lane.b32.xlu0 %v1882, %s1887
  %v1889 = vpop.permute.xlu0 %1888
  %v1890 = vlaneseq
  %v1891 = vshrl.u32 %v1890, 7
  %v1892 = vsub.s32 7, %v1891
  %v1893 = vrot.slane %v1710, %v1892
  %1895 = vbcast.lane.b32.xlu0 %v1893, 256
  %v1896 = vpop.permute.xlu0 %1895
  %s1898 = sor.u32 256, 8
  %1899 = vbcast.lane.b32.xlu0 %v1893, %s1898
  %v1900 = vpop.permute.xlu0 %1899
  %v1901 = vlaneseq
  %v1902 = vshrl.u32 %v1901, 7
  %v1903 = vsub.s32 0, %v1902
  %v1904 = vrot.slane %v1711, %v1903
  %1906 = vbcast.lane.b32.xlu0 %v1904, 256
  %v1907 = vpop.permute.xlu0 %1906
  %s1909 = sor.u32 256, 8
  %1910 = vbcast.lane.b32.xlu0 %v1904, %s1909
  %v1911 = vpop.permute.xlu0 %1910
  %v1912 = vlaneseq
  %v1913 = vshrl.u32 %v1912, 7
  %v1914 = vsub.s32 1, %v1913
  %v1915 = vrot.slane %v1711, %v1914
  %1917 = vbcast.lane.b32.xlu0 %v1915, 256
  %v1918 = vpop.permute.xlu0 %1917
  %s1920 = sor.u32 256, 8
  %1921 = vbcast.lane.b32.xlu0 %v1915, %s1920
  %v1922 = vpop.permute.xlu0 %1921
  %v1923 = vlaneseq
  %v1924 = vshrl.u32 %v1923, 7
  %v1925 = vsub.s32 2, %v1924
  %v1926 = vrot.slane %v1711, %v1925
  %1928 = vbcast.lane.b32.xlu0 %v1926, 256
  %v1929 = vpop.permute.xlu0 %1928
  %s1931 = sor.u32 256, 8
  %1932 = vbcast.lane.b32.xlu0 %v1926, %s1931
  %v1933 = vpop.permute.xlu0 %1932
  %v1934 = vlaneseq
  %v1935 = vshrl.u32 %v1934, 7
  %v1936 = vsub.s32 3, %v1935
  %v1937 = vrot.slane %v1711, %v1936
  %1939 = vbcast.lane.b32.xlu0 %v1937, 256
  %v1940 = vpop.permute.xlu0 %1939
  %s1942 = sor.u32 256, 8
  %1943 = vbcast.lane.b32.xlu0 %v1937, %s1942
  %v1944 = vpop.permute.xlu0 %1943
  %v1945 = vlaneseq
  %v1946 = vshrl.u32 %v1945, 7
  %v1947 = vsub.s32 4, %v1946
  %v1948 = vrot.slane %v1711, %v1947
  %1950 = vbcast.lane.b32.xlu0 %v1948, 256
  %v1951 = vpop.permute.xlu0 %1950
  %s1953 = sor.u32 256, 8
  %1954 = vbcast.lane.b32.xlu0 %v1948, %s1953
  %v1955 = vpop.permute.xlu0 %1954
  %v1956 = vlaneseq
  %v1957 = vshrl.u32 %v1956, 7
  %v1958 = vsub.s32 5, %v1957
  %v1959 = vrot.slane %v1711, %v1958
  %1961 = vbcast.lane.b32.xlu0 %v1959, 256
  %v1962 = vpop.permute.xlu0 %1961
  %s1964 = sor.u32 256, 8
  %1965 = vbcast.lane.b32.xlu0 %v1959, %s1964
  %v1966 = vpop.permute.xlu0 %1965
  %v1967 = vlaneseq
  %v1968 = vshrl.u32 %v1967, 7
  %v1969 = vsub.s32 6, %v1968
  %v1970 = vrot.slane %v1711, %v1969
  %1972 = vbcast.lane.b32.xlu0 %v1970, 256
  %v1973 = vpop.permute.xlu0 %1972
  %s1975 = sor.u32 256, 8
  %1976 = vbcast.lane.b32.xlu0 %v1970, %s1975
  %v1977 = vpop.permute.xlu0 %1976
  %v1978 = vlaneseq
  %v1979 = vshrl.u32 %v1978, 7
  %v1980 = vsub.s32 7, %v1979
  %v1981 = vrot.slane %v1711, %v1980
  %1983 = vbcast.lane.b32.xlu0 %v1981, 256
  %v1984 = vpop.permute.xlu0 %1983
  %s1986 = sor.u32 256, 8
  %1987 = vbcast.lane.b32.xlu0 %v1981, %s1986
  %v1988 = vpop.permute.xlu0 %1987
  %v1989 = vlaneseq
  %v1990 = vshrl.u32 %v1989, 7
  %v1991 = vsub.s32 0, %v1990
  %v1992 = vrot.slane %v1712, %v1991
  %1994 = vbcast.lane.b32.xlu0 %v1992, 256
  %v1995 = vpop.permute.xlu0 %1994
  %s1997 = sor.u32 256, 8
  %1998 = vbcast.lane.b32.xlu0 %v1992, %s1997
  %v1999 = vpop.permute.xlu0 %1998
  %v2000 = vlaneseq
  %v2001 = vshrl.u32 %v2000, 7
  %v2002 = vsub.s32 1, %v2001
  %v2003 = vrot.slane %v1712, %v2002
  %2005 = vbcast.lane.b32.xlu0 %v2003, 256
  %v2006 = vpop.permute.xlu0 %2005
  %s2008 = sor.u32 256, 8
  %2009 = vbcast.lane.b32.xlu0 %v2003, %s2008
  %v2010 = vpop.permute.xlu0 %2009
  %v2011 = vlaneseq
  %v2012 = vshrl.u32 %v2011, 7
  %v2013 = vsub.s32 2, %v2012
  %v2014 = vrot.slane %v1712, %v2013
  %2016 = vbcast.lane.b32.xlu0 %v2014, 256
  %v2017 = vpop.permute.xlu0 %2016
  %s2019 = sor.u32 256, 8
  %2020 = vbcast.lane.b32.xlu0 %v2014, %s2019
  %v2021 = vpop.permute.xlu0 %2020
  %v2022 = vlaneseq
  %v2023 = vshrl.u32 %v2022, 7
  %v2024 = vsub.s32 3, %v2023
  %v2025 = vrot.slane %v1712, %v2024
  %2027 = vbcast.lane.b32.xlu0 %v2025, 256
  %v2028 = vpop.permute.xlu0 %2027
  %s2030 = sor.u32 256, 8
  %2031 = vbcast.lane.b32.xlu0 %v2025, %s2030
  %v2032 = vpop.permute.xlu0 %2031
  %v2033 = vlaneseq
  %v2034 = vshrl.u32 %v2033, 7
  %v2035 = vsub.s32 4, %v2034
  %v2036 = vrot.slane %v1712, %v2035
  %2038 = vbcast.lane.b32.xlu0 %v2036, 256
  %v2039 = vpop.permute.xlu0 %2038
  %s2041 = sor.u32 256, 8
  %2042 = vbcast.lane.b32.xlu0 %v2036, %s2041
  %v2043 = vpop.permute.xlu0 %2042
  %v2044 = vlaneseq
  %v2045 = vshrl.u32 %v2044, 7
  %v2046 = vsub.s32 5, %v2045
  %v2047 = vrot.slane %v1712, %v2046
  %2049 = vbcast.lane.b32.xlu0 %v2047, 256
  %v2050 = vpop.permute.xlu0 %2049
  %s2052 = sor.u32 256, 8
  %2053 = vbcast.lane.b32.xlu0 %v2047, %s2052
  %v2054 = vpop.permute.xlu0 %2053
  %v2055 = vlaneseq
  %v2056 = vshrl.u32 %v2055, 7
  %v2057 = vsub.s32 6, %v2056
  %v2058 = vrot.slane %v1712, %v2057
  %2060 = vbcast.lane.b32.xlu0 %v2058, 256
  %v2061 = vpop.permute.xlu0 %2060
  %s2063 = sor.u32 256, 8
  %2064 = vbcast.lane.b32.xlu0 %v2058, %s2063
  %v2065 = vpop.permute.xlu0 %2064
  %v2066 = vlaneseq
  %v2067 = vshrl.u32 %v2066, 7
  %v2068 = vsub.s32 7, %v2067
  %v2069 = vrot.slane %v1712, %v2068
  %2071 = vbcast.lane.b32.xlu0 %v2069, 256
  %v2072 = vpop.permute.xlu0 %2071
  %s2074 = sor.u32 256, 8
  %2075 = vbcast.lane.b32.xlu0 %v2069, %s2074
  %v2076 = vpop.permute.xlu0 %2075
  %v2077 = vlaneseq
  %v2078 = vshrl.u32 %v2077, 7
  %v2079 = vsub.s32 0, %v2078
  %v2080 = vrot.slane %v1713, %v2079
  %2082 = vbcast.lane.b32.xlu0 %v2080, 256
  %v2083 = vpop.permute.xlu0 %2082
  %s2085 = sor.u32 256, 8
  %2086 = vbcast.lane.b32.xlu0 %v2080, %s2085
  %v2087 = vpop.permute.xlu0 %2086
  %v2088 = vlaneseq
  %v2089 = vshrl.u32 %v2088, 7
  %v2090 = vsub.s32 1, %v2089
  %v2091 = vrot.slane %v1713, %v2090
  %2093 = vbcast.lane.b32.xlu0 %v2091, 256
  %v2094 = vpop.permute.xlu0 %2093
  %s2096 = sor.u32 256, 8
  %2097 = vbcast.lane.b32.xlu0 %v2091, %s2096
  %v2098 = vpop.permute.xlu0 %2097
  %v2099 = vlaneseq
  %v2100 = vshrl.u32 %v2099, 7
  %v2101 = vsub.s32 2, %v2100
  %v2102 = vrot.slane %v1713, %v2101
  %2104 = vbcast.lane.b32.xlu0 %v2102, 256
  %v2105 = vpop.permute.xlu0 %2104
  %s2107 = sor.u32 256, 8
  %2108 = vbcast.lane.b32.xlu0 %v2102, %s2107
  %v2109 = vpop.permute.xlu0 %2108
  %v2110 = vlaneseq
  %v2111 = vshrl.u32 %v2110, 7
  %v2112 = vsub.s32 3, %v2111
  %v2113 = vrot.slane %v1713, %v2112
  %2115 = vbcast.lane.b32.xlu0 %v2113, 256
  %v2116 = vpop.permute.xlu0 %2115
  %s2118 = sor.u32 256, 8
  %2119 = vbcast.lane.b32.xlu0 %v2113, %s2118
  %v2120 = vpop.permute.xlu0 %2119
  %v2121 = vlaneseq
  %v2122 = vshrl.u32 %v2121, 7
  %v2123 = vsub.s32 4, %v2122
  %v2124 = vrot.slane %v1713, %v2123
  %2126 = vbcast.lane.b32.xlu0 %v2124, 256
  %v2127 = vpop.permute.xlu0 %2126
  %s2129 = sor.u32 256, 8
  %2130 = vbcast.lane.b32.xlu0 %v2124, %s2129
  %v2131 = vpop.permute.xlu0 %2130
  %v2132 = vlaneseq
  %v2133 = vshrl.u32 %v2132, 7
  %v2134 = vsub.s32 5, %v2133
  %v2135 = vrot.slane %v1713, %v2134
  %2137 = vbcast.lane.b32.xlu0 %v2135, 256
  %v2138 = vpop.permute.xlu0 %2137
  %s2140 = sor.u32 256, 8
  %2141 = vbcast.lane.b32.xlu0 %v2135, %s2140
  %v2142 = vpop.permute.xlu0 %2141
  %v2143 = vlaneseq
  %v2144 = vshrl.u32 %v2143, 7
  %v2145 = vsub.s32 6, %v2144
  %v2146 = vrot.slane %v1713, %v2145
  %2148 = vbcast.lane.b32.xlu0 %v2146, 256
  %v2149 = vpop.permute.xlu0 %2148
  %s2151 = sor.u32 256, 8
  %2152 = vbcast.lane.b32.xlu0 %v2146, %s2151
  %v2153 = vpop.permute.xlu0 %2152
  %v2154 = vlaneseq
  %v2155 = vshrl.u32 %v2154, 7
  %v2156 = vsub.s32 7, %v2155
  %v2157 = vrot.slane %v1713, %v2156
  %2159 = vbcast.lane.b32.xlu0 %v2157, 256
  %v2160 = vpop.permute.xlu0 %2159
  %s2162 = sor.u32 256, 8
  %2163 = vbcast.lane.b32.xlu0 %v2157, %s2162
  %v2164 = vpop.permute.xlu0 %2163
  %v2165 = vlaneseq
  %v2166 = vshrl.u32 %v2165, 7
  %v2167 = vsub.s32 0, %v2166
  %v2168 = vrot.slane %v1714, %v2167
  %2170 = vbcast.lane.b32.xlu0 %v2168, 256
  %v2171 = vpop.permute.xlu0 %2170
  %s2173 = sor.u32 256, 8
  %2174 = vbcast.lane.b32.xlu0 %v2168, %s2173
  %v2175 = vpop.permute.xlu0 %2174
  %v2176 = vlaneseq
  %v2177 = vshrl.u32 %v2176, 7
  %v2178 = vsub.s32 1, %v2177
  %v2179 = vrot.slane %v1714, %v2178
  %2181 = vbcast.lane.b32.xlu0 %v2179, 256
  %v2182 = vpop.permute.xlu0 %2181
  %s2184 = sor.u32 256, 8
  %2185 = vbcast.lane.b32.xlu0 %v2179, %s2184
  %v2186 = vpop.permute.xlu0 %2185
  %v2187 = vlaneseq
  %v2188 = vshrl.u32 %v2187, 7
  %v2189 = vsub.s32 2, %v2188
  %v2190 = vrot.slane %v1714, %v2189
  %2192 = vbcast.lane.b32.xlu0 %v2190, 256
  %v2193 = vpop.permute.xlu0 %2192
  %s2195 = sor.u32 256, 8
  %2196 = vbcast.lane.b32.xlu0 %v2190, %s2195
  %v2197 = vpop.permute.xlu0 %2196
  %v2198 = vlaneseq
  %v2199 = vshrl.u32 %v2198, 7
  %v2200 = vsub.s32 3, %v2199
  %v2201 = vrot.slane %v1714, %v2200
  %2203 = vbcast.lane.b32.xlu0 %v2201, 256
  %v2204 = vpop.permute.xlu0 %2203
  %s2206 = sor.u32 256, 8
  %2207 = vbcast.lane.b32.xlu0 %v2201, %s2206
  %v2208 = vpop.permute.xlu0 %2207
  %v2209 = vlaneseq
  %v2210 = vshrl.u32 %v2209, 7
  %v2211 = vsub.s32 4, %v2210
  %v2212 = vrot.slane %v1714, %v2211
  %2214 = vbcast.lane.b32.xlu0 %v2212, 256
  %v2215 = vpop.permute.xlu0 %2214
  %s2217 = sor.u32 256, 8
  %2218 = vbcast.lane.b32.xlu0 %v2212, %s2217
  %v2219 = vpop.permute.xlu0 %2218
  %v2220 = vlaneseq
  %v2221 = vshrl.u32 %v2220, 7
  %v2222 = vsub.s32 5, %v2221
  %v2223 = vrot.slane %v1714, %v2222
  %2225 = vbcast.lane.b32.xlu0 %v2223, 256
  %v2226 = vpop.permute.xlu0 %2225
  %s2228 = sor.u32 256, 8
  %2229 = vbcast.lane.b32.xlu0 %v2223, %s2228
  %v2230 = vpop.permute.xlu0 %2229
  %v2231 = vlaneseq
  %v2232 = vshrl.u32 %v2231, 7
  %v2233 = vsub.s32 6, %v2232
  %v2234 = vrot.slane %v1714, %v2233
  %2236 = vbcast.lane.b32.xlu0 %v2234, 256
  %v2237 = vpop.permute.xlu0 %2236
  %s2239 = sor.u32 256, 8
  %2240 = vbcast.lane.b32.xlu0 %v2234, %s2239
  %v2241 = vpop.permute.xlu0 %2240
  %v2242 = vlaneseq
  %v2243 = vshrl.u32 %v2242, 7
  %v2244 = vsub.s32 7, %v2243
  %v2245 = vrot.slane %v1714, %v2244
  %2247 = vbcast.lane.b32.xlu0 %v2245, 256
  %v2248 = vpop.permute.xlu0 %2247
  %s2250 = sor.u32 256, 8
  %2251 = vbcast.lane.b32.xlu0 %v2245, %s2250
  %v2252 = vpop.permute.xlu0 %2251
  %v2253 = vlaneseq
  %v2254 = vshrl.u32 %v2253, 7
  %v2255 = vsub.s32 0, %v2254
  %v2256 = vrot.slane %v1715, %v2255
  %2258 = vbcast.lane.b32.xlu0 %v2256, 256
  %v2259 = vpop.permute.xlu0 %2258
  %s2261 = sor.u32 256, 8
  %2262 = vbcast.lane.b32.xlu0 %v2256, %s2261
  %v2263 = vpop.permute.xlu0 %2262
  %v2264 = vlaneseq
  %v2265 = vshrl.u32 %v2264, 7
  %v2266 = vsub.s32 1, %v2265
  %v2267 = vrot.slane %v1715, %v2266
  %2269 = vbcast.lane.b32.xlu0 %v2267, 256
  %v2270 = vpop.permute.xlu0 %2269
  %s2272 = sor.u32 256, 8
  %2273 = vbcast.lane.b32.xlu0 %v2267, %s2272
  %v2274 = vpop.permute.xlu0 %2273
  %v2275 = vlaneseq
  %v2276 = vshrl.u32 %v2275, 7
  %v2277 = vsub.s32 2, %v2276
  %v2278 = vrot.slane %v1715, %v2277
  %2280 = vbcast.lane.b32.xlu0 %v2278, 256
  %v2281 = vpop.permute.xlu0 %2280
  %s2283 = sor.u32 256, 8
  %2284 = vbcast.lane.b32.xlu0 %v2278, %s2283
  %v2285 = vpop.permute.xlu0 %2284
  %v2286 = vlaneseq
  %v2287 = vshrl.u32 %v2286, 7
  %v2288 = vsub.s32 3, %v2287
  %v2289 = vrot.slane %v1715, %v2288
  %2291 = vbcast.lane.b32.xlu0 %v2289, 256
  %v2292 = vpop.permute.xlu0 %2291
  %s2294 = sor.u32 256, 8
  %2295 = vbcast.lane.b32.xlu0 %v2289, %s2294
  %v2296 = vpop.permute.xlu0 %2295
  %v2297 = vlaneseq
  %v2298 = vshrl.u32 %v2297, 7
  %v2299 = vsub.s32 4, %v2298
  %v2300 = vrot.slane %v1715, %v2299
  %2302 = vbcast.lane.b32.xlu0 %v2300, 256
  %v2303 = vpop.permute.xlu0 %2302
  %s2305 = sor.u32 256, 8
  %2306 = vbcast.lane.b32.xlu0 %v2300, %s2305
  %v2307 = vpop.permute.xlu0 %2306
  %v2308 = vlaneseq
  %v2309 = vshrl.u32 %v2308, 7
  %v2310 = vsub.s32 5, %v2309
  %v2311 = vrot.slane %v1715, %v2310
  %2313 = vbcast.lane.b32.xlu0 %v2311, 256
  %v2314 = vpop.permute.xlu0 %2313
  %s2316 = sor.u32 256, 8
  %2317 = vbcast.lane.b32.xlu0 %v2311, %s2316
  %v2318 = vpop.permute.xlu0 %2317
  %v2319 = vlaneseq
  %v2320 = vshrl.u32 %v2319, 7
  %v2321 = vsub.s32 6, %v2320
  %v2322 = vrot.slane %v1715, %v2321
  %2324 = vbcast.lane.b32.xlu0 %v2322, 256
  %v2325 = vpop.permute.xlu0 %2324
  %s2327 = sor.u32 256, 8
  %2328 = vbcast.lane.b32.xlu0 %v2322, %s2327
  %v2329 = vpop.permute.xlu0 %2328
  %v2330 = vlaneseq
  %v2331 = vshrl.u32 %v2330, 7
  %v2332 = vsub.s32 7, %v2331
  %v2333 = vrot.slane %v1715, %v2332
  %2335 = vbcast.lane.b32.xlu0 %v2333, 256
  %v2336 = vpop.permute.xlu0 %2335
  %s2338 = sor.u32 256, 8
  %2339 = vbcast.lane.b32.xlu0 %v2333, %s2338
  %v2340 = vpop.permute.xlu0 %2339
  %v2341 = vlaneseq
  %v2342 = vshrl.u32 %v2341, 7
  %v2343 = vsub.s32 0, %v2342
  %v2344 = vrot.slane %v1716, %v2343
  %2346 = vbcast.lane.b32.xlu0 %v2344, 256
  %v2347 = vpop.permute.xlu0 %2346
  %s2349 = sor.u32 256, 8
  %2350 = vbcast.lane.b32.xlu0 %v2344, %s2349
  %v2351 = vpop.permute.xlu0 %2350
  %v2352 = vlaneseq
  %v2353 = vshrl.u32 %v2352, 7
  %v2354 = vsub.s32 1, %v2353
  %v2355 = vrot.slane %v1716, %v2354
  %2357 = vbcast.lane.b32.xlu0 %v2355, 256
  %v2358 = vpop.permute.xlu0 %2357
  %s2360 = sor.u32 256, 8
  %2361 = vbcast.lane.b32.xlu0 %v2355, %s2360
  %v2362 = vpop.permute.xlu0 %2361
  %v2363 = vlaneseq
  %v2364 = vshrl.u32 %v2363, 7
  %v2365 = vsub.s32 2, %v2364
  %v2366 = vrot.slane %v1716, %v2365
  %2368 = vbcast.lane.b32.xlu0 %v2366, 256
  %v2369 = vpop.permute.xlu0 %2368
  %s2371 = sor.u32 256, 8
  %2372 = vbcast.lane.b32.xlu0 %v2366, %s2371
  %v2373 = vpop.permute.xlu0 %2372
  %v2374 = vlaneseq
  %v2375 = vshrl.u32 %v2374, 7
  %v2376 = vsub.s32 3, %v2375
  %v2377 = vrot.slane %v1716, %v2376
  %2379 = vbcast.lane.b32.xlu0 %v2377, 256
  %v2380 = vpop.permute.xlu0 %2379
  %s2382 = sor.u32 256, 8
  %2383 = vbcast.lane.b32.xlu0 %v2377, %s2382
  %v2384 = vpop.permute.xlu0 %2383
  %v2385 = vlaneseq
  %v2386 = vshrl.u32 %v2385, 7
  %v2387 = vsub.s32 4, %v2386
  %v2388 = vrot.slane %v1716, %v2387
  %2390 = vbcast.lane.b32.xlu0 %v2388, 256
  %v2391 = vpop.permute.xlu0 %2390
  %s2393 = sor.u32 256, 8
  %2394 = vbcast.lane.b32.xlu0 %v2388, %s2393
  %v2395 = vpop.permute.xlu0 %2394
  %v2396 = vlaneseq
  %v2397 = vshrl.u32 %v2396, 7
  %v2398 = vsub.s32 5, %v2397
  %v2399 = vrot.slane %v1716, %v2398
  %2401 = vbcast.lane.b32.xlu0 %v2399, 256
  %v2402 = vpop.permute.xlu0 %2401
  %s2404 = sor.u32 256, 8
  %2405 = vbcast.lane.b32.xlu0 %v2399, %s2404
  %v2406 = vpop.permute.xlu0 %2405
  %v2407 = vlaneseq
  %v2408 = vshrl.u32 %v2407, 7
  %v2409 = vsub.s32 6, %v2408
  %v2410 = vrot.slane %v1716, %v2409
  %2412 = vbcast.lane.b32.xlu0 %v2410, 256
  %v2413 = vpop.permute.xlu0 %2412
  %s2415 = sor.u32 256, 8
  %2416 = vbcast.lane.b32.xlu0 %v2410, %s2415
  %v2417 = vpop.permute.xlu0 %2416
  %v2418 = vlaneseq
  %v2419 = vshrl.u32 %v2418, 7
  %v2420 = vsub.s32 7, %v2419
  %v2421 = vrot.slane %v1716, %v2420
  %2423 = vbcast.lane.b32.xlu0 %v2421, 256
  %v2424 = vpop.permute.xlu0 %2423
  %s2426 = sor.u32 256, 8
  %2427 = vbcast.lane.b32.xlu0 %v2421, %s2426
  %v2428 = vpop.permute.xlu0 %2427
  %v2429 = vlaneseq
  %v2430 = vshrl.u32 %v2429, 7
  %v2431 = vsub.s32 0, %v2430
  %v2432 = vrot.slane %v1717, %v2431
  %2434 = vbcast.lane.b32.xlu0 %v2432, 256
  %v2435 = vpop.permute.xlu0 %2434
  %s2437 = sor.u32 256, 8
  %2438 = vbcast.lane.b32.xlu0 %v2432, %s2437
  %v2439 = vpop.permute.xlu0 %2438
  %v2440 = vlaneseq
  %v2441 = vshrl.u32 %v2440, 7
  %v2442 = vsub.s32 1, %v2441
  %v2443 = vrot.slane %v1717, %v2442
  %2445 = vbcast.lane.b32.xlu0 %v2443, 256
  %v2446 = vpop.permute.xlu0 %2445
  %s2448 = sor.u32 256, 8
  %2449 = vbcast.lane.b32.xlu0 %v2443, %s2448
  %v2450 = vpop.permute.xlu0 %2449
  %v2451 = vlaneseq
  %v2452 = vshrl.u32 %v2451, 7
  %v2453 = vsub.s32 2, %v2452
  %v2454 = vrot.slane %v1717, %v2453
  %2456 = vbcast.lane.b32.xlu0 %v2454, 256
  %v2457 = vpop.permute.xlu0 %2456
  %s2459 = sor.u32 256, 8
  %2460 = vbcast.lane.b32.xlu0 %v2454, %s2459
  %v2461 = vpop.permute.xlu0 %2460
  %v2462 = vlaneseq
  %v2463 = vshrl.u32 %v2462, 7
  %v2464 = vsub.s32 3, %v2463
  %v2465 = vrot.slane %v1717, %v2464
  %2467 = vbcast.lane.b32.xlu0 %v2465, 256
  %v2468 = vpop.permute.xlu0 %2467
  %s2470 = sor.u32 256, 8
  %2471 = vbcast.lane.b32.xlu0 %v2465, %s2470
  %v2472 = vpop.permute.xlu0 %2471
  %v2473 = vlaneseq
  %v2474 = vshrl.u32 %v2473, 7
  %v2475 = vsub.s32 4, %v2474
  %v2476 = vrot.slane %v1717, %v2475
  %2478 = vbcast.lane.b32.xlu0 %v2476, 256
  %v2479 = vpop.permute.xlu0 %2478
  %s2481 = sor.u32 256, 8
  %2482 = vbcast.lane.b32.xlu0 %v2476, %s2481
  %v2483 = vpop.permute.xlu0 %2482
  %v2484 = vlaneseq
  %v2485 = vshrl.u32 %v2484, 7
  %v2486 = vsub.s32 5, %v2485
  %v2487 = vrot.slane %v1717, %v2486
  %2489 = vbcast.lane.b32.xlu0 %v2487, 256
  %v2490 = vpop.permute.xlu0 %2489
  %s2492 = sor.u32 256, 8
  %2493 = vbcast.lane.b32.xlu0 %v2487, %s2492
  %v2494 = vpop.permute.xlu0 %2493
  %v2495 = vlaneseq
  %v2496 = vshrl.u32 %v2495, 7
  %v2497 = vsub.s32 6, %v2496
  %v2498 = vrot.slane %v1717, %v2497
  %2500 = vbcast.lane.b32.xlu0 %v2498, 256
  %v2501 = vpop.permute.xlu0 %2500
  %s2503 = sor.u32 256, 8
  %2504 = vbcast.lane.b32.xlu0 %v2498, %s2503
  %v2505 = vpop.permute.xlu0 %2504
  %v2506 = vlaneseq
  %v2507 = vshrl.u32 %v2506, 7
  %v2508 = vsub.s32 7, %v2507
  %v2509 = vrot.slane %v1717, %v2508
  %2511 = vbcast.lane.b32.xlu0 %v2509, 256
  %v2512 = vpop.permute.xlu0 %2511
  %s2514 = sor.u32 256, 8
  %2515 = vbcast.lane.b32.xlu0 %v2509, %s2514
  %v2516 = vpop.permute.xlu0 %2515
  %v2517 = vlaneseq
  %v2518 = vshrl.u32 %v2517, 7
  %v2519 = vsub.s32 0, %v2518
  %v2520 = vrot.slane %v1718, %v2519
  %2522 = vbcast.lane.b32.xlu0 %v2520, 256
  %v2523 = vpop.permute.xlu0 %2522
  %s2525 = sor.u32 256, 8
  %2526 = vbcast.lane.b32.xlu0 %v2520, %s2525
  %v2527 = vpop.permute.xlu0 %2526
  %v2528 = vlaneseq
  %v2529 = vshrl.u32 %v2528, 7
  %v2530 = vsub.s32 1, %v2529
  %v2531 = vrot.slane %v1718, %v2530
  %2533 = vbcast.lane.b32.xlu0 %v2531, 256
  %v2534 = vpop.permute.xlu0 %2533
  %s2536 = sor.u32 256, 8
  %2537 = vbcast.lane.b32.xlu0 %v2531, %s2536
  %v2538 = vpop.permute.xlu0 %2537
  %v2539 = vlaneseq
  %v2540 = vshrl.u32 %v2539, 7
  %v2541 = vsub.s32 2, %v2540
  %v2542 = vrot.slane %v1718, %v2541
  %2544 = vbcast.lane.b32.xlu0 %v2542, 256
  %v2545 = vpop.permute.xlu0 %2544
  %s2547 = sor.u32 256, 8
  %2548 = vbcast.lane.b32.xlu0 %v2542, %s2547
  %v2549 = vpop.permute.xlu0 %2548
  %v2550 = vlaneseq
  %v2551 = vshrl.u32 %v2550, 7
  %v2552 = vsub.s32 3, %v2551
  %v2553 = vrot.slane %v1718, %v2552
  %2555 = vbcast.lane.b32.xlu0 %v2553, 256
  %v2556 = vpop.permute.xlu0 %2555
  %s2558 = sor.u32 256, 8
  %2559 = vbcast.lane.b32.xlu0 %v2553, %s2558
  %v2560 = vpop.permute.xlu0 %2559
  %v2561 = vlaneseq
  %v2562 = vshrl.u32 %v2561, 7
  %v2563 = vsub.s32 4, %v2562
  %v2564 = vrot.slane %v1718, %v2563
  %2566 = vbcast.lane.b32.xlu0 %v2564, 256
  %v2567 = vpop.permute.xlu0 %2566
  %s2569 = sor.u32 256, 8
  %2570 = vbcast.lane.b32.xlu0 %v2564, %s2569
  %v2571 = vpop.permute.xlu0 %2570
  %v2572 = vlaneseq
  %v2573 = vshrl.u32 %v2572, 7
  %v2574 = vsub.s32 5, %v2573
  %v2575 = vrot.slane %v1718, %v2574
  %2577 = vbcast.lane.b32.xlu0 %v2575, 256
  %v2578 = vpop.permute.xlu0 %2577
  %s2580 = sor.u32 256, 8
  %2581 = vbcast.lane.b32.xlu0 %v2575, %s2580
  %v2582 = vpop.permute.xlu0 %2581
  %v2583 = vlaneseq
  %v2584 = vshrl.u32 %v2583, 7
  %v2585 = vsub.s32 6, %v2584
  %v2586 = vrot.slane %v1718, %v2585
  %2588 = vbcast.lane.b32.xlu0 %v2586, 256
  %v2589 = vpop.permute.xlu0 %2588
  %s2591 = sor.u32 256, 8
  %2592 = vbcast.lane.b32.xlu0 %v2586, %s2591
  %v2593 = vpop.permute.xlu0 %2592
  %v2594 = vlaneseq
  %v2595 = vshrl.u32 %v2594, 7
  %v2596 = vsub.s32 7, %v2595
  %v2597 = vrot.slane %v1718, %v2596
  %2599 = vbcast.lane.b32.xlu0 %v2597, 256
  %v2600 = vpop.permute.xlu0 %2599
  %s2602 = sor.u32 256, 8
  %2603 = vbcast.lane.b32.xlu0 %v2597, %s2602
  %v2604 = vpop.permute.xlu0 %2603
  %v2605 = vlaneseq
  %v2606 = vshrl.u32 %v2605, 7
  %v2607 = vsub.s32 0, %v2606
  %v2608 = vrot.slane %v1719, %v2607
  %2610 = vbcast.lane.b32.xlu0 %v2608, 256
  %v2611 = vpop.permute.xlu0 %2610
  %s2613 = sor.u32 256, 8
  %2614 = vbcast.lane.b32.xlu0 %v2608, %s2613
  %v2615 = vpop.permute.xlu0 %2614
  %v2616 = vlaneseq
  %v2617 = vshrl.u32 %v2616, 7
  %v2618 = vsub.s32 1, %v2617
  %v2619 = vrot.slane %v1719, %v2618
  %2621 = vbcast.lane.b32.xlu0 %v2619, 256
  %v2622 = vpop.permute.xlu0 %2621
  %s2624 = sor.u32 256, 8
  %2625 = vbcast.lane.b32.xlu0 %v2619, %s2624
  %v2626 = vpop.permute.xlu0 %2625
  %v2627 = vlaneseq
  %v2628 = vshrl.u32 %v2627, 7
  %v2629 = vsub.s32 2, %v2628
  %v2630 = vrot.slane %v1719, %v2629
  %2632 = vbcast.lane.b32.xlu0 %v2630, 256
  %v2633 = vpop.permute.xlu0 %2632
  %s2635 = sor.u32 256, 8
  %2636 = vbcast.lane.b32.xlu0 %v2630, %s2635
  %v2637 = vpop.permute.xlu0 %2636
  %v2638 = vlaneseq
  %v2639 = vshrl.u32 %v2638, 7
  %v2640 = vsub.s32 3, %v2639
  %v2641 = vrot.slane %v1719, %v2640
  %2643 = vbcast.lane.b32.xlu0 %v2641, 256
  %v2644 = vpop.permute.xlu0 %2643
  %s2646 = sor.u32 256, 8
  %2647 = vbcast.lane.b32.xlu0 %v2641, %s2646
  %v2648 = vpop.permute.xlu0 %2647
  %v2649 = vlaneseq
  %v2650 = vshrl.u32 %v2649, 7
  %v2651 = vsub.s32 4, %v2650
  %v2652 = vrot.slane %v1719, %v2651
  %2654 = vbcast.lane.b32.xlu0 %v2652, 256
  %v2655 = vpop.permute.xlu0 %2654
  %s2657 = sor.u32 256, 8
  %2658 = vbcast.lane.b32.xlu0 %v2652, %s2657
  %v2659 = vpop.permute.xlu0 %2658
  %v2660 = vlaneseq
  %v2661 = vshrl.u32 %v2660, 7
  %v2662 = vsub.s32 5, %v2661
  %v2663 = vrot.slane %v1719, %v2662
  %2665 = vbcast.lane.b32.xlu0 %v2663, 256
  %v2666 = vpop.permute.xlu0 %2665
  %s2668 = sor.u32 256, 8
  %2669 = vbcast.lane.b32.xlu0 %v2663, %s2668
  %v2670 = vpop.permute.xlu0 %2669
  %v2671 = vlaneseq
  %v2672 = vshrl.u32 %v2671, 7
  %v2673 = vsub.s32 6, %v2672
  %v2674 = vrot.slane %v1719, %v2673
  %2676 = vbcast.lane.b32.xlu0 %v2674, 256
  %v2677 = vpop.permute.xlu0 %2676
  %s2679 = sor.u32 256, 8
  %2680 = vbcast.lane.b32.xlu0 %v2674, %s2679
  %v2681 = vpop.permute.xlu0 %2680
  %v2682 = vlaneseq
  %v2683 = vshrl.u32 %v2682, 7
  %v2684 = vsub.s32 7, %v2683
  %v2685 = vrot.slane %v1719, %v2684
  %2687 = vbcast.lane.b32.xlu0 %v2685, 256
  %v2688 = vpop.permute.xlu0 %2687
  %s2690 = sor.u32 256, 8
  %2691 = vbcast.lane.b32.xlu0 %v2685, %s2690
  %v2692 = vpop.permute.xlu0 %2691
  %v2693 = vlaneseq
  %v2694 = vshrl.u32 %v2693, 7
  %v2695 = vsub.s32 0, %v2694
  %v2696 = vrot.slane %v1720, %v2695
  %2698 = vbcast.lane.b32.xlu0 %v2696, 256
  %v2699 = vpop.permute.xlu0 %2698
  %s2701 = sor.u32 256, 8
  %2702 = vbcast.lane.b32.xlu0 %v2696, %s2701
  %v2703 = vpop.permute.xlu0 %2702
  %v2704 = vlaneseq
  %v2705 = vshrl.u32 %v2704, 7
  %v2706 = vsub.s32 1, %v2705
  %v2707 = vrot.slane %v1720, %v2706
  %2709 = vbcast.lane.b32.xlu0 %v2707, 256
  %v2710 = vpop.permute.xlu0 %2709
  %s2712 = sor.u32 256, 8
  %2713 = vbcast.lane.b32.xlu0 %v2707, %s2712
  %v2714 = vpop.permute.xlu0 %2713
  %v2715 = vlaneseq
  %v2716 = vshrl.u32 %v2715, 7
  %v2717 = vsub.s32 2, %v2716
  %v2718 = vrot.slane %v1720, %v2717
  %2720 = vbcast.lane.b32.xlu0 %v2718, 256
  %v2721 = vpop.permute.xlu0 %2720
  %s2723 = sor.u32 256, 8
  %2724 = vbcast.lane.b32.xlu0 %v2718, %s2723
  %v2725 = vpop.permute.xlu0 %2724
  %v2726 = vlaneseq
  %v2727 = vshrl.u32 %v2726, 7
  %v2728 = vsub.s32 3, %v2727
  %v2729 = vrot.slane %v1720, %v2728
  %2731 = vbcast.lane.b32.xlu0 %v2729, 256
  %v2732 = vpop.permute.xlu0 %2731
  %s2734 = sor.u32 256, 8
  %2735 = vbcast.lane.b32.xlu0 %v2729, %s2734
  %v2736 = vpop.permute.xlu0 %2735
  %v2737 = vlaneseq
  %v2738 = vshrl.u32 %v2737, 7
  %v2739 = vsub.s32 4, %v2738
  %v2740 = vrot.slane %v1720, %v2739
  %2742 = vbcast.lane.b32.xlu0 %v2740, 256
  %v2743 = vpop.permute.xlu0 %2742
  %s2745 = sor.u32 256, 8
  %2746 = vbcast.lane.b32.xlu0 %v2740, %s2745
  %v2747 = vpop.permute.xlu0 %2746
  %v2748 = vlaneseq
  %v2749 = vshrl.u32 %v2748, 7
  %v2750 = vsub.s32 5, %v2749
  %v2751 = vrot.slane %v1720, %v2750
  %2753 = vbcast.lane.b32.xlu0 %v2751, 256
  %v2754 = vpop.permute.xlu0 %2753
  %s2756 = sor.u32 256, 8
  %2757 = vbcast.lane.b32.xlu0 %v2751, %s2756
  %v2758 = vpop.permute.xlu0 %2757
  %v2759 = vlaneseq
  %v2760 = vshrl.u32 %v2759, 7
  %v2761 = vsub.s32 6, %v2760
  %v2762 = vrot.slane %v1720, %v2761
  %2764 = vbcast.lane.b32.xlu0 %v2762, 256
  %v2765 = vpop.permute.xlu0 %2764
  %s2767 = sor.u32 256, 8
  %2768 = vbcast.lane.b32.xlu0 %v2762, %s2767
  %v2769 = vpop.permute.xlu0 %2768
  %v2770 = vlaneseq
  %v2771 = vshrl.u32 %v2770, 7
  %v2772 = vsub.s32 7, %v2771
  %v2773 = vrot.slane %v1720, %v2772
  %2775 = vbcast.lane.b32.xlu0 %v2773, 256
  %v2776 = vpop.permute.xlu0 %2775
  %s2778 = sor.u32 256, 8
  %2779 = vbcast.lane.b32.xlu0 %v2773, %s2778
  %v2780 = vpop.permute.xlu0 %2779
  %v2781 = vlaneseq
  %v2782 = vshrl.u32 %v2781, 7
  %v2783 = vsub.s32 0, %v2782
  %v2784 = vrot.slane %v1721, %v2783
  %2786 = vbcast.lane.b32.xlu0 %v2784, 256
  %v2787 = vpop.permute.xlu0 %2786
  %s2789 = sor.u32 256, 8
  %2790 = vbcast.lane.b32.xlu0 %v2784, %s2789
  %v2791 = vpop.permute.xlu0 %2790
  %v2792 = vlaneseq
  %v2793 = vshrl.u32 %v2792, 7
  %v2794 = vsub.s32 1, %v2793
  %v2795 = vrot.slane %v1721, %v2794
  %2797 = vbcast.lane.b32.xlu0 %v2795, 256
  %v2798 = vpop.permute.xlu0 %2797
  %s2800 = sor.u32 256, 8
  %2801 = vbcast.lane.b32.xlu0 %v2795, %s2800
  %v2802 = vpop.permute.xlu0 %2801
  %v2803 = vlaneseq
  %v2804 = vshrl.u32 %v2803, 7
  %v2805 = vsub.s32 2, %v2804
  %v2806 = vrot.slane %v1721, %v2805
  %2808 = vbcast.lane.b32.xlu0 %v2806, 256
  %v2809 = vpop.permute.xlu0 %2808
  %s2811 = sor.u32 256, 8
  %2812 = vbcast.lane.b32.xlu0 %v2806, %s2811
  %v2813 = vpop.permute.xlu0 %2812
  %v2814 = vlaneseq
  %v2815 = vshrl.u32 %v2814, 7
  %v2816 = vsub.s32 3, %v2815
  %v2817 = vrot.slane %v1721, %v2816
  %2819 = vbcast.lane.b32.xlu0 %v2817, 256
  %v2820 = vpop.permute.xlu0 %2819
  %s2822 = sor.u32 256, 8
  %2823 = vbcast.lane.b32.xlu0 %v2817, %s2822
  %v2824 = vpop.permute.xlu0 %2823
  %v2825 = vlaneseq
  %v2826 = vshrl.u32 %v2825, 7
  %v2827 = vsub.s32 4, %v2826
  %v2828 = vrot.slane %v1721, %v2827
  %2830 = vbcast.lane.b32.xlu0 %v2828, 256
  %v2831 = vpop.permute.xlu0 %2830
  %s2833 = sor.u32 256, 8
  %2834 = vbcast.lane.b32.xlu0 %v2828, %s2833
  %v2835 = vpop.permute.xlu0 %2834
  %v2836 = vlaneseq
  %v2837 = vshrl.u32 %v2836, 7
  %v2838 = vsub.s32 5, %v2837
  %v2839 = vrot.slane %v1721, %v2838
  %2841 = vbcast.lane.b32.xlu0 %v2839, 256
  %v2842 = vpop.permute.xlu0 %2841
  %s2844 = sor.u32 256, 8
  %2845 = vbcast.lane.b32.xlu0 %v2839, %s2844
  %v2846 = vpop.permute.xlu0 %2845
  %v2847 = vlaneseq
  %v2848 = vshrl.u32 %v2847, 7
  %v2849 = vsub.s32 6, %v2848
  %v2850 = vrot.slane %v1721, %v2849
  %2852 = vbcast.lane.b32.xlu0 %v2850, 256
  %v2853 = vpop.permute.xlu0 %2852
  %s2855 = sor.u32 256, 8
  %2856 = vbcast.lane.b32.xlu0 %v2850, %s2855
  %v2857 = vpop.permute.xlu0 %2856
  %v2858 = vlaneseq
  %v2859 = vshrl.u32 %v2858, 7
  %v2860 = vsub.s32 7, %v2859
  %v2861 = vrot.slane %v1721, %v2860
  %2863 = vbcast.lane.b32.xlu0 %v2861, 256
  %v2864 = vpop.permute.xlu0 %2863
  %s2866 = sor.u32 256, 8
  %2867 = vbcast.lane.b32.xlu0 %v2861, %s2866
  %v2868 = vpop.permute.xlu0 %2867
  %v2869 = vlaneseq
  %v2870 = vshrl.u32 %v2869, 7
  %v2871 = vsub.s32 0, %v2870
  %v2872 = vrot.slane %v1722, %v2871
  %2874 = vbcast.lane.b32.xlu0 %v2872, 256
  %v2875 = vpop.permute.xlu0 %2874
  %s2877 = sor.u32 256, 8
  %2878 = vbcast.lane.b32.xlu0 %v2872, %s2877
  %v2879 = vpop.permute.xlu0 %2878
  %v2880 = vlaneseq
  %v2881 = vshrl.u32 %v2880, 7
  %v2882 = vsub.s32 1, %v2881
  %v2883 = vrot.slane %v1722, %v2882
  %2885 = vbcast.lane.b32.xlu0 %v2883, 256
  %v2886 = vpop.permute.xlu0 %2885
  %s2888 = sor.u32 256, 8
  %2889 = vbcast.lane.b32.xlu0 %v2883, %s2888
  %v2890 = vpop.permute.xlu0 %2889
  %v2891 = vlaneseq
  %v2892 = vshrl.u32 %v2891, 7
  %v2893 = vsub.s32 2, %v2892
  %v2894 = vrot.slane %v1722, %v2893
  %2896 = vbcast.lane.b32.xlu0 %v2894, 256
  %v2897 = vpop.permute.xlu0 %2896
  %s2899 = sor.u32 256, 8
  %2900 = vbcast.lane.b32.xlu0 %v2894, %s2899
  %v2901 = vpop.permute.xlu0 %2900
  %v2902 = vlaneseq
  %v2903 = vshrl.u32 %v2902, 7
  %v2904 = vsub.s32 3, %v2903
  %v2905 = vrot.slane %v1722, %v2904
  %2907 = vbcast.lane.b32.xlu0 %v2905, 256
  %v2908 = vpop.permute.xlu0 %2907
  %s2910 = sor.u32 256, 8
  %2911 = vbcast.lane.b32.xlu0 %v2905, %s2910
  %v2912 = vpop.permute.xlu0 %2911
  %v2913 = vlaneseq
  %v2914 = vshrl.u32 %v2913, 7
  %v2915 = vsub.s32 4, %v2914
  %v2916 = vrot.slane %v1722, %v2915
  %2918 = vbcast.lane.b32.xlu0 %v2916, 256
  %v2919 = vpop.permute.xlu0 %2918
  %s2921 = sor.u32 256, 8
  %2922 = vbcast.lane.b32.xlu0 %v2916, %s2921
  %v2923 = vpop.permute.xlu0 %2922
  %v2924 = vlaneseq
  %v2925 = vshrl.u32 %v2924, 7
  %v2926 = vsub.s32 5, %v2925
  %v2927 = vrot.slane %v1722, %v2926
  %2929 = vbcast.lane.b32.xlu0 %v2927, 256
  %v2930 = vpop.permute.xlu0 %2929
  %s2932 = sor.u32 256, 8
  %2933 = vbcast.lane.b32.xlu0 %v2927, %s2932
  %v2934 = vpop.permute.xlu0 %2933
  %v2935 = vlaneseq
  %v2936 = vshrl.u32 %v2935, 7
  %v2937 = vsub.s32 6, %v2936
  %v2938 = vrot.slane %v1722, %v2937
  %2940 = vbcast.lane.b32.xlu0 %v2938, 256
  %v2941 = vpop.permute.xlu0 %2940
  %s2943 = sor.u32 256, 8
  %2944 = vbcast.lane.b32.xlu0 %v2938, %s2943
  %v2945 = vpop.permute.xlu0 %2944
  %v2946 = vlaneseq
  %v2947 = vshrl.u32 %v2946, 7
  %v2948 = vsub.s32 7, %v2947
  %v2949 = vrot.slane %v1722, %v2948
  %2951 = vbcast.lane.b32.xlu0 %v2949, 256
  %v2952 = vpop.permute.xlu0 %2951
  %s2954 = sor.u32 256, 8
  %2955 = vbcast.lane.b32.xlu0 %v2949, %s2954
  %v2956 = vpop.permute.xlu0 %2955
  %v2957 = vlaneseq
  %v2958 = vshrl.u32 %v2957, 7
  %v2959 = vsub.s32 0, %v2958
  %v2960 = vrot.slane %v1723, %v2959
  %2962 = vbcast.lane.b32.xlu0 %v2960, 256
  %v2963 = vpop.permute.xlu0 %2962
  %s2965 = sor.u32 256, 8
  %2966 = vbcast.lane.b32.xlu0 %v2960, %s2965
  %v2967 = vpop.permute.xlu0 %2966
  %v2968 = vlaneseq
  %v2969 = vshrl.u32 %v2968, 7
  %v2970 = vsub.s32 1, %v2969
  %v2971 = vrot.slane %v1723, %v2970
  %2973 = vbcast.lane.b32.xlu0 %v2971, 256
  %v2974 = vpop.permute.xlu0 %2973
  %s2976 = sor.u32 256, 8
  %2977 = vbcast.lane.b32.xlu0 %v2971, %s2976
  %v2978 = vpop.permute.xlu0 %2977
  %v2979 = vlaneseq
  %v2980 = vshrl.u32 %v2979, 7
  %v2981 = vsub.s32 2, %v2980
  %v2982 = vrot.slane %v1723, %v2981
  %2984 = vbcast.lane.b32.xlu0 %v2982, 256
  %v2985 = vpop.permute.xlu0 %2984
  %s2987 = sor.u32 256, 8
  %2988 = vbcast.lane.b32.xlu0 %v2982, %s2987
  %v2989 = vpop.permute.xlu0 %2988
  %v2990 = vlaneseq
  %v2991 = vshrl.u32 %v2990, 7
  %v2992 = vsub.s32 3, %v2991
  %v2993 = vrot.slane %v1723, %v2992
  %2995 = vbcast.lane.b32.xlu0 %v2993, 256
  %v2996 = vpop.permute.xlu0 %2995
  %s2998 = sor.u32 256, 8
  %2999 = vbcast.lane.b32.xlu0 %v2993, %s2998
  %v3000 = vpop.permute.xlu0 %2999
  %v3001 = vlaneseq
  %v3002 = vshrl.u32 %v3001, 7
  %v3003 = vsub.s32 4, %v3002
  %v3004 = vrot.slane %v1723, %v3003
  %3006 = vbcast.lane.b32.xlu0 %v3004, 256
  %v3007 = vpop.permute.xlu0 %3006
  %s3009 = sor.u32 256, 8
  %3010 = vbcast.lane.b32.xlu0 %v3004, %s3009
  %v3011 = vpop.permute.xlu0 %3010
  %v3012 = vlaneseq
  %v3013 = vshrl.u32 %v3012, 7
  %v3014 = vsub.s32 5, %v3013
  %v3015 = vrot.slane %v1723, %v3014
  %3017 = vbcast.lane.b32.xlu0 %v3015, 256
  %v3018 = vpop.permute.xlu0 %3017
  %s3020 = sor.u32 256, 8
  %3021 = vbcast.lane.b32.xlu0 %v3015, %s3020
  %v3022 = vpop.permute.xlu0 %3021
  %v3023 = vlaneseq
  %v3024 = vshrl.u32 %v3023, 7
  %v3025 = vsub.s32 6, %v3024
  %v3026 = vrot.slane %v1723, %v3025
  %3028 = vbcast.lane.b32.xlu0 %v3026, 256
  %v3029 = vpop.permute.xlu0 %3028
  %s3031 = sor.u32 256, 8
  %3032 = vbcast.lane.b32.xlu0 %v3026, %s3031
  %v3033 = vpop.permute.xlu0 %3032
  %v3034 = vlaneseq
  %v3035 = vshrl.u32 %v3034, 7
  %v3036 = vsub.s32 7, %v3035
  %v3037 = vrot.slane %v1723, %v3036
  %3039 = vbcast.lane.b32.xlu0 %v3037, 256
  %v3040 = vpop.permute.xlu0 %3039
  %s3042 = sor.u32 256, 8
  %3043 = vbcast.lane.b32.xlu0 %v3037, %s3042
  %v3044 = vpop.permute.xlu0 %3043
  %v3045 = vlaneseq
  %v3046 = vshrl.u32 %v3045, 7
  %v3047 = vsub.s32 0, %v3046
  %v3048 = vrot.slane %v1724, %v3047
  %3050 = vbcast.lane.b32.xlu0 %v3048, 256
  %v3051 = vpop.permute.xlu0 %3050
  %s3053 = sor.u32 256, 8
  %3054 = vbcast.lane.b32.xlu0 %v3048, %s3053
  %v3055 = vpop.permute.xlu0 %3054
  %v3056 = vlaneseq
  %v3057 = vshrl.u32 %v3056, 7
  %v3058 = vsub.s32 1, %v3057
  %v3059 = vrot.slane %v1724, %v3058
  %3061 = vbcast.lane.b32.xlu0 %v3059, 256
  %v3062 = vpop.permute.xlu0 %3061
  %s3064 = sor.u32 256, 8
  %3065 = vbcast.lane.b32.xlu0 %v3059, %s3064
  %v3066 = vpop.permute.xlu0 %3065
  %v3067 = vlaneseq
  %v3068 = vshrl.u32 %v3067, 7
  %v3069 = vsub.s32 2, %v3068
  %v3070 = vrot.slane %v1724, %v3069
  %3072 = vbcast.lane.b32.xlu0 %v3070, 256
  %v3073 = vpop.permute.xlu0 %3072
  %s3075 = sor.u32 256, 8
  %3076 = vbcast.lane.b32.xlu0 %v3070, %s3075
  %v3077 = vpop.permute.xlu0 %3076
  %v3078 = vlaneseq
  %v3079 = vshrl.u32 %v3078, 7
  %v3080 = vsub.s32 3, %v3079
  %v3081 = vrot.slane %v1724, %v3080
  %3083 = vbcast.lane.b32.xlu0 %v3081, 256
  %v3084 = vpop.permute.xlu0 %3083
  %s3086 = sor.u32 256, 8
  %3087 = vbcast.lane.b32.xlu0 %v3081, %s3086
  %v3088 = vpop.permute.xlu0 %3087
  %v3089 = vlaneseq
  %v3090 = vshrl.u32 %v3089, 7
  %v3091 = vsub.s32 4, %v3090
  %v3092 = vrot.slane %v1724, %v3091
  %3094 = vbcast.lane.b32.xlu0 %v3092, 256
  %v3095 = vpop.permute.xlu0 %3094
  %s3097 = sor.u32 256, 8
  %3098 = vbcast.lane.b32.xlu0 %v3092, %s3097
  %v3099 = vpop.permute.xlu0 %3098
  %v3100 = vlaneseq
  %v3101 = vshrl.u32 %v3100, 7
  %v3102 = vsub.s32 5, %v3101
  %v3103 = vrot.slane %v1724, %v3102
  %3105 = vbcast.lane.b32.xlu0 %v3103, 256
  %v3106 = vpop.permute.xlu0 %3105
  %s3108 = sor.u32 256, 8
  %3109 = vbcast.lane.b32.xlu0 %v3103, %s3108
  %v3110 = vpop.permute.xlu0 %3109
  %v3111 = vlaneseq
  %v3112 = vshrl.u32 %v3111, 7
  %v3113 = vsub.s32 6, %v3112
  %v3114 = vrot.slane %v1724, %v3113
  %3116 = vbcast.lane.b32.xlu0 %v3114, 256
  %v3117 = vpop.permute.xlu0 %3116
  %s3119 = sor.u32 256, 8
  %3120 = vbcast.lane.b32.xlu0 %v3114, %s3119
  %v3121 = vpop.permute.xlu0 %3120
  %v3122 = vlaneseq
  %v3123 = vshrl.u32 %v3122, 7
  %v3124 = vsub.s32 7, %v3123
  %v3125 = vrot.slane %v1724, %v3124
  %3127 = vbcast.lane.b32.xlu0 %v3125, 256
  %v3128 = vpop.permute.xlu0 %3127
  %s3130 = sor.u32 256, 8
  %3131 = vbcast.lane.b32.xlu0 %v3125, %s3130
  %v3132 = vpop.permute.xlu0 %3131
  %vm3133 = vcmp.eq.s32.totalorder %v1731, %v27
  %vm3134 = vcmp.eq.s32.totalorder %v1735, %v27
  %vm3135 = vcmp.eq.s32.totalorder %v1742, %v27
  %vm3136 = vcmp.eq.s32.totalorder %v1746, %v27
  %vm3137 = vcmp.eq.s32.totalorder %v1753, %v27
  %vm3138 = vcmp.eq.s32.totalorder %v1757, %v27
  %vm3139 = vcmp.eq.s32.totalorder %v1764, %v27
  %vm3140 = vcmp.eq.s32.totalorder %v1768, %v27
  %vm3141 = vcmp.eq.s32.totalorder %v1775, %v27
  %vm3142 = vcmp.eq.s32.totalorder %v1779, %v27
  %vm3143 = vcmp.eq.s32.totalorder %v1786, %v27
  %vm3144 = vcmp.eq.s32.totalorder %v1790, %v27
  %vm3145 = vcmp.eq.s32.totalorder %v1797, %v27
  %vm3146 = vcmp.eq.s32.totalorder %v1801, %v27
  %vm3147 = vcmp.eq.s32.totalorder %v1808, %v27
  %vm3148 = vcmp.eq.s32.totalorder %v1812, %v27
  %vm3149 = vcmp.eq.s32.totalorder %v1819, %v27
  %vm3150 = vcmp.eq.s32.totalorder %v1823, %v27
  %vm3151 = vcmp.eq.s32.totalorder %v1830, %v27
  %vm3152 = vcmp.eq.s32.totalorder %v1834, %v27
  %vm3153 = vcmp.eq.s32.totalorder %v1841, %v27
  %vm3154 = vcmp.eq.s32.totalorder %v1845, %v27
  %vm3155 = vcmp.eq.s32.totalorder %v1852, %v27
  %vm3156 = vcmp.eq.s32.totalorder %v1856, %v27
  %vm3157 = vcmp.eq.s32.totalorder %v1863, %v27
  %vm3158 = vcmp.eq.s32.totalorder %v1867, %v27
  %vm3159 = vcmp.eq.s32.totalorder %v1874, %v27
  %vm3160 = vcmp.eq.s32.totalorder %v1878, %v27
  %vm3161 = vcmp.eq.s32.totalorder %v1885, %v27
  %vm3162 = vcmp.eq.s32.totalorder %v1889, %v27
  %vm3163 = vcmp.eq.s32.totalorder %v1896, %v27
  %vm3164 = vcmp.eq.s32.totalorder %v1900, %v27
  %vm3165 = vcmp.eq.s32.totalorder %v1907, %v27
  %vm3166 = vcmp.eq.s32.totalorder %v1911, %v27
  %vm3167 = vcmp.eq.s32.totalorder %v1918, %v27
  %vm3168 = vcmp.eq.s32.totalorder %v1922, %v27
  %vm3169 = vcmp.eq.s32.totalorder %v1929, %v27
  %vm3170 = vcmp.eq.s32.totalorder %v1933, %v27
  %vm3171 = vcmp.eq.s32.totalorder %v1940, %v27
  %vm3172 = vcmp.eq.s32.totalorder %v1944, %v27
  %vm3173 = vcmp.eq.s32.totalorder %v1951, %v27
  %vm3174 = vcmp.eq.s32.totalorder %v1955, %v27
  %vm3175 = vcmp.eq.s32.totalorder %v1962, %v27
  %vm3176 = vcmp.eq.s32.totalorder %v1966, %v27
  %vm3177 = vcmp.eq.s32.totalorder %v1973, %v27
  %vm3178 = vcmp.eq.s32.totalorder %v1977, %v27
  %vm3179 = vcmp.eq.s32.totalorder %v1984, %v27
  %vm3180 = vcmp.eq.s32.totalorder %v1988, %v27
  %vm3181 = vcmp.eq.s32.totalorder %v1995, %v27
  %vm3182 = vcmp.eq.s32.totalorder %v1999, %v27
  %vm3183 = vcmp.eq.s32.totalorder %v2006, %v27
  %vm3184 = vcmp.eq.s32.totalorder %v2010, %v27
  %vm3185 = vcmp.eq.s32.totalorder %v2017, %v27
  %vm3186 = vcmp.eq.s32.totalorder %v2021, %v27
  %vm3187 = vcmp.eq.s32.totalorder %v2028, %v27
  %vm3188 = vcmp.eq.s32.totalorder %v2032, %v27
  %vm3189 = vcmp.eq.s32.totalorder %v2039, %v27
  %vm3190 = vcmp.eq.s32.totalorder %v2043, %v27
  %vm3191 = vcmp.eq.s32.totalorder %v2050, %v27
  %vm3192 = vcmp.eq.s32.totalorder %v2054, %v27
  %vm3193 = vcmp.eq.s32.totalorder %v2061, %v27
  %vm3194 = vcmp.eq.s32.totalorder %v2065, %v27
  %vm3195 = vcmp.eq.s32.totalorder %v2072, %v27
  %vm3196 = vcmp.eq.s32.totalorder %v2076, %v27
  %vm3197 = vcmp.eq.s32.totalorder %v2083, %v27
  %vm3198 = vcmp.eq.s32.totalorder %v2087, %v27
  %vm3199 = vcmp.eq.s32.totalorder %v2094, %v27
  %vm3200 = vcmp.eq.s32.totalorder %v2098, %v27
  %vm3201 = vcmp.eq.s32.totalorder %v2105, %v27
  %vm3202 = vcmp.eq.s32.totalorder %v2109, %v27
  %vm3203 = vcmp.eq.s32.totalorder %v2116, %v27
  %vm3204 = vcmp.eq.s32.totalorder %v2120, %v27
  %vm3205 = vcmp.eq.s32.totalorder %v2127, %v27
  %vm3206 = vcmp.eq.s32.totalorder %v2131, %v27
  %vm3207 = vcmp.eq.s32.totalorder %v2138, %v27
  %vm3208 = vcmp.eq.s32.totalorder %v2142, %v27
  %vm3209 = vcmp.eq.s32.totalorder %v2149, %v27
  %vm3210 = vcmp.eq.s32.totalorder %v2153, %v27
  %vm3211 = vcmp.eq.s32.totalorder %v2160, %v27
  %vm3212 = vcmp.eq.s32.totalorder %v2164, %v27
  %vm3213 = vcmp.eq.s32.totalorder %v2171, %v27
  %vm3214 = vcmp.eq.s32.totalorder %v2175, %v27
  %vm3215 = vcmp.eq.s32.totalorder %v2182, %v27
  %vm3216 = vcmp.eq.s32.totalorder %v2186, %v27
  %vm3217 = vcmp.eq.s32.totalorder %v2193, %v27
  %vm3218 = vcmp.eq.s32.totalorder %v2197, %v27
  %vm3219 = vcmp.eq.s32.totalorder %v2204, %v27
  %vm3220 = vcmp.eq.s32.totalorder %v2208, %v27
  %vm3221 = vcmp.eq.s32.totalorder %v2215, %v27
  %vm3222 = vcmp.eq.s32.totalorder %v2219, %v27
  %vm3223 = vcmp.eq.s32.totalorder %v2226, %v27
  %vm3224 = vcmp.eq.s32.totalorder %v2230, %v27
  %vm3225 = vcmp.eq.s32.totalorder %v2237, %v27
  %vm3226 = vcmp.eq.s32.totalorder %v2241, %v27
  %vm3227 = vcmp.eq.s32.totalorder %v2248, %v27
  %vm3228 = vcmp.eq.s32.totalorder %v2252, %v27
  %vm3229 = vcmp.eq.s32.totalorder %v2259, %v27
  %vm3230 = vcmp.eq.s32.totalorder %v2263, %v27
  %vm3231 = vcmp.eq.s32.totalorder %v2270, %v27
  %vm3232 = vcmp.eq.s32.totalorder %v2274, %v27
  %vm3233 = vcmp.eq.s32.totalorder %v2281, %v27
  %vm3234 = vcmp.eq.s32.totalorder %v2285, %v27
  %vm3235 = vcmp.eq.s32.totalorder %v2292, %v27
  %vm3236 = vcmp.eq.s32.totalorder %v2296, %v27
  %vm3237 = vcmp.eq.s32.totalorder %v2303, %v27
  %vm3238 = vcmp.eq.s32.totalorder %v2307, %v27
  %vm3239 = vcmp.eq.s32.totalorder %v2314, %v27
  %vm3240 = vcmp.eq.s32.totalorder %v2318, %v27
  %vm3241 = vcmp.eq.s32.totalorder %v2325, %v27
  %vm3242 = vcmp.eq.s32.totalorder %v2329, %v27
  %vm3243 = vcmp.eq.s32.totalorder %v2336, %v27
  %vm3244 = vcmp.eq.s32.totalorder %v2340, %v27
  %vm3245 = vcmp.eq.s32.totalorder %v2347, %v27
  %vm3246 = vcmp.eq.s32.totalorder %v2351, %v27
  %vm3247 = vcmp.eq.s32.totalorder %v2358, %v27
  %vm3248 = vcmp.eq.s32.totalorder %v2362, %v27
  %vm3249 = vcmp.eq.s32.totalorder %v2369, %v27
  %vm3250 = vcmp.eq.s32.totalorder %v2373, %v27
  %vm3251 = vcmp.eq.s32.totalorder %v2380, %v27
  %vm3252 = vcmp.eq.s32.totalorder %v2384, %v27
  %vm3253 = vcmp.eq.s32.totalorder %v2391, %v27
  %vm3254 = vcmp.eq.s32.totalorder %v2395, %v27
  %vm3255 = vcmp.eq.s32.totalorder %v2402, %v27
  %vm3256 = vcmp.eq.s32.totalorder %v2406, %v27
  %vm3257 = vcmp.eq.s32.totalorder %v2413, %v27
  %vm3258 = vcmp.eq.s32.totalorder %v2417, %v27
  %vm3259 = vcmp.eq.s32.totalorder %v2424, %v27
  %vm3260 = vcmp.eq.s32.totalorder %v2428, %v27
  %vm3261 = vcmp.eq.s32.totalorder %v2435, %v27
  %vm3262 = vcmp.eq.s32.totalorder %v2439, %v27
  %vm3263 = vcmp.eq.s32.totalorder %v2446, %v27
  %vm3264 = vcmp.eq.s32.totalorder %v2450, %v27
  %vm3265 = vcmp.eq.s32.totalorder %v2457, %v27
  %vm3266 = vcmp.eq.s32.totalorder %v2461, %v27
  %vm3267 = vcmp.eq.s32.totalorder %v2468, %v27
  %vm3268 = vcmp.eq.s32.totalorder %v2472, %v27
  %vm3269 = vcmp.eq.s32.totalorder %v2479, %v27
  %vm3270 = vcmp.eq.s32.totalorder %v2483, %v27
  %vm3271 = vcmp.eq.s32.totalorder %v2490, %v27
  %vm3272 = vcmp.eq.s32.totalorder %v2494, %v27
  %vm3273 = vcmp.eq.s32.totalorder %v2501, %v27
  %vm3274 = vcmp.eq.s32.totalorder %v2505, %v27
  %vm3275 = vcmp.eq.s32.totalorder %v2512, %v27
  %vm3276 = vcmp.eq.s32.totalorder %v2516, %v27
  %vm3277 = vcmp.eq.s32.totalorder %v2523, %v27
  %vm3278 = vcmp.eq.s32.totalorder %v2527, %v27
  %vm3279 = vcmp.eq.s32.totalorder %v2534, %v27
  %vm3280 = vcmp.eq.s32.totalorder %v2538, %v27
  %vm3281 = vcmp.eq.s32.totalorder %v2545, %v27
  %vm3282 = vcmp.eq.s32.totalorder %v2549, %v27
  %vm3283 = vcmp.eq.s32.totalorder %v2556, %v27
  %vm3284 = vcmp.eq.s32.totalorder %v2560, %v27
  %vm3285 = vcmp.eq.s32.totalorder %v2567, %v27
  %vm3286 = vcmp.eq.s32.totalorder %v2571, %v27
  %vm3287 = vcmp.eq.s32.totalorder %v2578, %v27
  %vm3288 = vcmp.eq.s32.totalorder %v2582, %v27
  %vm3289 = vcmp.eq.s32.totalorder %v2589, %v27
  %vm3290 = vcmp.eq.s32.totalorder %v2593, %v27
  %vm3291 = vcmp.eq.s32.totalorder %v2600, %v27
  %vm3292 = vcmp.eq.s32.totalorder %v2604, %v27
  %vm3293 = vcmp.eq.s32.totalorder %v2611, %v27
  %vm3294 = vcmp.eq.s32.totalorder %v2615, %v27
  %vm3295 = vcmp.eq.s32.totalorder %v2622, %v27
  %vm3296 = vcmp.eq.s32.totalorder %v2626, %v27
  %vm3297 = vcmp.eq.s32.totalorder %v2633, %v27
  %vm3298 = vcmp.eq.s32.totalorder %v2637, %v27
  %vm3299 = vcmp.eq.s32.totalorder %v2644, %v27
  %vm3300 = vcmp.eq.s32.totalorder %v2648, %v27
  %vm3301 = vcmp.eq.s32.totalorder %v2655, %v27
  %vm3302 = vcmp.eq.s32.totalorder %v2659, %v27
  %vm3303 = vcmp.eq.s32.totalorder %v2666, %v27
  %vm3304 = vcmp.eq.s32.totalorder %v2670, %v27
  %vm3305 = vcmp.eq.s32.totalorder %v2677, %v27
  %vm3306 = vcmp.eq.s32.totalorder %v2681, %v27
  %vm3307 = vcmp.eq.s32.totalorder %v2688, %v27
  %vm3308 = vcmp.eq.s32.totalorder %v2692, %v27
  %vm3309 = vcmp.eq.s32.totalorder %v2699, %v27
  %vm3310 = vcmp.eq.s32.totalorder %v2703, %v27
  %vm3311 = vcmp.eq.s32.totalorder %v2710, %v27
  %vm3312 = vcmp.eq.s32.totalorder %v2714, %v27
  %vm3313 = vcmp.eq.s32.totalorder %v2721, %v27
  %vm3314 = vcmp.eq.s32.totalorder %v2725, %v27
  %vm3315 = vcmp.eq.s32.totalorder %v2732, %v27
  %vm3316 = vcmp.eq.s32.totalorder %v2736, %v27
  %vm3317 = vcmp.eq.s32.totalorder %v2743, %v27
  %vm3318 = vcmp.eq.s32.totalorder %v2747, %v27
  %vm3319 = vcmp.eq.s32.totalorder %v2754, %v27
  %vm3320 = vcmp.eq.s32.totalorder %v2758, %v27
  %vm3321 = vcmp.eq.s32.totalorder %v2765, %v27
  %vm3322 = vcmp.eq.s32.totalorder %v2769, %v27
  %vm3323 = vcmp.eq.s32.totalorder %v2776, %v27
  %vm3324 = vcmp.eq.s32.totalorder %v2780, %v27
  %vm3325 = vcmp.eq.s32.totalorder %v2787, %v27
  %vm3326 = vcmp.eq.s32.totalorder %v2791, %v27
  %vm3327 = vcmp.eq.s32.totalorder %v2798, %v27
  %vm3328 = vcmp.eq.s32.totalorder %v2802, %v27
  %vm3329 = vcmp.eq.s32.totalorder %v2809, %v27
  %vm3330 = vcmp.eq.s32.totalorder %v2813, %v27
  %vm3331 = vcmp.eq.s32.totalorder %v2820, %v27
  %vm3332 = vcmp.eq.s32.totalorder %v2824, %v27
  %vm3333 = vcmp.eq.s32.totalorder %v2831, %v27
  %vm3334 = vcmp.eq.s32.totalorder %v2835, %v27
  %vm3335 = vcmp.eq.s32.totalorder %v2842, %v27
  %vm3336 = vcmp.eq.s32.totalorder %v2846, %v27
  %vm3337 = vcmp.eq.s32.totalorder %v2853, %v27
  %vm3338 = vcmp.eq.s32.totalorder %v2857, %v27
  %vm3339 = vcmp.eq.s32.totalorder %v2864, %v27
  %vm3340 = vcmp.eq.s32.totalorder %v2868, %v27
  %vm3341 = vcmp.eq.s32.totalorder %v2875, %v27
  %vm3342 = vcmp.eq.s32.totalorder %v2879, %v27
  %vm3343 = vcmp.eq.s32.totalorder %v2886, %v27
  %vm3344 = vcmp.eq.s32.totalorder %v2890, %v27
  %vm3345 = vcmp.eq.s32.totalorder %v2897, %v27
  %vm3346 = vcmp.eq.s32.totalorder %v2901, %v27
  %vm3347 = vcmp.eq.s32.totalorder %v2908, %v27
  %vm3348 = vcmp.eq.s32.totalorder %v2912, %v27
  %vm3349 = vcmp.eq.s32.totalorder %v2919, %v27
  %vm3350 = vcmp.eq.s32.totalorder %v2923, %v27
  %vm3351 = vcmp.eq.s32.totalorder %v2930, %v27
  %vm3352 = vcmp.eq.s32.totalorder %v2934, %v27
  %vm3353 = vcmp.eq.s32.totalorder %v2941, %v27
  %vm3354 = vcmp.eq.s32.totalorder %v2945, %v27
  %vm3355 = vcmp.eq.s32.totalorder %v2952, %v27
  %vm3356 = vcmp.eq.s32.totalorder %v2956, %v27
  %vm3357 = vcmp.eq.s32.totalorder %v2963, %v27
  %vm3358 = vcmp.eq.s32.totalorder %v2967, %v27
  %vm3359 = vcmp.eq.s32.totalorder %v2974, %v27
  %vm3360 = vcmp.eq.s32.totalorder %v2978, %v27
  %vm3361 = vcmp.eq.s32.totalorder %v2985, %v27
  %vm3362 = vcmp.eq.s32.totalorder %v2989, %v27
  %vm3363 = vcmp.eq.s32.totalorder %v2996, %v27
  %vm3364 = vcmp.eq.s32.totalorder %v3000, %v27
  %vm3365 = vcmp.eq.s32.totalorder %v3007, %v27
  %vm3366 = vcmp.eq.s32.totalorder %v3011, %v27
  %vm3367 = vcmp.eq.s32.totalorder %v3018, %v27
  %vm3368 = vcmp.eq.s32.totalorder %v3022, %v27
  %vm3369 = vcmp.eq.s32.totalorder %v3029, %v27
  %vm3370 = vcmp.eq.s32.totalorder %v3033, %v27
  %vm3371 = vcmp.eq.s32.totalorder %v3040, %v27
  %vm3372 = vcmp.eq.s32.totalorder %v3044, %v27
  %vm3373 = vcmp.eq.s32.totalorder %v3051, %v27
  %vm3374 = vcmp.eq.s32.totalorder %v3055, %v27
  %vm3375 = vcmp.eq.s32.totalorder %v3062, %v27
  %vm3376 = vcmp.eq.s32.totalorder %v3066, %v27
  %vm3377 = vcmp.eq.s32.totalorder %v3073, %v27
  %vm3378 = vcmp.eq.s32.totalorder %v3077, %v27
  %vm3379 = vcmp.eq.s32.totalorder %v3084, %v27
  %vm3380 = vcmp.eq.s32.totalorder %v3088, %v27
  %vm3381 = vcmp.eq.s32.totalorder %v3095, %v27
  %vm3382 = vcmp.eq.s32.totalorder %v3099, %v27
  %vm3383 = vcmp.eq.s32.totalorder %v3106, %v27
  %vm3384 = vcmp.eq.s32.totalorder %v3110, %v27
  %vm3385 = vcmp.eq.s32.totalorder %v3117, %v27
  %vm3386 = vcmp.eq.s32.totalorder %v3121, %v27
  %vm3387 = vcmp.eq.s32.totalorder %v3128, %v27
  %vm3388 = vcmp.eq.s32.totalorder %v3132, %v27
  %vm3389 = vmor %vm1452, %vm3133
  %vm3390 = vmor %vm1453, %vm3134
  %vm3391 = vmor %vm1454, %vm3135
  %vm3392 = vmor %vm1455, %vm3136
  %vm3393 = vmor %vm1456, %vm3137
  %vm3394 = vmor %vm1457, %vm3138
  %vm3395 = vmor %vm1458, %vm3139
  %vm3396 = vmor %vm1459, %vm3140
  %vm3397 = vmor %vm1460, %vm3141
  %vm3398 = vmor %vm1461, %vm3142
  %vm3399 = vmor %vm1462, %vm3143
  %vm3400 = vmor %vm1463, %vm3144
  %vm3401 = vmor %vm1464, %vm3145
  %vm3402 = vmor %vm1465, %vm3146
  %vm3403 = vmor %vm1466, %vm3147
  %vm3404 = vmor %vm1467, %vm3148
  %vm3405 = vmor %vm1468, %vm3149
  %vm3406 = vmor %vm1469, %vm3150
  %vm3407 = vmor %vm1470, %vm3151
  %vm3408 = vmor %vm1471, %vm3152
  %vm3409 = vmor %vm1472, %vm3153
  %vm3410 = vmor %vm1473, %vm3154
  %vm3411 = vmor %vm1474, %vm3155
  %vm3412 = vmor %vm1475, %vm3156
  %vm3413 = vmor %vm1476, %vm3157
  %vm3414 = vmor %vm1477, %vm3158
  %vm3415 = vmor %vm1478, %vm3159
  %vm3416 = vmor %vm1479, %vm3160
  %vm3417 = vmor %vm1480, %vm3161
  %vm3418 = vmor %vm1481, %vm3162
  %vm3419 = vmor %vm1482, %vm3163
  %vm3420 = vmor %vm1483, %vm3164
  %vm3421 = vmor %vm1484, %vm3165
  %vm3422 = vmor %vm1485, %vm3166
  %vm3423 = vmor %vm1486, %vm3167
  %vm3424 = vmor %vm1487, %vm3168
  %vm3425 = vmor %vm1488, %vm3169
  %vm3426 = vmor %vm1489, %vm3170
  %vm3427 = vmor %vm1490, %vm3171
  %vm3428 = vmor %vm1491, %vm3172
  %vm3429 = vmor %vm1492, %vm3173
  %vm3430 = vmor %vm1493, %vm3174
  %vm3431 = vmor %vm1494, %vm3175
  %vm3432 = vmor %vm1495, %vm3176
  %vm3433 = vmor %vm1496, %vm3177
  %vm3434 = vmor %vm1497, %vm3178
  %vm3435 = vmor %vm1498, %vm3179
  %vm3436 = vmor %vm1499, %vm3180
  %vm3437 = vmor %vm1500, %vm3181
  %vm3438 = vmor %vm1501, %vm3182
  %vm3439 = vmor %vm1502, %vm3183
  %vm3440 = vmor %vm1503, %vm3184
  %vm3441 = vmor %vm1504, %vm3185
  %vm3442 = vmor %vm1505, %vm3186
  %vm3443 = vmor %vm1506, %vm3187
  %vm3444 = vmor %vm1507, %vm3188
  %vm3445 = vmor %vm1508, %vm3189
  %vm3446 = vmor %vm1509, %vm3190
  %vm3447 = vmor %vm1510, %vm3191
  %vm3448 = vmor %vm1511, %vm3192
  %vm3449 = vmor %vm1512, %vm3193
  %vm3450 = vmor %vm1513, %vm3194
  %vm3451 = vmor %vm1514, %vm3195
  %vm3452 = vmor %vm1515, %vm3196
  %vm3453 = vmor %vm1516, %vm3197
  %vm3454 = vmor %vm1517, %vm3198
  %vm3455 = vmor %vm1518, %vm3199
  %vm3456 = vmor %vm1519, %vm3200
  %vm3457 = vmor %vm1520, %vm3201
  %vm3458 = vmor %vm1521, %vm3202
  %vm3459 = vmor %vm1522, %vm3203
  %vm3460 = vmor %vm1523, %vm3204
  %vm3461 = vmor %vm1524, %vm3205
  %vm3462 = vmor %vm1525, %vm3206
  %vm3463 = vmor %vm1526, %vm3207
  %vm3464 = vmor %vm1527, %vm3208
  %vm3465 = vmor %vm1528, %vm3209
  %vm3466 = vmor %vm1529, %vm3210
  %vm3467 = vmor %vm1530, %vm3211
  %vm3468 = vmor %vm1531, %vm3212
  %vm3469 = vmor %vm1532, %vm3213
  %vm3470 = vmor %vm1533, %vm3214
  %vm3471 = vmor %vm1534, %vm3215
  %vm3472 = vmor %vm1535, %vm3216
  %vm3473 = vmor %vm1536, %vm3217
  %vm3474 = vmor %vm1537, %vm3218
  %vm3475 = vmor %vm1538, %vm3219
  %vm3476 = vmor %vm1539, %vm3220
  %vm3477 = vmor %vm1540, %vm3221
  %vm3478 = vmor %vm1541, %vm3222
  %vm3479 = vmor %vm1542, %vm3223
  %vm3480 = vmor %vm1543, %vm3224
  %vm3481 = vmor %vm1544, %vm3225
  %vm3482 = vmor %vm1545, %vm3226
  %vm3483 = vmor %vm1546, %vm3227
  %vm3484 = vmor %vm1547, %vm3228
  %vm3485 = vmor %vm1548, %vm3229
  %vm3486 = vmor %vm1549, %vm3230
  %vm3487 = vmor %vm1550, %vm3231
  %vm3488 = vmor %vm1551, %vm3232
  %vm3489 = vmor %vm1552, %vm3233
  %vm3490 = vmor %vm1553, %vm3234
  %vm3491 = vmor %vm1554, %vm3235
  %vm3492 = vmor %vm1555, %vm3236
  %vm3493 = vmor %vm1556, %vm3237
  %vm3494 = vmor %vm1557, %vm3238
  %vm3495 = vmor %vm1558, %vm3239
  %vm3496 = vmor %vm1559, %vm3240
  %vm3497 = vmor %vm1560, %vm3241
  %vm3498 = vmor %vm1561, %vm3242
  %vm3499 = vmor %vm1562, %vm3243
  %vm3500 = vmor %vm1563, %vm3244
  %vm3501 = vmor %vm1564, %vm3245
  %vm3502 = vmor %vm1565, %vm3246
  %vm3503 = vmor %vm1566, %vm3247
  %vm3504 = vmor %vm1567, %vm3248
  %vm3505 = vmor %vm1568, %vm3249
  %vm3506 = vmor %vm1569, %vm3250
  %vm3507 = vmor %vm1570, %vm3251
  %vm3508 = vmor %vm1571, %vm3252
  %vm3509 = vmor %vm1572, %vm3253
  %vm3510 = vmor %vm1573, %vm3254
  %vm3511 = vmor %vm1574, %vm3255
  %vm3512 = vmor %vm1575, %vm3256
  %vm3513 = vmor %vm1576, %vm3257
  %vm3514 = vmor %vm1577, %vm3258
  %vm3515 = vmor %vm1578, %vm3259
  %vm3516 = vmor %vm1579, %vm3260
  %vm3517 = vmor %vm1580, %vm3261
  %vm3518 = vmor %vm1581, %vm3262
  %vm3519 = vmor %vm1582, %vm3263
  %vm3520 = vmor %vm1583, %vm3264
  %vm3521 = vmor %vm1584, %vm3265
  %vm3522 = vmor %vm1585, %vm3266
  %vm3523 = vmor %vm1586, %vm3267
  %vm3524 = vmor %vm1587, %vm3268
  %vm3525 = vmor %vm1588, %vm3269
  %vm3526 = vmor %vm1589, %vm3270
  %vm3527 = vmor %vm1590, %vm3271
  %vm3528 = vmor %vm1591, %vm3272
  %vm3529 = vmor %vm1592, %vm3273
  %vm3530 = vmor %vm1593, %vm3274
  %vm3531 = vmor %vm1594, %vm3275
  %vm3532 = vmor %vm1595, %vm3276
  %vm3533 = vmor %vm1596, %vm3277
  %vm3534 = vmor %vm1597, %vm3278
  %vm3535 = vmor %vm1598, %vm3279
  %vm3536 = vmor %vm1599, %vm3280
  %vm3537 = vmor %vm1600, %vm3281
  %vm3538 = vmor %vm1601, %vm3282
  %vm3539 = vmor %vm1602, %vm3283
  %vm3540 = vmor %vm1603, %vm3284
  %vm3541 = vmor %vm1604, %vm3285
  %vm3542 = vmor %vm1605, %vm3286
  %vm3543 = vmor %vm1606, %vm3287
  %vm3544 = vmor %vm1607, %vm3288
  %vm3545 = vmor %vm1608, %vm3289
  %vm3546 = vmor %vm1609, %vm3290
  %vm3547 = vmor %vm1610, %vm3291
  %vm3548 = vmor %vm1611, %vm3292
  %vm3549 = vmor %vm1612, %vm3293
  %vm3550 = vmor %vm1613, %vm3294
  %vm3551 = vmor %vm1614, %vm3295
  %vm3552 = vmor %vm1615, %vm3296
  %vm3553 = vmor %vm1616, %vm3297
  %vm3554 = vmor %vm1617, %vm3298
  %vm3555 = vmor %vm1618, %vm3299
  %vm3556 = vmor %vm1619, %vm3300
  %vm3557 = vmor %vm1620, %vm3301
  %vm3558 = vmor %vm1621, %vm3302
  %vm3559 = vmor %vm1622, %vm3303
  %vm3560 = vmor %vm1623, %vm3304
  %vm3561 = vmor %vm1624, %vm3305
  %vm3562 = vmor %vm1625, %vm3306
  %vm3563 = vmor %vm1626, %vm3307
  %vm3564 = vmor %vm1627, %vm3308
  %vm3565 = vmor %vm1628, %vm3309
  %vm3566 = vmor %vm1629, %vm3310
  %vm3567 = vmor %vm1630, %vm3311
  %vm3568 = vmor %vm1631, %vm3312
  %vm3569 = vmor %vm1632, %vm3313
  %vm3570 = vmor %vm1633, %vm3314
  %vm3571 = vmor %vm1634, %vm3315
  %vm3572 = vmor %vm1635, %vm3316
  %vm3573 = vmor %vm1636, %vm3317
  %vm3574 = vmor %vm1637, %vm3318
  %vm3575 = vmor %vm1638, %vm3319
  %vm3576 = vmor %vm1639, %vm3320
  %vm3577 = vmor %vm1640, %vm3321
  %vm3578 = vmor %vm1641, %vm3322
  %vm3579 = vmor %vm1642, %vm3323
  %vm3580 = vmor %vm1643, %vm3324
  %vm3581 = vmor %vm1644, %vm3325
  %vm3582 = vmor %vm1645, %vm3326
  %vm3583 = vmor %vm1646, %vm3327
  %vm3584 = vmor %vm1647, %vm3328
  %vm3585 = vmor %vm1648, %vm3329
  %vm3586 = vmor %vm1649, %vm3330
  %vm3587 = vmor %vm1650, %vm3331
  %vm3588 = vmor %vm1651, %vm3332
  %vm3589 = vmor %vm1652, %vm3333
  %vm3590 = vmor %vm1653, %vm3334
  %vm3591 = vmor %vm1654, %vm3335
  %vm3592 = vmor %vm1655, %vm3336
  %vm3593 = vmor %vm1656, %vm3337
  %vm3594 = vmor %vm1657, %vm3338
  %vm3595 = vmor %vm1658, %vm3339
  %vm3596 = vmor %vm1659, %vm3340
  %vm3597 = vmor %vm1660, %vm3341
  %vm3598 = vmor %vm1661, %vm3342
  %vm3599 = vmor %vm1662, %vm3343
  %vm3600 = vmor %vm1663, %vm3344
  %vm3601 = vmor %vm1664, %vm3345
  %vm3602 = vmor %vm1665, %vm3346
  %vm3603 = vmor %vm1666, %vm3347
  %vm3604 = vmor %vm1667, %vm3348
  %vm3605 = vmor %vm1668, %vm3349
  %vm3606 = vmor %vm1669, %vm3350
  %vm3607 = vmor %vm1670, %vm3351
  %vm3608 = vmor %vm1671, %vm3352
  %vm3609 = vmor %vm1672, %vm3353
  %vm3610 = vmor %vm1673, %vm3354
  %vm3611 = vmor %vm1674, %vm3355
  %vm3612 = vmor %vm1675, %vm3356
  %vm3613 = vmor %vm1676, %vm3357
  %vm3614 = vmor %vm1677, %vm3358
  %vm3615 = vmor %vm1678, %vm3359
  %vm3616 = vmor %vm1679, %vm3360
  %vm3617 = vmor %vm1680, %vm3361
  %vm3618 = vmor %vm1681, %vm3362
  %vm3619 = vmor %vm1682, %vm3363
  %vm3620 = vmor %vm1683, %vm3364
  %vm3621 = vmor %vm1684, %vm3365
  %vm3622 = vmor %vm1685, %vm3366
  %vm3623 = vmor %vm1686, %vm3367
  %vm3624 = vmor %vm1687, %vm3368
  %vm3625 = vmor %vm1688, %vm3369
  %vm3626 = vmor %vm1689, %vm3370
  %vm3627 = vmor %vm1690, %vm3371
  %vm3628 = vmor %vm1691, %vm3372
  %vm3629 = vmor %vm1692, %vm3373
  %vm3630 = vmor %vm1693, %vm3374
  %vm3631 = vmor %vm1694, %vm3375
  %vm3632 = vmor %vm1695, %vm3376
  %vm3633 = vmor %vm1696, %vm3377
  %vm3634 = vmor %vm1697, %vm3378
  %vm3635 = vmor %vm1698, %vm3379
  %vm3636 = vmor %vm1699, %vm3380
  %vm3637 = vmor %vm1700, %vm3381
  %vm3638 = vmor %vm1701, %vm3382
  %vm3639 = vmor %vm1702, %vm3383
  %vm3640 = vmor %vm1703, %vm3384
  %vm3641 = vmor %vm1704, %vm3385
  %vm3642 = vmor %vm1705, %vm3386
  %vm3643 = vmor %vm1706, %vm3387
  %vm3644 = vmor %vm1707, %vm3388
  %s3645 = scalar_lea.vmem %s0, 256
  %v3646 = vld [vmem:[%s3645] sm:$0xff]
  %v3647 = vld [vmem:[%s3645 + $0x8] sm:$0xff]
  %v3648 = vld [vmem:[%s3645 + $0x10] sm:$0xff]
  %v3649 = vld [vmem:[%s3645 + $0x18] sm:$0xff]
  %v3650 = vld [vmem:[%s3645 + $0x20] sm:$0xff]
  %v3651 = vld [vmem:[%s3645 + $0x28] sm:$0xff]
  %v3652 = vld [vmem:[%s3645 + $0x30] sm:$0xff]
  %v3653 = vld [vmem:[%s3645 + $0x38] sm:$0xff]
  %v3654 = vld [vmem:[%s3645 + $0x40] sm:$0xff]
  %v3655 = vld [vmem:[%s3645 + $0x48] sm:$0xff]
  %v3656 = vld [vmem:[%s3645 + $0x50] sm:$0xff]
  %v3657 = vld [vmem:[%s3645 + $0x58] sm:$0xff]
  %v3658 = vld [vmem:[%s3645 + $0x60] sm:$0xff]
  %v3659 = vld [vmem:[%s3645 + $0x68] sm:$0xff]
  %v3660 = vld [vmem:[%s3645 + $0x70] sm:$0xff]
  %v3661 = vld [vmem:[%s3645 + $0x78] sm:$0xff]
  %v3662 = vlaneseq
  %v3663 = vshrl.u32 %v3662, 7
  %v3664 = vsub.s32 0, %v3663
  %v3665 = vrot.slane %v3646, %v3664
  %3667 = vbcast.lane.b32.xlu0 %v3665, 256
  %v3668 = vpop.permute.xlu0 %3667
  %s3670 = sor.u32 256, 8
  %3671 = vbcast.lane.b32.xlu0 %v3665, %s3670
  %v3672 = vpop.permute.xlu0 %3671
  %v3673 = vlaneseq
  %v3674 = vshrl.u32 %v3673, 7
  %v3675 = vsub.s32 1, %v3674
  %v3676 = vrot.slane %v3646, %v3675
  %3678 = vbcast.lane.b32.xlu0 %v3676, 256
  %v3679 = vpop.permute.xlu0 %3678
  %s3681 = sor.u32 256, 8
  %3682 = vbcast.lane.b32.xlu0 %v3676, %s3681
  %v3683 = vpop.permute.xlu0 %3682
  %v3684 = vlaneseq
  %v3685 = vshrl.u32 %v3684, 7
  %v3686 = vsub.s32 2, %v3685
  %v3687 = vrot.slane %v3646, %v3686
  %3689 = vbcast.lane.b32.xlu0 %v3687, 256
  %v3690 = vpop.permute.xlu0 %3689
  %s3692 = sor.u32 256, 8
  %3693 = vbcast.lane.b32.xlu0 %v3687, %s3692
  %v3694 = vpop.permute.xlu0 %3693
  %v3695 = vlaneseq
  %v3696 = vshrl.u32 %v3695, 7
  %v3697 = vsub.s32 3, %v3696
  %v3698 = vrot.slane %v3646, %v3697
  %3700 = vbcast.lane.b32.xlu0 %v3698, 256
  %v3701 = vpop.permute.xlu0 %3700
  %s3703 = sor.u32 256, 8
  %3704 = vbcast.lane.b32.xlu0 %v3698, %s3703
  %v3705 = vpop.permute.xlu0 %3704
  %v3706 = vlaneseq
  %v3707 = vshrl.u32 %v3706, 7
  %v3708 = vsub.s32 4, %v3707
  %v3709 = vrot.slane %v3646, %v3708
  %3711 = vbcast.lane.b32.xlu0 %v3709, 256
  %v3712 = vpop.permute.xlu0 %3711
  %s3714 = sor.u32 256, 8
  %3715 = vbcast.lane.b32.xlu0 %v3709, %s3714
  %v3716 = vpop.permute.xlu0 %3715
  %v3717 = vlaneseq
  %v3718 = vshrl.u32 %v3717, 7
  %v3719 = vsub.s32 5, %v3718
  %v3720 = vrot.slane %v3646, %v3719
  %3722 = vbcast.lane.b32.xlu0 %v3720, 256
  %v3723 = vpop.permute.xlu0 %3722
  %s3725 = sor.u32 256, 8
  %3726 = vbcast.lane.b32.xlu0 %v3720, %s3725
  %v3727 = vpop.permute.xlu0 %3726
  %v3728 = vlaneseq
  %v3729 = vshrl.u32 %v3728, 7
  %v3730 = vsub.s32 6, %v3729
  %v3731 = vrot.slane %v3646, %v3730
  %3733 = vbcast.lane.b32.xlu0 %v3731, 256
  %v3734 = vpop.permute.xlu0 %3733
  %s3736 = sor.u32 256, 8
  %3737 = vbcast.lane.b32.xlu0 %v3731, %s3736
  %v3738 = vpop.permute.xlu0 %3737
  %v3739 = vlaneseq
  %v3740 = vshrl.u32 %v3739, 7
  %v3741 = vsub.s32 7, %v3740
  %v3742 = vrot.slane %v3646, %v3741
  %3744 = vbcast.lane.b32.xlu0 %v3742, 256
  %v3745 = vpop.permute.xlu0 %3744
  %s3747 = sor.u32 256, 8
  %3748 = vbcast.lane.b32.xlu0 %v3742, %s3747
  %v3749 = vpop.permute.xlu0 %3748
  %v3750 = vlaneseq
  %v3751 = vshrl.u32 %v3750, 7
  %v3752 = vsub.s32 0, %v3751
  %v3753 = vrot.slane %v3647, %v3752
  %3755 = vbcast.lane.b32.xlu0 %v3753, 256
  %v3756 = vpop.permute.xlu0 %3755
  %s3758 = sor.u32 256, 8
  %3759 = vbcast.lane.b32.xlu0 %v3753, %s3758
  %v3760 = vpop.permute.xlu0 %3759
  %v3761 = vlaneseq
  %v3762 = vshrl.u32 %v3761, 7
  %v3763 = vsub.s32 1, %v3762
  %v3764 = vrot.slane %v3647, %v3763
  %3766 = vbcast.lane.b32.xlu0 %v3764, 256
  %v3767 = vpop.permute.xlu0 %3766
  %s3769 = sor.u32 256, 8
  %3770 = vbcast.lane.b32.xlu0 %v3764, %s3769
  %v3771 = vpop.permute.xlu0 %3770
  %v3772 = vlaneseq
  %v3773 = vshrl.u32 %v3772, 7
  %v3774 = vsub.s32 2, %v3773
  %v3775 = vrot.slane %v3647, %v3774
  %3777 = vbcast.lane.b32.xlu0 %v3775, 256
  %v3778 = vpop.permute.xlu0 %3777
  %s3780 = sor.u32 256, 8
  %3781 = vbcast.lane.b32.xlu0 %v3775, %s3780
  %v3782 = vpop.permute.xlu0 %3781
  %v3783 = vlaneseq
  %v3784 = vshrl.u32 %v3783, 7
  %v3785 = vsub.s32 3, %v3784
  %v3786 = vrot.slane %v3647, %v3785
  %3788 = vbcast.lane.b32.xlu0 %v3786, 256
  %v3789 = vpop.permute.xlu0 %3788
  %s3791 = sor.u32 256, 8
  %3792 = vbcast.lane.b32.xlu0 %v3786, %s3791
  %v3793 = vpop.permute.xlu0 %3792
  %v3794 = vlaneseq
  %v3795 = vshrl.u32 %v3794, 7
  %v3796 = vsub.s32 4, %v3795
  %v3797 = vrot.slane %v3647, %v3796
  %3799 = vbcast.lane.b32.xlu0 %v3797, 256
  %v3800 = vpop.permute.xlu0 %3799
  %s3802 = sor.u32 256, 8
  %3803 = vbcast.lane.b32.xlu0 %v3797, %s3802
  %v3804 = vpop.permute.xlu0 %3803
  %v3805 = vlaneseq
  %v3806 = vshrl.u32 %v3805, 7
  %v3807 = vsub.s32 5, %v3806
  %v3808 = vrot.slane %v3647, %v3807
  %3810 = vbcast.lane.b32.xlu0 %v3808, 256
  %v3811 = vpop.permute.xlu0 %3810
  %s3813 = sor.u32 256, 8
  %3814 = vbcast.lane.b32.xlu0 %v3808, %s3813
  %v3815 = vpop.permute.xlu0 %3814
  %v3816 = vlaneseq
  %v3817 = vshrl.u32 %v3816, 7
  %v3818 = vsub.s32 6, %v3817
  %v3819 = vrot.slane %v3647, %v3818
  %3821 = vbcast.lane.b32.xlu0 %v3819, 256
  %v3822 = vpop.permute.xlu0 %3821
  %s3824 = sor.u32 256, 8
  %3825 = vbcast.lane.b32.xlu0 %v3819, %s3824
  %v3826 = vpop.permute.xlu0 %3825
  %v3827 = vlaneseq
  %v3828 = vshrl.u32 %v3827, 7
  %v3829 = vsub.s32 7, %v3828
  %v3830 = vrot.slane %v3647, %v3829
  %3832 = vbcast.lane.b32.xlu0 %v3830, 256
  %v3833 = vpop.permute.xlu0 %3832
  %s3835 = sor.u32 256, 8
  %3836 = vbcast.lane.b32.xlu0 %v3830, %s3835
  %v3837 = vpop.permute.xlu0 %3836
  %v3838 = vlaneseq
  %v3839 = vshrl.u32 %v3838, 7
  %v3840 = vsub.s32 0, %v3839
  %v3841 = vrot.slane %v3648, %v3840
  %3843 = vbcast.lane.b32.xlu0 %v3841, 256
  %v3844 = vpop.permute.xlu0 %3843
  %s3846 = sor.u32 256, 8
  %3847 = vbcast.lane.b32.xlu0 %v3841, %s3846
  %v3848 = vpop.permute.xlu0 %3847
  %v3849 = vlaneseq
  %v3850 = vshrl.u32 %v3849, 7
  %v3851 = vsub.s32 1, %v3850
  %v3852 = vrot.slane %v3648, %v3851
  %3854 = vbcast.lane.b32.xlu0 %v3852, 256
  %v3855 = vpop.permute.xlu0 %3854
  %s3857 = sor.u32 256, 8
  %3858 = vbcast.lane.b32.xlu0 %v3852, %s3857
  %v3859 = vpop.permute.xlu0 %3858
  %v3860 = vlaneseq
  %v3861 = vshrl.u32 %v3860, 7
  %v3862 = vsub.s32 2, %v3861
  %v3863 = vrot.slane %v3648, %v3862
  %3865 = vbcast.lane.b32.xlu0 %v3863, 256
  %v3866 = vpop.permute.xlu0 %3865
  %s3868 = sor.u32 256, 8
  %3869 = vbcast.lane.b32.xlu0 %v3863, %s3868
  %v3870 = vpop.permute.xlu0 %3869
  %v3871 = vlaneseq
  %v3872 = vshrl.u32 %v3871, 7
  %v3873 = vsub.s32 3, %v3872
  %v3874 = vrot.slane %v3648, %v3873
  %3876 = vbcast.lane.b32.xlu0 %v3874, 256
  %v3877 = vpop.permute.xlu0 %3876
  %s3879 = sor.u32 256, 8
  %3880 = vbcast.lane.b32.xlu0 %v3874, %s3879
  %v3881 = vpop.permute.xlu0 %3880
  %v3882 = vlaneseq
  %v3883 = vshrl.u32 %v3882, 7
  %v3884 = vsub.s32 4, %v3883
  %v3885 = vrot.slane %v3648, %v3884
  %3887 = vbcast.lane.b32.xlu0 %v3885, 256
  %v3888 = vpop.permute.xlu0 %3887
  %s3890 = sor.u32 256, 8
  %3891 = vbcast.lane.b32.xlu0 %v3885, %s3890
  %v3892 = vpop.permute.xlu0 %3891
  %v3893 = vlaneseq
  %v3894 = vshrl.u32 %v3893, 7
  %v3895 = vsub.s32 5, %v3894
  %v3896 = vrot.slane %v3648, %v3895
  %3898 = vbcast.lane.b32.xlu0 %v3896, 256
  %v3899 = vpop.permute.xlu0 %3898
  %s3901 = sor.u32 256, 8
  %3902 = vbcast.lane.b32.xlu0 %v3896, %s3901
  %v3903 = vpop.permute.xlu0 %3902
  %v3904 = vlaneseq
  %v3905 = vshrl.u32 %v3904, 7
  %v3906 = vsub.s32 6, %v3905
  %v3907 = vrot.slane %v3648, %v3906
  %3909 = vbcast.lane.b32.xlu0 %v3907, 256
  %v3910 = vpop.permute.xlu0 %3909
  %s3912 = sor.u32 256, 8
  %3913 = vbcast.lane.b32.xlu0 %v3907, %s3912
  %v3914 = vpop.permute.xlu0 %3913
  %v3915 = vlaneseq
  %v3916 = vshrl.u32 %v3915, 7
  %v3917 = vsub.s32 7, %v3916
  %v3918 = vrot.slane %v3648, %v3917
  %3920 = vbcast.lane.b32.xlu0 %v3918, 256
  %v3921 = vpop.permute.xlu0 %3920
  %s3923 = sor.u32 256, 8
  %3924 = vbcast.lane.b32.xlu0 %v3918, %s3923
  %v3925 = vpop.permute.xlu0 %3924
  %v3926 = vlaneseq
  %v3927 = vshrl.u32 %v3926, 7
  %v3928 = vsub.s32 0, %v3927
  %v3929 = vrot.slane %v3649, %v3928
  %3931 = vbcast.lane.b32.xlu0 %v3929, 256
  %v3932 = vpop.permute.xlu0 %3931
  %s3934 = sor.u32 256, 8
  %3935 = vbcast.lane.b32.xlu0 %v3929, %s3934
  %v3936 = vpop.permute.xlu0 %3935
  %v3937 = vlaneseq
  %v3938 = vshrl.u32 %v3937, 7
  %v3939 = vsub.s32 1, %v3938
  %v3940 = vrot.slane %v3649, %v3939
  %3942 = vbcast.lane.b32.xlu0 %v3940, 256
  %v3943 = vpop.permute.xlu0 %3942
  %s3945 = sor.u32 256, 8
  %3946 = vbcast.lane.b32.xlu0 %v3940, %s3945
  %v3947 = vpop.permute.xlu0 %3946
  %v3948 = vlaneseq
  %v3949 = vshrl.u32 %v3948, 7
  %v3950 = vsub.s32 2, %v3949
  %v3951 = vrot.slane %v3649, %v3950
  %3953 = vbcast.lane.b32.xlu0 %v3951, 256
  %v3954 = vpop.permute.xlu0 %3953
  %s3956 = sor.u32 256, 8
  %3957 = vbcast.lane.b32.xlu0 %v3951, %s3956
  %v3958 = vpop.permute.xlu0 %3957
  %v3959 = vlaneseq
  %v3960 = vshrl.u32 %v3959, 7
  %v3961 = vsub.s32 3, %v3960
  %v3962 = vrot.slane %v3649, %v3961
  %3964 = vbcast.lane.b32.xlu0 %v3962, 256
  %v3965 = vpop.permute.xlu0 %3964
  %s3967 = sor.u32 256, 8
  %3968 = vbcast.lane.b32.xlu0 %v3962, %s3967
  %v3969 = vpop.permute.xlu0 %3968
  %v3970 = vlaneseq
  %v3971 = vshrl.u32 %v3970, 7
  %v3972 = vsub.s32 4, %v3971
  %v3973 = vrot.slane %v3649, %v3972
  %3975 = vbcast.lane.b32.xlu0 %v3973, 256
  %v3976 = vpop.permute.xlu0 %3975
  %s3978 = sor.u32 256, 8
  %3979 = vbcast.lane.b32.xlu0 %v3973, %s3978
  %v3980 = vpop.permute.xlu0 %3979
  %v3981 = vlaneseq
  %v3982 = vshrl.u32 %v3981, 7
  %v3983 = vsub.s32 5, %v3982
  %v3984 = vrot.slane %v3649, %v3983
  %3986 = vbcast.lane.b32.xlu0 %v3984, 256
  %v3987 = vpop.permute.xlu0 %3986
  %s3989 = sor.u32 256, 8
  %3990 = vbcast.lane.b32.xlu0 %v3984, %s3989
  %v3991 = vpop.permute.xlu0 %3990
  %v3992 = vlaneseq
  %v3993 = vshrl.u32 %v3992, 7
  %v3994 = vsub.s32 6, %v3993
  %v3995 = vrot.slane %v3649, %v3994
  %3997 = vbcast.lane.b32.xlu0 %v3995, 256
  %v3998 = vpop.permute.xlu0 %3997
  %s4000 = sor.u32 256, 8
  %4001 = vbcast.lane.b32.xlu0 %v3995, %s4000
  %v4002 = vpop.permute.xlu0 %4001
  %v4003 = vlaneseq
  %v4004 = vshrl.u32 %v4003, 7
  %v4005 = vsub.s32 7, %v4004
  %v4006 = vrot.slane %v3649, %v4005
  %4008 = vbcast.lane.b32.xlu0 %v4006, 256
  %v4009 = vpop.permute.xlu0 %4008
  %s4011 = sor.u32 256, 8
  %4012 = vbcast.lane.b32.xlu0 %v4006, %s4011
  %v4013 = vpop.permute.xlu0 %4012
  %v4014 = vlaneseq
  %v4015 = vshrl.u32 %v4014, 7
  %v4016 = vsub.s32 0, %v4015
  %v4017 = vrot.slane %v3650, %v4016
  %4019 = vbcast.lane.b32.xlu0 %v4017, 256
  %v4020 = vpop.permute.xlu0 %4019
  %s4022 = sor.u32 256, 8
  %4023 = vbcast.lane.b32.xlu0 %v4017, %s4022
  %v4024 = vpop.permute.xlu0 %4023
  %v4025 = vlaneseq
  %v4026 = vshrl.u32 %v4025, 7
  %v4027 = vsub.s32 1, %v4026
  %v4028 = vrot.slane %v3650, %v4027
  %4030 = vbcast.lane.b32.xlu0 %v4028, 256
  %v4031 = vpop.permute.xlu0 %4030
  %s4033 = sor.u32 256, 8
  %4034 = vbcast.lane.b32.xlu0 %v4028, %s4033
  %v4035 = vpop.permute.xlu0 %4034
  %v4036 = vlaneseq
  %v4037 = vshrl.u32 %v4036, 7
  %v4038 = vsub.s32 2, %v4037
  %v4039 = vrot.slane %v3650, %v4038
  %4041 = vbcast.lane.b32.xlu0 %v4039, 256
  %v4042 = vpop.permute.xlu0 %4041
  %s4044 = sor.u32 256, 8
  %4045 = vbcast.lane.b32.xlu0 %v4039, %s4044
  %v4046 = vpop.permute.xlu0 %4045
  %v4047 = vlaneseq
  %v4048 = vshrl.u32 %v4047, 7
  %v4049 = vsub.s32 3, %v4048
  %v4050 = vrot.slane %v3650, %v4049
  %4052 = vbcast.lane.b32.xlu0 %v4050, 256
  %v4053 = vpop.permute.xlu0 %4052
  %s4055 = sor.u32 256, 8
  %4056 = vbcast.lane.b32.xlu0 %v4050, %s4055
  %v4057 = vpop.permute.xlu0 %4056
  %v4058 = vlaneseq
  %v4059 = vshrl.u32 %v4058, 7
  %v4060 = vsub.s32 4, %v4059
  %v4061 = vrot.slane %v3650, %v4060
  %4063 = vbcast.lane.b32.xlu0 %v4061, 256
  %v4064 = vpop.permute.xlu0 %4063
  %s4066 = sor.u32 256, 8
  %4067 = vbcast.lane.b32.xlu0 %v4061, %s4066
  %v4068 = vpop.permute.xlu0 %4067
  %v4069 = vlaneseq
  %v4070 = vshrl.u32 %v4069, 7
  %v4071 = vsub.s32 5, %v4070
  %v4072 = vrot.slane %v3650, %v4071
  %4074 = vbcast.lane.b32.xlu0 %v4072, 256
  %v4075 = vpop.permute.xlu0 %4074
  %s4077 = sor.u32 256, 8
  %4078 = vbcast.lane.b32.xlu0 %v4072, %s4077
  %v4079 = vpop.permute.xlu0 %4078
  %v4080 = vlaneseq
  %v4081 = vshrl.u32 %v4080, 7
  %v4082 = vsub.s32 6, %v4081
  %v4083 = vrot.slane %v3650, %v4082
  %4085 = vbcast.lane.b32.xlu0 %v4083, 256
  %v4086 = vpop.permute.xlu0 %4085
  %s4088 = sor.u32 256, 8
  %4089 = vbcast.lane.b32.xlu0 %v4083, %s4088
  %v4090 = vpop.permute.xlu0 %4089
  %v4091 = vlaneseq
  %v4092 = vshrl.u32 %v4091, 7
  %v4093 = vsub.s32 7, %v4092
  %v4094 = vrot.slane %v3650, %v4093
  %4096 = vbcast.lane.b32.xlu0 %v4094, 256
  %v4097 = vpop.permute.xlu0 %4096
  %s4099 = sor.u32 256, 8
  %4100 = vbcast.lane.b32.xlu0 %v4094, %s4099
  %v4101 = vpop.permute.xlu0 %4100
  %v4102 = vlaneseq
  %v4103 = vshrl.u32 %v4102, 7
  %v4104 = vsub.s32 0, %v4103
  %v4105 = vrot.slane %v3651, %v4104
  %4107 = vbcast.lane.b32.xlu0 %v4105, 256
  %v4108 = vpop.permute.xlu0 %4107
  %s4110 = sor.u32 256, 8
  %4111 = vbcast.lane.b32.xlu0 %v4105, %s4110
  %v4112 = vpop.permute.xlu0 %4111
  %v4113 = vlaneseq
  %v4114 = vshrl.u32 %v4113, 7
  %v4115 = vsub.s32 1, %v4114
  %v4116 = vrot.slane %v3651, %v4115
  %4118 = vbcast.lane.b32.xlu0 %v4116, 256
  %v4119 = vpop.permute.xlu0 %4118
  %s4121 = sor.u32 256, 8
  %4122 = vbcast.lane.b32.xlu0 %v4116, %s4121
  %v4123 = vpop.permute.xlu0 %4122
  %v4124 = vlaneseq
  %v4125 = vshrl.u32 %v4124, 7
  %v4126 = vsub.s32 2, %v4125
  %v4127 = vrot.slane %v3651, %v4126
  %4129 = vbcast.lane.b32.xlu0 %v4127, 256
  %v4130 = vpop.permute.xlu0 %4129
  %s4132 = sor.u32 256, 8
  %4133 = vbcast.lane.b32.xlu0 %v4127, %s4132
  %v4134 = vpop.permute.xlu0 %4133
  %v4135 = vlaneseq
  %v4136 = vshrl.u32 %v4135, 7
  %v4137 = vsub.s32 3, %v4136
  %v4138 = vrot.slane %v3651, %v4137
  %4140 = vbcast.lane.b32.xlu0 %v4138, 256
  %v4141 = vpop.permute.xlu0 %4140
  %s4143 = sor.u32 256, 8
  %4144 = vbcast.lane.b32.xlu0 %v4138, %s4143
  %v4145 = vpop.permute.xlu0 %4144
  %v4146 = vlaneseq
  %v4147 = vshrl.u32 %v4146, 7
  %v4148 = vsub.s32 4, %v4147
  %v4149 = vrot.slane %v3651, %v4148
  %4151 = vbcast.lane.b32.xlu0 %v4149, 256
  %v4152 = vpop.permute.xlu0 %4151
  %s4154 = sor.u32 256, 8
  %4155 = vbcast.lane.b32.xlu0 %v4149, %s4154
  %v4156 = vpop.permute.xlu0 %4155
  %v4157 = vlaneseq
  %v4158 = vshrl.u32 %v4157, 7
  %v4159 = vsub.s32 5, %v4158
  %v4160 = vrot.slane %v3651, %v4159
  %4162 = vbcast.lane.b32.xlu0 %v4160, 256
  %v4163 = vpop.permute.xlu0 %4162
  %s4165 = sor.u32 256, 8
  %4166 = vbcast.lane.b32.xlu0 %v4160, %s4165
  %v4167 = vpop.permute.xlu0 %4166
  %v4168 = vlaneseq
  %v4169 = vshrl.u32 %v4168, 7
  %v4170 = vsub.s32 6, %v4169
  %v4171 = vrot.slane %v3651, %v4170
  %4173 = vbcast.lane.b32.xlu0 %v4171, 256
  %v4174 = vpop.permute.xlu0 %4173
  %s4176 = sor.u32 256, 8
  %4177 = vbcast.lane.b32.xlu0 %v4171, %s4176
  %v4178 = vpop.permute.xlu0 %4177
  %v4179 = vlaneseq
  %v4180 = vshrl.u32 %v4179, 7
  %v4181 = vsub.s32 7, %v4180
  %v4182 = vrot.slane %v3651, %v4181
  %4184 = vbcast.lane.b32.xlu0 %v4182, 256
  %v4185 = vpop.permute.xlu0 %4184
  %s4187 = sor.u32 256, 8
  %4188 = vbcast.lane.b32.xlu0 %v4182, %s4187
  %v4189 = vpop.permute.xlu0 %4188
  %v4190 = vlaneseq
  %v4191 = vshrl.u32 %v4190, 7
  %v4192 = vsub.s32 0, %v4191
  %v4193 = vrot.slane %v3652, %v4192
  %4195 = vbcast.lane.b32.xlu0 %v4193, 256
  %v4196 = vpop.permute.xlu0 %4195
  %s4198 = sor.u32 256, 8
  %4199 = vbcast.lane.b32.xlu0 %v4193, %s4198
  %v4200 = vpop.permute.xlu0 %4199
  %v4201 = vlaneseq
  %v4202 = vshrl.u32 %v4201, 7
  %v4203 = vsub.s32 1, %v4202
  %v4204 = vrot.slane %v3652, %v4203
  %4206 = vbcast.lane.b32.xlu0 %v4204, 256
  %v4207 = vpop.permute.xlu0 %4206
  %s4209 = sor.u32 256, 8
  %4210 = vbcast.lane.b32.xlu0 %v4204, %s4209
  %v4211 = vpop.permute.xlu0 %4210
  %v4212 = vlaneseq
  %v4213 = vshrl.u32 %v4212, 7
  %v4214 = vsub.s32 2, %v4213
  %v4215 = vrot.slane %v3652, %v4214
  %4217 = vbcast.lane.b32.xlu0 %v4215, 256
  %v4218 = vpop.permute.xlu0 %4217
  %s4220 = sor.u32 256, 8
  %4221 = vbcast.lane.b32.xlu0 %v4215, %s4220
  %v4222 = vpop.permute.xlu0 %4221
  %v4223 = vlaneseq
  %v4224 = vshrl.u32 %v4223, 7
  %v4225 = vsub.s32 3, %v4224
  %v4226 = vrot.slane %v3652, %v4225
  %4228 = vbcast.lane.b32.xlu0 %v4226, 256
  %v4229 = vpop.permute.xlu0 %4228
  %s4231 = sor.u32 256, 8
  %4232 = vbcast.lane.b32.xlu0 %v4226, %s4231
  %v4233 = vpop.permute.xlu0 %4232
  %v4234 = vlaneseq
  %v4235 = vshrl.u32 %v4234, 7
  %v4236 = vsub.s32 4, %v4235
  %v4237 = vrot.slane %v3652, %v4236
  %4239 = vbcast.lane.b32.xlu0 %v4237, 256
  %v4240 = vpop.permute.xlu0 %4239
  %s4242 = sor.u32 256, 8
  %4243 = vbcast.lane.b32.xlu0 %v4237, %s4242
  %v4244 = vpop.permute.xlu0 %4243
  %v4245 = vlaneseq
  %v4246 = vshrl.u32 %v4245, 7
  %v4247 = vsub.s32 5, %v4246
  %v4248 = vrot.slane %v3652, %v4247
  %4250 = vbcast.lane.b32.xlu0 %v4248, 256
  %v4251 = vpop.permute.xlu0 %4250
  %s4253 = sor.u32 256, 8
  %4254 = vbcast.lane.b32.xlu0 %v4248, %s4253
  %v4255 = vpop.permute.xlu0 %4254
  %v4256 = vlaneseq
  %v4257 = vshrl.u32 %v4256, 7
  %v4258 = vsub.s32 6, %v4257
  %v4259 = vrot.slane %v3652, %v4258
  %4261 = vbcast.lane.b32.xlu0 %v4259, 256
  %v4262 = vpop.permute.xlu0 %4261
  %s4264 = sor.u32 256, 8
  %4265 = vbcast.lane.b32.xlu0 %v4259, %s4264
  %v4266 = vpop.permute.xlu0 %4265
  %v4267 = vlaneseq
  %v4268 = vshrl.u32 %v4267, 7
  %v4269 = vsub.s32 7, %v4268
  %v4270 = vrot.slane %v3652, %v4269
  %4272 = vbcast.lane.b32.xlu0 %v4270, 256
  %v4273 = vpop.permute.xlu0 %4272
  %s4275 = sor.u32 256, 8
  %4276 = vbcast.lane.b32.xlu0 %v4270, %s4275
  %v4277 = vpop.permute.xlu0 %4276
  %v4278 = vlaneseq
  %v4279 = vshrl.u32 %v4278, 7
  %v4280 = vsub.s32 0, %v4279
  %v4281 = vrot.slane %v3653, %v4280
  %4283 = vbcast.lane.b32.xlu0 %v4281, 256
  %v4284 = vpop.permute.xlu0 %4283
  %s4286 = sor.u32 256, 8
  %4287 = vbcast.lane.b32.xlu0 %v4281, %s4286
  %v4288 = vpop.permute.xlu0 %4287
  %v4289 = vlaneseq
  %v4290 = vshrl.u32 %v4289, 7
  %v4291 = vsub.s32 1, %v4290
  %v4292 = vrot.slane %v3653, %v4291
  %4294 = vbcast.lane.b32.xlu0 %v4292, 256
  %v4295 = vpop.permute.xlu0 %4294
  %s4297 = sor.u32 256, 8
  %4298 = vbcast.lane.b32.xlu0 %v4292, %s4297
  %v4299 = vpop.permute.xlu0 %4298
  %v4300 = vlaneseq
  %v4301 = vshrl.u32 %v4300, 7
  %v4302 = vsub.s32 2, %v4301
  %v4303 = vrot.slane %v3653, %v4302
  %4305 = vbcast.lane.b32.xlu0 %v4303, 256
  %v4306 = vpop.permute.xlu0 %4305
  %s4308 = sor.u32 256, 8
  %4309 = vbcast.lane.b32.xlu0 %v4303, %s4308
  %v4310 = vpop.permute.xlu0 %4309
  %v4311 = vlaneseq
  %v4312 = vshrl.u32 %v4311, 7
  %v4313 = vsub.s32 3, %v4312
  %v4314 = vrot.slane %v3653, %v4313
  %4316 = vbcast.lane.b32.xlu0 %v4314, 256
  %v4317 = vpop.permute.xlu0 %4316
  %s4319 = sor.u32 256, 8
  %4320 = vbcast.lane.b32.xlu0 %v4314, %s4319
  %v4321 = vpop.permute.xlu0 %4320
  %v4322 = vlaneseq
  %v4323 = vshrl.u32 %v4322, 7
  %v4324 = vsub.s32 4, %v4323
  %v4325 = vrot.slane %v3653, %v4324
  %4327 = vbcast.lane.b32.xlu0 %v4325, 256
  %v4328 = vpop.permute.xlu0 %4327
  %s4330 = sor.u32 256, 8
  %4331 = vbcast.lane.b32.xlu0 %v4325, %s4330
  %v4332 = vpop.permute.xlu0 %4331
  %v4333 = vlaneseq
  %v4334 = vshrl.u32 %v4333, 7
  %v4335 = vsub.s32 5, %v4334
  %v4336 = vrot.slane %v3653, %v4335
  %4338 = vbcast.lane.b32.xlu0 %v4336, 256
  %v4339 = vpop.permute.xlu0 %4338
  %s4341 = sor.u32 256, 8
  %4342 = vbcast.lane.b32.xlu0 %v4336, %s4341
  %v4343 = vpop.permute.xlu0 %4342
  %v4344 = vlaneseq
  %v4345 = vshrl.u32 %v4344, 7
  %v4346 = vsub.s32 6, %v4345
  %v4347 = vrot.slane %v3653, %v4346
  %4349 = vbcast.lane.b32.xlu0 %v4347, 256
  %v4350 = vpop.permute.xlu0 %4349
  %s4352 = sor.u32 256, 8
  %4353 = vbcast.lane.b32.xlu0 %v4347, %s4352
  %v4354 = vpop.permute.xlu0 %4353
  %v4355 = vlaneseq
  %v4356 = vshrl.u32 %v4355, 7
  %v4357 = vsub.s32 7, %v4356
  %v4358 = vrot.slane %v3653, %v4357
  %4360 = vbcast.lane.b32.xlu0 %v4358, 256
  %v4361 = vpop.permute.xlu0 %4360
  %s4363 = sor.u32 256, 8
  %4364 = vbcast.lane.b32.xlu0 %v4358, %s4363
  %v4365 = vpop.permute.xlu0 %4364
  %v4366 = vlaneseq
  %v4367 = vshrl.u32 %v4366, 7
  %v4368 = vsub.s32 0, %v4367
  %v4369 = vrot.slane %v3654, %v4368
  %4371 = vbcast.lane.b32.xlu0 %v4369, 256
  %v4372 = vpop.permute.xlu0 %4371
  %s4374 = sor.u32 256, 8
  %4375 = vbcast.lane.b32.xlu0 %v4369, %s4374
  %v4376 = vpop.permute.xlu0 %4375
  %v4377 = vlaneseq
  %v4378 = vshrl.u32 %v4377, 7
  %v4379 = vsub.s32 1, %v4378
  %v4380 = vrot.slane %v3654, %v4379
  %4382 = vbcast.lane.b32.xlu0 %v4380, 256
  %v4383 = vpop.permute.xlu0 %4382
  %s4385 = sor.u32 256, 8
  %4386 = vbcast.lane.b32.xlu0 %v4380, %s4385
  %v4387 = vpop.permute.xlu0 %4386
  %v4388 = vlaneseq
  %v4389 = vshrl.u32 %v4388, 7
  %v4390 = vsub.s32 2, %v4389
  %v4391 = vrot.slane %v3654, %v4390
  %4393 = vbcast.lane.b32.xlu0 %v4391, 256
  %v4394 = vpop.permute.xlu0 %4393
  %s4396 = sor.u32 256, 8
  %4397 = vbcast.lane.b32.xlu0 %v4391, %s4396
  %v4398 = vpop.permute.xlu0 %4397
  %v4399 = vlaneseq
  %v4400 = vshrl.u32 %v4399, 7
  %v4401 = vsub.s32 3, %v4400
  %v4402 = vrot.slane %v3654, %v4401
  %4404 = vbcast.lane.b32.xlu0 %v4402, 256
  %v4405 = vpop.permute.xlu0 %4404
  %s4407 = sor.u32 256, 8
  %4408 = vbcast.lane.b32.xlu0 %v4402, %s4407
  %v4409 = vpop.permute.xlu0 %4408
  %v4410 = vlaneseq
  %v4411 = vshrl.u32 %v4410, 7
  %v4412 = vsub.s32 4, %v4411
  %v4413 = vrot.slane %v3654, %v4412
  %4415 = vbcast.lane.b32.xlu0 %v4413, 256
  %v4416 = vpop.permute.xlu0 %4415
  %s4418 = sor.u32 256, 8
  %4419 = vbcast.lane.b32.xlu0 %v4413, %s4418
  %v4420 = vpop.permute.xlu0 %4419
  %v4421 = vlaneseq
  %v4422 = vshrl.u32 %v4421, 7
  %v4423 = vsub.s32 5, %v4422
  %v4424 = vrot.slane %v3654, %v4423
  %4426 = vbcast.lane.b32.xlu0 %v4424, 256
  %v4427 = vpop.permute.xlu0 %4426
  %s4429 = sor.u32 256, 8
  %4430 = vbcast.lane.b32.xlu0 %v4424, %s4429
  %v4431 = vpop.permute.xlu0 %4430
  %v4432 = vlaneseq
  %v4433 = vshrl.u32 %v4432, 7
  %v4434 = vsub.s32 6, %v4433
  %v4435 = vrot.slane %v3654, %v4434
  %4437 = vbcast.lane.b32.xlu0 %v4435, 256
  %v4438 = vpop.permute.xlu0 %4437
  %s4440 = sor.u32 256, 8
  %4441 = vbcast.lane.b32.xlu0 %v4435, %s4440
  %v4442 = vpop.permute.xlu0 %4441
  %v4443 = vlaneseq
  %v4444 = vshrl.u32 %v4443, 7
  %v4445 = vsub.s32 7, %v4444
  %v4446 = vrot.slane %v3654, %v4445
  %4448 = vbcast.lane.b32.xlu0 %v4446, 256
  %v4449 = vpop.permute.xlu0 %4448
  %s4451 = sor.u32 256, 8
  %4452 = vbcast.lane.b32.xlu0 %v4446, %s4451
  %v4453 = vpop.permute.xlu0 %4452
  %v4454 = vlaneseq
  %v4455 = vshrl.u32 %v4454, 7
  %v4456 = vsub.s32 0, %v4455
  %v4457 = vrot.slane %v3655, %v4456
  %4459 = vbcast.lane.b32.xlu0 %v4457, 256
  %v4460 = vpop.permute.xlu0 %4459
  %s4462 = sor.u32 256, 8
  %4463 = vbcast.lane.b32.xlu0 %v4457, %s4462
  %v4464 = vpop.permute.xlu0 %4463
  %v4465 = vlaneseq
  %v4466 = vshrl.u32 %v4465, 7
  %v4467 = vsub.s32 1, %v4466
  %v4468 = vrot.slane %v3655, %v4467
  %4470 = vbcast.lane.b32.xlu0 %v4468, 256
  %v4471 = vpop.permute.xlu0 %4470
  %s4473 = sor.u32 256, 8
  %4474 = vbcast.lane.b32.xlu0 %v4468, %s4473
  %v4475 = vpop.permute.xlu0 %4474
  %v4476 = vlaneseq
  %v4477 = vshrl.u32 %v4476, 7
  %v4478 = vsub.s32 2, %v4477
  %v4479 = vrot.slane %v3655, %v4478
  %4481 = vbcast.lane.b32.xlu0 %v4479, 256
  %v4482 = vpop.permute.xlu0 %4481
  %s4484 = sor.u32 256, 8
  %4485 = vbcast.lane.b32.xlu0 %v4479, %s4484
  %v4486 = vpop.permute.xlu0 %4485
  %v4487 = vlaneseq
  %v4488 = vshrl.u32 %v4487, 7
  %v4489 = vsub.s32 3, %v4488
  %v4490 = vrot.slane %v3655, %v4489
  %4492 = vbcast.lane.b32.xlu0 %v4490, 256
  %v4493 = vpop.permute.xlu0 %4492
  %s4495 = sor.u32 256, 8
  %4496 = vbcast.lane.b32.xlu0 %v4490, %s4495
  %v4497 = vpop.permute.xlu0 %4496
  %v4498 = vlaneseq
  %v4499 = vshrl.u32 %v4498, 7
  %v4500 = vsub.s32 4, %v4499
  %v4501 = vrot.slane %v3655, %v4500
  %4503 = vbcast.lane.b32.xlu0 %v4501, 256
  %v4504 = vpop.permute.xlu0 %4503
  %s4506 = sor.u32 256, 8
  %4507 = vbcast.lane.b32.xlu0 %v4501, %s4506
  %v4508 = vpop.permute.xlu0 %4507
  %v4509 = vlaneseq
  %v4510 = vshrl.u32 %v4509, 7
  %v4511 = vsub.s32 5, %v4510
  %v4512 = vrot.slane %v3655, %v4511
  %4514 = vbcast.lane.b32.xlu0 %v4512, 256
  %v4515 = vpop.permute.xlu0 %4514
  %s4517 = sor.u32 256, 8
  %4518 = vbcast.lane.b32.xlu0 %v4512, %s4517
  %v4519 = vpop.permute.xlu0 %4518
  %v4520 = vlaneseq
  %v4521 = vshrl.u32 %v4520, 7
  %v4522 = vsub.s32 6, %v4521
  %v4523 = vrot.slane %v3655, %v4522
  %4525 = vbcast.lane.b32.xlu0 %v4523, 256
  %v4526 = vpop.permute.xlu0 %4525
  %s4528 = sor.u32 256, 8
  %4529 = vbcast.lane.b32.xlu0 %v4523, %s4528
  %v4530 = vpop.permute.xlu0 %4529
  %v4531 = vlaneseq
  %v4532 = vshrl.u32 %v4531, 7
  %v4533 = vsub.s32 7, %v4532
  %v4534 = vrot.slane %v3655, %v4533
  %4536 = vbcast.lane.b32.xlu0 %v4534, 256
  %v4537 = vpop.permute.xlu0 %4536
  %s4539 = sor.u32 256, 8
  %4540 = vbcast.lane.b32.xlu0 %v4534, %s4539
  %v4541 = vpop.permute.xlu0 %4540
  %v4542 = vlaneseq
  %v4543 = vshrl.u32 %v4542, 7
  %v4544 = vsub.s32 0, %v4543
  %v4545 = vrot.slane %v3656, %v4544
  %4547 = vbcast.lane.b32.xlu0 %v4545, 256
  %v4548 = vpop.permute.xlu0 %4547
  %s4550 = sor.u32 256, 8
  %4551 = vbcast.lane.b32.xlu0 %v4545, %s4550
  %v4552 = vpop.permute.xlu0 %4551
  %v4553 = vlaneseq
  %v4554 = vshrl.u32 %v4553, 7
  %v4555 = vsub.s32 1, %v4554
  %v4556 = vrot.slane %v3656, %v4555
  %4558 = vbcast.lane.b32.xlu0 %v4556, 256
  %v4559 = vpop.permute.xlu0 %4558
  %s4561 = sor.u32 256, 8
  %4562 = vbcast.lane.b32.xlu0 %v4556, %s4561
  %v4563 = vpop.permute.xlu0 %4562
  %v4564 = vlaneseq
  %v4565 = vshrl.u32 %v4564, 7
  %v4566 = vsub.s32 2, %v4565
  %v4567 = vrot.slane %v3656, %v4566
  %4569 = vbcast.lane.b32.xlu0 %v4567, 256
  %v4570 = vpop.permute.xlu0 %4569
  %s4572 = sor.u32 256, 8
  %4573 = vbcast.lane.b32.xlu0 %v4567, %s4572
  %v4574 = vpop.permute.xlu0 %4573
  %v4575 = vlaneseq
  %v4576 = vshrl.u32 %v4575, 7
  %v4577 = vsub.s32 3, %v4576
  %v4578 = vrot.slane %v3656, %v4577
  %4580 = vbcast.lane.b32.xlu0 %v4578, 256
  %v4581 = vpop.permute.xlu0 %4580
  %s4583 = sor.u32 256, 8
  %4584 = vbcast.lane.b32.xlu0 %v4578, %s4583
  %v4585 = vpop.permute.xlu0 %4584
  %v4586 = vlaneseq
  %v4587 = vshrl.u32 %v4586, 7
  %v4588 = vsub.s32 4, %v4587
  %v4589 = vrot.slane %v3656, %v4588
  %4591 = vbcast.lane.b32.xlu0 %v4589, 256
  %v4592 = vpop.permute.xlu0 %4591
  %s4594 = sor.u32 256, 8
  %4595 = vbcast.lane.b32.xlu0 %v4589, %s4594
  %v4596 = vpop.permute.xlu0 %4595
  %v4597 = vlaneseq
  %v4598 = vshrl.u32 %v4597, 7
  %v4599 = vsub.s32 5, %v4598
  %v4600 = vrot.slane %v3656, %v4599
  %4602 = vbcast.lane.b32.xlu0 %v4600, 256
  %v4603 = vpop.permute.xlu0 %4602
  %s4605 = sor.u32 256, 8
  %4606 = vbcast.lane.b32.xlu0 %v4600, %s4605
  %v4607 = vpop.permute.xlu0 %4606
  %v4608 = vlaneseq
  %v4609 = vshrl.u32 %v4608, 7
  %v4610 = vsub.s32 6, %v4609
  %v4611 = vrot.slane %v3656, %v4610
  %4613 = vbcast.lane.b32.xlu0 %v4611, 256
  %v4614 = vpop.permute.xlu0 %4613
  %s4616 = sor.u32 256, 8
  %4617 = vbcast.lane.b32.xlu0 %v4611, %s4616
  %v4618 = vpop.permute.xlu0 %4617
  %v4619 = vlaneseq
  %v4620 = vshrl.u32 %v4619, 7
  %v4621 = vsub.s32 7, %v4620
  %v4622 = vrot.slane %v3656, %v4621
  %4624 = vbcast.lane.b32.xlu0 %v4622, 256
  %v4625 = vpop.permute.xlu0 %4624
  %s4627 = sor.u32 256, 8
  %4628 = vbcast.lane.b32.xlu0 %v4622, %s4627
  %v4629 = vpop.permute.xlu0 %4628
  %v4630 = vlaneseq
  %v4631 = vshrl.u32 %v4630, 7
  %v4632 = vsub.s32 0, %v4631
  %v4633 = vrot.slane %v3657, %v4632
  %4635 = vbcast.lane.b32.xlu0 %v4633, 256
  %v4636 = vpop.permute.xlu0 %4635
  %s4638 = sor.u32 256, 8
  %4639 = vbcast.lane.b32.xlu0 %v4633, %s4638
  %v4640 = vpop.permute.xlu0 %4639
  %v4641 = vlaneseq
  %v4642 = vshrl.u32 %v4641, 7
  %v4643 = vsub.s32 1, %v4642
  %v4644 = vrot.slane %v3657, %v4643
  %4646 = vbcast.lane.b32.xlu0 %v4644, 256
  %v4647 = vpop.permute.xlu0 %4646
  %s4649 = sor.u32 256, 8
  %4650 = vbcast.lane.b32.xlu0 %v4644, %s4649
  %v4651 = vpop.permute.xlu0 %4650
  %v4652 = vlaneseq
  %v4653 = vshrl.u32 %v4652, 7
  %v4654 = vsub.s32 2, %v4653
  %v4655 = vrot.slane %v3657, %v4654
  %4657 = vbcast.lane.b32.xlu0 %v4655, 256
  %v4658 = vpop.permute.xlu0 %4657
  %s4660 = sor.u32 256, 8
  %4661 = vbcast.lane.b32.xlu0 %v4655, %s4660
  %v4662 = vpop.permute.xlu0 %4661
  %v4663 = vlaneseq
  %v4664 = vshrl.u32 %v4663, 7
  %v4665 = vsub.s32 3, %v4664
  %v4666 = vrot.slane %v3657, %v4665
  %4668 = vbcast.lane.b32.xlu0 %v4666, 256
  %v4669 = vpop.permute.xlu0 %4668
  %s4671 = sor.u32 256, 8
  %4672 = vbcast.lane.b32.xlu0 %v4666, %s4671
  %v4673 = vpop.permute.xlu0 %4672
  %v4674 = vlaneseq
  %v4675 = vshrl.u32 %v4674, 7
  %v4676 = vsub.s32 4, %v4675
  %v4677 = vrot.slane %v3657, %v4676
  %4679 = vbcast.lane.b32.xlu0 %v4677, 256
  %v4680 = vpop.permute.xlu0 %4679
  %s4682 = sor.u32 256, 8
  %4683 = vbcast.lane.b32.xlu0 %v4677, %s4682
  %v4684 = vpop.permute.xlu0 %4683
  %v4685 = vlaneseq
  %v4686 = vshrl.u32 %v4685, 7
  %v4687 = vsub.s32 5, %v4686
  %v4688 = vrot.slane %v3657, %v4687
  %4690 = vbcast.lane.b32.xlu0 %v4688, 256
  %v4691 = vpop.permute.xlu0 %4690
  %s4693 = sor.u32 256, 8
  %4694 = vbcast.lane.b32.xlu0 %v4688, %s4693
  %v4695 = vpop.permute.xlu0 %4694
  %v4696 = vlaneseq
  %v4697 = vshrl.u32 %v4696, 7
  %v4698 = vsub.s32 6, %v4697
  %v4699 = vrot.slane %v3657, %v4698
  %4701 = vbcast.lane.b32.xlu0 %v4699, 256
  %v4702 = vpop.permute.xlu0 %4701
  %s4704 = sor.u32 256, 8
  %4705 = vbcast.lane.b32.xlu0 %v4699, %s4704
  %v4706 = vpop.permute.xlu0 %4705
  %v4707 = vlaneseq
  %v4708 = vshrl.u32 %v4707, 7
  %v4709 = vsub.s32 7, %v4708
  %v4710 = vrot.slane %v3657, %v4709
  %4712 = vbcast.lane.b32.xlu0 %v4710, 256
  %v4713 = vpop.permute.xlu0 %4712
  %s4715 = sor.u32 256, 8
  %4716 = vbcast.lane.b32.xlu0 %v4710, %s4715
  %v4717 = vpop.permute.xlu0 %4716
  %v4718 = vlaneseq
  %v4719 = vshrl.u32 %v4718, 7
  %v4720 = vsub.s32 0, %v4719
  %v4721 = vrot.slane %v3658, %v4720
  %4723 = vbcast.lane.b32.xlu0 %v4721, 256
  %v4724 = vpop.permute.xlu0 %4723
  %s4726 = sor.u32 256, 8
  %4727 = vbcast.lane.b32.xlu0 %v4721, %s4726
  %v4728 = vpop.permute.xlu0 %4727
  %v4729 = vlaneseq
  %v4730 = vshrl.u32 %v4729, 7
  %v4731 = vsub.s32 1, %v4730
  %v4732 = vrot.slane %v3658, %v4731
  %4734 = vbcast.lane.b32.xlu0 %v4732, 256
  %v4735 = vpop.permute.xlu0 %4734
  %s4737 = sor.u32 256, 8
  %4738 = vbcast.lane.b32.xlu0 %v4732, %s4737
  %v4739 = vpop.permute.xlu0 %4738
  %v4740 = vlaneseq
  %v4741 = vshrl.u32 %v4740, 7
  %v4742 = vsub.s32 2, %v4741
  %v4743 = vrot.slane %v3658, %v4742
  %4745 = vbcast.lane.b32.xlu0 %v4743, 256
  %v4746 = vpop.permute.xlu0 %4745
  %s4748 = sor.u32 256, 8
  %4749 = vbcast.lane.b32.xlu0 %v4743, %s4748
  %v4750 = vpop.permute.xlu0 %4749
  %v4751 = vlaneseq
  %v4752 = vshrl.u32 %v4751, 7
  %v4753 = vsub.s32 3, %v4752
  %v4754 = vrot.slane %v3658, %v4753
  %4756 = vbcast.lane.b32.xlu0 %v4754, 256
  %v4757 = vpop.permute.xlu0 %4756
  %s4759 = sor.u32 256, 8
  %4760 = vbcast.lane.b32.xlu0 %v4754, %s4759
  %v4761 = vpop.permute.xlu0 %4760
  %v4762 = vlaneseq
  %v4763 = vshrl.u32 %v4762, 7
  %v4764 = vsub.s32 4, %v4763
  %v4765 = vrot.slane %v3658, %v4764
  %4767 = vbcast.lane.b32.xlu0 %v4765, 256
  %v4768 = vpop.permute.xlu0 %4767
  %s4770 = sor.u32 256, 8
  %4771 = vbcast.lane.b32.xlu0 %v4765, %s4770
  %v4772 = vpop.permute.xlu0 %4771
  %v4773 = vlaneseq
  %v4774 = vshrl.u32 %v4773, 7
  %v4775 = vsub.s32 5, %v4774
  %v4776 = vrot.slane %v3658, %v4775
  %4778 = vbcast.lane.b32.xlu0 %v4776, 256
  %v4779 = vpop.permute.xlu0 %4778
  %s4781 = sor.u32 256, 8
  %4782 = vbcast.lane.b32.xlu0 %v4776, %s4781
  %v4783 = vpop.permute.xlu0 %4782
  %v4784 = vlaneseq
  %v4785 = vshrl.u32 %v4784, 7
  %v4786 = vsub.s32 6, %v4785
  %v4787 = vrot.slane %v3658, %v4786
  %4789 = vbcast.lane.b32.xlu0 %v4787, 256
  %v4790 = vpop.permute.xlu0 %4789
  %s4792 = sor.u32 256, 8
  %4793 = vbcast.lane.b32.xlu0 %v4787, %s4792
  %v4794 = vpop.permute.xlu0 %4793
  %v4795 = vlaneseq
  %v4796 = vshrl.u32 %v4795, 7
  %v4797 = vsub.s32 7, %v4796
  %v4798 = vrot.slane %v3658, %v4797
  %4800 = vbcast.lane.b32.xlu0 %v4798, 256
  %v4801 = vpop.permute.xlu0 %4800
  %s4803 = sor.u32 256, 8
  %4804 = vbcast.lane.b32.xlu0 %v4798, %s4803
  %v4805 = vpop.permute.xlu0 %4804
  %v4806 = vlaneseq
  %v4807 = vshrl.u32 %v4806, 7
  %v4808 = vsub.s32 0, %v4807
  %v4809 = vrot.slane %v3659, %v4808
  %4811 = vbcast.lane.b32.xlu0 %v4809, 256
  %v4812 = vpop.permute.xlu0 %4811
  %s4814 = sor.u32 256, 8
  %4815 = vbcast.lane.b32.xlu0 %v4809, %s4814
  %v4816 = vpop.permute.xlu0 %4815
  %v4817 = vlaneseq
  %v4818 = vshrl.u32 %v4817, 7
  %v4819 = vsub.s32 1, %v4818
  %v4820 = vrot.slane %v3659, %v4819
  %4822 = vbcast.lane.b32.xlu0 %v4820, 256
  %v4823 = vpop.permute.xlu0 %4822
  %s4825 = sor.u32 256, 8
  %4826 = vbcast.lane.b32.xlu0 %v4820, %s4825
  %v4827 = vpop.permute.xlu0 %4826
  %v4828 = vlaneseq
  %v4829 = vshrl.u32 %v4828, 7
  %v4830 = vsub.s32 2, %v4829
  %v4831 = vrot.slane %v3659, %v4830
  %4833 = vbcast.lane.b32.xlu0 %v4831, 256
  %v4834 = vpop.permute.xlu0 %4833
  %s4836 = sor.u32 256, 8
  %4837 = vbcast.lane.b32.xlu0 %v4831, %s4836
  %v4838 = vpop.permute.xlu0 %4837
  %v4839 = vlaneseq
  %v4840 = vshrl.u32 %v4839, 7
  %v4841 = vsub.s32 3, %v4840
  %v4842 = vrot.slane %v3659, %v4841
  %4844 = vbcast.lane.b32.xlu0 %v4842, 256
  %v4845 = vpop.permute.xlu0 %4844
  %s4847 = sor.u32 256, 8
  %4848 = vbcast.lane.b32.xlu0 %v4842, %s4847
  %v4849 = vpop.permute.xlu0 %4848
  %v4850 = vlaneseq
  %v4851 = vshrl.u32 %v4850, 7
  %v4852 = vsub.s32 4, %v4851
  %v4853 = vrot.slane %v3659, %v4852
  %4855 = vbcast.lane.b32.xlu0 %v4853, 256
  %v4856 = vpop.permute.xlu0 %4855
  %s4858 = sor.u32 256, 8
  %4859 = vbcast.lane.b32.xlu0 %v4853, %s4858
  %v4860 = vpop.permute.xlu0 %4859
  %v4861 = vlaneseq
  %v4862 = vshrl.u32 %v4861, 7
  %v4863 = vsub.s32 5, %v4862
  %v4864 = vrot.slane %v3659, %v4863
  %4866 = vbcast.lane.b32.xlu0 %v4864, 256
  %v4867 = vpop.permute.xlu0 %4866
  %s4869 = sor.u32 256, 8
  %4870 = vbcast.lane.b32.xlu0 %v4864, %s4869
  %v4871 = vpop.permute.xlu0 %4870
  %v4872 = vlaneseq
  %v4873 = vshrl.u32 %v4872, 7
  %v4874 = vsub.s32 6, %v4873
  %v4875 = vrot.slane %v3659, %v4874
  %4877 = vbcast.lane.b32.xlu0 %v4875, 256
  %v4878 = vpop.permute.xlu0 %4877
  %s4880 = sor.u32 256, 8
  %4881 = vbcast.lane.b32.xlu0 %v4875, %s4880
  %v4882 = vpop.permute.xlu0 %4881
  %v4883 = vlaneseq
  %v4884 = vshrl.u32 %v4883, 7
  %v4885 = vsub.s32 7, %v4884
  %v4886 = vrot.slane %v3659, %v4885
  %4888 = vbcast.lane.b32.xlu0 %v4886, 256
  %v4889 = vpop.permute.xlu0 %4888
  %s4891 = sor.u32 256, 8
  %4892 = vbcast.lane.b32.xlu0 %v4886, %s4891
  %v4893 = vpop.permute.xlu0 %4892
  %v4894 = vlaneseq
  %v4895 = vshrl.u32 %v4894, 7
  %v4896 = vsub.s32 0, %v4895
  %v4897 = vrot.slane %v3660, %v4896
  %4899 = vbcast.lane.b32.xlu0 %v4897, 256
  %v4900 = vpop.permute.xlu0 %4899
  %s4902 = sor.u32 256, 8
  %4903 = vbcast.lane.b32.xlu0 %v4897, %s4902
  %v4904 = vpop.permute.xlu0 %4903
  %v4905 = vlaneseq
  %v4906 = vshrl.u32 %v4905, 7
  %v4907 = vsub.s32 1, %v4906
  %v4908 = vrot.slane %v3660, %v4907
  %4910 = vbcast.lane.b32.xlu0 %v4908, 256
  %v4911 = vpop.permute.xlu0 %4910
  %s4913 = sor.u32 256, 8
  %4914 = vbcast.lane.b32.xlu0 %v4908, %s4913
  %v4915 = vpop.permute.xlu0 %4914
  %v4916 = vlaneseq
  %v4917 = vshrl.u32 %v4916, 7
  %v4918 = vsub.s32 2, %v4917
  %v4919 = vrot.slane %v3660, %v4918
  %4921 = vbcast.lane.b32.xlu0 %v4919, 256
  %v4922 = vpop.permute.xlu0 %4921
  %s4924 = sor.u32 256, 8
  %4925 = vbcast.lane.b32.xlu0 %v4919, %s4924
  %v4926 = vpop.permute.xlu0 %4925
  %v4927 = vlaneseq
  %v4928 = vshrl.u32 %v4927, 7
  %v4929 = vsub.s32 3, %v4928
  %v4930 = vrot.slane %v3660, %v4929
  %4932 = vbcast.lane.b32.xlu0 %v4930, 256
  %v4933 = vpop.permute.xlu0 %4932
  %s4935 = sor.u32 256, 8
  %4936 = vbcast.lane.b32.xlu0 %v4930, %s4935
  %v4937 = vpop.permute.xlu0 %4936
  %v4938 = vlaneseq
  %v4939 = vshrl.u32 %v4938, 7
  %v4940 = vsub.s32 4, %v4939
  %v4941 = vrot.slane %v3660, %v4940
  %4943 = vbcast.lane.b32.xlu0 %v4941, 256
  %v4944 = vpop.permute.xlu0 %4943
  %s4946 = sor.u32 256, 8
  %4947 = vbcast.lane.b32.xlu0 %v4941, %s4946
  %v4948 = vpop.permute.xlu0 %4947
  %v4949 = vlaneseq
  %v4950 = vshrl.u32 %v4949, 7
  %v4951 = vsub.s32 5, %v4950
  %v4952 = vrot.slane %v3660, %v4951
  %4954 = vbcast.lane.b32.xlu0 %v4952, 256
  %v4955 = vpop.permute.xlu0 %4954
  %s4957 = sor.u32 256, 8
  %4958 = vbcast.lane.b32.xlu0 %v4952, %s4957
  %v4959 = vpop.permute.xlu0 %4958
  %v4960 = vlaneseq
  %v4961 = vshrl.u32 %v4960, 7
  %v4962 = vsub.s32 6, %v4961
  %v4963 = vrot.slane %v3660, %v4962
  %4965 = vbcast.lane.b32.xlu0 %v4963, 256
  %v4966 = vpop.permute.xlu0 %4965
  %s4968 = sor.u32 256, 8
  %4969 = vbcast.lane.b32.xlu0 %v4963, %s4968
  %v4970 = vpop.permute.xlu0 %4969
  %v4971 = vlaneseq
  %v4972 = vshrl.u32 %v4971, 7
  %v4973 = vsub.s32 7, %v4972
  %v4974 = vrot.slane %v3660, %v4973
  %4976 = vbcast.lane.b32.xlu0 %v4974, 256
  %v4977 = vpop.permute.xlu0 %4976
  %s4979 = sor.u32 256, 8
  %4980 = vbcast.lane.b32.xlu0 %v4974, %s4979
  %v4981 = vpop.permute.xlu0 %4980
  %v4982 = vlaneseq
  %v4983 = vshrl.u32 %v4982, 7
  %v4984 = vsub.s32 0, %v4983
  %v4985 = vrot.slane %v3661, %v4984
  %4987 = vbcast.lane.b32.xlu0 %v4985, 256
  %v4988 = vpop.permute.xlu0 %4987
  %s4990 = sor.u32 256, 8
  %4991 = vbcast.lane.b32.xlu0 %v4985, %s4990
  %v4992 = vpop.permute.xlu0 %4991
  %v4993 = vlaneseq
  %v4994 = vshrl.u32 %v4993, 7
  %v4995 = vsub.s32 1, %v4994
  %v4996 = vrot.slane %v3661, %v4995
  %4998 = vbcast.lane.b32.xlu0 %v4996, 256
  %v4999 = vpop.permute.xlu0 %4998
  %s5001 = sor.u32 256, 8
  %5002 = vbcast.lane.b32.xlu0 %v4996, %s5001
  %v5003 = vpop.permute.xlu0 %5002
  %v5004 = vlaneseq
  %v5005 = vshrl.u32 %v5004, 7
  %v5006 = vsub.s32 2, %v5005
  %v5007 = vrot.slane %v3661, %v5006
  %5009 = vbcast.lane.b32.xlu0 %v5007, 256
  %v5010 = vpop.permute.xlu0 %5009
  %s5012 = sor.u32 256, 8
  %5013 = vbcast.lane.b32.xlu0 %v5007, %s5012
  %v5014 = vpop.permute.xlu0 %5013
  %v5015 = vlaneseq
  %v5016 = vshrl.u32 %v5015, 7
  %v5017 = vsub.s32 3, %v5016
  %v5018 = vrot.slane %v3661, %v5017
  %5020 = vbcast.lane.b32.xlu0 %v5018, 256
  %v5021 = vpop.permute.xlu0 %5020
  %s5023 = sor.u32 256, 8
  %5024 = vbcast.lane.b32.xlu0 %v5018, %s5023
  %v5025 = vpop.permute.xlu0 %5024
  %v5026 = vlaneseq
  %v5027 = vshrl.u32 %v5026, 7
  %v5028 = vsub.s32 4, %v5027
  %v5029 = vrot.slane %v3661, %v5028
  %5031 = vbcast.lane.b32.xlu0 %v5029, 256
  %v5032 = vpop.permute.xlu0 %5031
  %s5034 = sor.u32 256, 8
  %5035 = vbcast.lane.b32.xlu0 %v5029, %s5034
  %v5036 = vpop.permute.xlu0 %5035
  %v5037 = vlaneseq
  %v5038 = vshrl.u32 %v5037, 7
  %v5039 = vsub.s32 5, %v5038
  %v5040 = vrot.slane %v3661, %v5039
  %5042 = vbcast.lane.b32.xlu0 %v5040, 256
  %v5043 = vpop.permute.xlu0 %5042
  %s5045 = sor.u32 256, 8
  %5046 = vbcast.lane.b32.xlu0 %v5040, %s5045
  %v5047 = vpop.permute.xlu0 %5046
  %v5048 = vlaneseq
  %v5049 = vshrl.u32 %v5048, 7
  %v5050 = vsub.s32 6, %v5049
  %v5051 = vrot.slane %v3661, %v5050
  %5053 = vbcast.lane.b32.xlu0 %v5051, 256
  %v5054 = vpop.permute.xlu0 %5053
  %s5056 = sor.u32 256, 8
  %5057 = vbcast.lane.b32.xlu0 %v5051, %s5056
  %v5058 = vpop.permute.xlu0 %5057
  %v5059 = vlaneseq
  %v5060 = vshrl.u32 %v5059, 7
  %v5061 = vsub.s32 7, %v5060
  %v5062 = vrot.slane %v3661, %v5061
  %5064 = vbcast.lane.b32.xlu0 %v5062, 256
  %v5065 = vpop.permute.xlu0 %5064
  %s5067 = sor.u32 256, 8
  %5068 = vbcast.lane.b32.xlu0 %v5062, %s5067
  %v5069 = vpop.permute.xlu0 %5068
  %vm5070 = vcmp.eq.s32.totalorder %v3668, %v27
  %vm5071 = vcmp.eq.s32.totalorder %v3672, %v27
  %vm5072 = vcmp.eq.s32.totalorder %v3679, %v27
  %vm5073 = vcmp.eq.s32.totalorder %v3683, %v27
  %vm5074 = vcmp.eq.s32.totalorder %v3690, %v27
  %vm5075 = vcmp.eq.s32.totalorder %v3694, %v27
  %vm5076 = vcmp.eq.s32.totalorder %v3701, %v27
  %vm5077 = vcmp.eq.s32.totalorder %v3705, %v27
  %vm5078 = vcmp.eq.s32.totalorder %v3712, %v27
  %vm5079 = vcmp.eq.s32.totalorder %v3716, %v27
  %vm5080 = vcmp.eq.s32.totalorder %v3723, %v27
  %vm5081 = vcmp.eq.s32.totalorder %v3727, %v27
  %vm5082 = vcmp.eq.s32.totalorder %v3734, %v27
  %vm5083 = vcmp.eq.s32.totalorder %v3738, %v27
  %vm5084 = vcmp.eq.s32.totalorder %v3745, %v27
  %vm5085 = vcmp.eq.s32.totalorder %v3749, %v27
  %vm5086 = vcmp.eq.s32.totalorder %v3756, %v27
  %vm5087 = vcmp.eq.s32.totalorder %v3760, %v27
  %vm5088 = vcmp.eq.s32.totalorder %v3767, %v27
  %vm5089 = vcmp.eq.s32.totalorder %v3771, %v27
  %vm5090 = vcmp.eq.s32.totalorder %v3778, %v27
  %vm5091 = vcmp.eq.s32.totalorder %v3782, %v27
  %vm5092 = vcmp.eq.s32.totalorder %v3789, %v27
  %vm5093 = vcmp.eq.s32.totalorder %v3793, %v27
  %vm5094 = vcmp.eq.s32.totalorder %v3800, %v27
  %vm5095 = vcmp.eq.s32.totalorder %v3804, %v27
  %vm5096 = vcmp.eq.s32.totalorder %v3811, %v27
  %vm5097 = vcmp.eq.s32.totalorder %v3815, %v27
  %vm5098 = vcmp.eq.s32.totalorder %v3822, %v27
  %vm5099 = vcmp.eq.s32.totalorder %v3826, %v27
  %vm5100 = vcmp.eq.s32.totalorder %v3833, %v27
  %vm5101 = vcmp.eq.s32.totalorder %v3837, %v27
  %vm5102 = vcmp.eq.s32.totalorder %v3844, %v27
  %vm5103 = vcmp.eq.s32.totalorder %v3848, %v27
  %vm5104 = vcmp.eq.s32.totalorder %v3855, %v27
  %vm5105 = vcmp.eq.s32.totalorder %v3859, %v27
  %vm5106 = vcmp.eq.s32.totalorder %v3866, %v27
  %vm5107 = vcmp.eq.s32.totalorder %v3870, %v27
  %vm5108 = vcmp.eq.s32.totalorder %v3877, %v27
  %vm5109 = vcmp.eq.s32.totalorder %v3881, %v27
  %vm5110 = vcmp.eq.s32.totalorder %v3888, %v27
  %vm5111 = vcmp.eq.s32.totalorder %v3892, %v27
  %vm5112 = vcmp.eq.s32.totalorder %v3899, %v27
  %vm5113 = vcmp.eq.s32.totalorder %v3903, %v27
  %vm5114 = vcmp.eq.s32.totalorder %v3910, %v27
  %vm5115 = vcmp.eq.s32.totalorder %v3914, %v27
  %vm5116 = vcmp.eq.s32.totalorder %v3921, %v27
  %vm5117 = vcmp.eq.s32.totalorder %v3925, %v27
  %vm5118 = vcmp.eq.s32.totalorder %v3932, %v27
  %vm5119 = vcmp.eq.s32.totalorder %v3936, %v27
  %vm5120 = vcmp.eq.s32.totalorder %v3943, %v27
  %vm5121 = vcmp.eq.s32.totalorder %v3947, %v27
  %vm5122 = vcmp.eq.s32.totalorder %v3954, %v27
  %vm5123 = vcmp.eq.s32.totalorder %v3958, %v27
  %vm5124 = vcmp.eq.s32.totalorder %v3965, %v27
  %vm5125 = vcmp.eq.s32.totalorder %v3969, %v27
  %vm5126 = vcmp.eq.s32.totalorder %v3976, %v27
  %vm5127 = vcmp.eq.s32.totalorder %v3980, %v27
  %vm5128 = vcmp.eq.s32.totalorder %v3987, %v27
  %vm5129 = vcmp.eq.s32.totalorder %v3991, %v27
  %vm5130 = vcmp.eq.s32.totalorder %v3998, %v27
  %vm5131 = vcmp.eq.s32.totalorder %v4002, %v27
  %vm5132 = vcmp.eq.s32.totalorder %v4009, %v27
  %vm5133 = vcmp.eq.s32.totalorder %v4013, %v27
  %vm5134 = vcmp.eq.s32.totalorder %v4020, %v27
  %vm5135 = vcmp.eq.s32.totalorder %v4024, %v27
  %vm5136 = vcmp.eq.s32.totalorder %v4031, %v27
  %vm5137 = vcmp.eq.s32.totalorder %v4035, %v27
  %vm5138 = vcmp.eq.s32.totalorder %v4042, %v27
  %vm5139 = vcmp.eq.s32.totalorder %v4046, %v27
  %vm5140 = vcmp.eq.s32.totalorder %v4053, %v27
  %vm5141 = vcmp.eq.s32.totalorder %v4057, %v27
  %vm5142 = vcmp.eq.s32.totalorder %v4064, %v27
  %vm5143 = vcmp.eq.s32.totalorder %v4068, %v27
  %vm5144 = vcmp.eq.s32.totalorder %v4075, %v27
  %vm5145 = vcmp.eq.s32.totalorder %v4079, %v27
  %vm5146 = vcmp.eq.s32.totalorder %v4086, %v27
  %vm5147 = vcmp.eq.s32.totalorder %v4090, %v27
  %vm5148 = vcmp.eq.s32.totalorder %v4097, %v27
  %vm5149 = vcmp.eq.s32.totalorder %v4101, %v27
  %vm5150 = vcmp.eq.s32.totalorder %v4108, %v27
  %vm5151 = vcmp.eq.s32.totalorder %v4112, %v27
  %vm5152 = vcmp.eq.s32.totalorder %v4119, %v27
  %vm5153 = vcmp.eq.s32.totalorder %v4123, %v27
  %vm5154 = vcmp.eq.s32.totalorder %v4130, %v27
  %vm5155 = vcmp.eq.s32.totalorder %v4134, %v27
  %vm5156 = vcmp.eq.s32.totalorder %v4141, %v27
  %vm5157 = vcmp.eq.s32.totalorder %v4145, %v27
  %vm5158 = vcmp.eq.s32.totalorder %v4152, %v27
  %vm5159 = vcmp.eq.s32.totalorder %v4156, %v27
  %vm5160 = vcmp.eq.s32.totalorder %v4163, %v27
  %vm5161 = vcmp.eq.s32.totalorder %v4167, %v27
  %vm5162 = vcmp.eq.s32.totalorder %v4174, %v27
  %vm5163 = vcmp.eq.s32.totalorder %v4178, %v27
  %vm5164 = vcmp.eq.s32.totalorder %v4185, %v27
  %vm5165 = vcmp.eq.s32.totalorder %v4189, %v27
  %vm5166 = vcmp.eq.s32.totalorder %v4196, %v27
  %vm5167 = vcmp.eq.s32.totalorder %v4200, %v27
  %vm5168 = vcmp.eq.s32.totalorder %v4207, %v27
  %vm5169 = vcmp.eq.s32.totalorder %v4211, %v27
  %vm5170 = vcmp.eq.s32.totalorder %v4218, %v27
  %vm5171 = vcmp.eq.s32.totalorder %v4222, %v27
  %vm5172 = vcmp.eq.s32.totalorder %v4229, %v27
  %vm5173 = vcmp.eq.s32.totalorder %v4233, %v27
  %vm5174 = vcmp.eq.s32.totalorder %v4240, %v27
  %vm5175 = vcmp.eq.s32.totalorder %v4244, %v27
  %vm5176 = vcmp.eq.s32.totalorder %v4251, %v27
  %vm5177 = vcmp.eq.s32.totalorder %v4255, %v27
  %vm5178 = vcmp.eq.s32.totalorder %v4262, %v27
  %vm5179 = vcmp.eq.s32.totalorder %v4266, %v27
  %vm5180 = vcmp.eq.s32.totalorder %v4273, %v27
  %vm5181 = vcmp.eq.s32.totalorder %v4277, %v27
  %vm5182 = vcmp.eq.s32.totalorder %v4284, %v27
  %vm5183 = vcmp.eq.s32.totalorder %v4288, %v27
  %vm5184 = vcmp.eq.s32.totalorder %v4295, %v27
  %vm5185 = vcmp.eq.s32.totalorder %v4299, %v27
  %vm5186 = vcmp.eq.s32.totalorder %v4306, %v27
  %vm5187 = vcmp.eq.s32.totalorder %v4310, %v27
  %vm5188 = vcmp.eq.s32.totalorder %v4317, %v27
  %vm5189 = vcmp.eq.s32.totalorder %v4321, %v27
  %vm5190 = vcmp.eq.s32.totalorder %v4328, %v27
  %vm5191 = vcmp.eq.s32.totalorder %v4332, %v27
  %vm5192 = vcmp.eq.s32.totalorder %v4339, %v27
  %vm5193 = vcmp.eq.s32.totalorder %v4343, %v27
  %vm5194 = vcmp.eq.s32.totalorder %v4350, %v27
  %vm5195 = vcmp.eq.s32.totalorder %v4354, %v27
  %vm5196 = vcmp.eq.s32.totalorder %v4361, %v27
  %vm5197 = vcmp.eq.s32.totalorder %v4365, %v27
  %vm5198 = vcmp.eq.s32.totalorder %v4372, %v27
  %vm5199 = vcmp.eq.s32.totalorder %v4376, %v27
  %vm5200 = vcmp.eq.s32.totalorder %v4383, %v27
  %vm5201 = vcmp.eq.s32.totalorder %v4387, %v27
  %vm5202 = vcmp.eq.s32.totalorder %v4394, %v27
  %vm5203 = vcmp.eq.s32.totalorder %v4398, %v27
  %vm5204 = vcmp.eq.s32.totalorder %v4405, %v27
  %vm5205 = vcmp.eq.s32.totalorder %v4409, %v27
  %vm5206 = vcmp.eq.s32.totalorder %v4416, %v27
  %vm5207 = vcmp.eq.s32.totalorder %v4420, %v27
  %vm5208 = vcmp.eq.s32.totalorder %v4427, %v27
  %vm5209 = vcmp.eq.s32.totalorder %v4431, %v27
  %vm5210 = vcmp.eq.s32.totalorder %v4438, %v27
  %vm5211 = vcmp.eq.s32.totalorder %v4442, %v27
  %vm5212 = vcmp.eq.s32.totalorder %v4449, %v27
  %vm5213 = vcmp.eq.s32.totalorder %v4453, %v27
  %vm5214 = vcmp.eq.s32.totalorder %v4460, %v27
  %vm5215 = vcmp.eq.s32.totalorder %v4464, %v27
  %vm5216 = vcmp.eq.s32.totalorder %v4471, %v27
  %vm5217 = vcmp.eq.s32.totalorder %v4475, %v27
  %vm5218 = vcmp.eq.s32.totalorder %v4482, %v27
  %vm5219 = vcmp.eq.s32.totalorder %v4486, %v27
  %vm5220 = vcmp.eq.s32.totalorder %v4493, %v27
  %vm5221 = vcmp.eq.s32.totalorder %v4497, %v27
  %vm5222 = vcmp.eq.s32.totalorder %v4504, %v27
  %vm5223 = vcmp.eq.s32.totalorder %v4508, %v27
  %vm5224 = vcmp.eq.s32.totalorder %v4515, %v27
  %vm5225 = vcmp.eq.s32.totalorder %v4519, %v27
  %vm5226 = vcmp.eq.s32.totalorder %v4526, %v27
  %vm5227 = vcmp.eq.s32.totalorder %v4530, %v27
  %vm5228 = vcmp.eq.s32.totalorder %v4537, %v27
  %vm5229 = vcmp.eq.s32.totalorder %v4541, %v27
  %vm5230 = vcmp.eq.s32.totalorder %v4548, %v27
  %vm5231 = vcmp.eq.s32.totalorder %v4552, %v27
  %vm5232 = vcmp.eq.s32.totalorder %v4559, %v27
  %vm5233 = vcmp.eq.s32.totalorder %v4563, %v27
  %vm5234 = vcmp.eq.s32.totalorder %v4570, %v27
  %vm5235 = vcmp.eq.s32.totalorder %v4574, %v27
  %vm5236 = vcmp.eq.s32.totalorder %v4581, %v27
  %vm5237 = vcmp.eq.s32.totalorder %v4585, %v27
  %vm5238 = vcmp.eq.s32.totalorder %v4592, %v27
  %vm5239 = vcmp.eq.s32.totalorder %v4596, %v27
  %vm5240 = vcmp.eq.s32.totalorder %v4603, %v27
  %vm5241 = vcmp.eq.s32.totalorder %v4607, %v27
  %vm5242 = vcmp.eq.s32.totalorder %v4614, %v27
  %vm5243 = vcmp.eq.s32.totalorder %v4618, %v27
  %vm5244 = vcmp.eq.s32.totalorder %v4625, %v27
  %vm5245 = vcmp.eq.s32.totalorder %v4629, %v27
  %vm5246 = vcmp.eq.s32.totalorder %v4636, %v27
  %vm5247 = vcmp.eq.s32.totalorder %v4640, %v27
  %vm5248 = vcmp.eq.s32.totalorder %v4647, %v27
  %vm5249 = vcmp.eq.s32.totalorder %v4651, %v27
  %vm5250 = vcmp.eq.s32.totalorder %v4658, %v27
  %vm5251 = vcmp.eq.s32.totalorder %v4662, %v27
  %vm5252 = vcmp.eq.s32.totalorder %v4669, %v27
  %vm5253 = vcmp.eq.s32.totalorder %v4673, %v27
  %vm5254 = vcmp.eq.s32.totalorder %v4680, %v27
  %vm5255 = vcmp.eq.s32.totalorder %v4684, %v27
  %vm5256 = vcmp.eq.s32.totalorder %v4691, %v27
  %vm5257 = vcmp.eq.s32.totalorder %v4695, %v27
  %vm5258 = vcmp.eq.s32.totalorder %v4702, %v27
  %vm5259 = vcmp.eq.s32.totalorder %v4706, %v27
  %vm5260 = vcmp.eq.s32.totalorder %v4713, %v27
  %vm5261 = vcmp.eq.s32.totalorder %v4717, %v27
  %vm5262 = vcmp.eq.s32.totalorder %v4724, %v27
  %vm5263 = vcmp.eq.s32.totalorder %v4728, %v27
  %vm5264 = vcmp.eq.s32.totalorder %v4735, %v27
  %vm5265 = vcmp.eq.s32.totalorder %v4739, %v27
  %vm5266 = vcmp.eq.s32.totalorder %v4746, %v27
  %vm5267 = vcmp.eq.s32.totalorder %v4750, %v27
  %vm5268 = vcmp.eq.s32.totalorder %v4757, %v27
  %vm5269 = vcmp.eq.s32.totalorder %v4761, %v27
  %vm5270 = vcmp.eq.s32.totalorder %v4768, %v27
  %vm5271 = vcmp.eq.s32.totalorder %v4772, %v27
  %vm5272 = vcmp.eq.s32.totalorder %v4779, %v27
  %vm5273 = vcmp.eq.s32.totalorder %v4783, %v27
  %vm5274 = vcmp.eq.s32.totalorder %v4790, %v27
  %vm5275 = vcmp.eq.s32.totalorder %v4794, %v27
  %vm5276 = vcmp.eq.s32.totalorder %v4801, %v27
  %vm5277 = vcmp.eq.s32.totalorder %v4805, %v27
  %vm5278 = vcmp.eq.s32.totalorder %v4812, %v27
  %vm5279 = vcmp.eq.s32.totalorder %v4816, %v27
  %vm5280 = vcmp.eq.s32.totalorder %v4823, %v27
  %vm5281 = vcmp.eq.s32.totalorder %v4827, %v27
  %vm5282 = vcmp.eq.s32.totalorder %v4834, %v27
  %vm5283 = vcmp.eq.s32.totalorder %v4838, %v27
  %vm5284 = vcmp.eq.s32.totalorder %v4845, %v27
  %vm5285 = vcmp.eq.s32.totalorder %v4849, %v27
  %vm5286 = vcmp.eq.s32.totalorder %v4856, %v27
  %vm5287 = vcmp.eq.s32.totalorder %v4860, %v27
  %vm5288 = vcmp.eq.s32.totalorder %v4867, %v27
  %vm5289 = vcmp.eq.s32.totalorder %v4871, %v27
  %vm5290 = vcmp.eq.s32.totalorder %v4878, %v27
  %vm5291 = vcmp.eq.s32.totalorder %v4882, %v27
  %vm5292 = vcmp.eq.s32.totalorder %v4889, %v27
  %vm5293 = vcmp.eq.s32.totalorder %v4893, %v27
  %vm5294 = vcmp.eq.s32.totalorder %v4900, %v27
  %vm5295 = vcmp.eq.s32.totalorder %v4904, %v27
  %vm5296 = vcmp.eq.s32.totalorder %v4911, %v27
  %vm5297 = vcmp.eq.s32.totalorder %v4915, %v27
  %vm5298 = vcmp.eq.s32.totalorder %v4922, %v27
  %vm5299 = vcmp.eq.s32.totalorder %v4926, %v27
  %vm5300 = vcmp.eq.s32.totalorder %v4933, %v27
  %vm5301 = vcmp.eq.s32.totalorder %v4937, %v27
  %vm5302 = vcmp.eq.s32.totalorder %v4944, %v27
  %vm5303 = vcmp.eq.s32.totalorder %v4948, %v27
  %vm5304 = vcmp.eq.s32.totalorder %v4955, %v27
  %vm5305 = vcmp.eq.s32.totalorder %v4959, %v27
  %vm5306 = vcmp.eq.s32.totalorder %v4966, %v27
  %vm5307 = vcmp.eq.s32.totalorder %v4970, %v27
  %vm5308 = vcmp.eq.s32.totalorder %v4977, %v27
  %vm5309 = vcmp.eq.s32.totalorder %v4981, %v27
  %vm5310 = vcmp.eq.s32.totalorder %v4988, %v27
  %vm5311 = vcmp.eq.s32.totalorder %v4992, %v27
  %vm5312 = vcmp.eq.s32.totalorder %v4999, %v27
  %vm5313 = vcmp.eq.s32.totalorder %v5003, %v27
  %vm5314 = vcmp.eq.s32.totalorder %v5010, %v27
  %vm5315 = vcmp.eq.s32.totalorder %v5014, %v27
  %vm5316 = vcmp.eq.s32.totalorder %v5021, %v27
  %vm5317 = vcmp.eq.s32.totalorder %v5025, %v27
  %vm5318 = vcmp.eq.s32.totalorder %v5032, %v27
  %vm5319 = vcmp.eq.s32.totalorder %v5036, %v27
  %vm5320 = vcmp.eq.s32.totalorder %v5043, %v27
  %vm5321 = vcmp.eq.s32.totalorder %v5047, %v27
  %vm5322 = vcmp.eq.s32.totalorder %v5054, %v27
  %vm5323 = vcmp.eq.s32.totalorder %v5058, %v27
  %vm5324 = vcmp.eq.s32.totalorder %v5065, %v27
  %vm5325 = vcmp.eq.s32.totalorder %v5069, %v27
  %vm5326 = vmor %vm3389, %vm5070
  %vm5327 = vmor %vm3390, %vm5071
  %vm5328 = vmor %vm3391, %vm5072
  %vm5329 = vmor %vm3392, %vm5073
  %vm5330 = vmor %vm3393, %vm5074
  %vm5331 = vmor %vm3394, %vm5075
  %vm5332 = vmor %vm3395, %vm5076
  %vm5333 = vmor %vm3396, %vm5077
  %vm5334 = vmor %vm3397, %vm5078
  %vm5335 = vmor %vm3398, %vm5079
  %vm5336 = vmor %vm3399, %vm5080
  %vm5337 = vmor %vm3400, %vm5081
  %vm5338 = vmor %vm3401, %vm5082
  %vm5339 = vmor %vm3402, %vm5083
  %vm5340 = vmor %vm3403, %vm5084
  %vm5341 = vmor %vm3404, %vm5085
  %vm5342 = vmor %vm3405, %vm5086
  %vm5343 = vmor %vm3406, %vm5087
  %vm5344 = vmor %vm3407, %vm5088
  %vm5345 = vmor %vm3408, %vm5089
  %vm5346 = vmor %vm3409, %vm5090
  %vm5347 = vmor %vm3410, %vm5091
  %vm5348 = vmor %vm3411, %vm5092
  %vm5349 = vmor %vm3412, %vm5093
  %vm5350 = vmor %vm3413, %vm5094
  %vm5351 = vmor %vm3414, %vm5095
  %vm5352 = vmor %vm3415, %vm5096
  %vm5353 = vmor %vm3416, %vm5097
  %vm5354 = vmor %vm3417, %vm5098
  %vm5355 = vmor %vm3418, %vm5099
  %vm5356 = vmor %vm3419, %vm5100
  %vm5357 = vmor %vm3420, %vm5101
  %vm5358 = vmor %vm3421, %vm5102
  %vm5359 = vmor %vm3422, %vm5103
  %vm5360 = vmor %vm3423, %vm5104
  %vm5361 = vmor %vm3424, %vm5105
  %vm5362 = vmor %vm3425, %vm5106
  %vm5363 = vmor %vm3426, %vm5107
  %vm5364 = vmor %vm3427, %vm5108
  %vm5365 = vmor %vm3428, %vm5109
  %vm5366 = vmor %vm3429, %vm5110
  %vm5367 = vmor %vm3430, %vm5111
  %vm5368 = vmor %vm3431, %vm5112
  %vm5369 = vmor %vm3432, %vm5113
  %vm5370 = vmor %vm3433, %vm5114
  %vm5371 = vmor %vm3434, %vm5115
  %vm5372 = vmor %vm3435, %vm5116
  %vm5373 = vmor %vm3436, %vm5117
  %vm5374 = vmor %vm3437, %vm5118
  %vm5375 = vmor %vm3438, %vm5119
  %vm5376 = vmor %vm3439, %vm5120
  %vm5377 = vmor %vm3440, %vm5121
  %vm5378 = vmor %vm3441, %vm5122
  %vm5379 = vmor %vm3442, %vm5123
  %vm5380 = vmor %vm3443, %vm5124
  %vm5381 = vmor %vm3444, %vm5125
  %vm5382 = vmor %vm3445, %vm5126
  %vm5383 = vmor %vm3446, %vm5127
  %vm5384 = vmor %vm3447, %vm5128
  %vm5385 = vmor %vm3448, %vm5129
  %vm5386 = vmor %vm3449, %vm5130
  %vm5387 = vmor %vm3450, %vm5131
  %vm5388 = vmor %vm3451, %vm5132
  %vm5389 = vmor %vm3452, %vm5133
  %vm5390 = vmor %vm3453, %vm5134
  %vm5391 = vmor %vm3454, %vm5135
  %vm5392 = vmor %vm3455, %vm5136
  %vm5393 = vmor %vm3456, %vm5137
  %vm5394 = vmor %vm3457, %vm5138
  %vm5395 = vmor %vm3458, %vm5139
  %vm5396 = vmor %vm3459, %vm5140
  %vm5397 = vmor %vm3460, %vm5141
  %vm5398 = vmor %vm3461, %vm5142
  %vm5399 = vmor %vm3462, %vm5143
  %vm5400 = vmor %vm3463, %vm5144
  %vm5401 = vmor %vm3464, %vm5145
  %vm5402 = vmor %vm3465, %vm5146
  %vm5403 = vmor %vm3466, %vm5147
  %vm5404 = vmor %vm3467, %vm5148
  %vm5405 = vmor %vm3468, %vm5149
  %vm5406 = vmor %vm3469, %vm5150
  %vm5407 = vmor %vm3470, %vm5151
  %vm5408 = vmor %vm3471, %vm5152
  %vm5409 = vmor %vm3472, %vm5153
  %vm5410 = vmor %vm3473, %vm5154
  %vm5411 = vmor %vm3474, %vm5155
  %vm5412 = vmor %vm3475, %vm5156
  %vm5413 = vmor %vm3476, %vm5157
  %vm5414 = vmor %vm3477, %vm5158
  %vm5415 = vmor %vm3478, %vm5159
  %vm5416 = vmor %vm3479, %vm5160
  %vm5417 = vmor %vm3480, %vm5161
  %vm5418 = vmor %vm3481, %vm5162
  %vm5419 = vmor %vm3482, %vm5163
  %vm5420 = vmor %vm3483, %vm5164
  %vm5421 = vmor %vm3484, %vm5165
  %vm5422 = vmor %vm3485, %vm5166
  %vm5423 = vmor %vm3486, %vm5167
  %vm5424 = vmor %vm3487, %vm5168
  %vm5425 = vmor %vm3488, %vm5169
  %vm5426 = vmor %vm3489, %vm5170
  %vm5427 = vmor %vm3490, %vm5171
  %vm5428 = vmor %vm3491, %vm5172
  %vm5429 = vmor %vm3492, %vm5173
  %vm5430 = vmor %vm3493, %vm5174
  %vm5431 = vmor %vm3494, %vm5175
  %vm5432 = vmor %vm3495, %vm5176
  %vm5433 = vmor %vm3496, %vm5177
  %vm5434 = vmor %vm3497, %vm5178
  %vm5435 = vmor %vm3498, %vm5179
  %vm5436 = vmor %vm3499, %vm5180
  %vm5437 = vmor %vm3500, %vm5181
  %vm5438 = vmor %vm3501, %vm5182
  %vm5439 = vmor %vm3502, %vm5183
  %vm5440 = vmor %vm3503, %vm5184
  %vm5441 = vmor %vm3504, %vm5185
  %vm5442 = vmor %vm3505, %vm5186
  %vm5443 = vmor %vm3506, %vm5187
  %vm5444 = vmor %vm3507, %vm5188
  %vm5445 = vmor %vm3508, %vm5189
  %vm5446 = vmor %vm3509, %vm5190
  %vm5447 = vmor %vm3510, %vm5191
  %vm5448 = vmor %vm3511, %vm5192
  %vm5449 = vmor %vm3512, %vm5193
  %vm5450 = vmor %vm3513, %vm5194
  %vm5451 = vmor %vm3514, %vm5195
  %vm5452 = vmor %vm3515, %vm5196
  %vm5453 = vmor %vm3516, %vm5197
  %vm5454 = vmor %vm3517, %vm5198
  %vm5455 = vmor %vm3518, %vm5199
  %vm5456 = vmor %vm3519, %vm5200
  %vm5457 = vmor %vm3520, %vm5201
  %vm5458 = vmor %vm3521, %vm5202
  %vm5459 = vmor %vm3522, %vm5203
  %vm5460 = vmor %vm3523, %vm5204
  %vm5461 = vmor %vm3524, %vm5205
  %vm5462 = vmor %vm3525, %vm5206
  %vm5463 = vmor %vm3526, %vm5207
  %vm5464 = vmor %vm3527, %vm5208
  %vm5465 = vmor %vm3528, %vm5209
  %vm5466 = vmor %vm3529, %vm5210
  %vm5467 = vmor %vm3530, %vm5211
  %vm5468 = vmor %vm3531, %vm5212
  %vm5469 = vmor %vm3532, %vm5213
  %vm5470 = vmor %vm3533, %vm5214
  %vm5471 = vmor %vm3534, %vm5215
  %vm5472 = vmor %vm3535, %vm5216
  %vm5473 = vmor %vm3536, %vm5217
  %vm5474 = vmor %vm3537, %vm5218
  %vm5475 = vmor %vm3538, %vm5219
  %vm5476 = vmor %vm3539, %vm5220
  %vm5477 = vmor %vm3540, %vm5221
  %vm5478 = vmor %vm3541, %vm5222
  %vm5479 = vmor %vm3542, %vm5223
  %vm5480 = vmor %vm3543, %vm5224
  %vm5481 = vmor %vm3544, %vm5225
  %vm5482 = vmor %vm3545, %vm5226
  %vm5483 = vmor %vm3546, %vm5227
  %vm5484 = vmor %vm3547, %vm5228
  %vm5485 = vmor %vm3548, %vm5229
  %vm5486 = vmor %vm3549, %vm5230
  %vm5487 = vmor %vm3550, %vm5231
  %vm5488 = vmor %vm3551, %vm5232
  %vm5489 = vmor %vm3552, %vm5233
  %vm5490 = vmor %vm3553, %vm5234
  %vm5491 = vmor %vm3554, %vm5235
  %vm5492 = vmor %vm3555, %vm5236
  %vm5493 = vmor %vm3556, %vm5237
  %vm5494 = vmor %vm3557, %vm5238
  %vm5495 = vmor %vm3558, %vm5239
  %vm5496 = vmor %vm3559, %vm5240
  %vm5497 = vmor %vm3560, %vm5241
  %vm5498 = vmor %vm3561, %vm5242
  %vm5499 = vmor %vm3562, %vm5243
  %vm5500 = vmor %vm3563, %vm5244
  %vm5501 = vmor %vm3564, %vm5245
  %vm5502 = vmor %vm3565, %vm5246
  %vm5503 = vmor %vm3566, %vm5247
  %vm5504 = vmor %vm3567, %vm5248
  %vm5505 = vmor %vm3568, %vm5249
  %vm5506 = vmor %vm3569, %vm5250
  %vm5507 = vmor %vm3570, %vm5251
  %vm5508 = vmor %vm3571, %vm5252
  %vm5509 = vmor %vm3572, %vm5253
  %vm5510 = vmor %vm3573, %vm5254
  %vm5511 = vmor %vm3574, %vm5255
  %vm5512 = vmor %vm3575, %vm5256
  %vm5513 = vmor %vm3576, %vm5257
  %vm5514 = vmor %vm3577, %vm5258
  %vm5515 = vmor %vm3578, %vm5259
  %vm5516 = vmor %vm3579, %vm5260
  %vm5517 = vmor %vm3580, %vm5261
  %vm5518 = vmor %vm3581, %vm5262
  %vm5519 = vmor %vm3582, %vm5263
  %vm5520 = vmor %vm3583, %vm5264
  %vm5521 = vmor %vm3584, %vm5265
  %vm5522 = vmor %vm3585, %vm5266
  %vm5523 = vmor %vm3586, %vm5267
  %vm5524 = vmor %vm3587, %vm5268
  %vm5525 = vmor %vm3588, %vm5269
  %vm5526 = vmor %vm3589, %vm5270
  %vm5527 = vmor %vm3590, %vm5271
  %vm5528 = vmor %vm3591, %vm5272
  %vm5529 = vmor %vm3592, %vm5273
  %vm5530 = vmor %vm3593, %vm5274
  %vm5531 = vmor %vm3594, %vm5275
  %vm5532 = vmor %vm3595, %vm5276
  %vm5533 = vmor %vm3596, %vm5277
  %vm5534 = vmor %vm3597, %vm5278
  %vm5535 = vmor %vm3598, %vm5279
  %vm5536 = vmor %vm3599, %vm5280
  %vm5537 = vmor %vm3600, %vm5281
  %vm5538 = vmor %vm3601, %vm5282
  %vm5539 = vmor %vm3602, %vm5283
  %vm5540 = vmor %vm3603, %vm5284
  %vm5541 = vmor %vm3604, %vm5285
  %vm5542 = vmor %vm3605, %vm5286
  %vm5543 = vmor %vm3606, %vm5287
  %vm5544 = vmor %vm3607, %vm5288
  %vm5545 = vmor %vm3608, %vm5289
  %vm5546 = vmor %vm3609, %vm5290
  %vm5547 = vmor %vm3610, %vm5291
  %vm5548 = vmor %vm3611, %vm5292
  %vm5549 = vmor %vm3612, %vm5293
  %vm5550 = vmor %vm3613, %vm5294
  %vm5551 = vmor %vm3614, %vm5295
  %vm5552 = vmor %vm3615, %vm5296
  %vm5553 = vmor %vm3616, %vm5297
  %vm5554 = vmor %vm3617, %vm5298
  %vm5555 = vmor %vm3618, %vm5299
  %vm5556 = vmor %vm3619, %vm5300
  %vm5557 = vmor %vm3620, %vm5301
  %vm5558 = vmor %vm3621, %vm5302
  %vm5559 = vmor %vm3622, %vm5303
  %vm5560 = vmor %vm3623, %vm5304
  %vm5561 = vmor %vm3624, %vm5305
  %vm5562 = vmor %vm3625, %vm5306
  %vm5563 = vmor %vm3626, %vm5307
  %vm5564 = vmor %vm3627, %vm5308
  %vm5565 = vmor %vm3628, %vm5309
  %vm5566 = vmor %vm3629, %vm5310
  %vm5567 = vmor %vm3630, %vm5311
  %vm5568 = vmor %vm3631, %vm5312
  %vm5569 = vmor %vm3632, %vm5313
  %vm5570 = vmor %vm3633, %vm5314
  %vm5571 = vmor %vm3634, %vm5315
  %vm5572 = vmor %vm3635, %vm5316
  %vm5573 = vmor %vm3636, %vm5317
  %vm5574 = vmor %vm3637, %vm5318
  %vm5575 = vmor %vm3638, %vm5319
  %vm5576 = vmor %vm3639, %vm5320
  %vm5577 = vmor %vm3640, %vm5321
  %vm5578 = vmor %vm3641, %vm5322
  %vm5579 = vmor %vm3642, %vm5323
  %vm5580 = vmor %vm3643, %vm5324
  %vm5581 = vmor %vm3644, %vm5325
  %s5582 = scalar_lea.vmem %s0, 384
  %v5583 = vld [vmem:[%s5582] sm:$0xff]
  %v5584 = vld [vmem:[%s5582 + $0x8] sm:$0xff]
  %v5585 = vld [vmem:[%s5582 + $0x10] sm:$0xff]
  %v5586 = vld [vmem:[%s5582 + $0x18] sm:$0xff]
  %v5587 = vld [vmem:[%s5582 + $0x20] sm:$0xff]
  %v5588 = vld [vmem:[%s5582 + $0x28] sm:$0xff]
  %v5589 = vld [vmem:[%s5582 + $0x30] sm:$0xff]
  %v5590 = vld [vmem:[%s5582 + $0x38] sm:$0xff]
  %v5591 = vld [vmem:[%s5582 + $0x40] sm:$0xff]
  %v5592 = vld [vmem:[%s5582 + $0x48] sm:$0xff]
  %v5593 = vld [vmem:[%s5582 + $0x50] sm:$0xff]
  %v5594 = vld [vmem:[%s5582 + $0x58] sm:$0xff]
  %v5595 = vld [vmem:[%s5582 + $0x60] sm:$0xff]
  %v5596 = vld [vmem:[%s5582 + $0x68] sm:$0xff]
  %v5597 = vld [vmem:[%s5582 + $0x70] sm:$0xff]
  %v5598 = vld [vmem:[%s5582 + $0x78] sm:$0xff]
  %v5599 = vlaneseq
  %v5600 = vshrl.u32 %v5599, 7
  %v5601 = vsub.s32 0, %v5600
  %v5602 = vrot.slane %v5583, %v5601
  %5604 = vbcast.lane.b32.xlu0 %v5602, 256
  %v5605 = vpop.permute.xlu0 %5604
  %s5607 = sor.u32 256, 8
  %5608 = vbcast.lane.b32.xlu0 %v5602, %s5607
  %v5609 = vpop.permute.xlu0 %5608
  %v5610 = vlaneseq
  %v5611 = vshrl.u32 %v5610, 7
  %v5612 = vsub.s32 1, %v5611
  %v5613 = vrot.slane %v5583, %v5612
  %5615 = vbcast.lane.b32.xlu0 %v5613, 256
  %v5616 = vpop.permute.xlu0 %5615
  %s5618 = sor.u32 256, 8
  %5619 = vbcast.lane.b32.xlu0 %v5613, %s5618
  %v5620 = vpop.permute.xlu0 %5619
  %v5621 = vlaneseq
  %v5622 = vshrl.u32 %v5621, 7
  %v5623 = vsub.s32 2, %v5622
  %v5624 = vrot.slane %v5583, %v5623
  %5626 = vbcast.lane.b32.xlu0 %v5624, 256
  %v5627 = vpop.permute.xlu0 %5626
  %s5629 = sor.u32 256, 8
  %5630 = vbcast.lane.b32.xlu0 %v5624, %s5629
  %v5631 = vpop.permute.xlu0 %5630
  %v5632 = vlaneseq
  %v5633 = vshrl.u32 %v5632, 7
  %v5634 = vsub.s32 3, %v5633
  %v5635 = vrot.slane %v5583, %v5634
  %5637 = vbcast.lane.b32.xlu0 %v5635, 256
  %v5638 = vpop.permute.xlu0 %5637
  %s5640 = sor.u32 256, 8
  %5641 = vbcast.lane.b32.xlu0 %v5635, %s5640
  %v5642 = vpop.permute.xlu0 %5641
  %v5643 = vlaneseq
  %v5644 = vshrl.u32 %v5643, 7
  %v5645 = vsub.s32 4, %v5644
  %v5646 = vrot.slane %v5583, %v5645
  %5648 = vbcast.lane.b32.xlu0 %v5646, 256
  %v5649 = vpop.permute.xlu0 %5648
  %s5651 = sor.u32 256, 8
  %5652 = vbcast.lane.b32.xlu0 %v5646, %s5651
  %v5653 = vpop.permute.xlu0 %5652
  %v5654 = vlaneseq
  %v5655 = vshrl.u32 %v5654, 7
  %v5656 = vsub.s32 5, %v5655
  %v5657 = vrot.slane %v5583, %v5656
  %5659 = vbcast.lane.b32.xlu0 %v5657, 256
  %v5660 = vpop.permute.xlu0 %5659
  %s5662 = sor.u32 256, 8
  %5663 = vbcast.lane.b32.xlu0 %v5657, %s5662
  %v5664 = vpop.permute.xlu0 %5663
  %v5665 = vlaneseq
  %v5666 = vshrl.u32 %v5665, 7
  %v5667 = vsub.s32 6, %v5666
  %v5668 = vrot.slane %v5583, %v5667
  %5670 = vbcast.lane.b32.xlu0 %v5668, 256
  %v5671 = vpop.permute.xlu0 %5670
  %s5673 = sor.u32 256, 8
  %5674 = vbcast.lane.b32.xlu0 %v5668, %s5673
  %v5675 = vpop.permute.xlu0 %5674
  %v5676 = vlaneseq
  %v5677 = vshrl.u32 %v5676, 7
  %v5678 = vsub.s32 7, %v5677
  %v5679 = vrot.slane %v5583, %v5678
  %5681 = vbcast.lane.b32.xlu0 %v5679, 256
  %v5682 = vpop.permute.xlu0 %5681
  %s5684 = sor.u32 256, 8
  %5685 = vbcast.lane.b32.xlu0 %v5679, %s5684
  %v5686 = vpop.permute.xlu0 %5685
  %v5687 = vlaneseq
  %v5688 = vshrl.u32 %v5687, 7
  %v5689 = vsub.s32 0, %v5688
  %v5690 = vrot.slane %v5584, %v5689
  %5692 = vbcast.lane.b32.xlu0 %v5690, 256
  %v5693 = vpop.permute.xlu0 %5692
  %s5695 = sor.u32 256, 8
  %5696 = vbcast.lane.b32.xlu0 %v5690, %s5695
  %v5697 = vpop.permute.xlu0 %5696
  %v5698 = vlaneseq
  %v5699 = vshrl.u32 %v5698, 7
  %v5700 = vsub.s32 1, %v5699
  %v5701 = vrot.slane %v5584, %v5700
  %5703 = vbcast.lane.b32.xlu0 %v5701, 256
  %v5704 = vpop.permute.xlu0 %5703
  %s5706 = sor.u32 256, 8
  %5707 = vbcast.lane.b32.xlu0 %v5701, %s5706
  %v5708 = vpop.permute.xlu0 %5707
  %v5709 = vlaneseq
  %v5710 = vshrl.u32 %v5709, 7
  %v5711 = vsub.s32 2, %v5710
  %v5712 = vrot.slane %v5584, %v5711
  %5714 = vbcast.lane.b32.xlu0 %v5712, 256
  %v5715 = vpop.permute.xlu0 %5714
  %s5717 = sor.u32 256, 8
  %5718 = vbcast.lane.b32.xlu0 %v5712, %s5717
  %v5719 = vpop.permute.xlu0 %5718
  %v5720 = vlaneseq
  %v5721 = vshrl.u32 %v5720, 7
  %v5722 = vsub.s32 3, %v5721
  %v5723 = vrot.slane %v5584, %v5722
  %5725 = vbcast.lane.b32.xlu0 %v5723, 256
  %v5726 = vpop.permute.xlu0 %5725
  %s5728 = sor.u32 256, 8
  %5729 = vbcast.lane.b32.xlu0 %v5723, %s5728
  %v5730 = vpop.permute.xlu0 %5729
  %v5731 = vlaneseq
  %v5732 = vshrl.u32 %v5731, 7
  %v5733 = vsub.s32 4, %v5732
  %v5734 = vrot.slane %v5584, %v5733
  %5736 = vbcast.lane.b32.xlu0 %v5734, 256
  %v5737 = vpop.permute.xlu0 %5736
  %s5739 = sor.u32 256, 8
  %5740 = vbcast.lane.b32.xlu0 %v5734, %s5739
  %v5741 = vpop.permute.xlu0 %5740
  %v5742 = vlaneseq
  %v5743 = vshrl.u32 %v5742, 7
  %v5744 = vsub.s32 5, %v5743
  %v5745 = vrot.slane %v5584, %v5744
  %5747 = vbcast.lane.b32.xlu0 %v5745, 256
  %v5748 = vpop.permute.xlu0 %5747
  %s5750 = sor.u32 256, 8
  %5751 = vbcast.lane.b32.xlu0 %v5745, %s5750
  %v5752 = vpop.permute.xlu0 %5751
  %v5753 = vlaneseq
  %v5754 = vshrl.u32 %v5753, 7
  %v5755 = vsub.s32 6, %v5754
  %v5756 = vrot.slane %v5584, %v5755
  %5758 = vbcast.lane.b32.xlu0 %v5756, 256
  %v5759 = vpop.permute.xlu0 %5758
  %s5761 = sor.u32 256, 8
  %5762 = vbcast.lane.b32.xlu0 %v5756, %s5761
  %v5763 = vpop.permute.xlu0 %5762
  %v5764 = vlaneseq
  %v5765 = vshrl.u32 %v5764, 7
  %v5766 = vsub.s32 7, %v5765
  %v5767 = vrot.slane %v5584, %v5766
  %5769 = vbcast.lane.b32.xlu0 %v5767, 256
  %v5770 = vpop.permute.xlu0 %5769
  %s5772 = sor.u32 256, 8
  %5773 = vbcast.lane.b32.xlu0 %v5767, %s5772
  %v5774 = vpop.permute.xlu0 %5773
  %v5775 = vlaneseq
  %v5776 = vshrl.u32 %v5775, 7
  %v5777 = vsub.s32 0, %v5776
  %v5778 = vrot.slane %v5585, %v5777
  %5780 = vbcast.lane.b32.xlu0 %v5778, 256
  %v5781 = vpop.permute.xlu0 %5780
  %s5783 = sor.u32 256, 8
  %5784 = vbcast.lane.b32.xlu0 %v5778, %s5783
  %v5785 = vpop.permute.xlu0 %5784
  %v5786 = vlaneseq
  %v5787 = vshrl.u32 %v5786, 7
  %v5788 = vsub.s32 1, %v5787
  %v5789 = vrot.slane %v5585, %v5788
  %5791 = vbcast.lane.b32.xlu0 %v5789, 256
  %v5792 = vpop.permute.xlu0 %5791
  %s5794 = sor.u32 256, 8
  %5795 = vbcast.lane.b32.xlu0 %v5789, %s5794
  %v5796 = vpop.permute.xlu0 %5795
  %v5797 = vlaneseq
  %v5798 = vshrl.u32 %v5797, 7
  %v5799 = vsub.s32 2, %v5798
  %v5800 = vrot.slane %v5585, %v5799
  %5802 = vbcast.lane.b32.xlu0 %v5800, 256
  %v5803 = vpop.permute.xlu0 %5802
  %s5805 = sor.u32 256, 8
  %5806 = vbcast.lane.b32.xlu0 %v5800, %s5805
  %v5807 = vpop.permute.xlu0 %5806
  %v5808 = vlaneseq
  %v5809 = vshrl.u32 %v5808, 7
  %v5810 = vsub.s32 3, %v5809
  %v5811 = vrot.slane %v5585, %v5810
  %5813 = vbcast.lane.b32.xlu0 %v5811, 256
  %v5814 = vpop.permute.xlu0 %5813
  %s5816 = sor.u32 256, 8
  %5817 = vbcast.lane.b32.xlu0 %v5811, %s5816
  %v5818 = vpop.permute.xlu0 %5817
  %v5819 = vlaneseq
  %v5820 = vshrl.u32 %v5819, 7
  %v5821 = vsub.s32 4, %v5820
  %v5822 = vrot.slane %v5585, %v5821
  %5824 = vbcast.lane.b32.xlu0 %v5822, 256
  %v5825 = vpop.permute.xlu0 %5824
  %s5827 = sor.u32 256, 8
  %5828 = vbcast.lane.b32.xlu0 %v5822, %s5827
  %v5829 = vpop.permute.xlu0 %5828
  %v5830 = vlaneseq
  %v5831 = vshrl.u32 %v5830, 7
  %v5832 = vsub.s32 5, %v5831
  %v5833 = vrot.slane %v5585, %v5832
  %5835 = vbcast.lane.b32.xlu0 %v5833, 256
  %v5836 = vpop.permute.xlu0 %5835
  %s5838 = sor.u32 256, 8
  %5839 = vbcast.lane.b32.xlu0 %v5833, %s5838
  %v5840 = vpop.permute.xlu0 %5839
  %v5841 = vlaneseq
  %v5842 = vshrl.u32 %v5841, 7
  %v5843 = vsub.s32 6, %v5842
  %v5844 = vrot.slane %v5585, %v5843
  %5846 = vbcast.lane.b32.xlu0 %v5844, 256
  %v5847 = vpop.permute.xlu0 %5846
  %s5849 = sor.u32 256, 8
  %5850 = vbcast.lane.b32.xlu0 %v5844, %s5849
  %v5851 = vpop.permute.xlu0 %5850
  %v5852 = vlaneseq
  %v5853 = vshrl.u32 %v5852, 7
  %v5854 = vsub.s32 7, %v5853
  %v5855 = vrot.slane %v5585, %v5854
  %5857 = vbcast.lane.b32.xlu0 %v5855, 256
  %v5858 = vpop.permute.xlu0 %5857
  %s5860 = sor.u32 256, 8
  %5861 = vbcast.lane.b32.xlu0 %v5855, %s5860
  %v5862 = vpop.permute.xlu0 %5861
  %v5863 = vlaneseq
  %v5864 = vshrl.u32 %v5863, 7
  %v5865 = vsub.s32 0, %v5864
  %v5866 = vrot.slane %v5586, %v5865
  %5868 = vbcast.lane.b32.xlu0 %v5866, 256
  %v5869 = vpop.permute.xlu0 %5868
  %s5871 = sor.u32 256, 8
  %5872 = vbcast.lane.b32.xlu0 %v5866, %s5871
  %v5873 = vpop.permute.xlu0 %5872
  %v5874 = vlaneseq
  %v5875 = vshrl.u32 %v5874, 7
  %v5876 = vsub.s32 1, %v5875
  %v5877 = vrot.slane %v5586, %v5876
  %5879 = vbcast.lane.b32.xlu0 %v5877, 256
  %v5880 = vpop.permute.xlu0 %5879
  %s5882 = sor.u32 256, 8
  %5883 = vbcast.lane.b32.xlu0 %v5877, %s5882
  %v5884 = vpop.permute.xlu0 %5883
  %v5885 = vlaneseq
  %v5886 = vshrl.u32 %v5885, 7
  %v5887 = vsub.s32 2, %v5886
  %v5888 = vrot.slane %v5586, %v5887
  %5890 = vbcast.lane.b32.xlu0 %v5888, 256
  %v5891 = vpop.permute.xlu0 %5890
  %s5893 = sor.u32 256, 8
  %5894 = vbcast.lane.b32.xlu0 %v5888, %s5893
  %v5895 = vpop.permute.xlu0 %5894
  %v5896 = vlaneseq
  %v5897 = vshrl.u32 %v5896, 7
  %v5898 = vsub.s32 3, %v5897
  %v5899 = vrot.slane %v5586, %v5898
  %5901 = vbcast.lane.b32.xlu0 %v5899, 256
  %v5902 = vpop.permute.xlu0 %5901
  %s5904 = sor.u32 256, 8
  %5905 = vbcast.lane.b32.xlu0 %v5899, %s5904
  %v5906 = vpop.permute.xlu0 %5905
  %v5907 = vlaneseq
  %v5908 = vshrl.u32 %v5907, 7
  %v5909 = vsub.s32 4, %v5908
  %v5910 = vrot.slane %v5586, %v5909
  %5912 = vbcast.lane.b32.xlu0 %v5910, 256
  %v5913 = vpop.permute.xlu0 %5912
  %s5915 = sor.u32 256, 8
  %5916 = vbcast.lane.b32.xlu0 %v5910, %s5915
  %v5917 = vpop.permute.xlu0 %5916
  %v5918 = vlaneseq
  %v5919 = vshrl.u32 %v5918, 7
  %v5920 = vsub.s32 5, %v5919
  %v5921 = vrot.slane %v5586, %v5920
  %5923 = vbcast.lane.b32.xlu0 %v5921, 256
  %v5924 = vpop.permute.xlu0 %5923
  %s5926 = sor.u32 256, 8
  %5927 = vbcast.lane.b32.xlu0 %v5921, %s5926
  %v5928 = vpop.permute.xlu0 %5927
  %v5929 = vlaneseq
  %v5930 = vshrl.u32 %v5929, 7
  %v5931 = vsub.s32 6, %v5930
  %v5932 = vrot.slane %v5586, %v5931
  %5934 = vbcast.lane.b32.xlu0 %v5932, 256
  %v5935 = vpop.permute.xlu0 %5934
  %s5937 = sor.u32 256, 8
  %5938 = vbcast.lane.b32.xlu0 %v5932, %s5937
  %v5939 = vpop.permute.xlu0 %5938
  %v5940 = vlaneseq
  %v5941 = vshrl.u32 %v5940, 7
  %v5942 = vsub.s32 7, %v5941
  %v5943 = vrot.slane %v5586, %v5942
  %5945 = vbcast.lane.b32.xlu0 %v5943, 256
  %v5946 = vpop.permute.xlu0 %5945
  %s5948 = sor.u32 256, 8
  %5949 = vbcast.lane.b32.xlu0 %v5943, %s5948
  %v5950 = vpop.permute.xlu0 %5949
  %v5951 = vlaneseq
  %v5952 = vshrl.u32 %v5951, 7
  %v5953 = vsub.s32 0, %v5952
  %v5954 = vrot.slane %v5587, %v5953
  %5956 = vbcast.lane.b32.xlu0 %v5954, 256
  %v5957 = vpop.permute.xlu0 %5956
  %s5959 = sor.u32 256, 8
  %5960 = vbcast.lane.b32.xlu0 %v5954, %s5959
  %v5961 = vpop.permute.xlu0 %5960
  %v5962 = vlaneseq
  %v5963 = vshrl.u32 %v5962, 7
  %v5964 = vsub.s32 1, %v5963
  %v5965 = vrot.slane %v5587, %v5964
  %5967 = vbcast.lane.b32.xlu0 %v5965, 256
  %v5968 = vpop.permute.xlu0 %5967
  %s5970 = sor.u32 256, 8
  %5971 = vbcast.lane.b32.xlu0 %v5965, %s5970
  %v5972 = vpop.permute.xlu0 %5971
  %v5973 = vlaneseq
  %v5974 = vshrl.u32 %v5973, 7
  %v5975 = vsub.s32 2, %v5974
  %v5976 = vrot.slane %v5587, %v5975
  %5978 = vbcast.lane.b32.xlu0 %v5976, 256
  %v5979 = vpop.permute.xlu0 %5978
  %s5981 = sor.u32 256, 8
  %5982 = vbcast.lane.b32.xlu0 %v5976, %s5981
  %v5983 = vpop.permute.xlu0 %5982
  %v5984 = vlaneseq
  %v5985 = vshrl.u32 %v5984, 7
  %v5986 = vsub.s32 3, %v5985
  %v5987 = vrot.slane %v5587, %v5986
  %5989 = vbcast.lane.b32.xlu0 %v5987, 256
  %v5990 = vpop.permute.xlu0 %5989
  %s5992 = sor.u32 256, 8
  %5993 = vbcast.lane.b32.xlu0 %v5987, %s5992
  %v5994 = vpop.permute.xlu0 %5993
  %v5995 = vlaneseq
  %v5996 = vshrl.u32 %v5995, 7
  %v5997 = vsub.s32 4, %v5996
  %v5998 = vrot.slane %v5587, %v5997
  %6000 = vbcast.lane.b32.xlu0 %v5998, 256
  %v6001 = vpop.permute.xlu0 %6000
  %s6003 = sor.u32 256, 8
  %6004 = vbcast.lane.b32.xlu0 %v5998, %s6003
  %v6005 = vpop.permute.xlu0 %6004
  %v6006 = vlaneseq
  %v6007 = vshrl.u32 %v6006, 7
  %v6008 = vsub.s32 5, %v6007
  %v6009 = vrot.slane %v5587, %v6008
  %6011 = vbcast.lane.b32.xlu0 %v6009, 256
  %v6012 = vpop.permute.xlu0 %6011
  %s6014 = sor.u32 256, 8
  %6015 = vbcast.lane.b32.xlu0 %v6009, %s6014
  %v6016 = vpop.permute.xlu0 %6015
  %v6017 = vlaneseq
  %v6018 = vshrl.u32 %v6017, 7
  %v6019 = vsub.s32 6, %v6018
  %v6020 = vrot.slane %v5587, %v6019
  %6022 = vbcast.lane.b32.xlu0 %v6020, 256
  %v6023 = vpop.permute.xlu0 %6022
  %s6025 = sor.u32 256, 8
  %6026 = vbcast.lane.b32.xlu0 %v6020, %s6025
  %v6027 = vpop.permute.xlu0 %6026
  %v6028 = vlaneseq
  %v6029 = vshrl.u32 %v6028, 7
  %v6030 = vsub.s32 7, %v6029
  %v6031 = vrot.slane %v5587, %v6030
  %6033 = vbcast.lane.b32.xlu0 %v6031, 256
  %v6034 = vpop.permute.xlu0 %6033
  %s6036 = sor.u32 256, 8
  %6037 = vbcast.lane.b32.xlu0 %v6031, %s6036
  %v6038 = vpop.permute.xlu0 %6037
  %v6039 = vlaneseq
  %v6040 = vshrl.u32 %v6039, 7
  %v6041 = vsub.s32 0, %v6040
  %v6042 = vrot.slane %v5588, %v6041
  %6044 = vbcast.lane.b32.xlu0 %v6042, 256
  %v6045 = vpop.permute.xlu0 %6044
  %s6047 = sor.u32 256, 8
  %6048 = vbcast.lane.b32.xlu0 %v6042, %s6047
  %v6049 = vpop.permute.xlu0 %6048
  %v6050 = vlaneseq
  %v6051 = vshrl.u32 %v6050, 7
  %v6052 = vsub.s32 1, %v6051
  %v6053 = vrot.slane %v5588, %v6052
  %6055 = vbcast.lane.b32.xlu0 %v6053, 256
  %v6056 = vpop.permute.xlu0 %6055
  %s6058 = sor.u32 256, 8
  %6059 = vbcast.lane.b32.xlu0 %v6053, %s6058
  %v6060 = vpop.permute.xlu0 %6059
  %v6061 = vlaneseq
  %v6062 = vshrl.u32 %v6061, 7
  %v6063 = vsub.s32 2, %v6062
  %v6064 = vrot.slane %v5588, %v6063
  %6066 = vbcast.lane.b32.xlu0 %v6064, 256
  %v6067 = vpop.permute.xlu0 %6066
  %s6069 = sor.u32 256, 8
  %6070 = vbcast.lane.b32.xlu0 %v6064, %s6069
  %v6071 = vpop.permute.xlu0 %6070
  %v6072 = vlaneseq
  %v6073 = vshrl.u32 %v6072, 7
  %v6074 = vsub.s32 3, %v6073
  %v6075 = vrot.slane %v5588, %v6074
  %6077 = vbcast.lane.b32.xlu0 %v6075, 256
  %v6078 = vpop.permute.xlu0 %6077
  %s6080 = sor.u32 256, 8
  %6081 = vbcast.lane.b32.xlu0 %v6075, %s6080
  %v6082 = vpop.permute.xlu0 %6081
  %v6083 = vlaneseq
  %v6084 = vshrl.u32 %v6083, 7
  %v6085 = vsub.s32 4, %v6084
  %v6086 = vrot.slane %v5588, %v6085
  %6088 = vbcast.lane.b32.xlu0 %v6086, 256
  %v6089 = vpop.permute.xlu0 %6088
  %s6091 = sor.u32 256, 8
  %6092 = vbcast.lane.b32.xlu0 %v6086, %s6091
  %v6093 = vpop.permute.xlu0 %6092
  %v6094 = vlaneseq
  %v6095 = vshrl.u32 %v6094, 7
  %v6096 = vsub.s32 5, %v6095
  %v6097 = vrot.slane %v5588, %v6096
  %6099 = vbcast.lane.b32.xlu0 %v6097, 256
  %v6100 = vpop.permute.xlu0 %6099
  %s6102 = sor.u32 256, 8
  %6103 = vbcast.lane.b32.xlu0 %v6097, %s6102
  %v6104 = vpop.permute.xlu0 %6103
  %v6105 = vlaneseq
  %v6106 = vshrl.u32 %v6105, 7
  %v6107 = vsub.s32 6, %v6106
  %v6108 = vrot.slane %v5588, %v6107
  %6110 = vbcast.lane.b32.xlu0 %v6108, 256
  %v6111 = vpop.permute.xlu0 %6110
  %s6113 = sor.u32 256, 8
  %6114 = vbcast.lane.b32.xlu0 %v6108, %s6113
  %v6115 = vpop.permute.xlu0 %6114
  %v6116 = vlaneseq
  %v6117 = vshrl.u32 %v6116, 7
  %v6118 = vsub.s32 7, %v6117
  %v6119 = vrot.slane %v5588, %v6118
  %6121 = vbcast.lane.b32.xlu0 %v6119, 256
  %v6122 = vpop.permute.xlu0 %6121
  %s6124 = sor.u32 256, 8
  %6125 = vbcast.lane.b32.xlu0 %v6119, %s6124
  %v6126 = vpop.permute.xlu0 %6125
  %v6127 = vlaneseq
  %v6128 = vshrl.u32 %v6127, 7
  %v6129 = vsub.s32 0, %v6128
  %v6130 = vrot.slane %v5589, %v6129
  %6132 = vbcast.lane.b32.xlu0 %v6130, 256
  %v6133 = vpop.permute.xlu0 %6132
  %s6135 = sor.u32 256, 8
  %6136 = vbcast.lane.b32.xlu0 %v6130, %s6135
  %v6137 = vpop.permute.xlu0 %6136
  %v6138 = vlaneseq
  %v6139 = vshrl.u32 %v6138, 7
  %v6140 = vsub.s32 1, %v6139
  %v6141 = vrot.slane %v5589, %v6140
  %6143 = vbcast.lane.b32.xlu0 %v6141, 256
  %v6144 = vpop.permute.xlu0 %6143
  %s6146 = sor.u32 256, 8
  %6147 = vbcast.lane.b32.xlu0 %v6141, %s6146
  %v6148 = vpop.permute.xlu0 %6147
  %v6149 = vlaneseq
  %v6150 = vshrl.u32 %v6149, 7
  %v6151 = vsub.s32 2, %v6150
  %v6152 = vrot.slane %v5589, %v6151
  %6154 = vbcast.lane.b32.xlu0 %v6152, 256
  %v6155 = vpop.permute.xlu0 %6154
  %s6157 = sor.u32 256, 8
  %6158 = vbcast.lane.b32.xlu0 %v6152, %s6157
  %v6159 = vpop.permute.xlu0 %6158
  %v6160 = vlaneseq
  %v6161 = vshrl.u32 %v6160, 7
  %v6162 = vsub.s32 3, %v6161
  %v6163 = vrot.slane %v5589, %v6162
  %6165 = vbcast.lane.b32.xlu0 %v6163, 256
  %v6166 = vpop.permute.xlu0 %6165
  %s6168 = sor.u32 256, 8
  %6169 = vbcast.lane.b32.xlu0 %v6163, %s6168
  %v6170 = vpop.permute.xlu0 %6169
  %v6171 = vlaneseq
  %v6172 = vshrl.u32 %v6171, 7
  %v6173 = vsub.s32 4, %v6172
  %v6174 = vrot.slane %v5589, %v6173
  %6176 = vbcast.lane.b32.xlu0 %v6174, 256
  %v6177 = vpop.permute.xlu0 %6176
  %s6179 = sor.u32 256, 8
  %6180 = vbcast.lane.b32.xlu0 %v6174, %s6179
  %v6181 = vpop.permute.xlu0 %6180
  %v6182 = vlaneseq
  %v6183 = vshrl.u32 %v6182, 7
  %v6184 = vsub.s32 5, %v6183
  %v6185 = vrot.slane %v5589, %v6184
  %6187 = vbcast.lane.b32.xlu0 %v6185, 256
  %v6188 = vpop.permute.xlu0 %6187
  %s6190 = sor.u32 256, 8
  %6191 = vbcast.lane.b32.xlu0 %v6185, %s6190
  %v6192 = vpop.permute.xlu0 %6191
  %v6193 = vlaneseq
  %v6194 = vshrl.u32 %v6193, 7
  %v6195 = vsub.s32 6, %v6194
  %v6196 = vrot.slane %v5589, %v6195
  %6198 = vbcast.lane.b32.xlu0 %v6196, 256
  %v6199 = vpop.permute.xlu0 %6198
  %s6201 = sor.u32 256, 8
  %6202 = vbcast.lane.b32.xlu0 %v6196, %s6201
  %v6203 = vpop.permute.xlu0 %6202
  %v6204 = vlaneseq
  %v6205 = vshrl.u32 %v6204, 7
  %v6206 = vsub.s32 7, %v6205
  %v6207 = vrot.slane %v5589, %v6206
  %6209 = vbcast.lane.b32.xlu0 %v6207, 256
  %v6210 = vpop.permute.xlu0 %6209
  %s6212 = sor.u32 256, 8
  %6213 = vbcast.lane.b32.xlu0 %v6207, %s6212
  %v6214 = vpop.permute.xlu0 %6213
  %v6215 = vlaneseq
  %v6216 = vshrl.u32 %v6215, 7
  %v6217 = vsub.s32 0, %v6216
  %v6218 = vrot.slane %v5590, %v6217
  %6220 = vbcast.lane.b32.xlu0 %v6218, 256
  %v6221 = vpop.permute.xlu0 %6220
  %s6223 = sor.u32 256, 8
  %6224 = vbcast.lane.b32.xlu0 %v6218, %s6223
  %v6225 = vpop.permute.xlu0 %6224
  %v6226 = vlaneseq
  %v6227 = vshrl.u32 %v6226, 7
  %v6228 = vsub.s32 1, %v6227
  %v6229 = vrot.slane %v5590, %v6228
  %6231 = vbcast.lane.b32.xlu0 %v6229, 256
  %v6232 = vpop.permute.xlu0 %6231
  %s6234 = sor.u32 256, 8
  %6235 = vbcast.lane.b32.xlu0 %v6229, %s6234
  %v6236 = vpop.permute.xlu0 %6235
  %v6237 = vlaneseq
  %v6238 = vshrl.u32 %v6237, 7
  %v6239 = vsub.s32 2, %v6238
  %v6240 = vrot.slane %v5590, %v6239
  %6242 = vbcast.lane.b32.xlu0 %v6240, 256
  %v6243 = vpop.permute.xlu0 %6242
  %s6245 = sor.u32 256, 8
  %6246 = vbcast.lane.b32.xlu0 %v6240, %s6245
  %v6247 = vpop.permute.xlu0 %6246
  %v6248 = vlaneseq
  %v6249 = vshrl.u32 %v6248, 7
  %v6250 = vsub.s32 3, %v6249
  %v6251 = vrot.slane %v5590, %v6250
  %6253 = vbcast.lane.b32.xlu0 %v6251, 256
  %v6254 = vpop.permute.xlu0 %6253
  %s6256 = sor.u32 256, 8
  %6257 = vbcast.lane.b32.xlu0 %v6251, %s6256
  %v6258 = vpop.permute.xlu0 %6257
  %v6259 = vlaneseq
  %v6260 = vshrl.u32 %v6259, 7
  %v6261 = vsub.s32 4, %v6260
  %v6262 = vrot.slane %v5590, %v6261
  %6264 = vbcast.lane.b32.xlu0 %v6262, 256
  %v6265 = vpop.permute.xlu0 %6264
  %s6267 = sor.u32 256, 8
  %6268 = vbcast.lane.b32.xlu0 %v6262, %s6267
  %v6269 = vpop.permute.xlu0 %6268
  %v6270 = vlaneseq
  %v6271 = vshrl.u32 %v6270, 7
  %v6272 = vsub.s32 5, %v6271
  %v6273 = vrot.slane %v5590, %v6272
  %6275 = vbcast.lane.b32.xlu0 %v6273, 256
  %v6276 = vpop.permute.xlu0 %6275
  %s6278 = sor.u32 256, 8
  %6279 = vbcast.lane.b32.xlu0 %v6273, %s6278
  %v6280 = vpop.permute.xlu0 %6279
  %v6281 = vlaneseq
  %v6282 = vshrl.u32 %v6281, 7
  %v6283 = vsub.s32 6, %v6282
  %v6284 = vrot.slane %v5590, %v6283
  %6286 = vbcast.lane.b32.xlu0 %v6284, 256
  %v6287 = vpop.permute.xlu0 %6286
  %s6289 = sor.u32 256, 8
  %6290 = vbcast.lane.b32.xlu0 %v6284, %s6289
  %v6291 = vpop.permute.xlu0 %6290
  %v6292 = vlaneseq
  %v6293 = vshrl.u32 %v6292, 7
  %v6294 = vsub.s32 7, %v6293
  %v6295 = vrot.slane %v5590, %v6294
  %6297 = vbcast.lane.b32.xlu0 %v6295, 256
  %v6298 = vpop.permute.xlu0 %6297
  %s6300 = sor.u32 256, 8
  %6301 = vbcast.lane.b32.xlu0 %v6295, %s6300
  %v6302 = vpop.permute.xlu0 %6301
  %v6303 = vlaneseq
  %v6304 = vshrl.u32 %v6303, 7
  %v6305 = vsub.s32 0, %v6304
  %v6306 = vrot.slane %v5591, %v6305
  %6308 = vbcast.lane.b32.xlu0 %v6306, 256
  %v6309 = vpop.permute.xlu0 %6308
  %s6311 = sor.u32 256, 8
  %6312 = vbcast.lane.b32.xlu0 %v6306, %s6311
  %v6313 = vpop.permute.xlu0 %6312
  %v6314 = vlaneseq
  %v6315 = vshrl.u32 %v6314, 7
  %v6316 = vsub.s32 1, %v6315
  %v6317 = vrot.slane %v5591, %v6316
  %6319 = vbcast.lane.b32.xlu0 %v6317, 256
  %v6320 = vpop.permute.xlu0 %6319
  %s6322 = sor.u32 256, 8
  %6323 = vbcast.lane.b32.xlu0 %v6317, %s6322
  %v6324 = vpop.permute.xlu0 %6323
  %v6325 = vlaneseq
  %v6326 = vshrl.u32 %v6325, 7
  %v6327 = vsub.s32 2, %v6326
  %v6328 = vrot.slane %v5591, %v6327
  %6330 = vbcast.lane.b32.xlu0 %v6328, 256
  %v6331 = vpop.permute.xlu0 %6330
  %s6333 = sor.u32 256, 8
  %6334 = vbcast.lane.b32.xlu0 %v6328, %s6333
  %v6335 = vpop.permute.xlu0 %6334
  %v6336 = vlaneseq
  %v6337 = vshrl.u32 %v6336, 7
  %v6338 = vsub.s32 3, %v6337
  %v6339 = vrot.slane %v5591, %v6338
  %6341 = vbcast.lane.b32.xlu0 %v6339, 256
  %v6342 = vpop.permute.xlu0 %6341
  %s6344 = sor.u32 256, 8
  %6345 = vbcast.lane.b32.xlu0 %v6339, %s6344
  %v6346 = vpop.permute.xlu0 %6345
  %v6347 = vlaneseq
  %v6348 = vshrl.u32 %v6347, 7
  %v6349 = vsub.s32 4, %v6348
  %v6350 = vrot.slane %v5591, %v6349
  %6352 = vbcast.lane.b32.xlu0 %v6350, 256
  %v6353 = vpop.permute.xlu0 %6352
  %s6355 = sor.u32 256, 8
  %6356 = vbcast.lane.b32.xlu0 %v6350, %s6355
  %v6357 = vpop.permute.xlu0 %6356
  %v6358 = vlaneseq
  %v6359 = vshrl.u32 %v6358, 7
  %v6360 = vsub.s32 5, %v6359
  %v6361 = vrot.slane %v5591, %v6360
  %6363 = vbcast.lane.b32.xlu0 %v6361, 256
  %v6364 = vpop.permute.xlu0 %6363
  %s6366 = sor.u32 256, 8
  %6367 = vbcast.lane.b32.xlu0 %v6361, %s6366
  %v6368 = vpop.permute.xlu0 %6367
  %v6369 = vlaneseq
  %v6370 = vshrl.u32 %v6369, 7
  %v6371 = vsub.s32 6, %v6370
  %v6372 = vrot.slane %v5591, %v6371
  %6374 = vbcast.lane.b32.xlu0 %v6372, 256
  %v6375 = vpop.permute.xlu0 %6374
  %s6377 = sor.u32 256, 8
  %6378 = vbcast.lane.b32.xlu0 %v6372, %s6377
  %v6379 = vpop.permute.xlu0 %6378
  %v6380 = vlaneseq
  %v6381 = vshrl.u32 %v6380, 7
  %v6382 = vsub.s32 7, %v6381
  %v6383 = vrot.slane %v5591, %v6382
  %6385 = vbcast.lane.b32.xlu0 %v6383, 256
  %v6386 = vpop.permute.xlu0 %6385
  %s6388 = sor.u32 256, 8
  %6389 = vbcast.lane.b32.xlu0 %v6383, %s6388
  %v6390 = vpop.permute.xlu0 %6389
  %v6391 = vlaneseq
  %v6392 = vshrl.u32 %v6391, 7
  %v6393 = vsub.s32 0, %v6392
  %v6394 = vrot.slane %v5592, %v6393
  %6396 = vbcast.lane.b32.xlu0 %v6394, 256
  %v6397 = vpop.permute.xlu0 %6396
  %s6399 = sor.u32 256, 8
  %6400 = vbcast.lane.b32.xlu0 %v6394, %s6399
  %v6401 = vpop.permute.xlu0 %6400
  %v6402 = vlaneseq
  %v6403 = vshrl.u32 %v6402, 7
  %v6404 = vsub.s32 1, %v6403
  %v6405 = vrot.slane %v5592, %v6404
  %6407 = vbcast.lane.b32.xlu0 %v6405, 256
  %v6408 = vpop.permute.xlu0 %6407
  %s6410 = sor.u32 256, 8
  %6411 = vbcast.lane.b32.xlu0 %v6405, %s6410
  %v6412 = vpop.permute.xlu0 %6411
  %v6413 = vlaneseq
  %v6414 = vshrl.u32 %v6413, 7
  %v6415 = vsub.s32 2, %v6414
  %v6416 = vrot.slane %v5592, %v6415
  %6418 = vbcast.lane.b32.xlu0 %v6416, 256
  %v6419 = vpop.permute.xlu0 %6418
  %s6421 = sor.u32 256, 8
  %6422 = vbcast.lane.b32.xlu0 %v6416, %s6421
  %v6423 = vpop.permute.xlu0 %6422
  %v6424 = vlaneseq
  %v6425 = vshrl.u32 %v6424, 7
  %v6426 = vsub.s32 3, %v6425
  %v6427 = vrot.slane %v5592, %v6426
  %6429 = vbcast.lane.b32.xlu0 %v6427, 256
  %v6430 = vpop.permute.xlu0 %6429
  %s6432 = sor.u32 256, 8
  %6433 = vbcast.lane.b32.xlu0 %v6427, %s6432
  %v6434 = vpop.permute.xlu0 %6433
  %v6435 = vlaneseq
  %v6436 = vshrl.u32 %v6435, 7
  %v6437 = vsub.s32 4, %v6436
  %v6438 = vrot.slane %v5592, %v6437
  %6440 = vbcast.lane.b32.xlu0 %v6438, 256
  %v6441 = vpop.permute.xlu0 %6440
  %s6443 = sor.u32 256, 8
  %6444 = vbcast.lane.b32.xlu0 %v6438, %s6443
  %v6445 = vpop.permute.xlu0 %6444
  %v6446 = vlaneseq
  %v6447 = vshrl.u32 %v6446, 7
  %v6448 = vsub.s32 5, %v6447
  %v6449 = vrot.slane %v5592, %v6448
  %6451 = vbcast.lane.b32.xlu0 %v6449, 256
  %v6452 = vpop.permute.xlu0 %6451
  %s6454 = sor.u32 256, 8
  %6455 = vbcast.lane.b32.xlu0 %v6449, %s6454
  %v6456 = vpop.permute.xlu0 %6455
  %v6457 = vlaneseq
  %v6458 = vshrl.u32 %v6457, 7
  %v6459 = vsub.s32 6, %v6458
  %v6460 = vrot.slane %v5592, %v6459
  %6462 = vbcast.lane.b32.xlu0 %v6460, 256
  %v6463 = vpop.permute.xlu0 %6462
  %s6465 = sor.u32 256, 8
  %6466 = vbcast.lane.b32.xlu0 %v6460, %s6465
  %v6467 = vpop.permute.xlu0 %6466
  %v6468 = vlaneseq
  %v6469 = vshrl.u32 %v6468, 7
  %v6470 = vsub.s32 7, %v6469
  %v6471 = vrot.slane %v5592, %v6470
  %6473 = vbcast.lane.b32.xlu0 %v6471, 256
  %v6474 = vpop.permute.xlu0 %6473
  %s6476 = sor.u32 256, 8
  %6477 = vbcast.lane.b32.xlu0 %v6471, %s6476
  %v6478 = vpop.permute.xlu0 %6477
  %v6479 = vlaneseq
  %v6480 = vshrl.u32 %v6479, 7
  %v6481 = vsub.s32 0, %v6480
  %v6482 = vrot.slane %v5593, %v6481
  %6484 = vbcast.lane.b32.xlu0 %v6482, 256
  %v6485 = vpop.permute.xlu0 %6484
  %s6487 = sor.u32 256, 8
  %6488 = vbcast.lane.b32.xlu0 %v6482, %s6487
  %v6489 = vpop.permute.xlu0 %6488
  %v6490 = vlaneseq
  %v6491 = vshrl.u32 %v6490, 7
  %v6492 = vsub.s32 1, %v6491
  %v6493 = vrot.slane %v5593, %v6492
  %6495 = vbcast.lane.b32.xlu0 %v6493, 256
  %v6496 = vpop.permute.xlu0 %6495
  %s6498 = sor.u32 256, 8
  %6499 = vbcast.lane.b32.xlu0 %v6493, %s6498
  %v6500 = vpop.permute.xlu0 %6499
  %v6501 = vlaneseq
  %v6502 = vshrl.u32 %v6501, 7
  %v6503 = vsub.s32 2, %v6502
  %v6504 = vrot.slane %v5593, %v6503
  %6506 = vbcast.lane.b32.xlu0 %v6504, 256
  %v6507 = vpop.permute.xlu0 %6506
  %s6509 = sor.u32 256, 8
  %6510 = vbcast.lane.b32.xlu0 %v6504, %s6509
  %v6511 = vpop.permute.xlu0 %6510
  %v6512 = vlaneseq
  %v6513 = vshrl.u32 %v6512, 7
  %v6514 = vsub.s32 3, %v6513
  %v6515 = vrot.slane %v5593, %v6514
  %6517 = vbcast.lane.b32.xlu0 %v6515, 256
  %v6518 = vpop.permute.xlu0 %6517
  %s6520 = sor.u32 256, 8
  %6521 = vbcast.lane.b32.xlu0 %v6515, %s6520
  %v6522 = vpop.permute.xlu0 %6521
  %v6523 = vlaneseq
  %v6524 = vshrl.u32 %v6523, 7
  %v6525 = vsub.s32 4, %v6524
  %v6526 = vrot.slane %v5593, %v6525
  %6528 = vbcast.lane.b32.xlu0 %v6526, 256
  %v6529 = vpop.permute.xlu0 %6528
  %s6531 = sor.u32 256, 8
  %6532 = vbcast.lane.b32.xlu0 %v6526, %s6531
  %v6533 = vpop.permute.xlu0 %6532
  %v6534 = vlaneseq
  %v6535 = vshrl.u32 %v6534, 7
  %v6536 = vsub.s32 5, %v6535
  %v6537 = vrot.slane %v5593, %v6536
  %6539 = vbcast.lane.b32.xlu0 %v6537, 256
  %v6540 = vpop.permute.xlu0 %6539
  %s6542 = sor.u32 256, 8
  %6543 = vbcast.lane.b32.xlu0 %v6537, %s6542
  %v6544 = vpop.permute.xlu0 %6543
  %v6545 = vlaneseq
  %v6546 = vshrl.u32 %v6545, 7
  %v6547 = vsub.s32 6, %v6546
  %v6548 = vrot.slane %v5593, %v6547
  %6550 = vbcast.lane.b32.xlu0 %v6548, 256
  %v6551 = vpop.permute.xlu0 %6550
  %s6553 = sor.u32 256, 8
  %6554 = vbcast.lane.b32.xlu0 %v6548, %s6553
  %v6555 = vpop.permute.xlu0 %6554
  %v6556 = vlaneseq
  %v6557 = vshrl.u32 %v6556, 7
  %v6558 = vsub.s32 7, %v6557
  %v6559 = vrot.slane %v5593, %v6558
  %6561 = vbcast.lane.b32.xlu0 %v6559, 256
  %v6562 = vpop.permute.xlu0 %6561
  %s6564 = sor.u32 256, 8
  %6565 = vbcast.lane.b32.xlu0 %v6559, %s6564
  %v6566 = vpop.permute.xlu0 %6565
  %v6567 = vlaneseq
  %v6568 = vshrl.u32 %v6567, 7
  %v6569 = vsub.s32 0, %v6568
  %v6570 = vrot.slane %v5594, %v6569
  %6572 = vbcast.lane.b32.xlu0 %v6570, 256
  %v6573 = vpop.permute.xlu0 %6572
  %s6575 = sor.u32 256, 8
  %6576 = vbcast.lane.b32.xlu0 %v6570, %s6575
  %v6577 = vpop.permute.xlu0 %6576
  %v6578 = vlaneseq
  %v6579 = vshrl.u32 %v6578, 7
  %v6580 = vsub.s32 1, %v6579
  %v6581 = vrot.slane %v5594, %v6580
  %6583 = vbcast.lane.b32.xlu0 %v6581, 256
  %v6584 = vpop.permute.xlu0 %6583
  %s6586 = sor.u32 256, 8
  %6587 = vbcast.lane.b32.xlu0 %v6581, %s6586
  %v6588 = vpop.permute.xlu0 %6587
  %v6589 = vlaneseq
  %v6590 = vshrl.u32 %v6589, 7
  %v6591 = vsub.s32 2, %v6590
  %v6592 = vrot.slane %v5594, %v6591
  %6594 = vbcast.lane.b32.xlu0 %v6592, 256
  %v6595 = vpop.permute.xlu0 %6594
  %s6597 = sor.u32 256, 8
  %6598 = vbcast.lane.b32.xlu0 %v6592, %s6597
  %v6599 = vpop.permute.xlu0 %6598
  %v6600 = vlaneseq
  %v6601 = vshrl.u32 %v6600, 7
  %v6602 = vsub.s32 3, %v6601
  %v6603 = vrot.slane %v5594, %v6602
  %6605 = vbcast.lane.b32.xlu0 %v6603, 256
  %v6606 = vpop.permute.xlu0 %6605
  %s6608 = sor.u32 256, 8
  %6609 = vbcast.lane.b32.xlu0 %v6603, %s6608
  %v6610 = vpop.permute.xlu0 %6609
  %v6611 = vlaneseq
  %v6612 = vshrl.u32 %v6611, 7
  %v6613 = vsub.s32 4, %v6612
  %v6614 = vrot.slane %v5594, %v6613
  %6616 = vbcast.lane.b32.xlu0 %v6614, 256
  %v6617 = vpop.permute.xlu0 %6616
  %s6619 = sor.u32 256, 8
  %6620 = vbcast.lane.b32.xlu0 %v6614, %s6619
  %v6621 = vpop.permute.xlu0 %6620
  %v6622 = vlaneseq
  %v6623 = vshrl.u32 %v6622, 7
  %v6624 = vsub.s32 5, %v6623
  %v6625 = vrot.slane %v5594, %v6624
  %6627 = vbcast.lane.b32.xlu0 %v6625, 256
  %v6628 = vpop.permute.xlu0 %6627
  %s6630 = sor.u32 256, 8
  %6631 = vbcast.lane.b32.xlu0 %v6625, %s6630
  %v6632 = vpop.permute.xlu0 %6631
  %v6633 = vlaneseq
  %v6634 = vshrl.u32 %v6633, 7
  %v6635 = vsub.s32 6, %v6634
  %v6636 = vrot.slane %v5594, %v6635
  %6638 = vbcast.lane.b32.xlu0 %v6636, 256
  %v6639 = vpop.permute.xlu0 %6638
  %s6641 = sor.u32 256, 8
  %6642 = vbcast.lane.b32.xlu0 %v6636, %s6641
  %v6643 = vpop.permute.xlu0 %6642
  %v6644 = vlaneseq
  %v6645 = vshrl.u32 %v6644, 7
  %v6646 = vsub.s32 7, %v6645
  %v6647 = vrot.slane %v5594, %v6646
  %6649 = vbcast.lane.b32.xlu0 %v6647, 256
  %v6650 = vpop.permute.xlu0 %6649
  %s6652 = sor.u32 256, 8
  %6653 = vbcast.lane.b32.xlu0 %v6647, %s6652
  %v6654 = vpop.permute.xlu0 %6653
  %v6655 = vlaneseq
  %v6656 = vshrl.u32 %v6655, 7
  %v6657 = vsub.s32 0, %v6656
  %v6658 = vrot.slane %v5595, %v6657
  %6660 = vbcast.lane.b32.xlu0 %v6658, 256
  %v6661 = vpop.permute.xlu0 %6660
  %s6663 = sor.u32 256, 8
  %6664 = vbcast.lane.b32.xlu0 %v6658, %s6663
  %v6665 = vpop.permute.xlu0 %6664
  %v6666 = vlaneseq
  %v6667 = vshrl.u32 %v6666, 7
  %v6668 = vsub.s32 1, %v6667
  %v6669 = vrot.slane %v5595, %v6668
  %6671 = vbcast.lane.b32.xlu0 %v6669, 256
  %v6672 = vpop.permute.xlu0 %6671
  %s6674 = sor.u32 256, 8
  %6675 = vbcast.lane.b32.xlu0 %v6669, %s6674
  %v6676 = vpop.permute.xlu0 %6675
  %v6677 = vlaneseq
  %v6678 = vshrl.u32 %v6677, 7
  %v6679 = vsub.s32 2, %v6678
  %v6680 = vrot.slane %v5595, %v6679
  %6682 = vbcast.lane.b32.xlu0 %v6680, 256
  %v6683 = vpop.permute.xlu0 %6682
  %s6685 = sor.u32 256, 8
  %6686 = vbcast.lane.b32.xlu0 %v6680, %s6685
  %v6687 = vpop.permute.xlu0 %6686
  %v6688 = vlaneseq
  %v6689 = vshrl.u32 %v6688, 7
  %v6690 = vsub.s32 3, %v6689
  %v6691 = vrot.slane %v5595, %v6690
  %6693 = vbcast.lane.b32.xlu0 %v6691, 256
  %v6694 = vpop.permute.xlu0 %6693
  %s6696 = sor.u32 256, 8
  %6697 = vbcast.lane.b32.xlu0 %v6691, %s6696
  %v6698 = vpop.permute.xlu0 %6697
  %v6699 = vlaneseq
  %v6700 = vshrl.u32 %v6699, 7
  %v6701 = vsub.s32 4, %v6700
  %v6702 = vrot.slane %v5595, %v6701
  %6704 = vbcast.lane.b32.xlu0 %v6702, 256
  %v6705 = vpop.permute.xlu0 %6704
  %s6707 = sor.u32 256, 8
  %6708 = vbcast.lane.b32.xlu0 %v6702, %s6707
  %v6709 = vpop.permute.xlu0 %6708
  %v6710 = vlaneseq
  %v6711 = vshrl.u32 %v6710, 7
  %v6712 = vsub.s32 5, %v6711
  %v6713 = vrot.slane %v5595, %v6712
  %6715 = vbcast.lane.b32.xlu0 %v6713, 256
  %v6716 = vpop.permute.xlu0 %6715
  %s6718 = sor.u32 256, 8
  %6719 = vbcast.lane.b32.xlu0 %v6713, %s6718
  %v6720 = vpop.permute.xlu0 %6719
  %v6721 = vlaneseq
  %v6722 = vshrl.u32 %v6721, 7
  %v6723 = vsub.s32 6, %v6722
  %v6724 = vrot.slane %v5595, %v6723
  %6726 = vbcast.lane.b32.xlu0 %v6724, 256
  %v6727 = vpop.permute.xlu0 %6726
  %s6729 = sor.u32 256, 8
  %6730 = vbcast.lane.b32.xlu0 %v6724, %s6729
  %v6731 = vpop.permute.xlu0 %6730
  %v6732 = vlaneseq
  %v6733 = vshrl.u32 %v6732, 7
  %v6734 = vsub.s32 7, %v6733
  %v6735 = vrot.slane %v5595, %v6734
  %6737 = vbcast.lane.b32.xlu0 %v6735, 256
  %v6738 = vpop.permute.xlu0 %6737
  %s6740 = sor.u32 256, 8
  %6741 = vbcast.lane.b32.xlu0 %v6735, %s6740
  %v6742 = vpop.permute.xlu0 %6741
  %v6743 = vlaneseq
  %v6744 = vshrl.u32 %v6743, 7
  %v6745 = vsub.s32 0, %v6744
  %v6746 = vrot.slane %v5596, %v6745
  %6748 = vbcast.lane.b32.xlu0 %v6746, 256
  %v6749 = vpop.permute.xlu0 %6748
  %s6751 = sor.u32 256, 8
  %6752 = vbcast.lane.b32.xlu0 %v6746, %s6751
  %v6753 = vpop.permute.xlu0 %6752
  %v6754 = vlaneseq
  %v6755 = vshrl.u32 %v6754, 7
  %v6756 = vsub.s32 1, %v6755
  %v6757 = vrot.slane %v5596, %v6756
  %6759 = vbcast.lane.b32.xlu0 %v6757, 256
  %v6760 = vpop.permute.xlu0 %6759
  %s6762 = sor.u32 256, 8
  %6763 = vbcast.lane.b32.xlu0 %v6757, %s6762
  %v6764 = vpop.permute.xlu0 %6763
  %v6765 = vlaneseq
  %v6766 = vshrl.u32 %v6765, 7
  %v6767 = vsub.s32 2, %v6766
  %v6768 = vrot.slane %v5596, %v6767
  %6770 = vbcast.lane.b32.xlu0 %v6768, 256
  %v6771 = vpop.permute.xlu0 %6770
  %s6773 = sor.u32 256, 8
  %6774 = vbcast.lane.b32.xlu0 %v6768, %s6773
  %v6775 = vpop.permute.xlu0 %6774
  %v6776 = vlaneseq
  %v6777 = vshrl.u32 %v6776, 7
  %v6778 = vsub.s32 3, %v6777
  %v6779 = vrot.slane %v5596, %v6778
  %6781 = vbcast.lane.b32.xlu0 %v6779, 256
  %v6782 = vpop.permute.xlu0 %6781
  %s6784 = sor.u32 256, 8
  %6785 = vbcast.lane.b32.xlu0 %v6779, %s6784
  %v6786 = vpop.permute.xlu0 %6785
  %v6787 = vlaneseq
  %v6788 = vshrl.u32 %v6787, 7
  %v6789 = vsub.s32 4, %v6788
  %v6790 = vrot.slane %v5596, %v6789
  %6792 = vbcast.lane.b32.xlu0 %v6790, 256
  %v6793 = vpop.permute.xlu0 %6792
  %s6795 = sor.u32 256, 8
  %6796 = vbcast.lane.b32.xlu0 %v6790, %s6795
  %v6797 = vpop.permute.xlu0 %6796
  %v6798 = vlaneseq
  %v6799 = vshrl.u32 %v6798, 7
  %v6800 = vsub.s32 5, %v6799
  %v6801 = vrot.slane %v5596, %v6800
  %6803 = vbcast.lane.b32.xlu0 %v6801, 256
  %v6804 = vpop.permute.xlu0 %6803
  %s6806 = sor.u32 256, 8
  %6807 = vbcast.lane.b32.xlu0 %v6801, %s6806
  %v6808 = vpop.permute.xlu0 %6807
  %v6809 = vlaneseq
  %v6810 = vshrl.u32 %v6809, 7
  %v6811 = vsub.s32 6, %v6810
  %v6812 = vrot.slane %v5596, %v6811
  %6814 = vbcast.lane.b32.xlu0 %v6812, 256
  %v6815 = vpop.permute.xlu0 %6814
  %s6817 = sor.u32 256, 8
  %6818 = vbcast.lane.b32.xlu0 %v6812, %s6817
  %v6819 = vpop.permute.xlu0 %6818
  %v6820 = vlaneseq
  %v6821 = vshrl.u32 %v6820, 7
  %v6822 = vsub.s32 7, %v6821
  %v6823 = vrot.slane %v5596, %v6822
  %6825 = vbcast.lane.b32.xlu0 %v6823, 256
  %v6826 = vpop.permute.xlu0 %6825
  %s6828 = sor.u32 256, 8
  %6829 = vbcast.lane.b32.xlu0 %v6823, %s6828
  %v6830 = vpop.permute.xlu0 %6829
  %v6831 = vlaneseq
  %v6832 = vshrl.u32 %v6831, 7
  %v6833 = vsub.s32 0, %v6832
  %v6834 = vrot.slane %v5597, %v6833
  %6836 = vbcast.lane.b32.xlu0 %v6834, 256
  %v6837 = vpop.permute.xlu0 %6836
  %s6839 = sor.u32 256, 8
  %6840 = vbcast.lane.b32.xlu0 %v6834, %s6839
  %v6841 = vpop.permute.xlu0 %6840
  %v6842 = vlaneseq
  %v6843 = vshrl.u32 %v6842, 7
  %v6844 = vsub.s32 1, %v6843
  %v6845 = vrot.slane %v5597, %v6844
  %6847 = vbcast.lane.b32.xlu0 %v6845, 256
  %v6848 = vpop.permute.xlu0 %6847
  %s6850 = sor.u32 256, 8
  %6851 = vbcast.lane.b32.xlu0 %v6845, %s6850
  %v6852 = vpop.permute.xlu0 %6851
  %v6853 = vlaneseq
  %v6854 = vshrl.u32 %v6853, 7
  %v6855 = vsub.s32 2, %v6854
  %v6856 = vrot.slane %v5597, %v6855
  %6858 = vbcast.lane.b32.xlu0 %v6856, 256
  %v6859 = vpop.permute.xlu0 %6858
  %s6861 = sor.u32 256, 8
  %6862 = vbcast.lane.b32.xlu0 %v6856, %s6861
  %v6863 = vpop.permute.xlu0 %6862
  %v6864 = vlaneseq
  %v6865 = vshrl.u32 %v6864, 7
  %v6866 = vsub.s32 3, %v6865
  %v6867 = vrot.slane %v5597, %v6866
  %6869 = vbcast.lane.b32.xlu0 %v6867, 256
  %v6870 = vpop.permute.xlu0 %6869
  %s6872 = sor.u32 256, 8
  %6873 = vbcast.lane.b32.xlu0 %v6867, %s6872
  %v6874 = vpop.permute.xlu0 %6873
  %v6875 = vlaneseq
  %v6876 = vshrl.u32 %v6875, 7
  %v6877 = vsub.s32 4, %v6876
  %v6878 = vrot.slane %v5597, %v6877
  %6880 = vbcast.lane.b32.xlu0 %v6878, 256
  %v6881 = vpop.permute.xlu0 %6880
  %s6883 = sor.u32 256, 8
  %6884 = vbcast.lane.b32.xlu0 %v6878, %s6883
  %v6885 = vpop.permute.xlu0 %6884
  %v6886 = vlaneseq
  %v6887 = vshrl.u32 %v6886, 7
  %v6888 = vsub.s32 5, %v6887
  %v6889 = vrot.slane %v5597, %v6888
  %6891 = vbcast.lane.b32.xlu0 %v6889, 256
  %v6892 = vpop.permute.xlu0 %6891
  %s6894 = sor.u32 256, 8
  %6895 = vbcast.lane.b32.xlu0 %v6889, %s6894
  %v6896 = vpop.permute.xlu0 %6895
  %v6897 = vlaneseq
  %v6898 = vshrl.u32 %v6897, 7
  %v6899 = vsub.s32 6, %v6898
  %v6900 = vrot.slane %v5597, %v6899
  %6902 = vbcast.lane.b32.xlu0 %v6900, 256
  %v6903 = vpop.permute.xlu0 %6902
  %s6905 = sor.u32 256, 8
  %6906 = vbcast.lane.b32.xlu0 %v6900, %s6905
  %v6907 = vpop.permute.xlu0 %6906
  %v6908 = vlaneseq
  %v6909 = vshrl.u32 %v6908, 7
  %v6910 = vsub.s32 7, %v6909
  %v6911 = vrot.slane %v5597, %v6910
  %6913 = vbcast.lane.b32.xlu0 %v6911, 256
  %v6914 = vpop.permute.xlu0 %6913
  %s6916 = sor.u32 256, 8
  %6917 = vbcast.lane.b32.xlu0 %v6911, %s6916
  %v6918 = vpop.permute.xlu0 %6917
  %v6919 = vlaneseq
  %v6920 = vshrl.u32 %v6919, 7
  %v6921 = vsub.s32 0, %v6920
  %v6922 = vrot.slane %v5598, %v6921
  %6924 = vbcast.lane.b32.xlu0 %v6922, 256
  %v6925 = vpop.permute.xlu0 %6924
  %s6927 = sor.u32 256, 8
  %6928 = vbcast.lane.b32.xlu0 %v6922, %s6927
  %v6929 = vpop.permute.xlu0 %6928
  %v6930 = vlaneseq
  %v6931 = vshrl.u32 %v6930, 7
  %v6932 = vsub.s32 1, %v6931
  %v6933 = vrot.slane %v5598, %v6932
  %6935 = vbcast.lane.b32.xlu0 %v6933, 256
  %v6936 = vpop.permute.xlu0 %6935
  %s6938 = sor.u32 256, 8
  %6939 = vbcast.lane.b32.xlu0 %v6933, %s6938
  %v6940 = vpop.permute.xlu0 %6939
  %v6941 = vlaneseq
  %v6942 = vshrl.u32 %v6941, 7
  %v6943 = vsub.s32 2, %v6942
  %v6944 = vrot.slane %v5598, %v6943
  %6946 = vbcast.lane.b32.xlu0 %v6944, 256
  %v6947 = vpop.permute.xlu0 %6946
  %s6949 = sor.u32 256, 8
  %6950 = vbcast.lane.b32.xlu0 %v6944, %s6949
  %v6951 = vpop.permute.xlu0 %6950
  %v6952 = vlaneseq
  %v6953 = vshrl.u32 %v6952, 7
  %v6954 = vsub.s32 3, %v6953
  %v6955 = vrot.slane %v5598, %v6954
  %6957 = vbcast.lane.b32.xlu0 %v6955, 256
  %v6958 = vpop.permute.xlu0 %6957
  %s6960 = sor.u32 256, 8
  %6961 = vbcast.lane.b32.xlu0 %v6955, %s6960
  %v6962 = vpop.permute.xlu0 %6961
  %v6963 = vlaneseq
  %v6964 = vshrl.u32 %v6963, 7
  %v6965 = vsub.s32 4, %v6964
  %v6966 = vrot.slane %v5598, %v6965
  %6968 = vbcast.lane.b32.xlu0 %v6966, 256
  %v6969 = vpop.permute.xlu0 %6968
  %s6971 = sor.u32 256, 8
  %6972 = vbcast.lane.b32.xlu0 %v6966, %s6971
  %v6973 = vpop.permute.xlu0 %6972
  %v6974 = vlaneseq
  %v6975 = vshrl.u32 %v6974, 7
  %v6976 = vsub.s32 5, %v6975
  %v6977 = vrot.slane %v5598, %v6976
  %6979 = vbcast.lane.b32.xlu0 %v6977, 256
  %v6980 = vpop.permute.xlu0 %6979
  %s6982 = sor.u32 256, 8
  %6983 = vbcast.lane.b32.xlu0 %v6977, %s6982
  %v6984 = vpop.permute.xlu0 %6983
  %v6985 = vlaneseq
  %v6986 = vshrl.u32 %v6985, 7
  %v6987 = vsub.s32 6, %v6986
  %v6988 = vrot.slane %v5598, %v6987
  %6990 = vbcast.lane.b32.xlu0 %v6988, 256
  %v6991 = vpop.permute.xlu0 %6990
  %s6993 = sor.u32 256, 8
  %6994 = vbcast.lane.b32.xlu0 %v6988, %s6993
  %v6995 = vpop.permute.xlu0 %6994
  %v6996 = vlaneseq
  %v6997 = vshrl.u32 %v6996, 7
  %v6998 = vsub.s32 7, %v6997
  %v6999 = vrot.slane %v5598, %v6998
  %7001 = vbcast.lane.b32.xlu0 %v6999, 256
  %v7002 = vpop.permute.xlu0 %7001
  %s7004 = sor.u32 256, 8
  %7005 = vbcast.lane.b32.xlu0 %v6999, %s7004
  %v7006 = vpop.permute.xlu0 %7005
  %vm7007 = vcmp.eq.s32.totalorder %v5605, %v27
  %vm7008 = vcmp.eq.s32.totalorder %v5609, %v27
  %vm7009 = vcmp.eq.s32.totalorder %v5616, %v27
  %vm7010 = vcmp.eq.s32.totalorder %v5620, %v27
  %vm7011 = vcmp.eq.s32.totalorder %v5627, %v27
  %vm7012 = vcmp.eq.s32.totalorder %v5631, %v27
  %vm7013 = vcmp.eq.s32.totalorder %v5638, %v27
  %vm7014 = vcmp.eq.s32.totalorder %v5642, %v27
  %vm7015 = vcmp.eq.s32.totalorder %v5649, %v27
  %vm7016 = vcmp.eq.s32.totalorder %v5653, %v27
  %vm7017 = vcmp.eq.s32.totalorder %v5660, %v27
  %vm7018 = vcmp.eq.s32.totalorder %v5664, %v27
  %vm7019 = vcmp.eq.s32.totalorder %v5671, %v27
  %vm7020 = vcmp.eq.s32.totalorder %v5675, %v27
  %vm7021 = vcmp.eq.s32.totalorder %v5682, %v27
  %vm7022 = vcmp.eq.s32.totalorder %v5686, %v27
  %vm7023 = vcmp.eq.s32.totalorder %v5693, %v27
  %vm7024 = vcmp.eq.s32.totalorder %v5697, %v27
  %vm7025 = vcmp.eq.s32.totalorder %v5704, %v27
  %vm7026 = vcmp.eq.s32.totalorder %v5708, %v27
  %vm7027 = vcmp.eq.s32.totalorder %v5715, %v27
  %vm7028 = vcmp.eq.s32.totalorder %v5719, %v27
  %vm7029 = vcmp.eq.s32.totalorder %v5726, %v27
  %vm7030 = vcmp.eq.s32.totalorder %v5730, %v27
  %vm7031 = vcmp.eq.s32.totalorder %v5737, %v27
  %vm7032 = vcmp.eq.s32.totalorder %v5741, %v27
  %vm7033 = vcmp.eq.s32.totalorder %v5748, %v27
  %vm7034 = vcmp.eq.s32.totalorder %v5752, %v27
  %vm7035 = vcmp.eq.s32.totalorder %v5759, %v27
  %vm7036 = vcmp.eq.s32.totalorder %v5763, %v27
  %vm7037 = vcmp.eq.s32.totalorder %v5770, %v27
  %vm7038 = vcmp.eq.s32.totalorder %v5774, %v27
  %vm7039 = vcmp.eq.s32.totalorder %v5781, %v27
  %vm7040 = vcmp.eq.s32.totalorder %v5785, %v27
  %vm7041 = vcmp.eq.s32.totalorder %v5792, %v27
  %vm7042 = vcmp.eq.s32.totalorder %v5796, %v27
  %vm7043 = vcmp.eq.s32.totalorder %v5803, %v27
  %vm7044 = vcmp.eq.s32.totalorder %v5807, %v27
  %vm7045 = vcmp.eq.s32.totalorder %v5814, %v27
  %vm7046 = vcmp.eq.s32.totalorder %v5818, %v27
  %vm7047 = vcmp.eq.s32.totalorder %v5825, %v27
  %vm7048 = vcmp.eq.s32.totalorder %v5829, %v27
  %vm7049 = vcmp.eq.s32.totalorder %v5836, %v27
  %vm7050 = vcmp.eq.s32.totalorder %v5840, %v27
  %vm7051 = vcmp.eq.s32.totalorder %v5847, %v27
  %vm7052 = vcmp.eq.s32.totalorder %v5851, %v27
  %vm7053 = vcmp.eq.s32.totalorder %v5858, %v27
  %vm7054 = vcmp.eq.s32.totalorder %v5862, %v27
  %vm7055 = vcmp.eq.s32.totalorder %v5869, %v27
  %vm7056 = vcmp.eq.s32.totalorder %v5873, %v27
  %vm7057 = vcmp.eq.s32.totalorder %v5880, %v27
  %vm7058 = vcmp.eq.s32.totalorder %v5884, %v27
  %vm7059 = vcmp.eq.s32.totalorder %v5891, %v27
  %vm7060 = vcmp.eq.s32.totalorder %v5895, %v27
  %vm7061 = vcmp.eq.s32.totalorder %v5902, %v27
  %vm7062 = vcmp.eq.s32.totalorder %v5906, %v27
  %vm7063 = vcmp.eq.s32.totalorder %v5913, %v27
  %vm7064 = vcmp.eq.s32.totalorder %v5917, %v27
  %vm7065 = vcmp.eq.s32.totalorder %v5924, %v27
  %vm7066 = vcmp.eq.s32.totalorder %v5928, %v27
  %vm7067 = vcmp.eq.s32.totalorder %v5935, %v27
  %vm7068 = vcmp.eq.s32.totalorder %v5939, %v27
  %vm7069 = vcmp.eq.s32.totalorder %v5946, %v27
  %vm7070 = vcmp.eq.s32.totalorder %v5950, %v27
  %vm7071 = vcmp.eq.s32.totalorder %v5957, %v27
  %vm7072 = vcmp.eq.s32.totalorder %v5961, %v27
  %vm7073 = vcmp.eq.s32.totalorder %v5968, %v27
  %vm7074 = vcmp.eq.s32.totalorder %v5972, %v27
  %vm7075 = vcmp.eq.s32.totalorder %v5979, %v27
  %vm7076 = vcmp.eq.s32.totalorder %v5983, %v27
  %vm7077 = vcmp.eq.s32.totalorder %v5990, %v27
  %vm7078 = vcmp.eq.s32.totalorder %v5994, %v27
  %vm7079 = vcmp.eq.s32.totalorder %v6001, %v27
  %vm7080 = vcmp.eq.s32.totalorder %v6005, %v27
  %vm7081 = vcmp.eq.s32.totalorder %v6012, %v27
  %vm7082 = vcmp.eq.s32.totalorder %v6016, %v27
  %vm7083 = vcmp.eq.s32.totalorder %v6023, %v27
  %vm7084 = vcmp.eq.s32.totalorder %v6027, %v27
  %vm7085 = vcmp.eq.s32.totalorder %v6034, %v27
  %vm7086 = vcmp.eq.s32.totalorder %v6038, %v27
  %vm7087 = vcmp.eq.s32.totalorder %v6045, %v27
  %vm7088 = vcmp.eq.s32.totalorder %v6049, %v27
  %vm7089 = vcmp.eq.s32.totalorder %v6056, %v27
  %vm7090 = vcmp.eq.s32.totalorder %v6060, %v27
  %vm7091 = vcmp.eq.s32.totalorder %v6067, %v27
  %vm7092 = vcmp.eq.s32.totalorder %v6071, %v27
  %vm7093 = vcmp.eq.s32.totalorder %v6078, %v27
  %vm7094 = vcmp.eq.s32.totalorder %v6082, %v27
  %vm7095 = vcmp.eq.s32.totalorder %v6089, %v27
  %vm7096 = vcmp.eq.s32.totalorder %v6093, %v27
  %vm7097 = vcmp.eq.s32.totalorder %v6100, %v27
  %vm7098 = vcmp.eq.s32.totalorder %v6104, %v27
  %vm7099 = vcmp.eq.s32.totalorder %v6111, %v27
  %vm7100 = vcmp.eq.s32.totalorder %v6115, %v27
  %vm7101 = vcmp.eq.s32.totalorder %v6122, %v27
  %vm7102 = vcmp.eq.s32.totalorder %v6126, %v27
  %vm7103 = vcmp.eq.s32.totalorder %v6133, %v27
  %vm7104 = vcmp.eq.s32.totalorder %v6137, %v27
  %vm7105 = vcmp.eq.s32.totalorder %v6144, %v27
  %vm7106 = vcmp.eq.s32.totalorder %v6148, %v27
  %vm7107 = vcmp.eq.s32.totalorder %v6155, %v27
  %vm7108 = vcmp.eq.s32.totalorder %v6159, %v27
  %vm7109 = vcmp.eq.s32.totalorder %v6166, %v27
  %vm7110 = vcmp.eq.s32.totalorder %v6170, %v27
  %vm7111 = vcmp.eq.s32.totalorder %v6177, %v27
  %vm7112 = vcmp.eq.s32.totalorder %v6181, %v27
  %vm7113 = vcmp.eq.s32.totalorder %v6188, %v27
  %vm7114 = vcmp.eq.s32.totalorder %v6192, %v27
  %vm7115 = vcmp.eq.s32.totalorder %v6199, %v27
  %vm7116 = vcmp.eq.s32.totalorder %v6203, %v27
  %vm7117 = vcmp.eq.s32.totalorder %v6210, %v27
  %vm7118 = vcmp.eq.s32.totalorder %v6214, %v27
  %vm7119 = vcmp.eq.s32.totalorder %v6221, %v27
  %vm7120 = vcmp.eq.s32.totalorder %v6225, %v27
  %vm7121 = vcmp.eq.s32.totalorder %v6232, %v27
  %vm7122 = vcmp.eq.s32.totalorder %v6236, %v27
  %vm7123 = vcmp.eq.s32.totalorder %v6243, %v27
  %vm7124 = vcmp.eq.s32.totalorder %v6247, %v27
  %vm7125 = vcmp.eq.s32.totalorder %v6254, %v27
  %vm7126 = vcmp.eq.s32.totalorder %v6258, %v27
  %vm7127 = vcmp.eq.s32.totalorder %v6265, %v27
  %vm7128 = vcmp.eq.s32.totalorder %v6269, %v27
  %vm7129 = vcmp.eq.s32.totalorder %v6276, %v27
  %vm7130 = vcmp.eq.s32.totalorder %v6280, %v27
  %vm7131 = vcmp.eq.s32.totalorder %v6287, %v27
  %vm7132 = vcmp.eq.s32.totalorder %v6291, %v27
  %vm7133 = vcmp.eq.s32.totalorder %v6298, %v27
  %vm7134 = vcmp.eq.s32.totalorder %v6302, %v27
  %vm7135 = vcmp.eq.s32.totalorder %v6309, %v27
  %vm7136 = vcmp.eq.s32.totalorder %v6313, %v27
  %vm7137 = vcmp.eq.s32.totalorder %v6320, %v27
  %vm7138 = vcmp.eq.s32.totalorder %v6324, %v27
  %vm7139 = vcmp.eq.s32.totalorder %v6331, %v27
  %vm7140 = vcmp.eq.s32.totalorder %v6335, %v27
  %vm7141 = vcmp.eq.s32.totalorder %v6342, %v27
  %vm7142 = vcmp.eq.s32.totalorder %v6346, %v27
  %vm7143 = vcmp.eq.s32.totalorder %v6353, %v27
  %vm7144 = vcmp.eq.s32.totalorder %v6357, %v27
  %vm7145 = vcmp.eq.s32.totalorder %v6364, %v27
  %vm7146 = vcmp.eq.s32.totalorder %v6368, %v27
  %vm7147 = vcmp.eq.s32.totalorder %v6375, %v27
  %vm7148 = vcmp.eq.s32.totalorder %v6379, %v27
  %vm7149 = vcmp.eq.s32.totalorder %v6386, %v27
  %vm7150 = vcmp.eq.s32.totalorder %v6390, %v27
  %vm7151 = vcmp.eq.s32.totalorder %v6397, %v27
  %vm7152 = vcmp.eq.s32.totalorder %v6401, %v27
  %vm7153 = vcmp.eq.s32.totalorder %v6408, %v27
  %vm7154 = vcmp.eq.s32.totalorder %v6412, %v27
  %vm7155 = vcmp.eq.s32.totalorder %v6419, %v27
  %vm7156 = vcmp.eq.s32.totalorder %v6423, %v27
  %vm7157 = vcmp.eq.s32.totalorder %v6430, %v27
  %vm7158 = vcmp.eq.s32.totalorder %v6434, %v27
  %vm7159 = vcmp.eq.s32.totalorder %v6441, %v27
  %vm7160 = vcmp.eq.s32.totalorder %v6445, %v27
  %vm7161 = vcmp.eq.s32.totalorder %v6452, %v27
  %vm7162 = vcmp.eq.s32.totalorder %v6456, %v27
  %vm7163 = vcmp.eq.s32.totalorder %v6463, %v27
  %vm7164 = vcmp.eq.s32.totalorder %v6467, %v27
  %vm7165 = vcmp.eq.s32.totalorder %v6474, %v27
  %vm7166 = vcmp.eq.s32.totalorder %v6478, %v27
  %vm7167 = vcmp.eq.s32.totalorder %v6485, %v27
  %vm7168 = vcmp.eq.s32.totalorder %v6489, %v27
  %vm7169 = vcmp.eq.s32.totalorder %v6496, %v27
  %vm7170 = vcmp.eq.s32.totalorder %v6500, %v27
  %vm7171 = vcmp.eq.s32.totalorder %v6507, %v27
  %vm7172 = vcmp.eq.s32.totalorder %v6511, %v27
  %vm7173 = vcmp.eq.s32.totalorder %v6518, %v27
  %vm7174 = vcmp.eq.s32.totalorder %v6522, %v27
  %vm7175 = vcmp.eq.s32.totalorder %v6529, %v27
  %vm7176 = vcmp.eq.s32.totalorder %v6533, %v27
  %vm7177 = vcmp.eq.s32.totalorder %v6540, %v27
  %vm7178 = vcmp.eq.s32.totalorder %v6544, %v27
  %vm7179 = vcmp.eq.s32.totalorder %v6551, %v27
  %vm7180 = vcmp.eq.s32.totalorder %v6555, %v27
  %vm7181 = vcmp.eq.s32.totalorder %v6562, %v27
  %vm7182 = vcmp.eq.s32.totalorder %v6566, %v27
  %vm7183 = vcmp.eq.s32.totalorder %v6573, %v27
  %vm7184 = vcmp.eq.s32.totalorder %v6577, %v27
  %vm7185 = vcmp.eq.s32.totalorder %v6584, %v27
  %vm7186 = vcmp.eq.s32.totalorder %v6588, %v27
  %vm7187 = vcmp.eq.s32.totalorder %v6595, %v27
  %vm7188 = vcmp.eq.s32.totalorder %v6599, %v27
  %vm7189 = vcmp.eq.s32.totalorder %v6606, %v27
  %vm7190 = vcmp.eq.s32.totalorder %v6610, %v27
  %vm7191 = vcmp.eq.s32.totalorder %v6617, %v27
  %vm7192 = vcmp.eq.s32.totalorder %v6621, %v27
  %vm7193 = vcmp.eq.s32.totalorder %v6628, %v27
  %vm7194 = vcmp.eq.s32.totalorder %v6632, %v27
  %vm7195 = vcmp.eq.s32.totalorder %v6639, %v27
  %vm7196 = vcmp.eq.s32.totalorder %v6643, %v27
  %vm7197 = vcmp.eq.s32.totalorder %v6650, %v27
  %vm7198 = vcmp.eq.s32.totalorder %v6654, %v27
  %vm7199 = vcmp.eq.s32.totalorder %v6661, %v27
  %vm7200 = vcmp.eq.s32.totalorder %v6665, %v27
  %vm7201 = vcmp.eq.s32.totalorder %v6672, %v27
  %vm7202 = vcmp.eq.s32.totalorder %v6676, %v27
  %vm7203 = vcmp.eq.s32.totalorder %v6683, %v27
  %vm7204 = vcmp.eq.s32.totalorder %v6687, %v27
  %vm7205 = vcmp.eq.s32.totalorder %v6694, %v27
  %vm7206 = vcmp.eq.s32.totalorder %v6698, %v27
  %vm7207 = vcmp.eq.s32.totalorder %v6705, %v27
  %vm7208 = vcmp.eq.s32.totalorder %v6709, %v27
  %vm7209 = vcmp.eq.s32.totalorder %v6716, %v27
  %vm7210 = vcmp.eq.s32.totalorder %v6720, %v27
  %vm7211 = vcmp.eq.s32.totalorder %v6727, %v27
  %vm7212 = vcmp.eq.s32.totalorder %v6731, %v27
  %vm7213 = vcmp.eq.s32.totalorder %v6738, %v27
  %vm7214 = vcmp.eq.s32.totalorder %v6742, %v27
  %vm7215 = vcmp.eq.s32.totalorder %v6749, %v27
  %vm7216 = vcmp.eq.s32.totalorder %v6753, %v27
  %vm7217 = vcmp.eq.s32.totalorder %v6760, %v27
  %vm7218 = vcmp.eq.s32.totalorder %v6764, %v27
  %vm7219 = vcmp.eq.s32.totalorder %v6771, %v27
  %vm7220 = vcmp.eq.s32.totalorder %v6775, %v27
  %vm7221 = vcmp.eq.s32.totalorder %v6782, %v27
  %vm7222 = vcmp.eq.s32.totalorder %v6786, %v27
  %vm7223 = vcmp.eq.s32.totalorder %v6793, %v27
  %vm7224 = vcmp.eq.s32.totalorder %v6797, %v27
  %vm7225 = vcmp.eq.s32.totalorder %v6804, %v27
  %vm7226 = vcmp.eq.s32.totalorder %v6808, %v27
  %vm7227 = vcmp.eq.s32.totalorder %v6815, %v27
  %vm7228 = vcmp.eq.s32.totalorder %v6819, %v27
  %vm7229 = vcmp.eq.s32.totalorder %v6826, %v27
  %vm7230 = vcmp.eq.s32.totalorder %v6830, %v27
  %vm7231 = vcmp.eq.s32.totalorder %v6837, %v27
  %vm7232 = vcmp.eq.s32.totalorder %v6841, %v27
  %vm7233 = vcmp.eq.s32.totalorder %v6848, %v27
  %vm7234 = vcmp.eq.s32.totalorder %v6852, %v27
  %vm7235 = vcmp.eq.s32.totalorder %v6859, %v27
  %vm7236 = vcmp.eq.s32.totalorder %v6863, %v27
  %vm7237 = vcmp.eq.s32.totalorder %v6870, %v27
  %vm7238 = vcmp.eq.s32.totalorder %v6874, %v27
  %vm7239 = vcmp.eq.s32.totalorder %v6881, %v27
  %vm7240 = vcmp.eq.s32.totalorder %v6885, %v27
  %vm7241 = vcmp.eq.s32.totalorder %v6892, %v27
  %vm7242 = vcmp.eq.s32.totalorder %v6896, %v27
  %vm7243 = vcmp.eq.s32.totalorder %v6903, %v27
  %vm7244 = vcmp.eq.s32.totalorder %v6907, %v27
  %vm7245 = vcmp.eq.s32.totalorder %v6914, %v27
  %vm7246 = vcmp.eq.s32.totalorder %v6918, %v27
  %vm7247 = vcmp.eq.s32.totalorder %v6925, %v27
  %vm7248 = vcmp.eq.s32.totalorder %v6929, %v27
  %vm7249 = vcmp.eq.s32.totalorder %v6936, %v27
  %vm7250 = vcmp.eq.s32.totalorder %v6940, %v27
  %vm7251 = vcmp.eq.s32.totalorder %v6947, %v27
  %vm7252 = vcmp.eq.s32.totalorder %v6951, %v27
  %vm7253 = vcmp.eq.s32.totalorder %v6958, %v27
  %vm7254 = vcmp.eq.s32.totalorder %v6962, %v27
  %vm7255 = vcmp.eq.s32.totalorder %v6969, %v27
  %vm7256 = vcmp.eq.s32.totalorder %v6973, %v27
  %vm7257 = vcmp.eq.s32.totalorder %v6980, %v27
  %vm7258 = vcmp.eq.s32.totalorder %v6984, %v27
  %vm7259 = vcmp.eq.s32.totalorder %v6991, %v27
  %vm7260 = vcmp.eq.s32.totalorder %v6995, %v27
  %vm7261 = vcmp.eq.s32.totalorder %v7002, %v27
  %vm7262 = vcmp.eq.s32.totalorder %v7006, %v27
  %vm7263 = vmor %vm5326, %vm7007
  %vm7264 = vmor %vm5327, %vm7008
  %vm7265 = vmor %vm5328, %vm7009
  %vm7266 = vmor %vm5329, %vm7010
  %vm7267 = vmor %vm5330, %vm7011
  %vm7268 = vmor %vm5331, %vm7012
  %vm7269 = vmor %vm5332, %vm7013
  %vm7270 = vmor %vm5333, %vm7014
  %vm7271 = vmor %vm5334, %vm7015
  %vm7272 = vmor %vm5335, %vm7016
  %vm7273 = vmor %vm5336, %vm7017
  %vm7274 = vmor %vm5337, %vm7018
  %vm7275 = vmor %vm5338, %vm7019
  %vm7276 = vmor %vm5339, %vm7020
  %vm7277 = vmor %vm5340, %vm7021
  %vm7278 = vmor %vm5341, %vm7022
  %vm7279 = vmor %vm5342, %vm7023
  %vm7280 = vmor %vm5343, %vm7024
  %vm7281 = vmor %vm5344, %vm7025
  %vm7282 = vmor %vm5345, %vm7026
  %vm7283 = vmor %vm5346, %vm7027
  %vm7284 = vmor %vm5347, %vm7028
  %vm7285 = vmor %vm5348, %vm7029
  %vm7286 = vmor %vm5349, %vm7030
  %vm7287 = vmor %vm5350, %vm7031
  %vm7288 = vmor %vm5351, %vm7032
  %vm7289 = vmor %vm5352, %vm7033
  %vm7290 = vmor %vm5353, %vm7034
  %vm7291 = vmor %vm5354, %vm7035
  %vm7292 = vmor %vm5355, %vm7036
  %vm7293 = vmor %vm5356, %vm7037
  %vm7294 = vmor %vm5357, %vm7038
  %vm7295 = vmor %vm5358, %vm7039
  %vm7296 = vmor %vm5359, %vm7040
  %vm7297 = vmor %vm5360, %vm7041
  %vm7298 = vmor %vm5361, %vm7042
  %vm7299 = vmor %vm5362, %vm7043
  %vm7300 = vmor %vm5363, %vm7044
  %vm7301 = vmor %vm5364, %vm7045
  %vm7302 = vmor %vm5365, %vm7046
  %vm7303 = vmor %vm5366, %vm7047
  %vm7304 = vmor %vm5367, %vm7048
  %vm7305 = vmor %vm5368, %vm7049
  %vm7306 = vmor %vm5369, %vm7050
  %vm7307 = vmor %vm5370, %vm7051
  %vm7308 = vmor %vm5371, %vm7052
  %vm7309 = vmor %vm5372, %vm7053
  %vm7310 = vmor %vm5373, %vm7054
  %vm7311 = vmor %vm5374, %vm7055
  %vm7312 = vmor %vm5375, %vm7056
  %vm7313 = vmor %vm5376, %vm7057
  %vm7314 = vmor %vm5377, %vm7058
  %vm7315 = vmor %vm5378, %vm7059
  %vm7316 = vmor %vm5379, %vm7060
  %vm7317 = vmor %vm5380, %vm7061
  %vm7318 = vmor %vm5381, %vm7062
  %vm7319 = vmor %vm5382, %vm7063
  %vm7320 = vmor %vm5383, %vm7064
  %vm7321 = vmor %vm5384, %vm7065
  %vm7322 = vmor %vm5385, %vm7066
  %vm7323 = vmor %vm5386, %vm7067
  %vm7324 = vmor %vm5387, %vm7068
  %vm7325 = vmor %vm5388, %vm7069
  %vm7326 = vmor %vm5389, %vm7070
  %vm7327 = vmor %vm5390, %vm7071
  %vm7328 = vmor %vm5391, %vm7072
  %vm7329 = vmor %vm5392, %vm7073
  %vm7330 = vmor %vm5393, %vm7074
  %vm7331 = vmor %vm5394, %vm7075
  %vm7332 = vmor %vm5395, %vm7076
  %vm7333 = vmor %vm5396, %vm7077
  %vm7334 = vmor %vm5397, %vm7078
  %vm7335 = vmor %vm5398, %vm7079
  %vm7336 = vmor %vm5399, %vm7080
  %vm7337 = vmor %vm5400, %vm7081
  %vm7338 = vmor %vm5401, %vm7082
  %vm7339 = vmor %vm5402, %vm7083
  %vm7340 = vmor %vm5403, %vm7084
  %vm7341 = vmor %vm5404, %vm7085
  %vm7342 = vmor %vm5405, %vm7086
  %vm7343 = vmor %vm5406, %vm7087
  %vm7344 = vmor %vm5407, %vm7088
  %vm7345 = vmor %vm5408, %vm7089
  %vm7346 = vmor %vm5409, %vm7090
  %vm7347 = vmor %vm5410, %vm7091
  %vm7348 = vmor %vm5411, %vm7092
  %vm7349 = vmor %vm5412, %vm7093
  %vm7350 = vmor %vm5413, %vm7094
  %vm7351 = vmor %vm5414, %vm7095
  %vm7352 = vmor %vm5415, %vm7096
  %vm7353 = vmor %vm5416, %vm7097
  %vm7354 = vmor %vm5417, %vm7098
  %vm7355 = vmor %vm5418, %vm7099
  %vm7356 = vmor %vm5419, %vm7100
  %vm7357 = vmor %vm5420, %vm7101
  %vm7358 = vmor %vm5421, %vm7102
  %vm7359 = vmor %vm5422, %vm7103
  %vm7360 = vmor %vm5423, %vm7104
  %vm7361 = vmor %vm5424, %vm7105
  %vm7362 = vmor %vm5425, %vm7106
  %vm7363 = vmor %vm5426, %vm7107
  %vm7364 = vmor %vm5427, %vm7108
  %vm7365 = vmor %vm5428, %vm7109
  %vm7366 = vmor %vm5429, %vm7110
  %vm7367 = vmor %vm5430, %vm7111
  %vm7368 = vmor %vm5431, %vm7112
  %vm7369 = vmor %vm5432, %vm7113
  %vm7370 = vmor %vm5433, %vm7114
  %vm7371 = vmor %vm5434, %vm7115
  %vm7372 = vmor %vm5435, %vm7116
  %vm7373 = vmor %vm5436, %vm7117
  %vm7374 = vmor %vm5437, %vm7118
  %vm7375 = vmor %vm5438, %vm7119
  %vm7376 = vmor %vm5439, %vm7120
  %vm7377 = vmor %vm5440, %vm7121
  %vm7378 = vmor %vm5441, %vm7122
  %vm7379 = vmor %vm5442, %vm7123
  %vm7380 = vmor %vm5443, %vm7124
  %vm7381 = vmor %vm5444, %vm7125
  %vm7382 = vmor %vm5445, %vm7126
  %vm7383 = vmor %vm5446, %vm7127
  %vm7384 = vmor %vm5447, %vm7128
  %vm7385 = vmor %vm5448, %vm7129
  %vm7386 = vmor %vm5449, %vm7130
  %vm7387 = vmor %vm5450, %vm7131
  %vm7388 = vmor %vm5451, %vm7132
  %vm7389 = vmor %vm5452, %vm7133
  %vm7390 = vmor %vm5453, %vm7134
  %vm7391 = vmor %vm5454, %vm7135
  %vm7392 = vmor %vm5455, %vm7136
  %vm7393 = vmor %vm5456, %vm7137
  %vm7394 = vmor %vm5457, %vm7138
  %vm7395 = vmor %vm5458, %vm7139
  %vm7396 = vmor %vm5459, %vm7140
  %vm7397 = vmor %vm5460, %vm7141
  %vm7398 = vmor %vm5461, %vm7142
  %vm7399 = vmor %vm5462, %vm7143
  %vm7400 = vmor %vm5463, %vm7144
  %vm7401 = vmor %vm5464, %vm7145
  %vm7402 = vmor %vm5465, %vm7146
  %vm7403 = vmor %vm5466, %vm7147
  %vm7404 = vmor %vm5467, %vm7148
  %vm7405 = vmor %vm5468, %vm7149
  %vm7406 = vmor %vm5469, %vm7150
  %vm7407 = vmor %vm5470, %vm7151
  %vm7408 = vmor %vm5471, %vm7152
  %vm7409 = vmor %vm5472, %vm7153
  %vm7410 = vmor %vm5473, %vm7154
  %vm7411 = vmor %vm5474, %vm7155
  %vm7412 = vmor %vm5475, %vm7156
  %vm7413 = vmor %vm5476, %vm7157
  %vm7414 = vmor %vm5477, %vm7158
  %vm7415 = vmor %vm5478, %vm7159
  %vm7416 = vmor %vm5479, %vm7160
  %vm7417 = vmor %vm5480, %vm7161
  %vm7418 = vmor %vm5481, %vm7162
  %vm7419 = vmor %vm5482, %vm7163
  %vm7420 = vmor %vm5483, %vm7164
  %vm7421 = vmor %vm5484, %vm7165
  %vm7422 = vmor %vm5485, %vm7166
  %vm7423 = vmor %vm5486, %vm7167
  %vm7424 = vmor %vm5487, %vm7168
  %vm7425 = vmor %vm5488, %vm7169
  %vm7426 = vmor %vm5489, %vm7170
  %vm7427 = vmor %vm5490, %vm7171
  %vm7428 = vmor %vm5491, %vm7172
  %vm7429 = vmor %vm5492, %vm7173
  %vm7430 = vmor %vm5493, %vm7174
  %vm7431 = vmor %vm5494, %vm7175
  %vm7432 = vmor %vm5495, %vm7176
  %vm7433 = vmor %vm5496, %vm7177
  %vm7434 = vmor %vm5497, %vm7178
  %vm7435 = vmor %vm5498, %vm7179
  %vm7436 = vmor %vm5499, %vm7180
  %vm7437 = vmor %vm5500, %vm7181
  %vm7438 = vmor %vm5501, %vm7182
  %vm7439 = vmor %vm5502, %vm7183
  %vm7440 = vmor %vm5503, %vm7184
  %vm7441 = vmor %vm5504, %vm7185
  %vm7442 = vmor %vm5505, %vm7186
  %vm7443 = vmor %vm5506, %vm7187
  %vm7444 = vmor %vm5507, %vm7188
  %vm7445 = vmor %vm5508, %vm7189
  %vm7446 = vmor %vm5509, %vm7190
  %vm7447 = vmor %vm5510, %vm7191
  %vm7448 = vmor %vm5511, %vm7192
  %vm7449 = vmor %vm5512, %vm7193
  %vm7450 = vmor %vm5513, %vm7194
  %vm7451 = vmor %vm5514, %vm7195
  %vm7452 = vmor %vm5515, %vm7196
  %vm7453 = vmor %vm5516, %vm7197
  %vm7454 = vmor %vm5517, %vm7198
  %vm7455 = vmor %vm5518, %vm7199
  %vm7456 = vmor %vm5519, %vm7200
  %vm7457 = vmor %vm5520, %vm7201
  %vm7458 = vmor %vm5521, %vm7202
  %vm7459 = vmor %vm5522, %vm7203
  %vm7460 = vmor %vm5523, %vm7204
  %vm7461 = vmor %vm5524, %vm7205
  %vm7462 = vmor %vm5525, %vm7206
  %vm7463 = vmor %vm5526, %vm7207
  %vm7464 = vmor %vm5527, %vm7208
  %vm7465 = vmor %vm5528, %vm7209
  %vm7466 = vmor %vm5529, %vm7210
  %vm7467 = vmor %vm5530, %vm7211
  %vm7468 = vmor %vm5531, %vm7212
  %vm7469 = vmor %vm5532, %vm7213
  %vm7470 = vmor %vm5533, %vm7214
  %vm7471 = vmor %vm5534, %vm7215
  %vm7472 = vmor %vm5535, %vm7216
  %vm7473 = vmor %vm5536, %vm7217
  %vm7474 = vmor %vm5537, %vm7218
  %vm7475 = vmor %vm5538, %vm7219
  %vm7476 = vmor %vm5539, %vm7220
  %vm7477 = vmor %vm5540, %vm7221
  %vm7478 = vmor %vm5541, %vm7222
  %vm7479 = vmor %vm5542, %vm7223
  %vm7480 = vmor %vm5543, %vm7224
  %vm7481 = vmor %vm5544, %vm7225
  %vm7482 = vmor %vm5545, %vm7226
  %vm7483 = vmor %vm5546, %vm7227
  %vm7484 = vmor %vm5547, %vm7228
  %vm7485 = vmor %vm5548, %vm7229
  %vm7486 = vmor %vm5549, %vm7230
  %vm7487 = vmor %vm5550, %vm7231
  %vm7488 = vmor %vm5551, %vm7232
  %vm7489 = vmor %vm5552, %vm7233
  %vm7490 = vmor %vm5553, %vm7234
  %vm7491 = vmor %vm5554, %vm7235
  %vm7492 = vmor %vm5555, %vm7236
  %vm7493 = vmor %vm5556, %vm7237
  %vm7494 = vmor %vm5557, %vm7238
  %vm7495 = vmor %vm5558, %vm7239
  %vm7496 = vmor %vm5559, %vm7240
  %vm7497 = vmor %vm5560, %vm7241
  %vm7498 = vmor %vm5561, %vm7242
  %vm7499 = vmor %vm5562, %vm7243
  %vm7500 = vmor %vm5563, %vm7244
  %vm7501 = vmor %vm5564, %vm7245
  %vm7502 = vmor %vm5565, %vm7246
  %vm7503 = vmor %vm5566, %vm7247
  %vm7504 = vmor %vm5567, %vm7248
  %vm7505 = vmor %vm5568, %vm7249
  %vm7506 = vmor %vm5569, %vm7250
  %vm7507 = vmor %vm5570, %vm7251
  %vm7508 = vmor %vm5571, %vm7252
  %vm7509 = vmor %vm5572, %vm7253
  %vm7510 = vmor %vm5573, %vm7254
  %vm7511 = vmor %vm5574, %vm7255
  %vm7512 = vmor %vm5575, %vm7256
  %vm7513 = vmor %vm5576, %vm7257
  %vm7514 = vmor %vm5577, %vm7258
  %vm7515 = vmor %vm5578, %vm7259
  %vm7516 = vmor %vm5579, %vm7260
  %vm7517 = vmor %vm5580, %vm7261
  %vm7518 = vmor %vm5581, %vm7262
  %v7519 = vsel %vm7263, 1, 0
  %v7520 = vsel %vm7264, 1, 0
  %v7521 = vsel %vm7265, 1, 0
  %v7522 = vsel %vm7266, 1, 0
  %v7523 = vsel %vm7267, 1, 0
  %v7524 = vsel %vm7268, 1, 0
  %v7525 = vsel %vm7269, 1, 0
  %v7526 = vsel %vm7270, 1, 0
  %v7527 = vsel %vm7271, 1, 0
  %v7528 = vsel %vm7272, 1, 0
  %v7529 = vsel %vm7273, 1, 0
  %v7530 = vsel %vm7274, 1, 0
  %v7531 = vsel %vm7275, 1, 0
  %v7532 = vsel %vm7276, 1, 0
  %v7533 = vsel %vm7277, 1, 0
  %v7534 = vsel %vm7278, 1, 0
  %v7535 = vsel %vm7279, 1, 0
  %v7536 = vsel %vm7280, 1, 0
  %v7537 = vsel %vm7281, 1, 0
  %v7538 = vsel %vm7282, 1, 0
  %v7539 = vsel %vm7283, 1, 0
  %v7540 = vsel %vm7284, 1, 0
  %v7541 = vsel %vm7285, 1, 0
  %v7542 = vsel %vm7286, 1, 0
  %v7543 = vsel %vm7287, 1, 0
  %v7544 = vsel %vm7288, 1, 0
  %v7545 = vsel %vm7289, 1, 0
  %v7546 = vsel %vm7290, 1, 0
  %v7547 = vsel %vm7291, 1, 0
  %v7548 = vsel %vm7292, 1, 0
  %v7549 = vsel %vm7293, 1, 0
  %v7550 = vsel %vm7294, 1, 0
  %v7551 = vsel %vm7295, 1, 0
  %v7552 = vsel %vm7296, 1, 0
  %v7553 = vsel %vm7297, 1, 0
  %v7554 = vsel %vm7298, 1, 0
  %v7555 = vsel %vm7299, 1, 0
  %v7556 = vsel %vm7300, 1, 0
  %v7557 = vsel %vm7301, 1, 0
  %v7558 = vsel %vm7302, 1, 0
  %v7559 = vsel %vm7303, 1, 0
  %v7560 = vsel %vm7304, 1, 0
  %v7561 = vsel %vm7305, 1, 0
  %v7562 = vsel %vm7306, 1, 0
  %v7563 = vsel %vm7307, 1, 0
  %v7564 = vsel %vm7308, 1, 0
  %v7565 = vsel %vm7309, 1, 0
  %v7566 = vsel %vm7310, 1, 0
  %v7567 = vsel %vm7311, 1, 0
  %v7568 = vsel %vm7312, 1, 0
  %v7569 = vsel %vm7313, 1, 0
  %v7570 = vsel %vm7314, 1, 0
  %v7571 = vsel %vm7315, 1, 0
  %v7572 = vsel %vm7316, 1, 0
  %v7573 = vsel %vm7317, 1, 0
  %v7574 = vsel %vm7318, 1, 0
  %v7575 = vsel %vm7319, 1, 0
  %v7576 = vsel %vm7320, 1, 0
  %v7577 = vsel %vm7321, 1, 0
  %v7578 = vsel %vm7322, 1, 0
  %v7579 = vsel %vm7323, 1, 0
  %v7580 = vsel %vm7324, 1, 0
  %v7581 = vsel %vm7325, 1, 0
  %v7582 = vsel %vm7326, 1, 0
  %v7583 = vsel %vm7327, 1, 0
  %v7584 = vsel %vm7328, 1, 0
  %v7585 = vsel %vm7329, 1, 0
  %v7586 = vsel %vm7330, 1, 0
  %v7587 = vsel %vm7331, 1, 0
  %v7588 = vsel %vm7332, 1, 0
  %v7589 = vsel %vm7333, 1, 0
  %v7590 = vsel %vm7334, 1, 0
  %v7591 = vsel %vm7335, 1, 0
  %v7592 = vsel %vm7336, 1, 0
  %v7593 = vsel %vm7337, 1, 0
  %v7594 = vsel %vm7338, 1, 0
  %v7595 = vsel %vm7339, 1, 0
  %v7596 = vsel %vm7340, 1, 0
  %v7597 = vsel %vm7341, 1, 0
  %v7598 = vsel %vm7342, 1, 0
  %v7599 = vsel %vm7343, 1, 0
  %v7600 = vsel %vm7344, 1, 0
  %v7601 = vsel %vm7345, 1, 0
  %v7602 = vsel %vm7346, 1, 0
  %v7603 = vsel %vm7347, 1, 0
  %v7604 = vsel %vm7348, 1, 0
  %v7605 = vsel %vm7349, 1, 0
  %v7606 = vsel %vm7350, 1, 0
  %v7607 = vsel %vm7351, 1, 0
  %v7608 = vsel %vm7352, 1, 0
  %v7609 = vsel %vm7353, 1, 0
  %v7610 = vsel %vm7354, 1, 0
  %v7611 = vsel %vm7355, 1, 0
  %v7612 = vsel %vm7356, 1, 0
  %v7613 = vsel %vm7357, 1, 0
  %v7614 = vsel %vm7358, 1, 0
  %v7615 = vsel %vm7359, 1, 0
  %v7616 = vsel %vm7360, 1, 0
  %v7617 = vsel %vm7361, 1, 0
  %v7618 = vsel %vm7362, 1, 0
  %v7619 = vsel %vm7363, 1, 0
  %v7620 = vsel %vm7364, 1, 0
  %v7621 = vsel %vm7365, 1, 0
  %v7622 = vsel %vm7366, 1, 0
  %v7623 = vsel %vm7367, 1, 0
  %v7624 = vsel %vm7368, 1, 0
  %v7625 = vsel %vm7369, 1, 0
  %v7626 = vsel %vm7370, 1, 0
  %v7627 = vsel %vm7371, 1, 0
  %v7628 = vsel %vm7372, 1, 0
  %v7629 = vsel %vm7373, 1, 0
  %v7630 = vsel %vm7374, 1, 0
  %v7631 = vsel %vm7375, 1, 0
  %v7632 = vsel %vm7376, 1, 0
  %v7633 = vsel %vm7377, 1, 0
  %v7634 = vsel %vm7378, 1, 0
  %v7635 = vsel %vm7379, 1, 0
  %v7636 = vsel %vm7380, 1, 0
  %v7637 = vsel %vm7381, 1, 0
  %v7638 = vsel %vm7382, 1, 0
  %v7639 = vsel %vm7383, 1, 0
  %v7640 = vsel %vm7384, 1, 0
  %v7641 = vsel %vm7385, 1, 0
  %v7642 = vsel %vm7386, 1, 0
  %v7643 = vsel %vm7387, 1, 0
  %v7644 = vsel %vm7388, 1, 0
  %v7645 = vsel %vm7389, 1, 0
  %v7646 = vsel %vm7390, 1, 0
  %v7647 = vsel %vm7391, 1, 0
  %v7648 = vsel %vm7392, 1, 0
  %v7649 = vsel %vm7393, 1, 0
  %v7650 = vsel %vm7394, 1, 0
  %v7651 = vsel %vm7395, 1, 0
  %v7652 = vsel %vm7396, 1, 0
  %v7653 = vsel %vm7397, 1, 0
  %v7654 = vsel %vm7398, 1, 0
  %v7655 = vsel %vm7399, 1, 0
  %v7656 = vsel %vm7400, 1, 0
  %v7657 = vsel %vm7401, 1, 0
  %v7658 = vsel %vm7402, 1, 0
  %v7659 = vsel %vm7403, 1, 0
  %v7660 = vsel %vm7404, 1, 0
  %v7661 = vsel %vm7405, 1, 0
  %v7662 = vsel %vm7406, 1, 0
  %v7663 = vsel %vm7407, 1, 0
  %v7664 = vsel %vm7408, 1, 0
  %v7665 = vsel %vm7409, 1, 0
  %v7666 = vsel %vm7410, 1, 0
  %v7667 = vsel %vm7411, 1, 0
  %v7668 = vsel %vm7412, 1, 0
  %v7669 = vsel %vm7413, 1, 0
  %v7670 = vsel %vm7414, 1, 0
  %v7671 = vsel %vm7415, 1, 0
  %v7672 = vsel %vm7416, 1, 0
  %v7673 = vsel %vm7417, 1, 0
  %v7674 = vsel %vm7418, 1, 0
  %v7675 = vsel %vm7419, 1, 0
  %v7676 = vsel %vm7420, 1, 0
  %v7677 = vsel %vm7421, 1, 0
  %v7678 = vsel %vm7422, 1, 0
  %v7679 = vsel %vm7423, 1, 0
  %v7680 = vsel %vm7424, 1, 0
  %v7681 = vsel %vm7425, 1, 0
  %v7682 = vsel %vm7426, 1, 0
  %v7683 = vsel %vm7427, 1, 0
  %v7684 = vsel %vm7428, 1, 0
  %v7685 = vsel %vm7429, 1, 0
  %v7686 = vsel %vm7430, 1, 0
  %v7687 = vsel %vm7431, 1, 0
  %v7688 = vsel %vm7432, 1, 0
  %v7689 = vsel %vm7433, 1, 0
  %v7690 = vsel %vm7434, 1, 0
  %v7691 = vsel %vm7435, 1, 0
  %v7692 = vsel %vm7436, 1, 0
  %v7693 = vsel %vm7437, 1, 0
  %v7694 = vsel %vm7438, 1, 0
  %v7695 = vsel %vm7439, 1, 0
  %v7696 = vsel %vm7440, 1, 0
  %v7697 = vsel %vm7441, 1, 0
  %v7698 = vsel %vm7442, 1, 0
  %v7699 = vsel %vm7443, 1, 0
  %v7700 = vsel %vm7444, 1, 0
  %v7701 = vsel %vm7445, 1, 0
  %v7702 = vsel %vm7446, 1, 0
  %v7703 = vsel %vm7447, 1, 0
  %v7704 = vsel %vm7448, 1, 0
  %v7705 = vsel %vm7449, 1, 0
  %v7706 = vsel %vm7450, 1, 0
  %v7707 = vsel %vm7451, 1, 0
  %v7708 = vsel %vm7452, 1, 0
  %v7709 = vsel %vm7453, 1, 0
  %v7710 = vsel %vm7454, 1, 0
  %v7711 = vsel %vm7455, 1, 0
  %v7712 = vsel %vm7456, 1, 0
  %v7713 = vsel %vm7457, 1, 0
  %v7714 = vsel %vm7458, 1, 0
  %v7715 = vsel %vm7459, 1, 0
  %v7716 = vsel %vm7460, 1, 0
  %v7717 = vsel %vm7461, 1, 0
  %v7718 = vsel %vm7462, 1, 0
  %v7719 = vsel %vm7463, 1, 0
  %v7720 = vsel %vm7464, 1, 0
  %v7721 = vsel %vm7465, 1, 0
  %v7722 = vsel %vm7466, 1, 0
  %v7723 = vsel %vm7467, 1, 0
  %v7724 = vsel %vm7468, 1, 0
  %v7725 = vsel %vm7469, 1, 0
  %v7726 = vsel %vm7470, 1, 0
  %v7727 = vsel %vm7471, 1, 0
  %v7728 = vsel %vm7472, 1, 0
  %v7729 = vsel %vm7473, 1, 0
  %v7730 = vsel %vm7474, 1, 0
  %v7731 = vsel %vm7475, 1, 0
  %v7732 = vsel %vm7476, 1, 0
  %v7733 = vsel %vm7477, 1, 0
  %v7734 = vsel %vm7478, 1, 0
  %v7735 = vsel %vm7479, 1, 0
  %v7736 = vsel %vm7480, 1, 0
  %v7737 = vsel %vm7481, 1, 0
  %v7738 = vsel %vm7482, 1, 0
  %v7739 = vsel %vm7483, 1, 0
  %v7740 = vsel %vm7484, 1, 0
  %v7741 = vsel %vm7485, 1, 0
  %v7742 = vsel %vm7486, 1, 0
  %v7743 = vsel %vm7487, 1, 0
  %v7744 = vsel %vm7488, 1, 0
  %v7745 = vsel %vm7489, 1, 0
  %v7746 = vsel %vm7490, 1, 0
  %v7747 = vsel %vm7491, 1, 0
  %v7748 = vsel %vm7492, 1, 0
  %v7749 = vsel %vm7493, 1, 0
  %v7750 = vsel %vm7494, 1, 0
  %v7751 = vsel %vm7495, 1, 0
  %v7752 = vsel %vm7496, 1, 0
  %v7753 = vsel %vm7497, 1, 0
  %v7754 = vsel %vm7498, 1, 0
  %v7755 = vsel %vm7499, 1, 0
  %v7756 = vsel %vm7500, 1, 0
  %v7757 = vsel %vm7501, 1, 0
  %v7758 = vsel %vm7502, 1, 0
  %v7759 = vsel %vm7503, 1, 0
  %v7760 = vsel %vm7504, 1, 0
  %v7761 = vsel %vm7505, 1, 0
  %v7762 = vsel %vm7506, 1, 0
  %v7763 = vsel %vm7507, 1, 0
  %v7764 = vsel %vm7508, 1, 0
  %v7765 = vsel %vm7509, 1, 0
  %v7766 = vsel %vm7510, 1, 0
  %v7767 = vsel %vm7511, 1, 0
  %v7768 = vsel %vm7512, 1, 0
  %v7769 = vsel %vm7513, 1, 0
  %v7770 = vsel %vm7514, 1, 0
  %v7771 = vsel %vm7515, 1, 0
  %v7772 = vsel %vm7516, 1, 0
  %v7773 = vsel %vm7517, 1, 0
  %v7774 = vsel %vm7518, 1, 0
  %v7775 = vcvt.s32.f32 %v7519
  %v7776 = vcvt.s32.f32 %v7520
  %v7777 = vcvt.s32.f32 %v7521
  %v7778 = vcvt.s32.f32 %v7522
  %v7779 = vcvt.s32.f32 %v7523
  %v7780 = vcvt.s32.f32 %v7524
  %v7781 = vcvt.s32.f32 %v7525
  %v7782 = vcvt.s32.f32 %v7526
  %v7783 = vcvt.s32.f32 %v7527
  %v7784 = vcvt.s32.f32 %v7528
  %v7785 = vcvt.s32.f32 %v7529
  %v7786 = vcvt.s32.f32 %v7530
  %v7787 = vcvt.s32.f32 %v7531
  %v7788 = vcvt.s32.f32 %v7532
  %v7789 = vcvt.s32.f32 %v7533
  %v7790 = vcvt.s32.f32 %v7534
  %v7791 = vcvt.s32.f32 %v7535
  %v7792 = vcvt.s32.f32 %v7536
  %v7793 = vcvt.s32.f32 %v7537
  %v7794 = vcvt.s32.f32 %v7538
  %v7795 = vcvt.s32.f32 %v7539
  %v7796 = vcvt.s32.f32 %v7540
  %v7797 = vcvt.s32.f32 %v7541
  %v7798 = vcvt.s32.f32 %v7542
  %v7799 = vcvt.s32.f32 %v7543
  %v7800 = vcvt.s32.f32 %v7544
  %v7801 = vcvt.s32.f32 %v7545
  %v7802 = vcvt.s32.f32 %v7546
  %v7803 = vcvt.s32.f32 %v7547
  %v7804 = vcvt.s32.f32 %v7548
  %v7805 = vcvt.s32.f32 %v7549
  %v7806 = vcvt.s32.f32 %v7550
  %v7807 = vcvt.s32.f32 %v7551
  %v7808 = vcvt.s32.f32 %v7552
  %v7809 = vcvt.s32.f32 %v7553
  %v7810 = vcvt.s32.f32 %v7554
  %v7811 = vcvt.s32.f32 %v7555
  %v7812 = vcvt.s32.f32 %v7556
  %v7813 = vcvt.s32.f32 %v7557
  %v7814 = vcvt.s32.f32 %v7558
  %v7815 = vcvt.s32.f32 %v7559
  %v7816 = vcvt.s32.f32 %v7560
  %v7817 = vcvt.s32.f32 %v7561
  %v7818 = vcvt.s32.f32 %v7562
  %v7819 = vcvt.s32.f32 %v7563
  %v7820 = vcvt.s32.f32 %v7564
  %v7821 = vcvt.s32.f32 %v7565
  %v7822 = vcvt.s32.f32 %v7566
  %v7823 = vcvt.s32.f32 %v7567
  %v7824 = vcvt.s32.f32 %v7568
  %v7825 = vcvt.s32.f32 %v7569
  %v7826 = vcvt.s32.f32 %v7570
  %v7827 = vcvt.s32.f32 %v7571
  %v7828 = vcvt.s32.f32 %v7572
  %v7829 = vcvt.s32.f32 %v7573
  %v7830 = vcvt.s32.f32 %v7574
  %v7831 = vcvt.s32.f32 %v7575
  %v7832 = vcvt.s32.f32 %v7576
  %v7833 = vcvt.s32.f32 %v7577
  %v7834 = vcvt.s32.f32 %v7578
  %v7835 = vcvt.s32.f32 %v7579
  %v7836 = vcvt.s32.f32 %v7580
  %v7837 = vcvt.s32.f32 %v7581
  %v7838 = vcvt.s32.f32 %v7582
  %v7839 = vcvt.s32.f32 %v7583
  %v7840 = vcvt.s32.f32 %v7584
  %v7841 = vcvt.s32.f32 %v7585
  %v7842 = vcvt.s32.f32 %v7586
  %v7843 = vcvt.s32.f32 %v7587
  %v7844 = vcvt.s32.f32 %v7588
  %v7845 = vcvt.s32.f32 %v7589
  %v7846 = vcvt.s32.f32 %v7590
  %v7847 = vcvt.s32.f32 %v7591
  %v7848 = vcvt.s32.f32 %v7592
  %v7849 = vcvt.s32.f32 %v7593
  %v7850 = vcvt.s32.f32 %v7594
  %v7851 = vcvt.s32.f32 %v7595
  %v7852 = vcvt.s32.f32 %v7596
  %v7853 = vcvt.s32.f32 %v7597
  %v7854 = vcvt.s32.f32 %v7598
  %v7855 = vcvt.s32.f32 %v7599
  %v7856 = vcvt.s32.f32 %v7600
  %v7857 = vcvt.s32.f32 %v7601
  %v7858 = vcvt.s32.f32 %v7602
  %v7859 = vcvt.s32.f32 %v7603
  %v7860 = vcvt.s32.f32 %v7604
  %v7861 = vcvt.s32.f32 %v7605
  %v7862 = vcvt.s32.f32 %v7606
  %v7863 = vcvt.s32.f32 %v7607
  %v7864 = vcvt.s32.f32 %v7608
  %v7865 = vcvt.s32.f32 %v7609
  %v7866 = vcvt.s32.f32 %v7610
  %v7867 = vcvt.s32.f32 %v7611
  %v7868 = vcvt.s32.f32 %v7612
  %v7869 = vcvt.s32.f32 %v7613
  %v7870 = vcvt.s32.f32 %v7614
  %v7871 = vcvt.s32.f32 %v7615
  %v7872 = vcvt.s32.f32 %v7616
  %v7873 = vcvt.s32.f32 %v7617
  %v7874 = vcvt.s32.f32 %v7618
  %v7875 = vcvt.s32.f32 %v7619
  %v7876 = vcvt.s32.f32 %v7620
  %v7877 = vcvt.s32.f32 %v7621
  %v7878 = vcvt.s32.f32 %v7622
  %v7879 = vcvt.s32.f32 %v7623
  %v7880 = vcvt.s32.f32 %v7624
  %v7881 = vcvt.s32.f32 %v7625
  %v7882 = vcvt.s32.f32 %v7626
  %v7883 = vcvt.s32.f32 %v7627
  %v7884 = vcvt.s32.f32 %v7628
  %v7885 = vcvt.s32.f32 %v7629
  %v7886 = vcvt.s32.f32 %v7630
  %v7887 = vcvt.s32.f32 %v7631
  %v7888 = vcvt.s32.f32 %v7632
  %v7889 = vcvt.s32.f32 %v7633
  %v7890 = vcvt.s32.f32 %v7634
  %v7891 = vcvt.s32.f32 %v7635
  %v7892 = vcvt.s32.f32 %v7636
  %v7893 = vcvt.s32.f32 %v7637
  %v7894 = vcvt.s32.f32 %v7638
  %v7895 = vcvt.s32.f32 %v7639
  %v7896 = vcvt.s32.f32 %v7640
  %v7897 = vcvt.s32.f32 %v7641
  %v7898 = vcvt.s32.f32 %v7642
  %v7899 = vcvt.s32.f32 %v7643
  %v7900 = vcvt.s32.f32 %v7644
  %v7901 = vcvt.s32.f32 %v7645
  %v7902 = vcvt.s32.f32 %v7646
  %v7903 = vcvt.s32.f32 %v7647
  %v7904 = vcvt.s32.f32 %v7648
  %v7905 = vcvt.s32.f32 %v7649
  %v7906 = vcvt.s32.f32 %v7650
  %v7907 = vcvt.s32.f32 %v7651
  %v7908 = vcvt.s32.f32 %v7652
  %v7909 = vcvt.s32.f32 %v7653
  %v7910 = vcvt.s32.f32 %v7654
  %v7911 = vcvt.s32.f32 %v7655
  %v7912 = vcvt.s32.f32 %v7656
  %v7913 = vcvt.s32.f32 %v7657
  %v7914 = vcvt.s32.f32 %v7658
  %v7915 = vcvt.s32.f32 %v7659
  %v7916 = vcvt.s32.f32 %v7660
  %v7917 = vcvt.s32.f32 %v7661
  %v7918 = vcvt.s32.f32 %v7662
  %v7919 = vcvt.s32.f32 %v7663
  %v7920 = vcvt.s32.f32 %v7664
  %v7921 = vcvt.s32.f32 %v7665
  %v7922 = vcvt.s32.f32 %v7666
  %v7923 = vcvt.s32.f32 %v7667
  %v7924 = vcvt.s32.f32 %v7668
  %v7925 = vcvt.s32.f32 %v7669
  %v7926 = vcvt.s32.f32 %v7670
  %v7927 = vcvt.s32.f32 %v7671
  %v7928 = vcvt.s32.f32 %v7672
  %v7929 = vcvt.s32.f32 %v7673
  %v7930 = vcvt.s32.f32 %v7674
  %v7931 = vcvt.s32.f32 %v7675
  %v7932 = vcvt.s32.f32 %v7676
  %v7933 = vcvt.s32.f32 %v7677
  %v7934 = vcvt.s32.f32 %v7678
  %v7935 = vcvt.s32.f32 %v7679
  %v7936 = vcvt.s32.f32 %v7680
  %v7937 = vcvt.s32.f32 %v7681
  %v7938 = vcvt.s32.f32 %v7682
  %v7939 = vcvt.s32.f32 %v7683
  %v7940 = vcvt.s32.f32 %v7684
  %v7941 = vcvt.s32.f32 %v7685
  %v7942 = vcvt.s32.f32 %v7686
  %v7943 = vcvt.s32.f32 %v7687
  %v7944 = vcvt.s32.f32 %v7688
  %v7945 = vcvt.s32.f32 %v7689
  %v7946 = vcvt.s32.f32 %v7690
  %v7947 = vcvt.s32.f32 %v7691
  %v7948 = vcvt.s32.f32 %v7692
  %v7949 = vcvt.s32.f32 %v7693
  %v7950 = vcvt.s32.f32 %v7694
  %v7951 = vcvt.s32.f32 %v7695
  %v7952 = vcvt.s32.f32 %v7696
  %v7953 = vcvt.s32.f32 %v7697
  %v7954 = vcvt.s32.f32 %v7698
  %v7955 = vcvt.s32.f32 %v7699
  %v7956 = vcvt.s32.f32 %v7700
  %v7957 = vcvt.s32.f32 %v7701
  %v7958 = vcvt.s32.f32 %v7702
  %v7959 = vcvt.s32.f32 %v7703
  %v7960 = vcvt.s32.f32 %v7704
  %v7961 = vcvt.s32.f32 %v7705
  %v7962 = vcvt.s32.f32 %v7706
  %v7963 = vcvt.s32.f32 %v7707
  %v7964 = vcvt.s32.f32 %v7708
  %v7965 = vcvt.s32.f32 %v7709
  %v7966 = vcvt.s32.f32 %v7710
  %v7967 = vcvt.s32.f32 %v7711
  %v7968 = vcvt.s32.f32 %v7712
  %v7969 = vcvt.s32.f32 %v7713
  %v7970 = vcvt.s32.f32 %v7714
  %v7971 = vcvt.s32.f32 %v7715
  %v7972 = vcvt.s32.f32 %v7716
  %v7973 = vcvt.s32.f32 %v7717
  %v7974 = vcvt.s32.f32 %v7718
  %v7975 = vcvt.s32.f32 %v7719
  %v7976 = vcvt.s32.f32 %v7720
  %v7977 = vcvt.s32.f32 %v7721
  %v7978 = vcvt.s32.f32 %v7722
  %v7979 = vcvt.s32.f32 %v7723
  %v7980 = vcvt.s32.f32 %v7724
  %v7981 = vcvt.s32.f32 %v7725
  %v7982 = vcvt.s32.f32 %v7726
  %v7983 = vcvt.s32.f32 %v7727
  %v7984 = vcvt.s32.f32 %v7728
  %v7985 = vcvt.s32.f32 %v7729
  %v7986 = vcvt.s32.f32 %v7730
  %v7987 = vcvt.s32.f32 %v7731
  %v7988 = vcvt.s32.f32 %v7732
  %v7989 = vcvt.s32.f32 %v7733
  %v7990 = vcvt.s32.f32 %v7734
  %v7991 = vcvt.s32.f32 %v7735
  %v7992 = vcvt.s32.f32 %v7736
  %v7993 = vcvt.s32.f32 %v7737
  %v7994 = vcvt.s32.f32 %v7738
  %v7995 = vcvt.s32.f32 %v7739
  %v7996 = vcvt.s32.f32 %v7740
  %v7997 = vcvt.s32.f32 %v7741
  %v7998 = vcvt.s32.f32 %v7742
  %v7999 = vcvt.s32.f32 %v7743
  %v8000 = vcvt.s32.f32 %v7744
  %v8001 = vcvt.s32.f32 %v7745
  %v8002 = vcvt.s32.f32 %v7746
  %v8003 = vcvt.s32.f32 %v7747
  %v8004 = vcvt.s32.f32 %v7748
  %v8005 = vcvt.s32.f32 %v7749
  %v8006 = vcvt.s32.f32 %v7750
  %v8007 = vcvt.s32.f32 %v7751
  %v8008 = vcvt.s32.f32 %v7752
  %v8009 = vcvt.s32.f32 %v7753
  %v8010 = vcvt.s32.f32 %v7754
  %v8011 = vcvt.s32.f32 %v7755
  %v8012 = vcvt.s32.f32 %v7756
  %v8013 = vcvt.s32.f32 %v7757
  %v8014 = vcvt.s32.f32 %v7758
  %v8015 = vcvt.s32.f32 %v7759
  %v8016 = vcvt.s32.f32 %v7760
  %v8017 = vcvt.s32.f32 %v7761
  %v8018 = vcvt.s32.f32 %v7762
  %v8019 = vcvt.s32.f32 %v7763
  %v8020 = vcvt.s32.f32 %v7764
  %v8021 = vcvt.s32.f32 %v7765
  %v8022 = vcvt.s32.f32 %v7766
  %v8023 = vcvt.s32.f32 %v7767
  %v8024 = vcvt.s32.f32 %v7768
  %v8025 = vcvt.s32.f32 %v7769
  %v8026 = vcvt.s32.f32 %v7770
  %v8027 = vcvt.s32.f32 %v7771
  %v8028 = vcvt.s32.f32 %v7772
  %v8029 = vcvt.s32.f32 %v7773
  %v8030 = vcvt.s32.f32 %v7774
  %v8031 = vld [vmem:[%s1] sm:$0xff]
  %v8032 = vld [vmem:[%s1 + $0x8] sm:$0xff]
  %v8033 = vld [vmem:[%s1 + $0x10] sm:$0xff]
  %v8034 = vld [vmem:[%s1 + $0x18] sm:$0xff]
  %v8035 = vld [vmem:[%s1 + $0x20] sm:$0xff]
  %v8036 = vld [vmem:[%s1 + $0x28] sm:$0xff]
  %v8037 = vld [vmem:[%s1 + $0x30] sm:$0xff]
  %v8038 = vld [vmem:[%s1 + $0x38] sm:$0xff]
  %v8039 = vld [vmem:[%s1 + $0x40] sm:$0xff]
  %v8040 = vld [vmem:[%s1 + $0x48] sm:$0xff]
  %v8041 = vld [vmem:[%s1 + $0x50] sm:$0xff]
  %v8042 = vld [vmem:[%s1 + $0x58] sm:$0xff]
  %v8043 = vld [vmem:[%s1 + $0x60] sm:$0xff]
  %v8044 = vld [vmem:[%s1 + $0x68] sm:$0xff]
  %v8045 = vld [vmem:[%s1 + $0x70] sm:$0xff]
  %v8046 = vld [vmem:[%s1 + $0x78] sm:$0xff]
  %8047 = vmatprep.subr.mxu0 0.0
  %8048 = vmatpush1.msra.mxu0 %v8031
  %8049 = vmatprep.subr.mxu0 0.0
  %8050 = vmatpush1.msra.mxu0 %v8032
  %8051 = vmatprep.subr.mxu0 0.0
  %8052 = vmatpush1.msra.mxu0 %v8033
  %8053 = vmatprep.subr.mxu0 0.0
  %8054 = vmatpush1.msra.mxu0 %v8034
  %8055 = vmatprep.subr.mxu0 0.0
  %8056 = vmatpush1.msra.mxu0 %v8035
  %8057 = vmatprep.subr.mxu0 0.0
  %8058 = vmatpush1.msra.mxu0 %v8036
  %8059 = vmatprep.subr.mxu0 0.0
  %8060 = vmatpush1.msra.mxu0 %v8037
  %8061 = vmatprep.subr.mxu0 0.0
  %8062 = vmatpush1.msra.mxu0 %v8038
  %8063 = vmatprep.subr.mxu0 0.0
  %8064 = vmatpush1.msra.mxu0 %v8039
  %8065 = vmatprep.subr.mxu0 0.0
  %8066 = vmatpush1.msra.mxu0 %v8040
  %8067 = vmatprep.subr.mxu0 0.0
  %8068 = vmatpush1.msra.mxu0 %v8041
  %8069 = vmatprep.subr.mxu0 0.0
  %8070 = vmatpush1.msra.mxu0 %v8042
  %8071 = vmatprep.subr.mxu0 0.0
  %8072 = vmatpush1.msra.mxu0 %v8043
  %8073 = vmatprep.subr.mxu0 0.0
  %8074 = vmatpush1.msra.mxu0 %v8044
  %8075 = vmatprep.subr.mxu0 0.0
  %8076 = vmatpush1.msra.mxu0 %v8045
  %8077 = vmatprep.subr.mxu0 0.0
  %8078 = vmatpush1.msra.mxu0 %v8046
  %8079 = vmatprep.subr.mxu0 0.0
  %8080 = vmatpush1.msra.mxu0 0.0
  %8081 = vmatprep.subr.mxu0 0.0
  %8082 = vmatpush1.msra.mxu0 0.0
  %8083 = vmatprep.subr.mxu0 0.0
  %8084 = vmatpush1.msra.mxu0 0.0
  %8085 = vmatprep.subr.mxu0 0.0
  %8086 = vmatpush1.msra.mxu0 0.0
  %8087 = vmatprep.subr.mxu0 0.0
  %8088 = vmatpush1.msra.mxu0 0.0
  %8089 = vmatprep.subr.mxu0 0.0
  %8090 = vmatpush1.msra.mxu0 0.0
  %8091 = vmatprep.subr.mxu0 0.0
  %8092 = vmatpush1.msra.mxu0 0.0
  %8093 = vmatprep.subr.mxu0 0.0
  %8094 = vmatpush1.msra.mxu0 0.0
  %8095 = vmatprep.subr.mxu0 0.0
  %8096 = vmatpush1.msra.mxu0 0.0
  %8097 = vmatprep.subr.mxu0 0.0
  %8098 = vmatpush1.msra.mxu0 0.0
  %8099 = vmatprep.subr.mxu0 0.0
  %8100 = vmatpush1.msra.mxu0 0.0
  %8101 = vmatprep.subr.mxu0 0.0
  %8102 = vmatpush1.msra.mxu0 0.0
  %8103 = vmatprep.subr.mxu0 0.0
  %8104 = vmatpush1.msra.mxu0 0.0
  %8105 = vmatprep.subr.mxu0 0.0
  %8106 = vmatpush1.msra.mxu0 0.0
  %8107 = vmatprep.subr.mxu0 0.0
  %8108 = vmatpush1.msra.mxu0 0.0
  %8109 = vmatprep.subr.mxu0 0.0
  %8110 = vmatpush1.msra.mxu0 0.0
  %8111 = vmatprep.mubr.f32.mxu0 0.0
  %8112 = vmatmul.mubr.f32.gmra.mrb[0].mxu0 %v7775
  %v8113 = vpop.f32.mrb[0].mxu0
  %v8114 = vadd.f32 0.0, %v8113
  %v8115 = vpop.f32.mrb[0].mxu0
  %8116 = vmatprep.mubr.f32.mxu0 0.0
  %8117 = vmatmul.mubr.f32.gmra.mrb[0].mxu0 %v7776
  %v8118 = vpop.f32.mrb[0].mxu0
  %v8119 = vadd.f32 0.0, %v8118
  %v8120 = vpop.f32.mrb[0].mxu0
  %8121 = vmatprep.mubr.f32.mxu0 0.0
  %8122 = vmatmul.mubr.f32.gmra.mrb[0].mxu0 %v7777
  %v8123 = vpop.f32.mrb[0].mxu0
  %v8124 = vadd.f32 0.0, %v8123
  %v8125 = vpop.f32.mrb[0].mxu0
  %8126 = vmatprep.mubr.f32.mxu0 0.0
  %8127 = vmatmul.mubr.f32.gmra.mrb[0].mxu0 %v7778
  %v8128 = vpop.f32.mrb[0].mxu0
  %v8129 = vadd.f32 0.0, %v8128
  %v8130 = vpop.f32.mrb[0].mxu0
  %8131 = vmatprep.mubr.f32.mxu0 0.0
  %8132 = vmatmul.mubr.f32.gmra.mrb[0].mxu0 %v7779
  %v8133 = vpop.f32.mrb[0].mxu0
  %v8134 = vadd.f32 0.0, %v8133
  %v8135 = vpop.f32.mrb[0].mxu0
  %8136 = vmatprep.mubr.f32.mxu0 0.0
  %8137 = vmatmul.mubr.f32.gmra.mrb[0].mxu0 %v7780
  %v8138 = vpop.f32.mrb[0].mxu0
  %v8139 = vadd.f32 0.0, %v8138
  %v8140 = vpop.f32.mrb[0].mxu0
  %8141 = vmatprep.mubr.f32.mxu0 0.0
  %8142 = vmatmul.mubr.f32.gmra.mrb[0].mxu0 %v7781
  %v8143 = vpop.f32.mrb[0].mxu0
  %v8144 = vadd.f32 0.0, %v8143
  %v8145 = vpop.f32.mrb[0].mxu0
  %8146 = vmatprep.mubr.f32.mxu0 0.0
  %8147 = vmatmul.mubr.f32.gmra.mrb[0].mxu0 %v7782
  %v8148 = vpop.f32.mrb[0].mxu0
  %v8149 = vadd.f32 0.0, %v8148
  %v8150 = vpop.f32.mrb[0].mxu0
  %8151 = vmatprep.mubr.f32.mxu0 0.0
  %8152 = vmatmul.mubr.f32.gmra.mrb[0].mxu0 %v7783
  %v8153 = vpop.f32.mrb[0].mxu0
  %v8154 = vadd.f32 0.0, %v8153
  %v8155 = vpop.f32.mrb[0].mxu0
  %8156 = vmatprep.mubr.f32.mxu0 0.0
  %8157 = vmatmul.mubr.f32.gmra.mrb[0].mxu0 %v7784
  %v8158 = vpop.f32.mrb[0].mxu0
  %v8159 = vadd.f32 0.0, %v8158
  %v8160 = vpop.f32.mrb[0].mxu0
  %8161 = vmatprep.mubr.f32.mxu0 0.0
  %8162 = vmatmul.mubr.f32.gmra.mrb[0].mxu0 %v7785
  %v8163 = vpop.f32.mrb[0].mxu0
  %v8164 = vadd.f32 0.0, %v8163
  %v8165 = vpop.f32.mrb[0].mxu0
  %8166 = vmatprep.mubr.f32.mxu0 0.0
  %8167 = vmatmul.mubr.f32.gmra.mrb[0].mxu0 %v7786
  %v8168 = vpop.f32.mrb[0].mxu0
  %v8169 = vadd.f32 0.0, %v8168
  %v8170 = vpop.f32.mrb[0].mxu0
  %8171 = vmatprep.mubr.f32.mxu0 0.0
  %8172 = vmatmul.mubr.f32.gmra.mrb[0].mxu0 %v7787
  %v8173 = vpop.f32.mrb[0].mxu0
  %v8174 = vadd.f32 0.0, %v8173
  %v8175 = vpop.f32.mrb[0].mxu0
  %8176 = vmatprep.mubr.f32.mxu0 0.0
  %8177 = vmatmul.mubr.f32.gmra.mrb[0].mxu0 %v7788
  %v8178 = vpop.f32.mrb[0].mxu0
  %v8179 = vadd.f32 0.0, %v8178
  %v8180 = vpop.f32.mrb[0].mxu0
  %8181 = vmatprep.mubr.f32.mxu0 0.0
  %8182 = vmatmul.mubr.f32.gmra.mrb[0].mxu0 %v7789
  %v8183 = vpop.f32.mrb[0].mxu0
  %v8184 = vadd.f32 0.0, %v8183
  %v8185 = vpop.f32.mrb[0].mxu0
  %8186 = vmatprep.mubr.f32.mxu0 0.0
  %8187 = vmatmul.mubr.f32.gmra.mrb[0].mxu0 %v7790
  %v8188 = vpop.f32.mrb[0].mxu0
  %v8189 = vadd.f32 0.0, %v8188
  %v8190 = vpop.f32.mrb[0].mxu0
  %8191 = vmatprep.mubr.f32.mxu0 0.0
  %8192 = vmatmul.mubr.f32.gmra.mrb[0].mxu0 %v7791
  %v8193 = vpop.f32.mrb[0].mxu0
  %v8194 = vadd.f32 0.0, %v8193
  %v8195 = vpop.f32.mrb[0].mxu0
  %8196 = vmatprep.mubr.f32.mxu0 0.0
  %8197 = vmatmul.mubr.f32.gmra.mrb[0].mxu0 %v7792
  %v8198 = vpop.f32.mrb[0].mxu0
  %v8199 = vadd.f32 0.0, %v8198
  %v8200 = vpop.f32.mrb[0].mxu0
  %8201 = vmatprep.mubr.f32.mxu0 0.0
  %8202 = vmatmul.mubr.f32.gmra.mrb[0].mxu0 %v7793
  %v8203 = vpop.f32.mrb[0].mxu0
  %v8204 = vadd.f32 0.0, %v8203
  %v8205 = vpop.f32.mrb[0].mxu0
  %8206 = vmatprep.mubr.f32.mxu0 0.0
  %8207 = vmatmul.mubr.f32.gmra.mrb[0].mxu0 %v7794
  %v8208 = vpop.f32.mrb[0].mxu0
  %v8209 = vadd.f32 0.0, %v8208
  %v8210 = vpop.f32.mrb[0].mxu0
  %8211 = vmatprep.mubr.f32.mxu0 0.0
  %8212 = vmatmul.mubr.f32.gmra.mrb[0].mxu0 %v7795
  %v8213 = vpop.f32.mrb[0].mxu0
  %v8214 = vadd.f32 0.0, %v8213
  %v8215 = vpop.f32.mrb[0].mxu0
  %8216 = vmatprep.mubr.f32.mxu0 0.0
  %8217 = vmatmul.mubr.f32.gmra.mrb[0].mxu0 %v7796
  %v8218 = vpop.f32.mrb[0].mxu0
  %v8219 = vadd.f32 0.0, %v8218
  %v8220 = vpop.f32.mrb[0].mxu0
  %8221 = vmatprep.mubr.f32.mxu0 0.0
  %8222 = vmatmul.mubr.f32.gmra.mrb[0].mxu0 %v7797
  %v8223 = vpop.f32.mrb[0].mxu0
  %v8224 = vadd.f32 0.0, %v8223
  %v8225 = vpop.f32.mrb[0].mxu0
  %8226 = vmatprep.mubr.f32.mxu0 0.0
  %8227 = vmatmul.mubr.f32.gmra.mrb[0].mxu0 %v7798
  %v8228 = vpop.f32.mrb[0].mxu0
  %v8229 = vadd.f32 0.0, %v8228
  %v8230 = vpop.f32.mrb[0].mxu0
  %8231 = vmatprep.mubr.f32.mxu0 0.0
  %8232 = vmatmul.mubr.f32.gmra.mrb[0].mxu0 %v7799
  %v8233 = vpop.f32.mrb[0].mxu0
  %v8234 = vadd.f32 0.0, %v8233
  %v8235 = vpop.f32.mrb[0].mxu0
  %8236 = vmatprep.mubr.f32.mxu0 0.0
  %8237 = vmatmul.mubr.f32.gmra.mrb[0].mxu0 %v7800
  %v8238 = vpop.f32.mrb[0].mxu0
  %v8239 = vadd.f32 0.0, %v8238
  %v8240 = vpop.f32.mrb[0].mxu0
  %8241 = vmatprep.mubr.f32.mxu0 0.0
  %8242 = vmatmul.mubr.f32.gmra.mrb[0].mxu0 %v7801
  %v8243 = vpop.f32.mrb[0].mxu0
  %v8244 = vadd.f32 0.0, %v8243
  %v8245 = vpop.f32.mrb[0].mxu0
  %8246 = vmatprep.mubr.f32.mxu0 0.0
  %8247 = vmatmul.mubr.f32.gmra.mrb[0].mxu0 %v7802
  %v8248 = vpop.f32.mrb[0].mxu0
  %v8249 = vadd.f32 0.0, %v8248
  %v8250 = vpop.f32.mrb[0].mxu0
  %8251 = vmatprep.mubr.f32.mxu0 0.0
  %8252 = vmatmul.mubr.f32.gmra.mrb[0].mxu0 %v7803
  %v8253 = vpop.f32.mrb[0].mxu0
  %v8254 = vadd.f32 0.0, %v8253
  %v8255 = vpop.f32.mrb[0].mxu0
  %8256 = vmatprep.mubr.f32.mxu0 0.0
  %8257 = vmatmul.mubr.f32.gmra.mrb[0].mxu0 %v7804
  %v8258 = vpop.f32.mrb[0].mxu0
  %v8259 = vadd.f32 0.0, %v8258
  %v8260 = vpop.f32.mrb[0].mxu0
  %8261 = vmatprep.mubr.f32.mxu0 0.0
  %8262 = vmatmul.mubr.f32.gmra.mrb[0].mxu0 %v7805
  %v8263 = vpop.f32.mrb[0].mxu0
  %v8264 = vadd.f32 0.0, %v8263
  %v8265 = vpop.f32.mrb[0].mxu0
  %8266 = vmatprep.mubr.f32.mxu0 0.0
  %8267 = vmatmul.mubr.f32.gmra.mrb[0].mxu0 %v7806
  %v8268 = vpop.f32.mrb[0].mxu0
  %v8269 = vadd.f32 0.0, %v8268
  %v8270 = vpop.f32.mrb[0].mxu0
  %8271 = vmatprep.mubr.f32.mxu0 0.0
  %8272 = vmatmul.mubr.f32.gmra.mrb[0].mxu0 %v7807
  %v8273 = vpop.f32.mrb[0].mxu0
  %v8274 = vadd.f32 0.0, %v8273
  %v8275 = vpop.f32.mrb[0].mxu0
  %8276 = vmatprep.mubr.f32.mxu0 0.0
  %8277 = vmatmul.mubr.f32.gmra.mrb[0].mxu0 %v7808
  %v8278 = vpop.f32.mrb[0].mxu0
  %v8279 = vadd.f32 0.0, %v8278
  %v8280 = vpop.f32.mrb[0].mxu0
  %8281 = vmatprep.mubr.f32.mxu0 0.0
  %8282 = vmatmul.mubr.f32.gmra.mrb[0].mxu0 %v7809
  %v8283 = vpop.f32.mrb[0].mxu0
  %v8284 = vadd.f32 0.0, %v8283
  %v8285 = vpop.f32.mrb[0].mxu0
  %8286 = vmatprep.mubr.f32.mxu0 0.0
  %8287 = vmatmul.mubr.f32.gmra.mrb[0].mxu0 %v7810
  %v8288 = vpop.f32.mrb[0].mxu0
  %v8289 = vadd.f32 0.0, %v8288
  %v8290 = vpop.f32.mrb[0].mxu0
  %8291 = vmatprep.mubr.f32.mxu0 0.0
  %8292 = vmatmul.mubr.f32.gmra.mrb[0].mxu0 %v7811
  %v8293 = vpop.f32.mrb[0].mxu0
  %v8294 = vadd.f32 0.0, %v8293
  %v8295 = vpop.f32.mrb[0].mxu0
  %8296 = vmatprep.mubr.f32.mxu0 0.0
  %8297 = vmatmul.mubr.f32.gmra.mrb[0].mxu0 %v7812
  %v8298 = vpop.f32.mrb[0].mxu0
  %v8299 = vadd.f32 0.0, %v8298
  %v8300 = vpop.f32.mrb[0].mxu0
  %8301 = vmatprep.mubr.f32.mxu0 0.0
  %8302 = vmatmul.mubr.f32.gmra.mrb[0].mxu0 %v7813
  %v8303 = vpop.f32.mrb[0].mxu0
  %v8304 = vadd.f32 0.0, %v8303
  %v8305 = vpop.f32.mrb[0].mxu0
  %8306 = vmatprep.mubr.f32.mxu0 0.0
  %8307 = vmatmul.mubr.f32.gmra.mrb[0].mxu0 %v7814
  %v8308 = vpop.f32.mrb[0].mxu0
  %v8309 = vadd.f32 0.0, %v8308
  %v8310 = vpop.f32.mrb[0].mxu0
  %8311 = vmatprep.mubr.f32.mxu0 0.0
  %8312 = vmatmul.mubr.f32.gmra.mrb[0].mxu0 %v7815
  %v8313 = vpop.f32.mrb[0].mxu0
  %v8314 = vadd.f32 0.0, %v8313
  %v8315 = vpop.f32.mrb[0].mxu0
  %8316 = vmatprep.mubr.f32.mxu0 0.0
  %8317 = vmatmul.mubr.f32.gmra.mrb[0].mxu0 %v7816
  %v8318 = vpop.f32.mrb[0].mxu0
  %v8319 = vadd.f32 0.0, %v8318
  %v8320 = vpop.f32.mrb[0].mxu0
  %8321 = vmatprep.mubr.f32.mxu0 0.0
  %8322 = vmatmul.mubr.f32.gmra.mrb[0].mxu0 %v7817
  %v8323 = vpop.f32.mrb[0].mxu0
  %v8324 = vadd.f32 0.0, %v8323
  %v8325 = vpop.f32.mrb[0].mxu0
  %8326 = vmatprep.mubr.f32.mxu0 0.0
  %8327 = vmatmul.mubr.f32.gmra.mrb[0].mxu0 %v7818
  %v8328 = vpop.f32.mrb[0].mxu0
  %v8329 = vadd.f32 0.0, %v8328
  %v8330 = vpop.f32.mrb[0].mxu0
  %8331 = vmatprep.mubr.f32.mxu0 0.0
  %8332 = vmatmul.mubr.f32.gmra.mrb[0].mxu0 %v7819
  %v8333 = vpop.f32.mrb[0].mxu0
  %v8334 = vadd.f32 0.0, %v8333
  %v8335 = vpop.f32.mrb[0].mxu0
  %8336 = vmatprep.mubr.f32.mxu0 0.0
  %8337 = vmatmul.mubr.f32.gmra.mrb[0].mxu0 %v7820
  %v8338 = vpop.f32.mrb[0].mxu0
  %v8339 = vadd.f32 0.0, %v8338
  %v8340 = vpop.f32.mrb[0].mxu0
  %8341 = vmatprep.mubr.f32.mxu0 0.0
  %8342 = vmatmul.mubr.f32.gmra.mrb[0].mxu0 %v7821
  %v8343 = vpop.f32.mrb[0].mxu0
  %v8344 = vadd.f32 0.0, %v8343
  %v8345 = vpop.f32.mrb[0].mxu0
  %8346 = vmatprep.mubr.f32.mxu0 0.0
  %8347 = vmatmul.mubr.f32.gmra.mrb[0].mxu0 %v7822
  %v8348 = vpop.f32.mrb[0].mxu0
  %v8349 = vadd.f32 0.0, %v8348
  %v8350 = vpop.f32.mrb[0].mxu0
  %8351 = vmatprep.mubr.f32.mxu0 0.0
  %8352 = vmatmul.mubr.f32.gmra.mrb[0].mxu0 %v7823
  %v8353 = vpop.f32.mrb[0].mxu0
  %v8354 = vadd.f32 0.0, %v8353
  %v8355 = vpop.f32.mrb[0].mxu0
  %8356 = vmatprep.mubr.f32.mxu0 0.0
  %8357 = vmatmul.mubr.f32.gmra.mrb[0].mxu0 %v7824
  %v8358 = vpop.f32.mrb[0].mxu0
  %v8359 = vadd.f32 0.0, %v8358
  %v8360 = vpop.f32.mrb[0].mxu0
  %8361 = vmatprep.mubr.f32.mxu0 0.0
  %8362 = vmatmul.mubr.f32.gmra.mrb[0].mxu0 %v7825
  %v8363 = vpop.f32.mrb[0].mxu0
  %v8364 = vadd.f32 0.0, %v8363
  %v8365 = vpop.f32.mrb[0].mxu0
  %8366 = vmatprep.mubr.f32.mxu0 0.0
  %8367 = vmatmul.mubr.f32.gmra.mrb[0].mxu0 %v7826
  %v8368 = vpop.f32.mrb[0].mxu0
  %v8369 = vadd.f32 0.0, %v8368
  %v8370 = vpop.f32.mrb[0].mxu0
  %8371 = vmatprep.mubr.f32.mxu0 0.0
  %8372 = vmatmul.mubr.f32.gmra.mrb[0].mxu0 %v7827
  %v8373 = vpop.f32.mrb[0].mxu0
  %v8374 = vadd.f32 0.0, %v8373
  %v8375 = vpop.f32.mrb[0].mxu0
  %8376 = vmatprep.mubr.f32.mxu0 0.0
  %8377 = vmatmul.mubr.f32.gmra.mrb[0].mxu0 %v7828
  %v8378 = vpop.f32.mrb[0].mxu0
  %v8379 = vadd.f32 0.0, %v8378
  %v8380 = vpop.f32.mrb[0].mxu0
  %8381 = vmatprep.mubr.f32.mxu0 0.0
  %8382 = vmatmul.mubr.f32.gmra.mrb[0].mxu0 %v7829
  %v8383 = vpop.f32.mrb[0].mxu0
  %v8384 = vadd.f32 0.0, %v8383
  %v8385 = vpop.f32.mrb[0].mxu0
  %8386 = vmatprep.mubr.f32.mxu0 0.0
  %8387 = vmatmul.mubr.f32.gmra.mrb[0].mxu0 %v7830
  %v8388 = vpop.f32.mrb[0].mxu0
  %v8389 = vadd.f32 0.0, %v8388
  %v8390 = vpop.f32.mrb[0].mxu0
  %8391 = vmatprep.mubr.f32.mxu0 0.0
  %8392 = vmatmul.mubr.f32.gmra.mrb[0].mxu0 %v7831
  %v8393 = vpop.f32.mrb[0].mxu0
  %v8394 = vadd.f32 0.0, %v8393
  %v8395 = vpop.f32.mrb[0].mxu0
  %8396 = vmatprep.mubr.f32.mxu0 0.0
  %8397 = vmatmul.mubr.f32.gmra.mrb[0].mxu0 %v7832
  %v8398 = vpop.f32.mrb[0].mxu0
  %v8399 = vadd.f32 0.0, %v8398
  %v8400 = vpop.f32.mrb[0].mxu0
  %8401 = vmatprep.mubr.f32.mxu0 0.0
  %8402 = vmatmul.mubr.f32.gmra.mrb[0].mxu0 %v7833
  %v8403 = vpop.f32.mrb[0].mxu0
  %v8404 = vadd.f32 0.0, %v8403
  %v8405 = vpop.f32.mrb[0].mxu0
  %8406 = vmatprep.mubr.f32.mxu0 0.0
  %8407 = vmatmul.mubr.f32.gmra.mrb[0].mxu0 %v7834
  %v8408 = vpop.f32.mrb[0].mxu0
  %v8409 = vadd.f32 0.0, %v8408
  %v8410 = vpop.f32.mrb[0].mxu0
  %8411 = vmatprep.mubr.f32.mxu0 0.0
  %8412 = vmatmul.mubr.f32.gmra.mrb[0].mxu0 %v7835
  %v8413 = vpop.f32.mrb[0].mxu0
  %v8414 = vadd.f32 0.0, %v8413
  %v8415 = vpop.f32.mrb[0].mxu0
  %8416 = vmatprep.mubr.f32.mxu0 0.0
  %8417 = vmatmul.mubr.f32.gmra.mrb[0].mxu0 %v7836
  %v8418 = vpop.f32.mrb[0].mxu0
  %v8419 = vadd.f32 0.0, %v8418
  %v8420 = vpop.f32.mrb[0].mxu0
  %8421 = vmatprep.mubr.f32.mxu0 0.0
  %8422 = vmatmul.mubr.f32.gmra.mrb[0].mxu0 %v7837
  %v8423 = vpop.f32.mrb[0].mxu0
  %v8424 = vadd.f32 0.0, %v8423
  %v8425 = vpop.f32.mrb[0].mxu0
  %8426 = vmatprep.mubr.f32.mxu0 0.0
  %8427 = vmatmul.mubr.f32.gmra.mrb[0].mxu0 %v7838
  %v8428 = vpop.f32.mrb[0].mxu0
  %v8429 = vadd.f32 0.0, %v8428
  %v8430 = vpop.f32.mrb[0].mxu0
  %8431 = vmatprep.mubr.f32.mxu0 0.0
  %8432 = vmatmul.mubr.f32.gmra.mrb[0].mxu0 %v7839
  %v8433 = vpop.f32.mrb[0].mxu0
  %v8434 = vadd.f32 0.0, %v8433
  %v8435 = vpop.f32.mrb[0].mxu0
  %8436 = vmatprep.mubr.f32.mxu0 0.0
  %8437 = vmatmul.mubr.f32.gmra.mrb[0].mxu0 %v7840
  %v8438 = vpop.f32.mrb[0].mxu0
  %v8439 = vadd.f32 0.0, %v8438
  %v8440 = vpop.f32.mrb[0].mxu0
  %8441 = vmatprep.mubr.f32.mxu0 0.0
  %8442 = vmatmul.mubr.f32.gmra.mrb[0].mxu0 %v7841
  %v8443 = vpop.f32.mrb[0].mxu0
  %v8444 = vadd.f32 0.0, %v8443
  %v8445 = vpop.f32.mrb[0].mxu0
  %8446 = vmatprep.mubr.f32.mxu0 0.0
  %8447 = vmatmul.mubr.f32.gmra.mrb[0].mxu0 %v7842
  %v8448 = vpop.f32.mrb[0].mxu0
  %v8449 = vadd.f32 0.0, %v8448
  %v8450 = vpop.f32.mrb[0].mxu0
  %8451 = vmatprep.mubr.f32.mxu0 0.0
  %8452 = vmatmul.mubr.f32.gmra.mrb[0].mxu0 %v7843
  %v8453 = vpop.f32.mrb[0].mxu0
  %v8454 = vadd.f32 0.0, %v8453
  %v8455 = vpop.f32.mrb[0].mxu0
  %8456 = vmatprep.mubr.f32.mxu0 0.0
  %8457 = vmatmul.mubr.f32.gmra.mrb[0].mxu0 %v7844
  %v8458 = vpop.f32.mrb[0].mxu0
  %v8459 = vadd.f32 0.0, %v8458
  %v8460 = vpop.f32.mrb[0].mxu0
  %8461 = vmatprep.mubr.f32.mxu0 0.0
  %8462 = vmatmul.mubr.f32.gmra.mrb[0].mxu0 %v7845
  %v8463 = vpop.f32.mrb[0].mxu0
  %v8464 = vadd.f32 0.0, %v8463
  %v8465 = vpop.f32.mrb[0].mxu0
  %8466 = vmatprep.mubr.f32.mxu0 0.0
  %8467 = vmatmul.mubr.f32.gmra.mrb[0].mxu0 %v7846
  %v8468 = vpop.f32.mrb[0].mxu0
  %v8469 = vadd.f32 0.0, %v8468
  %v8470 = vpop.f32.mrb[0].mxu0
  %8471 = vmatprep.mubr.f32.mxu0 0.0
  %8472 = vmatmul.mubr.f32.gmra.mrb[0].mxu0 %v7847
  %v8473 = vpop.f32.mrb[0].mxu0
  %v8474 = vadd.f32 0.0, %v8473
  %v8475 = vpop.f32.mrb[0].mxu0
  %8476 = vmatprep.mubr.f32.mxu0 0.0
  %8477 = vmatmul.mubr.f32.gmra.mrb[0].mxu0 %v7848
  %v8478 = vpop.f32.mrb[0].mxu0
  %v8479 = vadd.f32 0.0, %v8478
  %v8480 = vpop.f32.mrb[0].mxu0
  %8481 = vmatprep.mubr.f32.mxu0 0.0
  %8482 = vmatmul.mubr.f32.gmra.mrb[0].mxu0 %v7849
  %v8483 = vpop.f32.mrb[0].mxu0
  %v8484 = vadd.f32 0.0, %v8483
  %v8485 = vpop.f32.mrb[0].mxu0
  %8486 = vmatprep.mubr.f32.mxu0 0.0
  %8487 = vmatmul.mubr.f32.gmra.mrb[0].mxu0 %v7850
  %v8488 = vpop.f32.mrb[0].mxu0
  %v8489 = vadd.f32 0.0, %v8488
  %v8490 = vpop.f32.mrb[0].mxu0
  %8491 = vmatprep.mubr.f32.mxu0 0.0
  %8492 = vmatmul.mubr.f32.gmra.mrb[0].mxu0 %v7851
  %v8493 = vpop.f32.mrb[0].mxu0
  %v8494 = vadd.f32 0.0, %v8493
  %v8495 = vpop.f32.mrb[0].mxu0
  %8496 = vmatprep.mubr.f32.mxu0 0.0
  %8497 = vmatmul.mubr.f32.gmra.mrb[0].mxu0 %v7852
  %v8498 = vpop.f32.mrb[0].mxu0
  %v8499 = vadd.f32 0.0, %v8498
  %v8500 = vpop.f32.mrb[0].mxu0
  %8501 = vmatprep.mubr.f32.mxu0 0.0
  %8502 = vmatmul.mubr.f32.gmra.mrb[0].mxu0 %v7853
  %v8503 = vpop.f32.mrb[0].mxu0
  %v8504 = vadd.f32 0.0, %v8503
  %v8505 = vpop.f32.mrb[0].mxu0
  %8506 = vmatprep.mubr.f32.mxu0 0.0
  %8507 = vmatmul.mubr.f32.gmra.mrb[0].mxu0 %v7854
  %v8508 = vpop.f32.mrb[0].mxu0
  %v8509 = vadd.f32 0.0, %v8508
  %v8510 = vpop.f32.mrb[0].mxu0
  %8511 = vmatprep.mubr.f32.mxu0 0.0
  %8512 = vmatmul.mubr.f32.gmra.mrb[0].mxu0 %v7855
  %v8513 = vpop.f32.mrb[0].mxu0
  %v8514 = vadd.f32 0.0, %v8513
  %v8515 = vpop.f32.mrb[0].mxu0
  %8516 = vmatprep.mubr.f32.mxu0 0.0
  %8517 = vmatmul.mubr.f32.gmra.mrb[0].mxu0 %v7856
  %v8518 = vpop.f32.mrb[0].mxu0
  %v8519 = vadd.f32 0.0, %v8518
  %v8520 = vpop.f32.mrb[0].mxu0
  %8521 = vmatprep.mubr.f32.mxu0 0.0
  %8522 = vmatmul.mubr.f32.gmra.mrb[0].mxu0 %v7857
  %v8523 = vpop.f32.mrb[0].mxu0
  %v8524 = vadd.f32 0.0, %v8523
  %v8525 = vpop.f32.mrb[0].mxu0
  %8526 = vmatprep.mubr.f32.mxu0 0.0
  %8527 = vmatmul.mubr.f32.gmra.mrb[0].mxu0 %v7858
  %v8528 = vpop.f32.mrb[0].mxu0
  %v8529 = vadd.f32 0.0, %v8528
  %v8530 = vpop.f32.mrb[0].mxu0
  %8531 = vmatprep.mubr.f32.mxu0 0.0
  %8532 = vmatmul.mubr.f32.gmra.mrb[0].mxu0 %v7859
  %v8533 = vpop.f32.mrb[0].mxu0
  %v8534 = vadd.f32 0.0, %v8533
  %v8535 = vpop.f32.mrb[0].mxu0
  %8536 = vmatprep.mubr.f32.mxu0 0.0
  %8537 = vmatmul.mubr.f32.gmra.mrb[0].mxu0 %v7860
  %v8538 = vpop.f32.mrb[0].mxu0
  %v8539 = vadd.f32 0.0, %v8538
  %v8540 = vpop.f32.mrb[0].mxu0
  %8541 = vmatprep.mubr.f32.mxu0 0.0
  %8542 = vmatmul.mubr.f32.gmra.mrb[0].mxu0 %v7861
  %v8543 = vpop.f32.mrb[0].mxu0
  %v8544 = vadd.f32 0.0, %v8543
  %v8545 = vpop.f32.mrb[0].mxu0
  %8546 = vmatprep.mubr.f32.mxu0 0.0
  %8547 = vmatmul.mubr.f32.gmra.mrb[0].mxu0 %v7862
  %v8548 = vpop.f32.mrb[0].mxu0
  %v8549 = vadd.f32 0.0, %v8548
  %v8550 = vpop.f32.mrb[0].mxu0
  %8551 = vmatprep.mubr.f32.mxu0 0.0
  %8552 = vmatmul.mubr.f32.gmra.mrb[0].mxu0 %v7863
  %v8553 = vpop.f32.mrb[0].mxu0
  %v8554 = vadd.f32 0.0, %v8553
  %v8555 = vpop.f32.mrb[0].mxu0
  %8556 = vmatprep.mubr.f32.mxu0 0.0
  %8557 = vmatmul.mubr.f32.gmra.mrb[0].mxu0 %v7864
  %v8558 = vpop.f32.mrb[0].mxu0
  %v8559 = vadd.f32 0.0, %v8558
  %v8560 = vpop.f32.mrb[0].mxu0
  %8561 = vmatprep.mubr.f32.mxu0 0.0
  %8562 = vmatmul.mubr.f32.gmra.mrb[0].mxu0 %v7865
  %v8563 = vpop.f32.mrb[0].mxu0
  %v8564 = vadd.f32 0.0, %v8563
  %v8565 = vpop.f32.mrb[0].mxu0
  %8566 = vmatprep.mubr.f32.mxu0 0.0
  %8567 = vmatmul.mubr.f32.gmra.mrb[0].mxu0 %v7866
  %v8568 = vpop.f32.mrb[0].mxu0
  %v8569 = vadd.f32 0.0, %v8568
  %v8570 = vpop.f32.mrb[0].mxu0
  %8571 = vmatprep.mubr.f32.mxu0 0.0
  %8572 = vmatmul.mubr.f32.gmra.mrb[0].mxu0 %v7867
  %v8573 = vpop.f32.mrb[0].mxu0
  %v8574 = vadd.f32 0.0, %v8573
  %v8575 = vpop.f32.mrb[0].mxu0
  %8576 = vmatprep.mubr.f32.mxu0 0.0
  %8577 = vmatmul.mubr.f32.gmra.mrb[0].mxu0 %v7868
  %v8578 = vpop.f32.mrb[0].mxu0
  %v8579 = vadd.f32 0.0, %v8578
  %v8580 = vpop.f32.mrb[0].mxu0
  %8581 = vmatprep.mubr.f32.mxu0 0.0
  %8582 = vmatmul.mubr.f32.gmra.mrb[0].mxu0 %v7869
  %v8583 = vpop.f32.mrb[0].mxu0
  %v8584 = vadd.f32 0.0, %v8583
  %v8585 = vpop.f32.mrb[0].mxu0
  %8586 = vmatprep.mubr.f32.mxu0 0.0
  %8587 = vmatmul.mubr.f32.gmra.mrb[0].mxu0 %v7870
  %v8588 = vpop.f32.mrb[0].mxu0
  %v8589 = vadd.f32 0.0, %v8588
  %v8590 = vpop.f32.mrb[0].mxu0
  %8591 = vmatprep.mubr.f32.mxu0 0.0
  %8592 = vmatmul.mubr.f32.gmra.mrb[0].mxu0 %v7871
  %v8593 = vpop.f32.mrb[0].mxu0
  %v8594 = vadd.f32 0.0, %v8593
  %v8595 = vpop.f32.mrb[0].mxu0
  %8596 = vmatprep.mubr.f32.mxu0 0.0
  %8597 = vmatmul.mubr.f32.gmra.mrb[0].mxu0 %v7872
  %v8598 = vpop.f32.mrb[0].mxu0
  %v8599 = vadd.f32 0.0, %v8598
  %v8600 = vpop.f32.mrb[0].mxu0
  %8601 = vmatprep.mubr.f32.mxu0 0.0
  %8602 = vmatmul.mubr.f32.gmra.mrb[0].mxu0 %v7873
  %v8603 = vpop.f32.mrb[0].mxu0
  %v8604 = vadd.f32 0.0, %v8603
  %v8605 = vpop.f32.mrb[0].mxu0
  %8606 = vmatprep.mubr.f32.mxu0 0.0
  %8607 = vmatmul.mubr.f32.gmra.mrb[0].mxu0 %v7874
  %v8608 = vpop.f32.mrb[0].mxu0
  %v8609 = vadd.f32 0.0, %v8608
  %v8610 = vpop.f32.mrb[0].mxu0
  %8611 = vmatprep.mubr.f32.mxu0 0.0
  %8612 = vmatmul.mubr.f32.gmra.mrb[0].mxu0 %v7875
  %v8613 = vpop.f32.mrb[0].mxu0
  %v8614 = vadd.f32 0.0, %v8613
  %v8615 = vpop.f32.mrb[0].mxu0
  %8616 = vmatprep.mubr.f32.mxu0 0.0
  %8617 = vmatmul.mubr.f32.gmra.mrb[0].mxu0 %v7876
  %v8618 = vpop.f32.mrb[0].mxu0
  %v8619 = vadd.f32 0.0, %v8618
  %v8620 = vpop.f32.mrb[0].mxu0
  %8621 = vmatprep.mubr.f32.mxu0 0.0
  %8622 = vmatmul.mubr.f32.gmra.mrb[0].mxu0 %v7877
  %v8623 = vpop.f32.mrb[0].mxu0
  %v8624 = vadd.f32 0.0, %v8623
  %v8625 = vpop.f32.mrb[0].mxu0
  %8626 = vmatprep.mubr.f32.mxu0 0.0
  %8627 = vmatmul.mubr.f32.gmra.mrb[0].mxu0 %v7878
  %v8628 = vpop.f32.mrb[0].mxu0
  %v8629 = vadd.f32 0.0, %v8628
  %v8630 = vpop.f32.mrb[0].mxu0
  %8631 = vmatprep.mubr.f32.mxu0 0.0
  %8632 = vmatmul.mubr.f32.gmra.mrb[0].mxu0 %v7879
  %v8633 = vpop.f32.mrb[0].mxu0
  %v8634 = vadd.f32 0.0, %v8633
  %v8635 = vpop.f32.mrb[0].mxu0
  %8636 = vmatprep.mubr.f32.mxu0 0.0
  %8637 = vmatmul.mubr.f32.gmra.mrb[0].mxu0 %v7880
  %v8638 = vpop.f32.mrb[0].mxu0
  %v8639 = vadd.f32 0.0, %v8638
  %v8640 = vpop.f32.mrb[0].mxu0
  %8641 = vmatprep.mubr.f32.mxu0 0.0
  %8642 = vmatmul.mubr.f32.gmra.mrb[0].mxu0 %v7881
  %v8643 = vpop.f32.mrb[0].mxu0
  %v8644 = vadd.f32 0.0, %v8643
  %v8645 = vpop.f32.mrb[0].mxu0
  %8646 = vmatprep.mubr.f32.mxu0 0.0
  %8647 = vmatmul.mubr.f32.gmra.mrb[0].mxu0 %v7882
  %v8648 = vpop.f32.mrb[0].mxu0
  %v8649 = vadd.f32 0.0, %v8648
  %v8650 = vpop.f32.mrb[0].mxu0
  %8651 = vmatprep.mubr.f32.mxu0 0.0
  %8652 = vmatmul.mubr.f32.gmra.mrb[0].mxu0 %v7883
  %v8653 = vpop.f32.mrb[0].mxu0
  %v8654 = vadd.f32 0.0, %v8653
  %v8655 = vpop.f32.mrb[0].mxu0
  %8656 = vmatprep.mubr.f32.mxu0 0.0
  %8657 = vmatmul.mubr.f32.gmra.mrb[0].mxu0 %v7884
  %v8658 = vpop.f32.mrb[0].mxu0
  %v8659 = vadd.f32 0.0, %v8658
  %v8660 = vpop.f32.mrb[0].mxu0
  %8661 = vmatprep.mubr.f32.mxu0 0.0
  %8662 = vmatmul.mubr.f32.gmra.mrb[0].mxu0 %v7885
  %v8663 = vpop.f32.mrb[0].mxu0
  %v8664 = vadd.f32 0.0, %v8663
  %v8665 = vpop.f32.mrb[0].mxu0
  %8666 = vmatprep.mubr.f32.mxu0 0.0
  %8667 = vmatmul.mubr.f32.gmra.mrb[0].mxu0 %v7886
  %v8668 = vpop.f32.mrb[0].mxu0
  %v8669 = vadd.f32 0.0, %v8668
  %v8670 = vpop.f32.mrb[0].mxu0
  %8671 = vmatprep.mubr.f32.mxu0 0.0
  %8672 = vmatmul.mubr.f32.gmra.mrb[0].mxu0 %v7887
  %v8673 = vpop.f32.mrb[0].mxu0
  %v8674 = vadd.f32 0.0, %v8673
  %v8675 = vpop.f32.mrb[0].mxu0
  %8676 = vmatprep.mubr.f32.mxu0 0.0
  %8677 = vmatmul.mubr.f32.gmra.mrb[0].mxu0 %v7888
  %v8678 = vpop.f32.mrb[0].mxu0
  %v8679 = vadd.f32 0.0, %v8678
  %v8680 = vpop.f32.mrb[0].mxu0
  %8681 = vmatprep.mubr.f32.mxu0 0.0
  %8682 = vmatmul.mubr.f32.gmra.mrb[0].mxu0 %v7889
  %v8683 = vpop.f32.mrb[0].mxu0
  %v8684 = vadd.f32 0.0, %v8683
  %v8685 = vpop.f32.mrb[0].mxu0
  %8686 = vmatprep.mubr.f32.mxu0 0.0
  %8687 = vmatmul.mubr.f32.gmra.mrb[0].mxu0 %v7890
  %v8688 = vpop.f32.mrb[0].mxu0
  %v8689 = vadd.f32 0.0, %v8688
  %v8690 = vpop.f32.mrb[0].mxu0
  %8691 = vmatprep.mubr.f32.mxu0 0.0
  %8692 = vmatmul.mubr.f32.gmra.mrb[0].mxu0 %v7891
  %v8693 = vpop.f32.mrb[0].mxu0
  %v8694 = vadd.f32 0.0, %v8693
  %v8695 = vpop.f32.mrb[0].mxu0
  %8696 = vmatprep.mubr.f32.mxu0 0.0
  %8697 = vmatmul.mubr.f32.gmra.mrb[0].mxu0 %v7892
  %v8698 = vpop.f32.mrb[0].mxu0
  %v8699 = vadd.f32 0.0, %v8698
  %v8700 = vpop.f32.mrb[0].mxu0
  %8701 = vmatprep.mubr.f32.mxu0 0.0
  %8702 = vmatmul.mubr.f32.gmra.mrb[0].mxu0 %v7893
  %v8703 = vpop.f32.mrb[0].mxu0
  %v8704 = vadd.f32 0.0, %v8703
  %v8705 = vpop.f32.mrb[0].mxu0
  %8706 = vmatprep.mubr.f32.mxu0 0.0
  %8707 = vmatmul.mubr.f32.gmra.mrb[0].mxu0 %v7894
  %v8708 = vpop.f32.mrb[0].mxu0
  %v8709 = vadd.f32 0.0, %v8708
  %v8710 = vpop.f32.mrb[0].mxu0
  %8711 = vmatprep.mubr.f32.mxu0 0.0
  %8712 = vmatmul.mubr.f32.gmra.mrb[0].mxu0 %v7895
  %v8713 = vpop.f32.mrb[0].mxu0
  %v8714 = vadd.f32 0.0, %v8713
  %v8715 = vpop.f32.mrb[0].mxu0
  %8716 = vmatprep.mubr.f32.mxu0 0.0
  %8717 = vmatmul.mubr.f32.gmra.mrb[0].mxu0 %v7896
  %v8718 = vpop.f32.mrb[0].mxu0
  %v8719 = vadd.f32 0.0, %v8718
  %v8720 = vpop.f32.mrb[0].mxu0
  %8721 = vmatprep.mubr.f32.mxu0 0.0
  %8722 = vmatmul.mubr.f32.gmra.mrb[0].mxu0 %v7897
  %v8723 = vpop.f32.mrb[0].mxu0
  %v8724 = vadd.f32 0.0, %v8723
  %v8725 = vpop.f32.mrb[0].mxu0
  %8726 = vmatprep.mubr.f32.mxu0 0.0
  %8727 = vmatmul.mubr.f32.gmra.mrb[0].mxu0 %v7898
  %v8728 = vpop.f32.mrb[0].mxu0
  %v8729 = vadd.f32 0.0, %v8728
  %v8730 = vpop.f32.mrb[0].mxu0
  %8731 = vmatprep.mubr.f32.mxu0 0.0
  %8732 = vmatmul.mubr.f32.gmra.mrb[0].mxu0 %v7899
  %v8733 = vpop.f32.mrb[0].mxu0
  %v8734 = vadd.f32 0.0, %v8733
  %v8735 = vpop.f32.mrb[0].mxu0
  %8736 = vmatprep.mubr.f32.mxu0 0.0
  %8737 = vmatmul.mubr.f32.gmra.mrb[0].mxu0 %v7900
  %v8738 = vpop.f32.mrb[0].mxu0
  %v8739 = vadd.f32 0.0, %v8738
  %v8740 = vpop.f32.mrb[0].mxu0
  %8741 = vmatprep.mubr.f32.mxu0 0.0
  %8742 = vmatmul.mubr.f32.gmra.mrb[0].mxu0 %v7901
  %v8743 = vpop.f32.mrb[0].mxu0
  %v8744 = vadd.f32 0.0, %v8743
  %v8745 = vpop.f32.mrb[0].mxu0
  %8746 = vmatprep.mubr.f32.mxu0 0.0
  %8747 = vmatmul.mubr.f32.gmra.mrb[0].mxu0 %v7902
  %v8748 = vpop.f32.mrb[0].mxu0
  %v8749 = vadd.f32 0.0, %v8748
  %v8750 = vpop.f32.mrb[0].mxu0
  %8751 = vmatprep.mubr.f32.mxu0 0.0
  %8752 = vmatmul.mubr.f32.gmra.mrb[0].mxu0 %v7903
  %v8753 = vpop.f32.mrb[0].mxu0
  %v8754 = vadd.f32 0.0, %v8753
  %v8755 = vpop.f32.mrb[0].mxu0
  %8756 = vmatprep.mubr.f32.mxu0 0.0
  %8757 = vmatmul.mubr.f32.gmra.mrb[0].mxu0 %v7904
  %v8758 = vpop.f32.mrb[0].mxu0
  %v8759 = vadd.f32 0.0, %v8758
  %v8760 = vpop.f32.mrb[0].mxu0
  %8761 = vmatprep.mubr.f32.mxu0 0.0
  %8762 = vmatmul.mubr.f32.gmra.mrb[0].mxu0 %v7905
  %v8763 = vpop.f32.mrb[0].mxu0
  %v8764 = vadd.f32 0.0, %v8763
  %v8765 = vpop.f32.mrb[0].mxu0
  %8766 = vmatprep.mubr.f32.mxu0 0.0
  %8767 = vmatmul.mubr.f32.gmra.mrb[0].mxu0 %v7906
  %v8768 = vpop.f32.mrb[0].mxu0
  %v8769 = vadd.f32 0.0, %v8768
  %v8770 = vpop.f32.mrb[0].mxu0
  %8771 = vmatprep.mubr.f32.mxu0 0.0
  %8772 = vmatmul.mubr.f32.gmra.mrb[0].mxu0 %v7907
  %v8773 = vpop.f32.mrb[0].mxu0
  %v8774 = vadd.f32 0.0, %v8773
  %v8775 = vpop.f32.mrb[0].mxu0
  %8776 = vmatprep.mubr.f32.mxu0 0.0
  %8777 = vmatmul.mubr.f32.gmra.mrb[0].mxu0 %v7908
  %v8778 = vpop.f32.mrb[0].mxu0
  %v8779 = vadd.f32 0.0, %v8778
  %v8780 = vpop.f32.mrb[0].mxu0
  %8781 = vmatprep.mubr.f32.mxu0 0.0
  %8782 = vmatmul.mubr.f32.gmra.mrb[0].mxu0 %v7909
  %v8783 = vpop.f32.mrb[0].mxu0
  %v8784 = vadd.f32 0.0, %v8783
  %v8785 = vpop.f32.mrb[0].mxu0
  %8786 = vmatprep.mubr.f32.mxu0 0.0
  %8787 = vmatmul.mubr.f32.gmra.mrb[0].mxu0 %v7910
  %v8788 = vpop.f32.mrb[0].mxu0
  %v8789 = vadd.f32 0.0, %v8788
  %v8790 = vpop.f32.mrb[0].mxu0
  %8791 = vmatprep.mubr.f32.mxu0 0.0
  %8792 = vmatmul.mubr.f32.gmra.mrb[0].mxu0 %v7911
  %v8793 = vpop.f32.mrb[0].mxu0
  %v8794 = vadd.f32 0.0, %v8793
  %v8795 = vpop.f32.mrb[0].mxu0
  %8796 = vmatprep.mubr.f32.mxu0 0.0
  %8797 = vmatmul.mubr.f32.gmra.mrb[0].mxu0 %v7912
  %v8798 = vpop.f32.mrb[0].mxu0
  %v8799 = vadd.f32 0.0, %v8798
  %v8800 = vpop.f32.mrb[0].mxu0
  %8801 = vmatprep.mubr.f32.mxu0 0.0
  %8802 = vmatmul.mubr.f32.gmra.mrb[0].mxu0 %v7913
  %v8803 = vpop.f32.mrb[0].mxu0
  %v8804 = vadd.f32 0.0, %v8803
  %v8805 = vpop.f32.mrb[0].mxu0
  %8806 = vmatprep.mubr.f32.mxu0 0.0
  %8807 = vmatmul.mubr.f32.gmra.mrb[0].mxu0 %v7914
  %v8808 = vpop.f32.mrb[0].mxu0
  %v8809 = vadd.f32 0.0, %v8808
  %v8810 = vpop.f32.mrb[0].mxu0
  %8811 = vmatprep.mubr.f32.mxu0 0.0
  %8812 = vmatmul.mubr.f32.gmra.mrb[0].mxu0 %v7915
  %v8813 = vpop.f32.mrb[0].mxu0
  %v8814 = vadd.f32 0.0, %v8813
  %v8815 = vpop.f32.mrb[0].mxu0
  %8816 = vmatprep.mubr.f32.mxu0 0.0
  %8817 = vmatmul.mubr.f32.gmra.mrb[0].mxu0 %v7916
  %v8818 = vpop.f32.mrb[0].mxu0
  %v8819 = vadd.f32 0.0, %v8818
  %v8820 = vpop.f32.mrb[0].mxu0
  %8821 = vmatprep.mubr.f32.mxu0 0.0
  %8822 = vmatmul.mubr.f32.gmra.mrb[0].mxu0 %v7917
  %v8823 = vpop.f32.mrb[0].mxu0
  %v8824 = vadd.f32 0.0, %v8823
  %v8825 = vpop.f32.mrb[0].mxu0
  %8826 = vmatprep.mubr.f32.mxu0 0.0
  %8827 = vmatmul.mubr.f32.gmra.mrb[0].mxu0 %v7918
  %v8828 = vpop.f32.mrb[0].mxu0
  %v8829 = vadd.f32 0.0, %v8828
  %v8830 = vpop.f32.mrb[0].mxu0
  %8831 = vmatprep.mubr.f32.mxu0 0.0
  %8832 = vmatmul.mubr.f32.gmra.mrb[0].mxu0 %v7919
  %v8833 = vpop.f32.mrb[0].mxu0
  %v8834 = vadd.f32 0.0, %v8833
  %v8835 = vpop.f32.mrb[0].mxu0
  %8836 = vmatprep.mubr.f32.mxu0 0.0
  %8837 = vmatmul.mubr.f32.gmra.mrb[0].mxu0 %v7920
  %v8838 = vpop.f32.mrb[0].mxu0
  %v8839 = vadd.f32 0.0, %v8838
  %v8840 = vpop.f32.mrb[0].mxu0
  %8841 = vmatprep.mubr.f32.mxu0 0.0
  %8842 = vmatmul.mubr.f32.gmra.mrb[0].mxu0 %v7921
  %v8843 = vpop.f32.mrb[0].mxu0
  %v8844 = vadd.f32 0.0, %v8843
  %v8845 = vpop.f32.mrb[0].mxu0
  %8846 = vmatprep.mubr.f32.mxu0 0.0
  %8847 = vmatmul.mubr.f32.gmra.mrb[0].mxu0 %v7922
  %v8848 = vpop.f32.mrb[0].mxu0
  %v8849 = vadd.f32 0.0, %v8848
  %v8850 = vpop.f32.mrb[0].mxu0
  %8851 = vmatprep.mubr.f32.mxu0 0.0
  %8852 = vmatmul.mubr.f32.gmra.mrb[0].mxu0 %v7923
  %v8853 = vpop.f32.mrb[0].mxu0
  %v8854 = vadd.f32 0.0, %v8853
  %v8855 = vpop.f32.mrb[0].mxu0
  %8856 = vmatprep.mubr.f32.mxu0 0.0
  %8857 = vmatmul.mubr.f32.gmra.mrb[0].mxu0 %v7924
  %v8858 = vpop.f32.mrb[0].mxu0
  %v8859 = vadd.f32 0.0, %v8858
  %v8860 = vpop.f32.mrb[0].mxu0
  %8861 = vmatprep.mubr.f32.mxu0 0.0
  %8862 = vmatmul.mubr.f32.gmra.mrb[0].mxu0 %v7925
  %v8863 = vpop.f32.mrb[0].mxu0
  %v8864 = vadd.f32 0.0, %v8863
  %v8865 = vpop.f32.mrb[0].mxu0
  %8866 = vmatprep.mubr.f32.mxu0 0.0
  %8867 = vmatmul.mubr.f32.gmra.mrb[0].mxu0 %v7926
  %v8868 = vpop.f32.mrb[0].mxu0
  %v8869 = vadd.f32 0.0, %v8868
  %v8870 = vpop.f32.mrb[0].mxu0
  %8871 = vmatprep.mubr.f32.mxu0 0.0
  %8872 = vmatmul.mubr.f32.gmra.mrb[0].mxu0 %v7927
  %v8873 = vpop.f32.mrb[0].mxu0
  %v8874 = vadd.f32 0.0, %v8873
  %v8875 = vpop.f32.mrb[0].mxu0
  %8876 = vmatprep.mubr.f32.mxu0 0.0
  %8877 = vmatmul.mubr.f32.gmra.mrb[0].mxu0 %v7928
  %v8878 = vpop.f32.mrb[0].mxu0
  %v8879 = vadd.f32 0.0, %v8878
  %v8880 = vpop.f32.mrb[0].mxu0
  %8881 = vmatprep.mubr.f32.mxu0 0.0
  %8882 = vmatmul.mubr.f32.gmra.mrb[0].mxu0 %v7929
  %v8883 = vpop.f32.mrb[0].mxu0
  %v8884 = vadd.f32 0.0, %v8883
  %v8885 = vpop.f32.mrb[0].mxu0
  %8886 = vmatprep.mubr.f32.mxu0 0.0
  %8887 = vmatmul.mubr.f32.gmra.mrb[0].mxu0 %v7930
  %v8888 = vpop.f32.mrb[0].mxu0
  %v8889 = vadd.f32 0.0, %v8888
  %v8890 = vpop.f32.mrb[0].mxu0
  %8891 = vmatprep.mubr.f32.mxu0 0.0
  %8892 = vmatmul.mubr.f32.gmra.mrb[0].mxu0 %v7931
  %v8893 = vpop.f32.mrb[0].mxu0
  %v8894 = vadd.f32 0.0, %v8893
  %v8895 = vpop.f32.mrb[0].mxu0
  %8896 = vmatprep.mubr.f32.mxu0 0.0
  %8897 = vmatmul.mubr.f32.gmra.mrb[0].mxu0 %v7932
  %v8898 = vpop.f32.mrb[0].mxu0
  %v8899 = vadd.f32 0.0, %v8898
  %v8900 = vpop.f32.mrb[0].mxu0
  %8901 = vmatprep.mubr.f32.mxu0 0.0
  %8902 = vmatmul.mubr.f32.gmra.mrb[0].mxu0 %v7933
  %v8903 = vpop.f32.mrb[0].mxu0
  %v8904 = vadd.f32 0.0, %v8903
  %v8905 = vpop.f32.mrb[0].mxu0
  %8906 = vmatprep.mubr.f32.mxu0 0.0
  %8907 = vmatmul.mubr.f32.gmra.mrb[0].mxu0 %v7934
  %v8908 = vpop.f32.mrb[0].mxu0
  %v8909 = vadd.f32 0.0, %v8908
  %v8910 = vpop.f32.mrb[0].mxu0
  %8911 = vmatprep.mubr.f32.mxu0 0.0
  %8912 = vmatmul.mubr.f32.gmra.mrb[0].mxu0 %v7935
  %v8913 = vpop.f32.mrb[0].mxu0
  %v8914 = vadd.f32 0.0, %v8913
  %v8915 = vpop.f32.mrb[0].mxu0
  %8916 = vmatprep.mubr.f32.mxu0 0.0
  %8917 = vmatmul.mubr.f32.gmra.mrb[0].mxu0 %v7936
  %v8918 = vpop.f32.mrb[0].mxu0
  %v8919 = vadd.f32 0.0, %v8918
  %v8920 = vpop.f32.mrb[0].mxu0
  %8921 = vmatprep.mubr.f32.mxu0 0.0
  %8922 = vmatmul.mubr.f32.gmra.mrb[0].mxu0 %v7937
  %v8923 = vpop.f32.mrb[0].mxu0
  %v8924 = vadd.f32 0.0, %v8923
  %v8925 = vpop.f32.mrb[0].mxu0
  %8926 = vmatprep.mubr.f32.mxu0 0.0
  %8927 = vmatmul.mubr.f32.gmra.mrb[0].mxu0 %v7938
  %v8928 = vpop.f32.mrb[0].mxu0
  %v8929 = vadd.f32 0.0, %v8928
  %v8930 = vpop.f32.mrb[0].mxu0
  %8931 = vmatprep.mubr.f32.mxu0 0.0
  %8932 = vmatmul.mubr.f32.gmra.mrb[0].mxu0 %v7939
  %v8933 = vpop.f32.mrb[0].mxu0
  %v8934 = vadd.f32 0.0, %v8933
  %v8935 = vpop.f32.mrb[0].mxu0
  %8936 = vmatprep.mubr.f32.mxu0 0.0
  %8937 = vmatmul.mubr.f32.gmra.mrb[0].mxu0 %v7940
  %v8938 = vpop.f32.mrb[0].mxu0
  %v8939 = vadd.f32 0.0, %v8938
  %v8940 = vpop.f32.mrb[0].mxu0
  %8941 = vmatprep.mubr.f32.mxu0 0.0
  %8942 = vmatmul.mubr.f32.gmra.mrb[0].mxu0 %v7941
  %v8943 = vpop.f32.mrb[0].mxu0
  %v8944 = vadd.f32 0.0, %v8943
  %v8945 = vpop.f32.mrb[0].mxu0
  %8946 = vmatprep.mubr.f32.mxu0 0.0
  %8947 = vmatmul.mubr.f32.gmra.mrb[0].mxu0 %v7942
  %v8948 = vpop.f32.mrb[0].mxu0
  %v8949 = vadd.f32 0.0, %v8948
  %v8950 = vpop.f32.mrb[0].mxu0
  %8951 = vmatprep.mubr.f32.mxu0 0.0
  %8952 = vmatmul.mubr.f32.gmra.mrb[0].mxu0 %v7943
  %v8953 = vpop.f32.mrb[0].mxu0
  %v8954 = vadd.f32 0.0, %v8953
  %v8955 = vpop.f32.mrb[0].mxu0
  %8956 = vmatprep.mubr.f32.mxu0 0.0
  %8957 = vmatmul.mubr.f32.gmra.mrb[0].mxu0 %v7944
  %v8958 = vpop.f32.mrb[0].mxu0
  %v8959 = vadd.f32 0.0, %v8958
  %v8960 = vpop.f32.mrb[0].mxu0
  %8961 = vmatprep.mubr.f32.mxu0 0.0
  %8962 = vmatmul.mubr.f32.gmra.mrb[0].mxu0 %v7945
  %v8963 = vpop.f32.mrb[0].mxu0
  %v8964 = vadd.f32 0.0, %v8963
  %v8965 = vpop.f32.mrb[0].mxu0
  %8966 = vmatprep.mubr.f32.mxu0 0.0
  %8967 = vmatmul.mubr.f32.gmra.mrb[0].mxu0 %v7946
  %v8968 = vpop.f32.mrb[0].mxu0
  %v8969 = vadd.f32 0.0, %v8968
  %v8970 = vpop.f32.mrb[0].mxu0
  %8971 = vmatprep.mubr.f32.mxu0 0.0
  %8972 = vmatmul.mubr.f32.gmra.mrb[0].mxu0 %v7947
  %v8973 = vpop.f32.mrb[0].mxu0
  %v8974 = vadd.f32 0.0, %v8973
  %v8975 = vpop.f32.mrb[0].mxu0
  %8976 = vmatprep.mubr.f32.mxu0 0.0
  %8977 = vmatmul.mubr.f32.gmra.mrb[0].mxu0 %v7948
  %v8978 = vpop.f32.mrb[0].mxu0
  %v8979 = vadd.f32 0.0, %v8978
  %v8980 = vpop.f32.mrb[0].mxu0
  %8981 = vmatprep.mubr.f32.mxu0 0.0
  %8982 = vmatmul.mubr.f32.gmra.mrb[0].mxu0 %v7949
  %v8983 = vpop.f32.mrb[0].mxu0
  %v8984 = vadd.f32 0.0, %v8983
  %v8985 = vpop.f32.mrb[0].mxu0
  %8986 = vmatprep.mubr.f32.mxu0 0.0
  %8987 = vmatmul.mubr.f32.gmra.mrb[0].mxu0 %v7950
  %v8988 = vpop.f32.mrb[0].mxu0
  %v8989 = vadd.f32 0.0, %v8988
  %v8990 = vpop.f32.mrb[0].mxu0
  %8991 = vmatprep.mubr.f32.mxu0 0.0
  %8992 = vmatmul.mubr.f32.gmra.mrb[0].mxu0 %v7951
  %v8993 = vpop.f32.mrb[0].mxu0
  %v8994 = vadd.f32 0.0, %v8993
  %v8995 = vpop.f32.mrb[0].mxu0
  %8996 = vmatprep.mubr.f32.mxu0 0.0
  %8997 = vmatmul.mubr.f32.gmra.mrb[0].mxu0 %v7952
  %v8998 = vpop.f32.mrb[0].mxu0
  %v8999 = vadd.f32 0.0, %v8998
  %v9000 = vpop.f32.mrb[0].mxu0
  %9001 = vmatprep.mubr.f32.mxu0 0.0
  %9002 = vmatmul.mubr.f32.gmra.mrb[0].mxu0 %v7953
  %v9003 = vpop.f32.mrb[0].mxu0
  %v9004 = vadd.f32 0.0, %v9003
  %v9005 = vpop.f32.mrb[0].mxu0
  %9006 = vmatprep.mubr.f32.mxu0 0.0
  %9007 = vmatmul.mubr.f32.gmra.mrb[0].mxu0 %v7954
  %v9008 = vpop.f32.mrb[0].mxu0
  %v9009 = vadd.f32 0.0, %v9008
  %v9010 = vpop.f32.mrb[0].mxu0
  %9011 = vmatprep.mubr.f32.mxu0 0.0
  %9012 = vmatmul.mubr.f32.gmra.mrb[0].mxu0 %v7955
  %v9013 = vpop.f32.mrb[0].mxu0
  %v9014 = vadd.f32 0.0, %v9013
  %v9015 = vpop.f32.mrb[0].mxu0
  %9016 = vmatprep.mubr.f32.mxu0 0.0
  %9017 = vmatmul.mubr.f32.gmra.mrb[0].mxu0 %v7956
  %v9018 = vpop.f32.mrb[0].mxu0
  %v9019 = vadd.f32 0.0, %v9018
  %v9020 = vpop.f32.mrb[0].mxu0
  %9021 = vmatprep.mubr.f32.mxu0 0.0
  %9022 = vmatmul.mubr.f32.gmra.mrb[0].mxu0 %v7957
  %v9023 = vpop.f32.mrb[0].mxu0
  %v9024 = vadd.f32 0.0, %v9023
  %v9025 = vpop.f32.mrb[0].mxu0
  %9026 = vmatprep.mubr.f32.mxu0 0.0
  %9027 = vmatmul.mubr.f32.gmra.mrb[0].mxu0 %v7958
  %v9028 = vpop.f32.mrb[0].mxu0
  %v9029 = vadd.f32 0.0, %v9028
  %v9030 = vpop.f32.mrb[0].mxu0
  %9031 = vmatprep.mubr.f32.mxu0 0.0
  %9032 = vmatmul.mubr.f32.gmra.mrb[0].mxu0 %v7959
  %v9033 = vpop.f32.mrb[0].mxu0
  %v9034 = vadd.f32 0.0, %v9033
  %v9035 = vpop.f32.mrb[0].mxu0
  %9036 = vmatprep.mubr.f32.mxu0 0.0
  %9037 = vmatmul.mubr.f32.gmra.mrb[0].mxu0 %v7960
  %v9038 = vpop.f32.mrb[0].mxu0
  %v9039 = vadd.f32 0.0, %v9038
  %v9040 = vpop.f32.mrb[0].mxu0
  %9041 = vmatprep.mubr.f32.mxu0 0.0
  %9042 = vmatmul.mubr.f32.gmra.mrb[0].mxu0 %v7961
  %v9043 = vpop.f32.mrb[0].mxu0
  %v9044 = vadd.f32 0.0, %v9043
  %v9045 = vpop.f32.mrb[0].mxu0
  %9046 = vmatprep.mubr.f32.mxu0 0.0
  %9047 = vmatmul.mubr.f32.gmra.mrb[0].mxu0 %v7962
  %v9048 = vpop.f32.mrb[0].mxu0
  %v9049 = vadd.f32 0.0, %v9048
  %v9050 = vpop.f32.mrb[0].mxu0
  %9051 = vmatprep.mubr.f32.mxu0 0.0
  %9052 = vmatmul.mubr.f32.gmra.mrb[0].mxu0 %v7963
  %v9053 = vpop.f32.mrb[0].mxu0
  %v9054 = vadd.f32 0.0, %v9053
  %v9055 = vpop.f32.mrb[0].mxu0
  %9056 = vmatprep.mubr.f32.mxu0 0.0
  %9057 = vmatmul.mubr.f32.gmra.mrb[0].mxu0 %v7964
  %v9058 = vpop.f32.mrb[0].mxu0
  %v9059 = vadd.f32 0.0, %v9058
  %v9060 = vpop.f32.mrb[0].mxu0
  %9061 = vmatprep.mubr.f32.mxu0 0.0
  %9062 = vmatmul.mubr.f32.gmra.mrb[0].mxu0 %v7965
  %v9063 = vpop.f32.mrb[0].mxu0
  %v9064 = vadd.f32 0.0, %v9063
  %v9065 = vpop.f32.mrb[0].mxu0
  %9066 = vmatprep.mubr.f32.mxu0 0.0
  %9067 = vmatmul.mubr.f32.gmra.mrb[0].mxu0 %v7966
  %v9068 = vpop.f32.mrb[0].mxu0
  %v9069 = vadd.f32 0.0, %v9068
  %v9070 = vpop.f32.mrb[0].mxu0
  %9071 = vmatprep.mubr.f32.mxu0 0.0
  %9072 = vmatmul.mubr.f32.gmra.mrb[0].mxu0 %v7967
  %v9073 = vpop.f32.mrb[0].mxu0
  %v9074 = vadd.f32 0.0, %v9073
  %v9075 = vpop.f32.mrb[0].mxu0
  %9076 = vmatprep.mubr.f32.mxu0 0.0
  %9077 = vmatmul.mubr.f32.gmra.mrb[0].mxu0 %v7968
  %v9078 = vpop.f32.mrb[0].mxu0
  %v9079 = vadd.f32 0.0, %v9078
  %v9080 = vpop.f32.mrb[0].mxu0
  %9081 = vmatprep.mubr.f32.mxu0 0.0
  %9082 = vmatmul.mubr.f32.gmra.mrb[0].mxu0 %v7969
  %v9083 = vpop.f32.mrb[0].mxu0
  %v9084 = vadd.f32 0.0, %v9083
  %v9085 = vpop.f32.mrb[0].mxu0
  %9086 = vmatprep.mubr.f32.mxu0 0.0
  %9087 = vmatmul.mubr.f32.gmra.mrb[0].mxu0 %v7970
  %v9088 = vpop.f32.mrb[0].mxu0
  %v9089 = vadd.f32 0.0, %v9088
  %v9090 = vpop.f32.mrb[0].mxu0
  %9091 = vmatprep.mubr.f32.mxu0 0.0
  %9092 = vmatmul.mubr.f32.gmra.mrb[0].mxu0 %v7971
  %v9093 = vpop.f32.mrb[0].mxu0
  %v9094 = vadd.f32 0.0, %v9093
  %v9095 = vpop.f32.mrb[0].mxu0
  %9096 = vmatprep.mubr.f32.mxu0 0.0
  %9097 = vmatmul.mubr.f32.gmra.mrb[0].mxu0 %v7972
  %v9098 = vpop.f32.mrb[0].mxu0
  %v9099 = vadd.f32 0.0, %v9098
  %v9100 = vpop.f32.mrb[0].mxu0
  %9101 = vmatprep.mubr.f32.mxu0 0.0
  %9102 = vmatmul.mubr.f32.gmra.mrb[0].mxu0 %v7973
  %v9103 = vpop.f32.mrb[0].mxu0
  %v9104 = vadd.f32 0.0, %v9103
  %v9105 = vpop.f32.mrb[0].mxu0
  %9106 = vmatprep.mubr.f32.mxu0 0.0
  %9107 = vmatmul.mubr.f32.gmra.mrb[0].mxu0 %v7974
  %v9108 = vpop.f32.mrb[0].mxu0
  %v9109 = vadd.f32 0.0, %v9108
  %v9110 = vpop.f32.mrb[0].mxu0
  %9111 = vmatprep.mubr.f32.mxu0 0.0
  %9112 = vmatmul.mubr.f32.gmra.mrb[0].mxu0 %v7975
  %v9113 = vpop.f32.mrb[0].mxu0
  %v9114 = vadd.f32 0.0, %v9113
  %v9115 = vpop.f32.mrb[0].mxu0
  %9116 = vmatprep.mubr.f32.mxu0 0.0
  %9117 = vmatmul.mubr.f32.gmra.mrb[0].mxu0 %v7976
  %v9118 = vpop.f32.mrb[0].mxu0
  %v9119 = vadd.f32 0.0, %v9118
  %v9120 = vpop.f32.mrb[0].mxu0
  %9121 = vmatprep.mubr.f32.mxu0 0.0
  %9122 = vmatmul.mubr.f32.gmra.mrb[0].mxu0 %v7977
  %v9123 = vpop.f32.mrb[0].mxu0
  %v9124 = vadd.f32 0.0, %v9123
  %v9125 = vpop.f32.mrb[0].mxu0
  %9126 = vmatprep.mubr.f32.mxu0 0.0
  %9127 = vmatmul.mubr.f32.gmra.mrb[0].mxu0 %v7978
  %v9128 = vpop.f32.mrb[0].mxu0
  %v9129 = vadd.f32 0.0, %v9128
  %v9130 = vpop.f32.mrb[0].mxu0
  %9131 = vmatprep.mubr.f32.mxu0 0.0
  %9132 = vmatmul.mubr.f32.gmra.mrb[0].mxu0 %v7979
  %v9133 = vpop.f32.mrb[0].mxu0
  %v9134 = vadd.f32 0.0, %v9133
  %v9135 = vpop.f32.mrb[0].mxu0
  %9136 = vmatprep.mubr.f32.mxu0 0.0
  %9137 = vmatmul.mubr.f32.gmra.mrb[0].mxu0 %v7980
  %v9138 = vpop.f32.mrb[0].mxu0
  %v9139 = vadd.f32 0.0, %v9138
  %v9140 = vpop.f32.mrb[0].mxu0
  %9141 = vmatprep.mubr.f32.mxu0 0.0
  %9142 = vmatmul.mubr.f32.gmra.mrb[0].mxu0 %v7981
  %v9143 = vpop.f32.mrb[0].mxu0
  %v9144 = vadd.f32 0.0, %v9143
  %v9145 = vpop.f32.mrb[0].mxu0
  %9146 = vmatprep.mubr.f32.mxu0 0.0
  %9147 = vmatmul.mubr.f32.gmra.mrb[0].mxu0 %v7982
  %v9148 = vpop.f32.mrb[0].mxu0
  %v9149 = vadd.f32 0.0, %v9148
  %v9150 = vpop.f32.mrb[0].mxu0
  %9151 = vmatprep.mubr.f32.mxu0 0.0
  %9152 = vmatmul.mubr.f32.gmra.mrb[0].mxu0 %v7983
  %v9153 = vpop.f32.mrb[0].mxu0
  %v9154 = vadd.f32 0.0, %v9153
  %v9155 = vpop.f32.mrb[0].mxu0
  %9156 = vmatprep.mubr.f32.mxu0 0.0
  %9157 = vmatmul.mubr.f32.gmra.mrb[0].mxu0 %v7984
  %v9158 = vpop.f32.mrb[0].mxu0
  %v9159 = vadd.f32 0.0, %v9158
  %v9160 = vpop.f32.mrb[0].mxu0
  %9161 = vmatprep.mubr.f32.mxu0 0.0
  %9162 = vmatmul.mubr.f32.gmra.mrb[0].mxu0 %v7985
  %v9163 = vpop.f32.mrb[0].mxu0
  %v9164 = vadd.f32 0.0, %v9163
  %v9165 = vpop.f32.mrb[0].mxu0
  %9166 = vmatprep.mubr.f32.mxu0 0.0
  %9167 = vmatmul.mubr.f32.gmra.mrb[0].mxu0 %v7986
  %v9168 = vpop.f32.mrb[0].mxu0
  %v9169 = vadd.f32 0.0, %v9168
  %v9170 = vpop.f32.mrb[0].mxu0
  %9171 = vmatprep.mubr.f32.mxu0 0.0
  %9172 = vmatmul.mubr.f32.gmra.mrb[0].mxu0 %v7987
  %v9173 = vpop.f32.mrb[0].mxu0
  %v9174 = vadd.f32 0.0, %v9173
  %v9175 = vpop.f32.mrb[0].mxu0
  %9176 = vmatprep.mubr.f32.mxu0 0.0
  %9177 = vmatmul.mubr.f32.gmra.mrb[0].mxu0 %v7988
  %v9178 = vpop.f32.mrb[0].mxu0
  %v9179 = vadd.f32 0.0, %v9178
  %v9180 = vpop.f32.mrb[0].mxu0
  %9181 = vmatprep.mubr.f32.mxu0 0.0
  %9182 = vmatmul.mubr.f32.gmra.mrb[0].mxu0 %v7989
  %v9183 = vpop.f32.mrb[0].mxu0
  %v9184 = vadd.f32 0.0, %v9183
  %v9185 = vpop.f32.mrb[0].mxu0
  %9186 = vmatprep.mubr.f32.mxu0 0.0
  %9187 = vmatmul.mubr.f32.gmra.mrb[0].mxu0 %v7990
  %v9188 = vpop.f32.mrb[0].mxu0
  %v9189 = vadd.f32 0.0, %v9188
  %v9190 = vpop.f32.mrb[0].mxu0
  %9191 = vmatprep.mubr.f32.mxu0 0.0
  %9192 = vmatmul.mubr.f32.gmra.mrb[0].mxu0 %v7991
  %v9193 = vpop.f32.mrb[0].mxu0
  %v9194 = vadd.f32 0.0, %v9193
  %v9195 = vpop.f32.mrb[0].mxu0
  %9196 = vmatprep.mubr.f32.mxu0 0.0
  %9197 = vmatmul.mubr.f32.gmra.mrb[0].mxu0 %v7992
  %v9198 = vpop.f32.mrb[0].mxu0
  %v9199 = vadd.f32 0.0, %v9198
  %v9200 = vpop.f32.mrb[0].mxu0
  %9201 = vmatprep.mubr.f32.mxu0 0.0
  %9202 = vmatmul.mubr.f32.gmra.mrb[0].mxu0 %v7993
  %v9203 = vpop.f32.mrb[0].mxu0
  %v9204 = vadd.f32 0.0, %v9203
  %v9205 = vpop.f32.mrb[0].mxu0
  %9206 = vmatprep.mubr.f32.mxu0 0.0
  %9207 = vmatmul.mubr.f32.gmra.mrb[0].mxu0 %v7994
  %v9208 = vpop.f32.mrb[0].mxu0
  %v9209 = vadd.f32 0.0, %v9208
  %v9210 = vpop.f32.mrb[0].mxu0
  %9211 = vmatprep.mubr.f32.mxu0 0.0
  %9212 = vmatmul.mubr.f32.gmra.mrb[0].mxu0 %v7995
  %v9213 = vpop.f32.mrb[0].mxu0
  %v9214 = vadd.f32 0.0, %v9213
  %v9215 = vpop.f32.mrb[0].mxu0
  %9216 = vmatprep.mubr.f32.mxu0 0.0
  %9217 = vmatmul.mubr.f32.gmra.mrb[0].mxu0 %v7996
  %v9218 = vpop.f32.mrb[0].mxu0
  %v9219 = vadd.f32 0.0, %v9218
  %v9220 = vpop.f32.mrb[0].mxu0
  %9221 = vmatprep.mubr.f32.mxu0 0.0
  %9222 = vmatmul.mubr.f32.gmra.mrb[0].mxu0 %v7997
  %v9223 = vpop.f32.mrb[0].mxu0
  %v9224 = vadd.f32 0.0, %v9223
  %v9225 = vpop.f32.mrb[0].mxu0
  %9226 = vmatprep.mubr.f32.mxu0 0.0
  %9227 = vmatmul.mubr.f32.gmra.mrb[0].mxu0 %v7998
  %v9228 = vpop.f32.mrb[0].mxu0
  %v9229 = vadd.f32 0.0, %v9228
  %v9230 = vpop.f32.mrb[0].mxu0
  %9231 = vmatprep.mubr.f32.mxu0 0.0
  %9232 = vmatmul.mubr.f32.gmra.mrb[0].mxu0 %v7999
  %v9233 = vpop.f32.mrb[0].mxu0
  %v9234 = vadd.f32 0.0, %v9233
  %v9235 = vpop.f32.mrb[0].mxu0
  %9236 = vmatprep.mubr.f32.mxu0 0.0
  %9237 = vmatmul.mubr.f32.gmra.mrb[0].mxu0 %v8000
  %v9238 = vpop.f32.mrb[0].mxu0
  %v9239 = vadd.f32 0.0, %v9238
  %v9240 = vpop.f32.mrb[0].mxu0
  %9241 = vmatprep.mubr.f32.mxu0 0.0
  %9242 = vmatmul.mubr.f32.gmra.mrb[0].mxu0 %v8001
  %v9243 = vpop.f32.mrb[0].mxu0
  %v9244 = vadd.f32 0.0, %v9243
  %v9245 = vpop.f32.mrb[0].mxu0
  %9246 = vmatprep.mubr.f32.mxu0 0.0
  %9247 = vmatmul.mubr.f32.gmra.mrb[0].mxu0 %v8002
  %v9248 = vpop.f32.mrb[0].mxu0
  %v9249 = vadd.f32 0.0, %v9248
  %v9250 = vpop.f32.mrb[0].mxu0
  %9251 = vmatprep.mubr.f32.mxu0 0.0
  %9252 = vmatmul.mubr.f32.gmra.mrb[0].mxu0 %v8003
  %v9253 = vpop.f32.mrb[0].mxu0
  %v9254 = vadd.f32 0.0, %v9253
  %v9255 = vpop.f32.mrb[0].mxu0
  %9256 = vmatprep.mubr.f32.mxu0 0.0
  %9257 = vmatmul.mubr.f32.gmra.mrb[0].mxu0 %v8004
  %v9258 = vpop.f32.mrb[0].mxu0
  %v9259 = vadd.f32 0.0, %v9258
  %v9260 = vpop.f32.mrb[0].mxu0
  %9261 = vmatprep.mubr.f32.mxu0 0.0
  %9262 = vmatmul.mubr.f32.gmra.mrb[0].mxu0 %v8005
  %v9263 = vpop.f32.mrb[0].mxu0
  %v9264 = vadd.f32 0.0, %v9263
  %v9265 = vpop.f32.mrb[0].mxu0
  %9266 = vmatprep.mubr.f32.mxu0 0.0
  %9267 = vmatmul.mubr.f32.gmra.mrb[0].mxu0 %v8006
  %v9268 = vpop.f32.mrb[0].mxu0
  %v9269 = vadd.f32 0.0, %v9268
  %v9270 = vpop.f32.mrb[0].mxu0
  %9271 = vmatprep.mubr.f32.mxu0 0.0
  %9272 = vmatmul.mubr.f32.gmra.mrb[0].mxu0 %v8007
  %v9273 = vpop.f32.mrb[0].mxu0
  %v9274 = vadd.f32 0.0, %v9273
  %v9275 = vpop.f32.mrb[0].mxu0
  %9276 = vmatprep.mubr.f32.mxu0 0.0
  %9277 = vmatmul.mubr.f32.gmra.mrb[0].mxu0 %v8008
  %v9278 = vpop.f32.mrb[0].mxu0
  %v9279 = vadd.f32 0.0, %v9278
  %v9280 = vpop.f32.mrb[0].mxu0
  %9281 = vmatprep.mubr.f32.mxu0 0.0
  %9282 = vmatmul.mubr.f32.gmra.mrb[0].mxu0 %v8009
  %v9283 = vpop.f32.mrb[0].mxu0
  %v9284 = vadd.f32 0.0, %v9283
  %v9285 = vpop.f32.mrb[0].mxu0
  %9286 = vmatprep.mubr.f32.mxu0 0.0
  %9287 = vmatmul.mubr.f32.gmra.mrb[0].mxu0 %v8010
  %v9288 = vpop.f32.mrb[0].mxu0
  %v9289 = vadd.f32 0.0, %v9288
  %v9290 = vpop.f32.mrb[0].mxu0
  %9291 = vmatprep.mubr.f32.mxu0 0.0
  %9292 = vmatmul.mubr.f32.gmra.mrb[0].mxu0 %v8011
  %v9293 = vpop.f32.mrb[0].mxu0
  %v9294 = vadd.f32 0.0, %v9293
  %v9295 = vpop.f32.mrb[0].mxu0
  %9296 = vmatprep.mubr.f32.mxu0 0.0
  %9297 = vmatmul.mubr.f32.gmra.mrb[0].mxu0 %v8012
  %v9298 = vpop.f32.mrb[0].mxu0
  %v9299 = vadd.f32 0.0, %v9298
  %v9300 = vpop.f32.mrb[0].mxu0
  %9301 = vmatprep.mubr.f32.mxu0 0.0
  %9302 = vmatmul.mubr.f32.gmra.mrb[0].mxu0 %v8013
  %v9303 = vpop.f32.mrb[0].mxu0
  %v9304 = vadd.f32 0.0, %v9303
  %v9305 = vpop.f32.mrb[0].mxu0
  %9306 = vmatprep.mubr.f32.mxu0 0.0
  %9307 = vmatmul.mubr.f32.gmra.mrb[0].mxu0 %v8014
  %v9308 = vpop.f32.mrb[0].mxu0
  %v9309 = vadd.f32 0.0, %v9308
  %v9310 = vpop.f32.mrb[0].mxu0
  %9311 = vmatprep.mubr.f32.mxu0 0.0
  %9312 = vmatmul.mubr.f32.gmra.mrb[0].mxu0 %v8015
  %v9313 = vpop.f32.mrb[0].mxu0
  %v9314 = vadd.f32 0.0, %v9313
  %v9315 = vpop.f32.mrb[0].mxu0
  %9316 = vmatprep.mubr.f32.mxu0 0.0
  %9317 = vmatmul.mubr.f32.gmra.mrb[0].mxu0 %v8016
  %v9318 = vpop.f32.mrb[0].mxu0
  %v9319 = vadd.f32 0.0, %v9318
  %v9320 = vpop.f32.mrb[0].mxu0
  %9321 = vmatprep.mubr.f32.mxu0 0.0
  %9322 = vmatmul.mubr.f32.gmra.mrb[0].mxu0 %v8017
  %v9323 = vpop.f32.mrb[0].mxu0
  %v9324 = vadd.f32 0.0, %v9323
  %v9325 = vpop.f32.mrb[0].mxu0
  %9326 = vmatprep.mubr.f32.mxu0 0.0
  %9327 = vmatmul.mubr.f32.gmra.mrb[0].mxu0 %v8018
  %v9328 = vpop.f32.mrb[0].mxu0
  %v9329 = vadd.f32 0.0, %v9328
  %v9330 = vpop.f32.mrb[0].mxu0
  %9331 = vmatprep.mubr.f32.mxu0 0.0
  %9332 = vmatmul.mubr.f32.gmra.mrb[0].mxu0 %v8019
  %v9333 = vpop.f32.mrb[0].mxu0
  %v9334 = vadd.f32 0.0, %v9333
  %v9335 = vpop.f32.mrb[0].mxu0
  %9336 = vmatprep.mubr.f32.mxu0 0.0
  %9337 = vmatmul.mubr.f32.gmra.mrb[0].mxu0 %v8020
  %v9338 = vpop.f32.mrb[0].mxu0
  %v9339 = vadd.f32 0.0, %v9338
  %v9340 = vpop.f32.mrb[0].mxu0
  %9341 = vmatprep.mubr.f32.mxu0 0.0
  %9342 = vmatmul.mubr.f32.gmra.mrb[0].mxu0 %v8021
  %v9343 = vpop.f32.mrb[0].mxu0
  %v9344 = vadd.f32 0.0, %v9343
  %v9345 = vpop.f32.mrb[0].mxu0
  %9346 = vmatprep.mubr.f32.mxu0 0.0
  %9347 = vmatmul.mubr.f32.gmra.mrb[0].mxu0 %v8022
  %v9348 = vpop.f32.mrb[0].mxu0
  %v9349 = vadd.f32 0.0, %v9348
  %v9350 = vpop.f32.mrb[0].mxu0
  %9351 = vmatprep.mubr.f32.mxu0 0.0
  %9352 = vmatmul.mubr.f32.gmra.mrb[0].mxu0 %v8023
  %v9353 = vpop.f32.mrb[0].mxu0
  %v9354 = vadd.f32 0.0, %v9353
  %v9355 = vpop.f32.mrb[0].mxu0
  %9356 = vmatprep.mubr.f32.mxu0 0.0
  %9357 = vmatmul.mubr.f32.gmra.mrb[0].mxu0 %v8024
  %v9358 = vpop.f32.mrb[0].mxu0
  %v9359 = vadd.f32 0.0, %v9358
  %v9360 = vpop.f32.mrb[0].mxu0
  %9361 = vmatprep.mubr.f32.mxu0 0.0
  %9362 = vmatmul.mubr.f32.gmra.mrb[0].mxu0 %v8025
  %v9363 = vpop.f32.mrb[0].mxu0
  %v9364 = vadd.f32 0.0, %v9363
  %v9365 = vpop.f32.mrb[0].mxu0
  %9366 = vmatprep.mubr.f32.mxu0 0.0
  %9367 = vmatmul.mubr.f32.gmra.mrb[0].mxu0 %v8026
  %v9368 = vpop.f32.mrb[0].mxu0
  %v9369 = vadd.f32 0.0, %v9368
  %v9370 = vpop.f32.mrb[0].mxu0
  %9371 = vmatprep.mubr.f32.mxu0 0.0
  %9372 = vmatmul.mubr.f32.gmra.mrb[0].mxu0 %v8027
  %v9373 = vpop.f32.mrb[0].mxu0
  %v9374 = vadd.f32 0.0, %v9373
  %v9375 = vpop.f32.mrb[0].mxu0
  %9376 = vmatprep.mubr.f32.mxu0 0.0
  %9377 = vmatmul.mubr.f32.gmra.mrb[0].mxu0 %v8028
  %v9378 = vpop.f32.mrb[0].mxu0
  %v9379 = vadd.f32 0.0, %v9378
  %v9380 = vpop.f32.mrb[0].mxu0
  %9381 = vmatprep.mubr.f32.mxu0 0.0
  %9382 = vmatmul.mubr.f32.gmra.mrb[0].mxu0 %v8029
  %v9383 = vpop.f32.mrb[0].mxu0
  %v9384 = vadd.f32 0.0, %v9383
  %v9385 = vpop.f32.mrb[0].mxu0
  %9386 = vmatprep.mubr.f32.mxu0 0.0
  %9387 = vmatmul.mubr.f32.gmra.mrb[0].mxu0 %v8030
  %v9388 = vpop.f32.mrb[0].mxu0
  %v9389 = vadd.f32 0.0, %v9388
  %v9390 = vpop.f32.mrb[0].mxu0
  %9391 = vdwg.mxu0
  %v9392 = vld [vmem:[%s2] sm:$0xff]
  %v9393 = vld [vmem:[%s2 + $0x8] sm:$0xff]
  %v9394 = vadd.f32 %v8114, %v9392
  %v9395 = vadd.f32 %v8119, %v9393
  %v9396 = vadd.f32 %v8124, %v9392
  %v9397 = vadd.f32 %v8129, %v9393
  %v9398 = vadd.f32 %v8134, %v9392
  %v9399 = vadd.f32 %v8139, %v9393
  %v9400 = vadd.f32 %v8144, %v9392
  %v9401 = vadd.f32 %v8149, %v9393
  %v9402 = vadd.f32 %v8154, %v9392
  %v9403 = vadd.f32 %v8159, %v9393
  %v9404 = vadd.f32 %v8164, %v9392
  %v9405 = vadd.f32 %v8169, %v9393
  %v9406 = vadd.f32 %v8174, %v9392
  %v9407 = vadd.f32 %v8179, %v9393
  %v9408 = vadd.f32 %v8184, %v9392
  %v9409 = vadd.f32 %v8189, %v9393
  %v9410 = vadd.f32 %v8194, %v9392
  %v9411 = vadd.f32 %v8199, %v9393
  %v9412 = vadd.f32 %v8204, %v9392
  %v9413 = vadd.f32 %v8209, %v9393
  %v9414 = vadd.f32 %v8214, %v9392
  %v9415 = vadd.f32 %v8219, %v9393
  %v9416 = vadd.f32 %v8224, %v9392
  %v9417 = vadd.f32 %v8229, %v9393
  %v9418 = vadd.f32 %v8234, %v9392
  %v9419 = vadd.f32 %v8239, %v9393
  %v9420 = vadd.f32 %v8244, %v9392
  %v9421 = vadd.f32 %v8249, %v9393
  %v9422 = vadd.f32 %v8254, %v9392
  %v9423 = vadd.f32 %v8259, %v9393
  %v9424 = vadd.f32 %v8264, %v9392
  %v9425 = vadd.f32 %v8269, %v9393
  %v9426 = vadd.f32 %v8274, %v9392
  %v9427 = vadd.f32 %v8279, %v9393
  %v9428 = vadd.f32 %v8284, %v9392
  %v9429 = vadd.f32 %v8289, %v9393
  %v9430 = vadd.f32 %v8294, %v9392
  %v9431 = vadd.f32 %v8299, %v9393
  %v9432 = vadd.f32 %v8304, %v9392
  %v9433 = vadd.f32 %v8309, %v9393
  %v9434 = vadd.f32 %v8314, %v9392
  %v9435 = vadd.f32 %v8319, %v9393
  %v9436 = vadd.f32 %v8324, %v9392
  %v9437 = vadd.f32 %v8329, %v9393
  %v9438 = vadd.f32 %v8334, %v9392
  %v9439 = vadd.f32 %v8339, %v9393
  %v9440 = vadd.f32 %v8344, %v9392
  %v9441 = vadd.f32 %v8349, %v9393
  %v9442 = vadd.f32 %v8354, %v9392
  %v9443 = vadd.f32 %v8359, %v9393
  %v9444 = vadd.f32 %v8364, %v9392
  %v9445 = vadd.f32 %v8369, %v9393
  %v9446 = vadd.f32 %v8374, %v9392
  %v9447 = vadd.f32 %v8379, %v9393
  %v9448 = vadd.f32 %v8384, %v9392
  %v9449 = vadd.f32 %v8389, %v9393
  %v9450 = vadd.f32 %v8394, %v9392
  %v9451 = vadd.f32 %v8399, %v9393
  %v9452 = vadd.f32 %v8404, %v9392
  %v9453 = vadd.f32 %v8409, %v9393
  %v9454 = vadd.f32 %v8414, %v9392
  %v9455 = vadd.f32 %v8419, %v9393
  %v9456 = vadd.f32 %v8424, %v9392
  %v9457 = vadd.f32 %v8429, %v9393
  %v9458 = vadd.f32 %v8434, %v9392
  %v9459 = vadd.f32 %v8439, %v9393
  %v9460 = vadd.f32 %v8444, %v9392
  %v9461 = vadd.f32 %v8449, %v9393
  %v9462 = vadd.f32 %v8454, %v9392
  %v9463 = vadd.f32 %v8459, %v9393
  %v9464 = vadd.f32 %v8464, %v9392
  %v9465 = vadd.f32 %v8469, %v9393
  %v9466 = vadd.f32 %v8474, %v9392
  %v9467 = vadd.f32 %v8479, %v9393
  %v9468 = vadd.f32 %v8484, %v9392
  %v9469 = vadd.f32 %v8489, %v9393
  %v9470 = vadd.f32 %v8494, %v9392
  %v9471 = vadd.f32 %v8499, %v9393
  %v9472 = vadd.f32 %v8504, %v9392
  %v9473 = vadd.f32 %v8509, %v9393
  %v9474 = vadd.f32 %v8514, %v9392
  %v9475 = vadd.f32 %v8519, %v9393
  %v9476 = vadd.f32 %v8524, %v9392
  %v9477 = vadd.f32 %v8529, %v9393
  %v9478 = vadd.f32 %v8534, %v9392
  %v9479 = vadd.f32 %v8539, %v9393
  %v9480 = vadd.f32 %v8544, %v9392
  %v9481 = vadd.f32 %v8549, %v9393
  %v9482 = vadd.f32 %v8554, %v9392
  %v9483 = vadd.f32 %v8559, %v9393
  %v9484 = vadd.f32 %v8564, %v9392
  %v9485 = vadd.f32 %v8569, %v9393
  %v9486 = vadd.f32 %v8574, %v9392
  %v9487 = vadd.f32 %v8579, %v9393
  %v9488 = vadd.f32 %v8584, %v9392
  %v9489 = vadd.f32 %v8589, %v9393
  %v9490 = vadd.f32 %v8594, %v9392
  %v9491 = vadd.f32 %v8599, %v9393
  %v9492 = vadd.f32 %v8604, %v9392
  %v9493 = vadd.f32 %v8609, %v9393
  %v9494 = vadd.f32 %v8614, %v9392
  %v9495 = vadd.f32 %v8619, %v9393
  %v9496 = vadd.f32 %v8624, %v9392
  %v9497 = vadd.f32 %v8629, %v9393
  %v9498 = vadd.f32 %v8634, %v9392
  %v9499 = vadd.f32 %v8639, %v9393
  %v9500 = vadd.f32 %v8644, %v9392
  %v9501 = vadd.f32 %v8649, %v9393
  %v9502 = vadd.f32 %v8654, %v9392
  %v9503 = vadd.f32 %v8659, %v9393
  %v9504 = vadd.f32 %v8664, %v9392
  %v9505 = vadd.f32 %v8669, %v9393
  %v9506 = vadd.f32 %v8674, %v9392
  %v9507 = vadd.f32 %v8679, %v9393
  %v9508 = vadd.f32 %v8684, %v9392
  %v9509 = vadd.f32 %v8689, %v9393
  %v9510 = vadd.f32 %v8694, %v9392
  %v9511 = vadd.f32 %v8699, %v9393
  %v9512 = vadd.f32 %v8704, %v9392
  %v9513 = vadd.f32 %v8709, %v9393
  %v9514 = vadd.f32 %v8714, %v9392
  %v9515 = vadd.f32 %v8719, %v9393
  %v9516 = vadd.f32 %v8724, %v9392
  %v9517 = vadd.f32 %v8729, %v9393
  %v9518 = vadd.f32 %v8734, %v9392
  %v9519 = vadd.f32 %v8739, %v9393
  %v9520 = vadd.f32 %v8744, %v9392
  %v9521 = vadd.f32 %v8749, %v9393
  %v9522 = vadd.f32 %v8754, %v9392
  %v9523 = vadd.f32 %v8759, %v9393
  %v9524 = vadd.f32 %v8764, %v9392
  %v9525 = vadd.f32 %v8769, %v9393
  %v9526 = vadd.f32 %v8774, %v9392
  %v9527 = vadd.f32 %v8779, %v9393
  %v9528 = vadd.f32 %v8784, %v9392
  %v9529 = vadd.f32 %v8789, %v9393
  %v9530 = vadd.f32 %v8794, %v9392
  %v9531 = vadd.f32 %v8799, %v9393
  %v9532 = vadd.f32 %v8804, %v9392
  %v9533 = vadd.f32 %v8809, %v9393
  %v9534 = vadd.f32 %v8814, %v9392
  %v9535 = vadd.f32 %v8819, %v9393
  %v9536 = vadd.f32 %v8824, %v9392
  %v9537 = vadd.f32 %v8829, %v9393
  %v9538 = vadd.f32 %v8834, %v9392
  %v9539 = vadd.f32 %v8839, %v9393
  %v9540 = vadd.f32 %v8844, %v9392
  %v9541 = vadd.f32 %v8849, %v9393
  %v9542 = vadd.f32 %v8854, %v9392
  %v9543 = vadd.f32 %v8859, %v9393
  %v9544 = vadd.f32 %v8864, %v9392
  %v9545 = vadd.f32 %v8869, %v9393
  %v9546 = vadd.f32 %v8874, %v9392
  %v9547 = vadd.f32 %v8879, %v9393
  %v9548 = vadd.f32 %v8884, %v9392
  %v9549 = vadd.f32 %v8889, %v9393
  %v9550 = vadd.f32 %v8894, %v9392
  %v9551 = vadd.f32 %v8899, %v9393
  %v9552 = vadd.f32 %v8904, %v9392
  %v9553 = vadd.f32 %v8909, %v9393
  %v9554 = vadd.f32 %v8914, %v9392
  %v9555 = vadd.f32 %v8919, %v9393
  %v9556 = vadd.f32 %v8924, %v9392
  %v9557 = vadd.f32 %v8929, %v9393
  %v9558 = vadd.f32 %v8934, %v9392
  %v9559 = vadd.f32 %v8939, %v9393
  %v9560 = vadd.f32 %v8944, %v9392
  %v9561 = vadd.f32 %v8949, %v9393
  %v9562 = vadd.f32 %v8954, %v9392
  %v9563 = vadd.f32 %v8959, %v9393
  %v9564 = vadd.f32 %v8964, %v9392
  %v9565 = vadd.f32 %v8969, %v9393
  %v9566 = vadd.f32 %v8974, %v9392
  %v9567 = vadd.f32 %v8979, %v9393
  %v9568 = vadd.f32 %v8984, %v9392
  %v9569 = vadd.f32 %v8989, %v9393
  %v9570 = vadd.f32 %v8994, %v9392
  %v9571 = vadd.f32 %v8999, %v9393
  %v9572 = vadd.f32 %v9004, %v9392
  %v9573 = vadd.f32 %v9009, %v9393
  %v9574 = vadd.f32 %v9014, %v9392
  %v9575 = vadd.f32 %v9019, %v9393
  %v9576 = vadd.f32 %v9024, %v9392
  %v9577 = vadd.f32 %v9029, %v9393
  %v9578 = vadd.f32 %v9034, %v9392
  %v9579 = vadd.f32 %v9039, %v9393
  %v9580 = vadd.f32 %v9044, %v9392
  %v9581 = vadd.f32 %v9049, %v9393
  %v9582 = vadd.f32 %v9054, %v9392
  %v9583 = vadd.f32 %v9059, %v9393
  %v9584 = vadd.f32 %v9064, %v9392
  %v9585 = vadd.f32 %v9069, %v9393
  %v9586 = vadd.f32 %v9074, %v9392
  %v9587 = vadd.f32 %v9079, %v9393
  %v9588 = vadd.f32 %v9084, %v9392
  %v9589 = vadd.f32 %v9089, %v9393
  %v9590 = vadd.f32 %v9094, %v9392
  %v9591 = vadd.f32 %v9099, %v9393
  %v9592 = vadd.f32 %v9104, %v9392
  %v9593 = vadd.f32 %v9109, %v9393
  %v9594 = vadd.f32 %v9114, %v9392
  %v9595 = vadd.f32 %v9119, %v9393
  %v9596 = vadd.f32 %v9124, %v9392
  %v9597 = vadd.f32 %v9129, %v9393
  %v9598 = vadd.f32 %v9134, %v9392
  %v9599 = vadd.f32 %v9139, %v9393
  %v9600 = vadd.f32 %v9144, %v9392
  %v9601 = vadd.f32 %v9149, %v9393
  %v9602 = vadd.f32 %v9154, %v9392
  %v9603 = vadd.f32 %v9159, %v9393
  %v9604 = vadd.f32 %v9164, %v9392
  %v9605 = vadd.f32 %v9169, %v9393
  %v9606 = vadd.f32 %v9174, %v9392
  %v9607 = vadd.f32 %v9179, %v9393
  %v9608 = vadd.f32 %v9184, %v9392
  %v9609 = vadd.f32 %v9189, %v9393
  %v9610 = vadd.f32 %v9194, %v9392
  %v9611 = vadd.f32 %v9199, %v9393
  %v9612 = vadd.f32 %v9204, %v9392
  %v9613 = vadd.f32 %v9209, %v9393
  %v9614 = vadd.f32 %v9214, %v9392
  %v9615 = vadd.f32 %v9219, %v9393
  %v9616 = vadd.f32 %v9224, %v9392
  %v9617 = vadd.f32 %v9229, %v9393
  %v9618 = vadd.f32 %v9234, %v9392
  %v9619 = vadd.f32 %v9239, %v9393
  %v9620 = vadd.f32 %v9244, %v9392
  %v9621 = vadd.f32 %v9249, %v9393
  %v9622 = vadd.f32 %v9254, %v9392
  %v9623 = vadd.f32 %v9259, %v9393
  %v9624 = vadd.f32 %v9264, %v9392
  %v9625 = vadd.f32 %v9269, %v9393
  %v9626 = vadd.f32 %v9274, %v9392
  %v9627 = vadd.f32 %v9279, %v9393
  %v9628 = vadd.f32 %v9284, %v9392
  %v9629 = vadd.f32 %v9289, %v9393
  %v9630 = vadd.f32 %v9294, %v9392
  %v9631 = vadd.f32 %v9299, %v9393
  %v9632 = vadd.f32 %v9304, %v9392
  %v9633 = vadd.f32 %v9309, %v9393
  %v9634 = vadd.f32 %v9314, %v9392
  %v9635 = vadd.f32 %v9319, %v9393
  %v9636 = vadd.f32 %v9324, %v9392
  %v9637 = vadd.f32 %v9329, %v9393
  %v9638 = vadd.f32 %v9334, %v9392
  %v9639 = vadd.f32 %v9339, %v9393
  %v9640 = vadd.f32 %v9344, %v9392
  %v9641 = vadd.f32 %v9349, %v9393
  %v9642 = vadd.f32 %v9354, %v9392
  %v9643 = vadd.f32 %v9359, %v9393
  %v9644 = vadd.f32 %v9364, %v9392
  %v9645 = vadd.f32 %v9369, %v9393
  %v9646 = vadd.f32 %v9374, %v9392
  %v9647 = vadd.f32 %v9379, %v9393
  %v9648 = vadd.f32 %v9384, %v9392
  %v9649 = vadd.f32 %v9389, %v9393
  %vm9650 = vcmask 261120
  %v9651 = vsel %vm9650, %v9394, -inf
  %v9652 = vsel %vm9650, %v9395, -inf
  %v9653 = vmax.f32 %v9651, %v9652
  %v9654 = vrot.slane %v9653, 4
  %v9655 = vmax.f32 %v9653, %v9654
  %v9656 = vrot.slane %v9655, 2
  %v9657 = vmax.f32 %v9655, %v9656
  %v9658 = vrot.slane %v9657, 1
  %v9659 = vmax.f32 %v9657, %v9658
  %v9660 = vsel %vm9650, %v9396, -inf
  %v9661 = vsel %vm9650, %v9397, -inf
  %v9662 = vmax.f32 %v9660, %v9661
  %v9663 = vrot.slane %v9662, 4
  %v9664 = vmax.f32 %v9662, %v9663
  %v9665 = vrot.slane %v9664, 2
  %v9666 = vmax.f32 %v9664, %v9665
  %v9667 = vrot.slane %v9666, 1
  %v9668 = vmax.f32 %v9666, %v9667
  %v9669 = vsel %vm9650, %v9398, -inf
  %v9670 = vsel %vm9650, %v9399, -inf
  %v9671 = vmax.f32 %v9669, %v9670
  %v9672 = vrot.slane %v9671, 4
  %v9673 = vmax.f32 %v9671, %v9672
  %v9674 = vrot.slane %v9673, 2
  %v9675 = vmax.f32 %v9673, %v9674
  %v9676 = vrot.slane %v9675, 1
  %v9677 = vmax.f32 %v9675, %v9676
  %v9678 = vsel %vm9650, %v9400, -inf
  %v9679 = vsel %vm9650, %v9401, -inf
  %v9680 = vmax.f32 %v9678, %v9679
  %v9681 = vrot.slane %v9680, 4
  %v9682 = vmax.f32 %v9680, %v9681
  %v9683 = vrot.slane %v9682, 2
  %v9684 = vmax.f32 %v9682, %v9683
  %v9685 = vrot.slane %v9684, 1
  %v9686 = vmax.f32 %v9684, %v9685
  %v9687 = vsel %vm9650, %v9402, -inf
  %v9688 = vsel %vm9650, %v9403, -inf
  %v9689 = vmax.f32 %v9687, %v9688
  %v9690 = vrot.slane %v9689, 4
  %v9691 = vmax.f32 %v9689, %v9690
  %v9692 = vrot.slane %v9691, 2
  %v9693 = vmax.f32 %v9691, %v9692
  %v9694 = vrot.slane %v9693, 1
  %v9695 = vmax.f32 %v9693, %v9694
  %v9696 = vsel %vm9650, %v9404, -inf
  %v9697 = vsel %vm9650, %v9405, -inf
  %v9698 = vmax.f32 %v9696, %v9697
  %v9699 = vrot.slane %v9698, 4
  %v9700 = vmax.f32 %v9698, %v9699
  %v9701 = vrot.slane %v9700, 2
  %v9702 = vmax.f32 %v9700, %v9701
  %v9703 = vrot.slane %v9702, 1
  %v9704 = vmax.f32 %v9702, %v9703
  %v9705 = vsel %vm9650, %v9406, -inf
  %v9706 = vsel %vm9650, %v9407, -inf
  %v9707 = vmax.f32 %v9705, %v9706
  %v9708 = vrot.slane %v9707, 4
  %v9709 = vmax.f32 %v9707, %v9708
  %v9710 = vrot.slane %v9709, 2
  %v9711 = vmax.f32 %v9709, %v9710
  %v9712 = vrot.slane %v9711, 1
  %v9713 = vmax.f32 %v9711, %v9712
  %v9714 = vsel %vm9650, %v9408, -inf
  %v9715 = vsel %vm9650, %v9409, -inf
  %v9716 = vmax.f32 %v9714, %v9715
  %v9717 = vrot.slane %v9716, 4
  %v9718 = vmax.f32 %v9716, %v9717
  %v9719 = vrot.slane %v9718, 2
  %v9720 = vmax.f32 %v9718, %v9719
  %v9721 = vrot.slane %v9720, 1
  %v9722 = vmax.f32 %v9720, %v9721
  %v9723 = vsel %vm9650, %v9410, -inf
  %v9724 = vsel %vm9650, %v9411, -inf
  %v9725 = vmax.f32 %v9723, %v9724
  %v9726 = vrot.slane %v9725, 4
  %v9727 = vmax.f32 %v9725, %v9726
  %v9728 = vrot.slane %v9727, 2
  %v9729 = vmax.f32 %v9727, %v9728
  %v9730 = vrot.slane %v9729, 1
  %v9731 = vmax.f32 %v9729, %v9730
  %v9732 = vsel %vm9650, %v9412, -inf
  %v9733 = vsel %vm9650, %v9413, -inf
  %v9734 = vmax.f32 %v9732, %v9733
  %v9735 = vrot.slane %v9734, 4
  %v9736 = vmax.f32 %v9734, %v9735
  %v9737 = vrot.slane %v9736, 2
  %v9738 = vmax.f32 %v9736, %v9737
  %v9739 = vrot.slane %v9738, 1
  %v9740 = vmax.f32 %v9738, %v9739
  %v9741 = vsel %vm9650, %v9414, -inf
  %v9742 = vsel %vm9650, %v9415, -inf
  %v9743 = vmax.f32 %v9741, %v9742
  %v9744 = vrot.slane %v9743, 4
  %v9745 = vmax.f32 %v9743, %v9744
  %v9746 = vrot.slane %v9745, 2
  %v9747 = vmax.f32 %v9745, %v9746
  %v9748 = vrot.slane %v9747, 1
  %v9749 = vmax.f32 %v9747, %v9748
  %v9750 = vsel %vm9650, %v9416, -inf
  %v9751 = vsel %vm9650, %v9417, -inf
  %v9752 = vmax.f32 %v9750, %v9751
  %v9753 = vrot.slane %v9752, 4
  %v9754 = vmax.f32 %v9752, %v9753
  %v9755 = vrot.slane %v9754, 2
  %v9756 = vmax.f32 %v9754, %v9755
  %v9757 = vrot.slane %v9756, 1
  %v9758 = vmax.f32 %v9756, %v9757
  %v9759 = vsel %vm9650, %v9418, -inf
  %v9760 = vsel %vm9650, %v9419, -inf
  %v9761 = vmax.f32 %v9759, %v9760
  %v9762 = vrot.slane %v9761, 4
  %v9763 = vmax.f32 %v9761, %v9762
  %v9764 = vrot.slane %v9763, 2
  %v9765 = vmax.f32 %v9763, %v9764
  %v9766 = vrot.slane %v9765, 1
  %v9767 = vmax.f32 %v9765, %v9766
  %v9768 = vsel %vm9650, %v9420, -inf
  %v9769 = vsel %vm9650, %v9421, -inf
  %v9770 = vmax.f32 %v9768, %v9769
  %v9771 = vrot.slane %v9770, 4
  %v9772 = vmax.f32 %v9770, %v9771
  %v9773 = vrot.slane %v9772, 2
  %v9774 = vmax.f32 %v9772, %v9773
  %v9775 = vrot.slane %v9774, 1
  %v9776 = vmax.f32 %v9774, %v9775
  %v9777 = vsel %vm9650, %v9422, -inf
  %v9778 = vsel %vm9650, %v9423, -inf
  %v9779 = vmax.f32 %v9777, %v9778
  %v9780 = vrot.slane %v9779, 4
  %v9781 = vmax.f32 %v9779, %v9780
  %v9782 = vrot.slane %v9781, 2
  %v9783 = vmax.f32 %v9781, %v9782
  %v9784 = vrot.slane %v9783, 1
  %v9785 = vmax.f32 %v9783, %v9784
  %v9786 = vsel %vm9650, %v9424, -inf
  %v9787 = vsel %vm9650, %v9425, -inf
  %v9788 = vmax.f32 %v9786, %v9787
  %v9789 = vrot.slane %v9788, 4
  %v9790 = vmax.f32 %v9788, %v9789
  %v9791 = vrot.slane %v9790, 2
  %v9792 = vmax.f32 %v9790, %v9791
  %v9793 = vrot.slane %v9792, 1
  %v9794 = vmax.f32 %v9792, %v9793
  %v9795 = vsel %vm9650, %v9426, -inf
  %v9796 = vsel %vm9650, %v9427, -inf
  %v9797 = vmax.f32 %v9795, %v9796
  %v9798 = vrot.slane %v9797, 4
  %v9799 = vmax.f32 %v9797, %v9798
  %v9800 = vrot.slane %v9799, 2
  %v9801 = vmax.f32 %v9799, %v9800
  %v9802 = vrot.slane %v9801, 1
  %v9803 = vmax.f32 %v9801, %v9802
  %v9804 = vsel %vm9650, %v9428, -inf
  %v9805 = vsel %vm9650, %v9429, -inf
  %v9806 = vmax.f32 %v9804, %v9805
  %v9807 = vrot.slane %v9806, 4
  %v9808 = vmax.f32 %v9806, %v9807
  %v9809 = vrot.slane %v9808, 2
  %v9810 = vmax.f32 %v9808, %v9809
  %v9811 = vrot.slane %v9810, 1
  %v9812 = vmax.f32 %v9810, %v9811
  %v9813 = vsel %vm9650, %v9430, -inf
  %v9814 = vsel %vm9650, %v9431, -inf
  %v9815 = vmax.f32 %v9813, %v9814
  %v9816 = vrot.slane %v9815, 4
  %v9817 = vmax.f32 %v9815, %v9816
  %v9818 = vrot.slane %v9817, 2
  %v9819 = vmax.f32 %v9817, %v9818
  %v9820 = vrot.slane %v9819, 1
  %v9821 = vmax.f32 %v9819, %v9820
  %v9822 = vsel %vm9650, %v9432, -inf
  %v9823 = vsel %vm9650, %v9433, -inf
  %v9824 = vmax.f32 %v9822, %v9823
  %v9825 = vrot.slane %v9824, 4
  %v9826 = vmax.f32 %v9824, %v9825
  %v9827 = vrot.slane %v9826, 2
  %v9828 = vmax.f32 %v9826, %v9827
  %v9829 = vrot.slane %v9828, 1
  %v9830 = vmax.f32 %v9828, %v9829
  %v9831 = vsel %vm9650, %v9434, -inf
  %v9832 = vsel %vm9650, %v9435, -inf
  %v9833 = vmax.f32 %v9831, %v9832
  %v9834 = vrot.slane %v9833, 4
  %v9835 = vmax.f32 %v9833, %v9834
  %v9836 = vrot.slane %v9835, 2
  %v9837 = vmax.f32 %v9835, %v9836
  %v9838 = vrot.slane %v9837, 1
  %v9839 = vmax.f32 %v9837, %v9838
  %v9840 = vsel %vm9650, %v9436, -inf
  %v9841 = vsel %vm9650, %v9437, -inf
  %v9842 = vmax.f32 %v9840, %v9841
  %v9843 = vrot.slane %v9842, 4
  %v9844 = vmax.f32 %v9842, %v9843
  %v9845 = vrot.slane %v9844, 2
  %v9846 = vmax.f32 %v9844, %v9845
  %v9847 = vrot.slane %v9846, 1
  %v9848 = vmax.f32 %v9846, %v9847
  %v9849 = vsel %vm9650, %v9438, -inf
  %v9850 = vsel %vm9650, %v9439, -inf
  %v9851 = vmax.f32 %v9849, %v9850
  %v9852 = vrot.slane %v9851, 4
  %v9853 = vmax.f32 %v9851, %v9852
  %v9854 = vrot.slane %v9853, 2
  %v9855 = vmax.f32 %v9853, %v9854
  %v9856 = vrot.slane %v9855, 1
  %v9857 = vmax.f32 %v9855, %v9856
  %v9858 = vsel %vm9650, %v9440, -inf
  %v9859 = vsel %vm9650, %v9441, -inf
  %v9860 = vmax.f32 %v9858, %v9859
  %v9861 = vrot.slane %v9860, 4
  %v9862 = vmax.f32 %v9860, %v9861
  %v9863 = vrot.slane %v9862, 2
  %v9864 = vmax.f32 %v9862, %v9863
  %v9865 = vrot.slane %v9864, 1
  %v9866 = vmax.f32 %v9864, %v9865
  %v9867 = vsel %vm9650, %v9442, -inf
  %v9868 = vsel %vm9650, %v9443, -inf
  %v9869 = vmax.f32 %v9867, %v9868
  %v9870 = vrot.slane %v9869, 4
  %v9871 = vmax.f32 %v9869, %v9870
  %v9872 = vrot.slane %v9871, 2
  %v9873 = vmax.f32 %v9871, %v9872
  %v9874 = vrot.slane %v9873, 1
  %v9875 = vmax.f32 %v9873, %v9874
  %v9876 = vsel %vm9650, %v9444, -inf
  %v9877 = vsel %vm9650, %v9445, -inf
  %v9878 = vmax.f32 %v9876, %v9877
  %v9879 = vrot.slane %v9878, 4
  %v9880 = vmax.f32 %v9878, %v9879
  %v9881 = vrot.slane %v9880, 2
  %v9882 = vmax.f32 %v9880, %v9881
  %v9883 = vrot.slane %v9882, 1
  %v9884 = vmax.f32 %v9882, %v9883
  %v9885 = vsel %vm9650, %v9446, -inf
  %v9886 = vsel %vm9650, %v9447, -inf
  %v9887 = vmax.f32 %v9885, %v9886
  %v9888 = vrot.slane %v9887, 4
  %v9889 = vmax.f32 %v9887, %v9888
  %v9890 = vrot.slane %v9889, 2
  %v9891 = vmax.f32 %v9889, %v9890
  %v9892 = vrot.slane %v9891, 1
  %v9893 = vmax.f32 %v9891, %v9892
  %v9894 = vsel %vm9650, %v9448, -inf
  %v9895 = vsel %vm9650, %v9449, -inf
  %v9896 = vmax.f32 %v9894, %v9895
  %v9897 = vrot.slane %v9896, 4
  %v9898 = vmax.f32 %v9896, %v9897
  %v9899 = vrot.slane %v9898, 2
  %v9900 = vmax.f32 %v9898, %v9899
  %v9901 = vrot.slane %v9900, 1
  %v9902 = vmax.f32 %v9900, %v9901
  %v9903 = vsel %vm9650, %v9450, -inf
  %v9904 = vsel %vm9650, %v9451, -inf
  %v9905 = vmax.f32 %v9903, %v9904
  %v9906 = vrot.slane %v9905, 4
  %v9907 = vmax.f32 %v9905, %v9906
  %v9908 = vrot.slane %v9907, 2
  %v9909 = vmax.f32 %v9907, %v9908
  %v9910 = vrot.slane %v9909, 1
  %v9911 = vmax.f32 %v9909, %v9910
  %v9912 = vsel %vm9650, %v9452, -inf
  %v9913 = vsel %vm9650, %v9453, -inf
  %v9914 = vmax.f32 %v9912, %v9913
  %v9915 = vrot.slane %v9914, 4
  %v9916 = vmax.f32 %v9914, %v9915
  %v9917 = vrot.slane %v9916, 2
  %v9918 = vmax.f32 %v9916, %v9917
  %v9919 = vrot.slane %v9918, 1
  %v9920 = vmax.f32 %v9918, %v9919
  %v9921 = vsel %vm9650, %v9454, -inf
  %v9922 = vsel %vm9650, %v9455, -inf
  %v9923 = vmax.f32 %v9921, %v9922
  %v9924 = vrot.slane %v9923, 4
  %v9925 = vmax.f32 %v9923, %v9924
  %v9926 = vrot.slane %v9925, 2
  %v9927 = vmax.f32 %v9925, %v9926
  %v9928 = vrot.slane %v9927, 1
  %v9929 = vmax.f32 %v9927, %v9928
  %v9930 = vsel %vm9650, %v9456, -inf
  %v9931 = vsel %vm9650, %v9457, -inf
  %v9932 = vmax.f32 %v9930, %v9931
  %v9933 = vrot.slane %v9932, 4
  %v9934 = vmax.f32 %v9932, %v9933
  %v9935 = vrot.slane %v9934, 2
  %v9936 = vmax.f32 %v9934, %v9935
  %v9937 = vrot.slane %v9936, 1
  %v9938 = vmax.f32 %v9936, %v9937
  %v9939 = vsel %vm9650, %v9458, -inf
  %v9940 = vsel %vm9650, %v9459, -inf
  %v9941 = vmax.f32 %v9939, %v9940
  %v9942 = vrot.slane %v9941, 4
  %v9943 = vmax.f32 %v9941, %v9942
  %v9944 = vrot.slane %v9943, 2
  %v9945 = vmax.f32 %v9943, %v9944
  %v9946 = vrot.slane %v9945, 1
  %v9947 = vmax.f32 %v9945, %v9946
  %v9948 = vsel %vm9650, %v9460, -inf
  %v9949 = vsel %vm9650, %v9461, -inf
  %v9950 = vmax.f32 %v9948, %v9949
  %v9951 = vrot.slane %v9950, 4
  %v9952 = vmax.f32 %v9950, %v9951
  %v9953 = vrot.slane %v9952, 2
  %v9954 = vmax.f32 %v9952, %v9953
  %v9955 = vrot.slane %v9954, 1
  %v9956 = vmax.f32 %v9954, %v9955
  %v9957 = vsel %vm9650, %v9462, -inf
  %v9958 = vsel %vm9650, %v9463, -inf
  %v9959 = vmax.f32 %v9957, %v9958
  %v9960 = vrot.slane %v9959, 4
  %v9961 = vmax.f32 %v9959, %v9960
  %v9962 = vrot.slane %v9961, 2
  %v9963 = vmax.f32 %v9961, %v9962
  %v9964 = vrot.slane %v9963, 1
  %v9965 = vmax.f32 %v9963, %v9964
  %v9966 = vsel %vm9650, %v9464, -inf
  %v9967 = vsel %vm9650, %v9465, -inf
  %v9968 = vmax.f32 %v9966, %v9967
  %v9969 = vrot.slane %v9968, 4
  %v9970 = vmax.f32 %v9968, %v9969
  %v9971 = vrot.slane %v9970, 2
  %v9972 = vmax.f32 %v9970, %v9971
  %v9973 = vrot.slane %v9972, 1
  %v9974 = vmax.f32 %v9972, %v9973
  %v9975 = vsel %vm9650, %v9466, -inf
  %v9976 = vsel %vm9650, %v9467, -inf
  %v9977 = vmax.f32 %v9975, %v9976
  %v9978 = vrot.slane %v9977, 4
  %v9979 = vmax.f32 %v9977, %v9978
  %v9980 = vrot.slane %v9979, 2
  %v9981 = vmax.f32 %v9979, %v9980
  %v9982 = vrot.slane %v9981, 1
  %v9983 = vmax.f32 %v9981, %v9982
  %v9984 = vsel %vm9650, %v9468, -inf
  %v9985 = vsel %vm9650, %v9469, -inf
  %v9986 = vmax.f32 %v9984, %v9985
  %v9987 = vrot.slane %v9986, 4
  %v9988 = vmax.f32 %v9986, %v9987
  %v9989 = vrot.slane %v9988, 2
  %v9990 = vmax.f32 %v9988, %v9989
  %v9991 = vrot.slane %v9990, 1
  %v9992 = vmax.f32 %v9990, %v9991
  %v9993 = vsel %vm9650, %v9470, -inf
  %v9994 = vsel %vm9650, %v9471, -inf
  %v9995 = vmax.f32 %v9993, %v9994
  %v9996 = vrot.slane %v9995, 4
  %v9997 = vmax.f32 %v9995, %v9996
  %v9998 = vrot.slane %v9997, 2
  %v9999 = vmax.f32 %v9997, %v9998
  %v10000 = vrot.slane %v9999, 1
  %v10001 = vmax.f32 %v9999, %v10000
  %v10002 = vsel %vm9650, %v9472, -inf
  %v10003 = vsel %vm9650, %v9473, -inf
  %v10004 = vmax.f32 %v10002, %v10003
  %v10005 = vrot.slane %v10004, 4
  %v10006 = vmax.f32 %v10004, %v10005
  %v10007 = vrot.slane %v10006, 2
  %v10008 = vmax.f32 %v10006, %v10007
  %v10009 = vrot.slane %v10008, 1
  %v10010 = vmax.f32 %v10008, %v10009
  %v10011 = vsel %vm9650, %v9474, -inf
  %v10012 = vsel %vm9650, %v9475, -inf
  %v10013 = vmax.f32 %v10011, %v10012
  %v10014 = vrot.slane %v10013, 4
  %v10015 = vmax.f32 %v10013, %v10014
  %v10016 = vrot.slane %v10015, 2
  %v10017 = vmax.f32 %v10015, %v10016
  %v10018 = vrot.slane %v10017, 1
  %v10019 = vmax.f32 %v10017, %v10018
  %v10020 = vsel %vm9650, %v9476, -inf
  %v10021 = vsel %vm9650, %v9477, -inf
  %v10022 = vmax.f32 %v10020, %v10021
  %v10023 = vrot.slane %v10022, 4
  %v10024 = vmax.f32 %v10022, %v10023
  %v10025 = vrot.slane %v10024, 2
  %v10026 = vmax.f32 %v10024, %v10025
  %v10027 = vrot.slane %v10026, 1
  %v10028 = vmax.f32 %v10026, %v10027
  %v10029 = vsel %vm9650, %v9478, -inf
  %v10030 = vsel %vm9650, %v9479, -inf
  %v10031 = vmax.f32 %v10029, %v10030
  %v10032 = vrot.slane %v10031, 4
  %v10033 = vmax.f32 %v10031, %v10032
  %v10034 = vrot.slane %v10033, 2
  %v10035 = vmax.f32 %v10033, %v10034
  %v10036 = vrot.slane %v10035, 1
  %v10037 = vmax.f32 %v10035, %v10036
  %v10038 = vsel %vm9650, %v9480, -inf
  %v10039 = vsel %vm9650, %v9481, -inf
  %v10040 = vmax.f32 %v10038, %v10039
  %v10041 = vrot.slane %v10040, 4
  %v10042 = vmax.f32 %v10040, %v10041
  %v10043 = vrot.slane %v10042, 2
  %v10044 = vmax.f32 %v10042, %v10043
  %v10045 = vrot.slane %v10044, 1
  %v10046 = vmax.f32 %v10044, %v10045
  %v10047 = vsel %vm9650, %v9482, -inf
  %v10048 = vsel %vm9650, %v9483, -inf
  %v10049 = vmax.f32 %v10047, %v10048
  %v10050 = vrot.slane %v10049, 4
  %v10051 = vmax.f32 %v10049, %v10050
  %v10052 = vrot.slane %v10051, 2
  %v10053 = vmax.f32 %v10051, %v10052
  %v10054 = vrot.slane %v10053, 1
  %v10055 = vmax.f32 %v10053, %v10054
  %v10056 = vsel %vm9650, %v9484, -inf
  %v10057 = vsel %vm9650, %v9485, -inf
  %v10058 = vmax.f32 %v10056, %v10057
  %v10059 = vrot.slane %v10058, 4
  %v10060 = vmax.f32 %v10058, %v10059
  %v10061 = vrot.slane %v10060, 2
  %v10062 = vmax.f32 %v10060, %v10061
  %v10063 = vrot.slane %v10062, 1
  %v10064 = vmax.f32 %v10062, %v10063
  %v10065 = vsel %vm9650, %v9486, -inf
  %v10066 = vsel %vm9650, %v9487, -inf
  %v10067 = vmax.f32 %v10065, %v10066
  %v10068 = vrot.slane %v10067, 4
  %v10069 = vmax.f32 %v10067, %v10068
  %v10070 = vrot.slane %v10069, 2
  %v10071 = vmax.f32 %v10069, %v10070
  %v10072 = vrot.slane %v10071, 1
  %v10073 = vmax.f32 %v10071, %v10072
  %v10074 = vsel %vm9650, %v9488, -inf
  %v10075 = vsel %vm9650, %v9489, -inf
  %v10076 = vmax.f32 %v10074, %v10075
  %v10077 = vrot.slane %v10076, 4
  %v10078 = vmax.f32 %v10076, %v10077
  %v10079 = vrot.slane %v10078, 2
  %v10080 = vmax.f32 %v10078, %v10079
  %v10081 = vrot.slane %v10080, 1
  %v10082 = vmax.f32 %v10080, %v10081
  %v10083 = vsel %vm9650, %v9490, -inf
  %v10084 = vsel %vm9650, %v9491, -inf
  %v10085 = vmax.f32 %v10083, %v10084
  %v10086 = vrot.slane %v10085, 4
  %v10087 = vmax.f32 %v10085, %v10086
  %v10088 = vrot.slane %v10087, 2
  %v10089 = vmax.f32 %v10087, %v10088
  %v10090 = vrot.slane %v10089, 1
  %v10091 = vmax.f32 %v10089, %v10090
  %v10092 = vsel %vm9650, %v9492, -inf
  %v10093 = vsel %vm9650, %v9493, -inf
  %v10094 = vmax.f32 %v10092, %v10093
  %v10095 = vrot.slane %v10094, 4
  %v10096 = vmax.f32 %v10094, %v10095
  %v10097 = vrot.slane %v10096, 2
  %v10098 = vmax.f32 %v10096, %v10097
  %v10099 = vrot.slane %v10098, 1
  %v10100 = vmax.f32 %v10098, %v10099
  %v10101 = vsel %vm9650, %v9494, -inf
  %v10102 = vsel %vm9650, %v9495, -inf
  %v10103 = vmax.f32 %v10101, %v10102
  %v10104 = vrot.slane %v10103, 4
  %v10105 = vmax.f32 %v10103, %v10104
  %v10106 = vrot.slane %v10105, 2
  %v10107 = vmax.f32 %v10105, %v10106
  %v10108 = vrot.slane %v10107, 1
  %v10109 = vmax.f32 %v10107, %v10108
  %v10110 = vsel %vm9650, %v9496, -inf
  %v10111 = vsel %vm9650, %v9497, -inf
  %v10112 = vmax.f32 %v10110, %v10111
  %v10113 = vrot.slane %v10112, 4
  %v10114 = vmax.f32 %v10112, %v10113
  %v10115 = vrot.slane %v10114, 2
  %v10116 = vmax.f32 %v10114, %v10115
  %v10117 = vrot.slane %v10116, 1
  %v10118 = vmax.f32 %v10116, %v10117
  %v10119 = vsel %vm9650, %v9498, -inf
  %v10120 = vsel %vm9650, %v9499, -inf
  %v10121 = vmax.f32 %v10119, %v10120
  %v10122 = vrot.slane %v10121, 4
  %v10123 = vmax.f32 %v10121, %v10122
  %v10124 = vrot.slane %v10123, 2
  %v10125 = vmax.f32 %v10123, %v10124
  %v10126 = vrot.slane %v10125, 1
  %v10127 = vmax.f32 %v10125, %v10126
  %v10128 = vsel %vm9650, %v9500, -inf
  %v10129 = vsel %vm9650, %v9501, -inf
  %v10130 = vmax.f32 %v10128, %v10129
  %v10131 = vrot.slane %v10130, 4
  %v10132 = vmax.f32 %v10130, %v10131
  %v10133 = vrot.slane %v10132, 2
  %v10134 = vmax.f32 %v10132, %v10133
  %v10135 = vrot.slane %v10134, 1
  %v10136 = vmax.f32 %v10134, %v10135
  %v10137 = vsel %vm9650, %v9502, -inf
  %v10138 = vsel %vm9650, %v9503, -inf
  %v10139 = vmax.f32 %v10137, %v10138
  %v10140 = vrot.slane %v10139, 4
  %v10141 = vmax.f32 %v10139, %v10140
  %v10142 = vrot.slane %v10141, 2
  %v10143 = vmax.f32 %v10141, %v10142
  %v10144 = vrot.slane %v10143, 1
  %v10145 = vmax.f32 %v10143, %v10144
  %v10146 = vsel %vm9650, %v9504, -inf
  %v10147 = vsel %vm9650, %v9505, -inf
  %v10148 = vmax.f32 %v10146, %v10147
  %v10149 = vrot.slane %v10148, 4
  %v10150 = vmax.f32 %v10148, %v10149
  %v10151 = vrot.slane %v10150, 2
  %v10152 = vmax.f32 %v10150, %v10151
  %v10153 = vrot.slane %v10152, 1
  %v10154 = vmax.f32 %v10152, %v10153
  %v10155 = vsel %vm9650, %v9506, -inf
  %v10156 = vsel %vm9650, %v9507, -inf
  %v10157 = vmax.f32 %v10155, %v10156
  %v10158 = vrot.slane %v10157, 4
  %v10159 = vmax.f32 %v10157, %v10158
  %v10160 = vrot.slane %v10159, 2
  %v10161 = vmax.f32 %v10159, %v10160
  %v10162 = vrot.slane %v10161, 1
  %v10163 = vmax.f32 %v10161, %v10162
  %v10164 = vsel %vm9650, %v9508, -inf
  %v10165 = vsel %vm9650, %v9509, -inf
  %v10166 = vmax.f32 %v10164, %v10165
  %v10167 = vrot.slane %v10166, 4
  %v10168 = vmax.f32 %v10166, %v10167
  %v10169 = vrot.slane %v10168, 2
  %v10170 = vmax.f32 %v10168, %v10169
  %v10171 = vrot.slane %v10170, 1
  %v10172 = vmax.f32 %v10170, %v10171
  %v10173 = vsel %vm9650, %v9510, -inf
  %v10174 = vsel %vm9650, %v9511, -inf
  %v10175 = vmax.f32 %v10173, %v10174
  %v10176 = vrot.slane %v10175, 4
  %v10177 = vmax.f32 %v10175, %v10176
  %v10178 = vrot.slane %v10177, 2
  %v10179 = vmax.f32 %v10177, %v10178
  %v10180 = vrot.slane %v10179, 1
  %v10181 = vmax.f32 %v10179, %v10180
  %v10182 = vsel %vm9650, %v9512, -inf
  %v10183 = vsel %vm9650, %v9513, -inf
  %v10184 = vmax.f32 %v10182, %v10183
  %v10185 = vrot.slane %v10184, 4
  %v10186 = vmax.f32 %v10184, %v10185
  %v10187 = vrot.slane %v10186, 2
  %v10188 = vmax.f32 %v10186, %v10187
  %v10189 = vrot.slane %v10188, 1
  %v10190 = vmax.f32 %v10188, %v10189
  %v10191 = vsel %vm9650, %v9514, -inf
  %v10192 = vsel %vm9650, %v9515, -inf
  %v10193 = vmax.f32 %v10191, %v10192
  %v10194 = vrot.slane %v10193, 4
  %v10195 = vmax.f32 %v10193, %v10194
  %v10196 = vrot.slane %v10195, 2
  %v10197 = vmax.f32 %v10195, %v10196
  %v10198 = vrot.slane %v10197, 1
  %v10199 = vmax.f32 %v10197, %v10198
  %v10200 = vsel %vm9650, %v9516, -inf
  %v10201 = vsel %vm9650, %v9517, -inf
  %v10202 = vmax.f32 %v10200, %v10201
  %v10203 = vrot.slane %v10202, 4
  %v10204 = vmax.f32 %v10202, %v10203
  %v10205 = vrot.slane %v10204, 2
  %v10206 = vmax.f32 %v10204, %v10205
  %v10207 = vrot.slane %v10206, 1
  %v10208 = vmax.f32 %v10206, %v10207
  %v10209 = vsel %vm9650, %v9518, -inf
  %v10210 = vsel %vm9650, %v9519, -inf
  %v10211 = vmax.f32 %v10209, %v10210
  %v10212 = vrot.slane %v10211, 4
  %v10213 = vmax.f32 %v10211, %v10212
  %v10214 = vrot.slane %v10213, 2
  %v10215 = vmax.f32 %v10213, %v10214
  %v10216 = vrot.slane %v10215, 1
  %v10217 = vmax.f32 %v10215, %v10216
  %v10218 = vsel %vm9650, %v9520, -inf
  %v10219 = vsel %vm9650, %v9521, -inf
  %v10220 = vmax.f32 %v10218, %v10219
  %v10221 = vrot.slane %v10220, 4
  %v10222 = vmax.f32 %v10220, %v10221
  %v10223 = vrot.slane %v10222, 2
  %v10224 = vmax.f32 %v10222, %v10223
  %v10225 = vrot.slane %v10224, 1
  %v10226 = vmax.f32 %v10224, %v10225
  %v10227 = vsel %vm9650, %v9522, -inf
  %v10228 = vsel %vm9650, %v9523, -inf
  %v10229 = vmax.f32 %v10227, %v10228
  %v10230 = vrot.slane %v10229, 4
  %v10231 = vmax.f32 %v10229, %v10230
  %v10232 = vrot.slane %v10231, 2
  %v10233 = vmax.f32 %v10231, %v10232
  %v10234 = vrot.slane %v10233, 1
  %v10235 = vmax.f32 %v10233, %v10234
  %v10236 = vsel %vm9650, %v9524, -inf
  %v10237 = vsel %vm9650, %v9525, -inf
  %v10238 = vmax.f32 %v10236, %v10237
  %v10239 = vrot.slane %v10238, 4
  %v10240 = vmax.f32 %v10238, %v10239
  %v10241 = vrot.slane %v10240, 2
  %v10242 = vmax.f32 %v10240, %v10241
  %v10243 = vrot.slane %v10242, 1
  %v10244 = vmax.f32 %v10242, %v10243
  %v10245 = vsel %vm9650, %v9526, -inf
  %v10246 = vsel %vm9650, %v9527, -inf
  %v10247 = vmax.f32 %v10245, %v10246
  %v10248 = vrot.slane %v10247, 4
  %v10249 = vmax.f32 %v10247, %v10248
  %v10250 = vrot.slane %v10249, 2
  %v10251 = vmax.f32 %v10249, %v10250
  %v10252 = vrot.slane %v10251, 1
  %v10253 = vmax.f32 %v10251, %v10252
  %v10254 = vsel %vm9650, %v9528, -inf
  %v10255 = vsel %vm9650, %v9529, -inf
  %v10256 = vmax.f32 %v10254, %v10255
  %v10257 = vrot.slane %v10256, 4
  %v10258 = vmax.f32 %v10256, %v10257
  %v10259 = vrot.slane %v10258, 2
  %v10260 = vmax.f32 %v10258, %v10259
  %v10261 = vrot.slane %v10260, 1
  %v10262 = vmax.f32 %v10260, %v10261
  %v10263 = vsel %vm9650, %v9530, -inf
  %v10264 = vsel %vm9650, %v9531, -inf
  %v10265 = vmax.f32 %v10263, %v10264
  %v10266 = vrot.slane %v10265, 4
  %v10267 = vmax.f32 %v10265, %v10266
  %v10268 = vrot.slane %v10267, 2
  %v10269 = vmax.f32 %v10267, %v10268
  %v10270 = vrot.slane %v10269, 1
  %v10271 = vmax.f32 %v10269, %v10270
  %v10272 = vsel %vm9650, %v9532, -inf
  %v10273 = vsel %vm9650, %v9533, -inf
  %v10274 = vmax.f32 %v10272, %v10273
  %v10275 = vrot.slane %v10274, 4
  %v10276 = vmax.f32 %v10274, %v10275
  %v10277 = vrot.slane %v10276, 2
  %v10278 = vmax.f32 %v10276, %v10277
  %v10279 = vrot.slane %v10278, 1
  %v10280 = vmax.f32 %v10278, %v10279
  %v10281 = vsel %vm9650, %v9534, -inf
  %v10282 = vsel %vm9650, %v9535, -inf
  %v10283 = vmax.f32 %v10281, %v10282
  %v10284 = vrot.slane %v10283, 4
  %v10285 = vmax.f32 %v10283, %v10284
  %v10286 = vrot.slane %v10285, 2
  %v10287 = vmax.f32 %v10285, %v10286
  %v10288 = vrot.slane %v10287, 1
  %v10289 = vmax.f32 %v10287, %v10288
  %v10290 = vsel %vm9650, %v9536, -inf
  %v10291 = vsel %vm9650, %v9537, -inf
  %v10292 = vmax.f32 %v10290, %v10291
  %v10293 = vrot.slane %v10292, 4
  %v10294 = vmax.f32 %v10292, %v10293
  %v10295 = vrot.slane %v10294, 2
  %v10296 = vmax.f32 %v10294, %v10295
  %v10297 = vrot.slane %v10296, 1
  %v10298 = vmax.f32 %v10296, %v10297
  %v10299 = vsel %vm9650, %v9538, -inf
  %v10300 = vsel %vm9650, %v9539, -inf
  %v10301 = vmax.f32 %v10299, %v10300
  %v10302 = vrot.slane %v10301, 4
  %v10303 = vmax.f32 %v10301, %v10302
  %v10304 = vrot.slane %v10303, 2
  %v10305 = vmax.f32 %v10303, %v10304
  %v10306 = vrot.slane %v10305, 1
  %v10307 = vmax.f32 %v10305, %v10306
  %v10308 = vsel %vm9650, %v9540, -inf
  %v10309 = vsel %vm9650, %v9541, -inf
  %v10310 = vmax.f32 %v10308, %v10309
  %v10311 = vrot.slane %v10310, 4
  %v10312 = vmax.f32 %v10310, %v10311
  %v10313 = vrot.slane %v10312, 2
  %v10314 = vmax.f32 %v10312, %v10313
  %v10315 = vrot.slane %v10314, 1
  %v10316 = vmax.f32 %v10314, %v10315
  %v10317 = vsel %vm9650, %v9542, -inf
  %v10318 = vsel %vm9650, %v9543, -inf
  %v10319 = vmax.f32 %v10317, %v10318
  %v10320 = vrot.slane %v10319, 4
  %v10321 = vmax.f32 %v10319, %v10320
  %v10322 = vrot.slane %v10321, 2
  %v10323 = vmax.f32 %v10321, %v10322
  %v10324 = vrot.slane %v10323, 1
  %v10325 = vmax.f32 %v10323, %v10324
  %v10326 = vsel %vm9650, %v9544, -inf
  %v10327 = vsel %vm9650, %v9545, -inf
  %v10328 = vmax.f32 %v10326, %v10327
  %v10329 = vrot.slane %v10328, 4
  %v10330 = vmax.f32 %v10328, %v10329
  %v10331 = vrot.slane %v10330, 2
  %v10332 = vmax.f32 %v10330, %v10331
  %v10333 = vrot.slane %v10332, 1
  %v10334 = vmax.f32 %v10332, %v10333
  %v10335 = vsel %vm9650, %v9546, -inf
  %v10336 = vsel %vm9650, %v9547, -inf
  %v10337 = vmax.f32 %v10335, %v10336
  %v10338 = vrot.slane %v10337, 4
  %v10339 = vmax.f32 %v10337, %v10338
  %v10340 = vrot.slane %v10339, 2
  %v10341 = vmax.f32 %v10339, %v10340
  %v10342 = vrot.slane %v10341, 1
  %v10343 = vmax.f32 %v10341, %v10342
  %v10344 = vsel %vm9650, %v9548, -inf
  %v10345 = vsel %vm9650, %v9549, -inf
  %v10346 = vmax.f32 %v10344, %v10345
  %v10347 = vrot.slane %v10346, 4
  %v10348 = vmax.f32 %v10346, %v10347
  %v10349 = vrot.slane %v10348, 2
  %v10350 = vmax.f32 %v10348, %v10349
  %v10351 = vrot.slane %v10350, 1
  %v10352 = vmax.f32 %v10350, %v10351
  %v10353 = vsel %vm9650, %v9550, -inf
  %v10354 = vsel %vm9650, %v9551, -inf
  %v10355 = vmax.f32 %v10353, %v10354
  %v10356 = vrot.slane %v10355, 4
  %v10357 = vmax.f32 %v10355, %v10356
  %v10358 = vrot.slane %v10357, 2
  %v10359 = vmax.f32 %v10357, %v10358
  %v10360 = vrot.slane %v10359, 1
  %v10361 = vmax.f32 %v10359, %v10360
  %v10362 = vsel %vm9650, %v9552, -inf
  %v10363 = vsel %vm9650, %v9553, -inf
  %v10364 = vmax.f32 %v10362, %v10363
  %v10365 = vrot.slane %v10364, 4
  %v10366 = vmax.f32 %v10364, %v10365
  %v10367 = vrot.slane %v10366, 2
  %v10368 = vmax.f32 %v10366, %v10367
  %v10369 = vrot.slane %v10368, 1
  %v10370 = vmax.f32 %v10368, %v10369
  %v10371 = vsel %vm9650, %v9554, -inf
  %v10372 = vsel %vm9650, %v9555, -inf
  %v10373 = vmax.f32 %v10371, %v10372
  %v10374 = vrot.slane %v10373, 4
  %v10375 = vmax.f32 %v10373, %v10374
  %v10376 = vrot.slane %v10375, 2
  %v10377 = vmax.f32 %v10375, %v10376
  %v10378 = vrot.slane %v10377, 1
  %v10379 = vmax.f32 %v10377, %v10378
  %v10380 = vsel %vm9650, %v9556, -inf
  %v10381 = vsel %vm9650, %v9557, -inf
  %v10382 = vmax.f32 %v10380, %v10381
  %v10383 = vrot.slane %v10382, 4
  %v10384 = vmax.f32 %v10382, %v10383
  %v10385 = vrot.slane %v10384, 2
  %v10386 = vmax.f32 %v10384, %v10385
  %v10387 = vrot.slane %v10386, 1
  %v10388 = vmax.f32 %v10386, %v10387
  %v10389 = vsel %vm9650, %v9558, -inf
  %v10390 = vsel %vm9650, %v9559, -inf
  %v10391 = vmax.f32 %v10389, %v10390
  %v10392 = vrot.slane %v10391, 4
  %v10393 = vmax.f32 %v10391, %v10392
  %v10394 = vrot.slane %v10393, 2
  %v10395 = vmax.f32 %v10393, %v10394
  %v10396 = vrot.slane %v10395, 1
  %v10397 = vmax.f32 %v10395, %v10396
  %v10398 = vsel %vm9650, %v9560, -inf
  %v10399 = vsel %vm9650, %v9561, -inf
  %v10400 = vmax.f32 %v10398, %v10399
  %v10401 = vrot.slane %v10400, 4
  %v10402 = vmax.f32 %v10400, %v10401
  %v10403 = vrot.slane %v10402, 2
  %v10404 = vmax.f32 %v10402, %v10403
  %v10405 = vrot.slane %v10404, 1
  %v10406 = vmax.f32 %v10404, %v10405
  %v10407 = vsel %vm9650, %v9562, -inf
  %v10408 = vsel %vm9650, %v9563, -inf
  %v10409 = vmax.f32 %v10407, %v10408
  %v10410 = vrot.slane %v10409, 4
  %v10411 = vmax.f32 %v10409, %v10410
  %v10412 = vrot.slane %v10411, 2
  %v10413 = vmax.f32 %v10411, %v10412
  %v10414 = vrot.slane %v10413, 1
  %v10415 = vmax.f32 %v10413, %v10414
  %v10416 = vsel %vm9650, %v9564, -inf
  %v10417 = vsel %vm9650, %v9565, -inf
  %v10418 = vmax.f32 %v10416, %v10417
  %v10419 = vrot.slane %v10418, 4
  %v10420 = vmax.f32 %v10418, %v10419
  %v10421 = vrot.slane %v10420, 2
  %v10422 = vmax.f32 %v10420, %v10421
  %v10423 = vrot.slane %v10422, 1
  %v10424 = vmax.f32 %v10422, %v10423
  %v10425 = vsel %vm9650, %v9566, -inf
  %v10426 = vsel %vm9650, %v9567, -inf
  %v10427 = vmax.f32 %v10425, %v10426
  %v10428 = vrot.slane %v10427, 4
  %v10429 = vmax.f32 %v10427, %v10428
  %v10430 = vrot.slane %v10429, 2
  %v10431 = vmax.f32 %v10429, %v10430
  %v10432 = vrot.slane %v10431, 1
  %v10433 = vmax.f32 %v10431, %v10432
  %v10434 = vsel %vm9650, %v9568, -inf
  %v10435 = vsel %vm9650, %v9569, -inf
  %v10436 = vmax.f32 %v10434, %v10435
  %v10437 = vrot.slane %v10436, 4
  %v10438 = vmax.f32 %v10436, %v10437
  %v10439 = vrot.slane %v10438, 2
  %v10440 = vmax.f32 %v10438, %v10439
  %v10441 = vrot.slane %v10440, 1
  %v10442 = vmax.f32 %v10440, %v10441
  %v10443 = vsel %vm9650, %v9570, -inf
  %v10444 = vsel %vm9650, %v9571, -inf
  %v10445 = vmax.f32 %v10443, %v10444
  %v10446 = vrot.slane %v10445, 4
  %v10447 = vmax.f32 %v10445, %v10446
  %v10448 = vrot.slane %v10447, 2
  %v10449 = vmax.f32 %v10447, %v10448
  %v10450 = vrot.slane %v10449, 1
  %v10451 = vmax.f32 %v10449, %v10450
  %v10452 = vsel %vm9650, %v9572, -inf
  %v10453 = vsel %vm9650, %v9573, -inf
  %v10454 = vmax.f32 %v10452, %v10453
  %v10455 = vrot.slane %v10454, 4
  %v10456 = vmax.f32 %v10454, %v10455
  %v10457 = vrot.slane %v10456, 2
  %v10458 = vmax.f32 %v10456, %v10457
  %v10459 = vrot.slane %v10458, 1
  %v10460 = vmax.f32 %v10458, %v10459
  %v10461 = vsel %vm9650, %v9574, -inf
  %v10462 = vsel %vm9650, %v9575, -inf
  %v10463 = vmax.f32 %v10461, %v10462
  %v10464 = vrot.slane %v10463, 4
  %v10465 = vmax.f32 %v10463, %v10464
  %v10466 = vrot.slane %v10465, 2
  %v10467 = vmax.f32 %v10465, %v10466
  %v10468 = vrot.slane %v10467, 1
  %v10469 = vmax.f32 %v10467, %v10468
  %v10470 = vsel %vm9650, %v9576, -inf
  %v10471 = vsel %vm9650, %v9577, -inf
  %v10472 = vmax.f32 %v10470, %v10471
  %v10473 = vrot.slane %v10472, 4
  %v10474 = vmax.f32 %v10472, %v10473
  %v10475 = vrot.slane %v10474, 2
  %v10476 = vmax.f32 %v10474, %v10475
  %v10477 = vrot.slane %v10476, 1
  %v10478 = vmax.f32 %v10476, %v10477
  %v10479 = vsel %vm9650, %v9578, -inf
  %v10480 = vsel %vm9650, %v9579, -inf
  %v10481 = vmax.f32 %v10479, %v10480
  %v10482 = vrot.slane %v10481, 4
  %v10483 = vmax.f32 %v10481, %v10482
  %v10484 = vrot.slane %v10483, 2
  %v10485 = vmax.f32 %v10483, %v10484
  %v10486 = vrot.slane %v10485, 1
  %v10487 = vmax.f32 %v10485, %v10486
  %v10488 = vsel %vm9650, %v9580, -inf
  %v10489 = vsel %vm9650, %v9581, -inf
  %v10490 = vmax.f32 %v10488, %v10489
  %v10491 = vrot.slane %v10490, 4
  %v10492 = vmax.f32 %v10490, %v10491
  %v10493 = vrot.slane %v10492, 2
  %v10494 = vmax.f32 %v10492, %v10493
  %v10495 = vrot.slane %v10494, 1
  %v10496 = vmax.f32 %v10494, %v10495
  %v10497 = vsel %vm9650, %v9582, -inf
  %v10498 = vsel %vm9650, %v9583, -inf
  %v10499 = vmax.f32 %v10497, %v10498
  %v10500 = vrot.slane %v10499, 4
  %v10501 = vmax.f32 %v10499, %v10500
  %v10502 = vrot.slane %v10501, 2
  %v10503 = vmax.f32 %v10501, %v10502
  %v10504 = vrot.slane %v10503, 1
  %v10505 = vmax.f32 %v10503, %v10504
  %v10506 = vsel %vm9650, %v9584, -inf
  %v10507 = vsel %vm9650, %v9585, -inf
  %v10508 = vmax.f32 %v10506, %v10507
  %v10509 = vrot.slane %v10508, 4
  %v10510 = vmax.f32 %v10508, %v10509
  %v10511 = vrot.slane %v10510, 2
  %v10512 = vmax.f32 %v10510, %v10511
  %v10513 = vrot.slane %v10512, 1
  %v10514 = vmax.f32 %v10512, %v10513
  %v10515 = vsel %vm9650, %v9586, -inf
  %v10516 = vsel %vm9650, %v9587, -inf
  %v10517 = vmax.f32 %v10515, %v10516
  %v10518 = vrot.slane %v10517, 4
  %v10519 = vmax.f32 %v10517, %v10518
  %v10520 = vrot.slane %v10519, 2
  %v10521 = vmax.f32 %v10519, %v10520
  %v10522 = vrot.slane %v10521, 1
  %v10523 = vmax.f32 %v10521, %v10522
  %v10524 = vsel %vm9650, %v9588, -inf
  %v10525 = vsel %vm9650, %v9589, -inf
  %v10526 = vmax.f32 %v10524, %v10525
  %v10527 = vrot.slane %v10526, 4
  %v10528 = vmax.f32 %v10526, %v10527
  %v10529 = vrot.slane %v10528, 2
  %v10530 = vmax.f32 %v10528, %v10529
  %v10531 = vrot.slane %v10530, 1
  %v10532 = vmax.f32 %v10530, %v10531
  %v10533 = vsel %vm9650, %v9590, -inf
  %v10534 = vsel %vm9650, %v9591, -inf
  %v10535 = vmax.f32 %v10533, %v10534
  %v10536 = vrot.slane %v10535, 4
  %v10537 = vmax.f32 %v10535, %v10536
  %v10538 = vrot.slane %v10537, 2
  %v10539 = vmax.f32 %v10537, %v10538
  %v10540 = vrot.slane %v10539, 1
  %v10541 = vmax.f32 %v10539, %v10540
  %v10542 = vsel %vm9650, %v9592, -inf
  %v10543 = vsel %vm9650, %v9593, -inf
  %v10544 = vmax.f32 %v10542, %v10543
  %v10545 = vrot.slane %v10544, 4
  %v10546 = vmax.f32 %v10544, %v10545
  %v10547 = vrot.slane %v10546, 2
  %v10548 = vmax.f32 %v10546, %v10547
  %v10549 = vrot.slane %v10548, 1
  %v10550 = vmax.f32 %v10548, %v10549
  %v10551 = vsel %vm9650, %v9594, -inf
  %v10552 = vsel %vm9650, %v9595, -inf
  %v10553 = vmax.f32 %v10551, %v10552
  %v10554 = vrot.slane %v10553, 4
  %v10555 = vmax.f32 %v10553, %v10554
  %v10556 = vrot.slane %v10555, 2
  %v10557 = vmax.f32 %v10555, %v10556
  %v10558 = vrot.slane %v10557, 1
  %v10559 = vmax.f32 %v10557, %v10558
  %v10560 = vsel %vm9650, %v9596, -inf
  %v10561 = vsel %vm9650, %v9597, -inf
  %v10562 = vmax.f32 %v10560, %v10561
  %v10563 = vrot.slane %v10562, 4
  %v10564 = vmax.f32 %v10562, %v10563
  %v10565 = vrot.slane %v10564, 2
  %v10566 = vmax.f32 %v10564, %v10565
  %v10567 = vrot.slane %v10566, 1
  %v10568 = vmax.f32 %v10566, %v10567
  %v10569 = vsel %vm9650, %v9598, -inf
  %v10570 = vsel %vm9650, %v9599, -inf
  %v10571 = vmax.f32 %v10569, %v10570
  %v10572 = vrot.slane %v10571, 4
  %v10573 = vmax.f32 %v10571, %v10572
  %v10574 = vrot.slane %v10573, 2
  %v10575 = vmax.f32 %v10573, %v10574
  %v10576 = vrot.slane %v10575, 1
  %v10577 = vmax.f32 %v10575, %v10576
  %v10578 = vsel %vm9650, %v9600, -inf
  %v10579 = vsel %vm9650, %v9601, -inf
  %v10580 = vmax.f32 %v10578, %v10579
  %v10581 = vrot.slane %v10580, 4
  %v10582 = vmax.f32 %v10580, %v10581
  %v10583 = vrot.slane %v10582, 2
  %v10584 = vmax.f32 %v10582, %v10583
  %v10585 = vrot.slane %v10584, 1
  %v10586 = vmax.f32 %v10584, %v10585
  %v10587 = vsel %vm9650, %v9602, -inf
  %v10588 = vsel %vm9650, %v9603, -inf
  %v10589 = vmax.f32 %v10587, %v10588
  %v10590 = vrot.slane %v10589, 4
  %v10591 = vmax.f32 %v10589, %v10590
  %v10592 = vrot.slane %v10591, 2
  %v10593 = vmax.f32 %v10591, %v10592
  %v10594 = vrot.slane %v10593, 1
  %v10595 = vmax.f32 %v10593, %v10594
  %v10596 = vsel %vm9650, %v9604, -inf
  %v10597 = vsel %vm9650, %v9605, -inf
  %v10598 = vmax.f32 %v10596, %v10597
  %v10599 = vrot.slane %v10598, 4
  %v10600 = vmax.f32 %v10598, %v10599
  %v10601 = vrot.slane %v10600, 2
  %v10602 = vmax.f32 %v10600, %v10601
  %v10603 = vrot.slane %v10602, 1
  %v10604 = vmax.f32 %v10602, %v10603
  %v10605 = vsel %vm9650, %v9606, -inf
  %v10606 = vsel %vm9650, %v9607, -inf
  %v10607 = vmax.f32 %v10605, %v10606
  %v10608 = vrot.slane %v10607, 4
  %v10609 = vmax.f32 %v10607, %v10608
  %v10610 = vrot.slane %v10609, 2
  %v10611 = vmax.f32 %v10609, %v10610
  %v10612 = vrot.slane %v10611, 1
  %v10613 = vmax.f32 %v10611, %v10612
  %v10614 = vsel %vm9650, %v9608, -inf
  %v10615 = vsel %vm9650, %v9609, -inf
  %v10616 = vmax.f32 %v10614, %v10615
  %v10617 = vrot.slane %v10616, 4
  %v10618 = vmax.f32 %v10616, %v10617
  %v10619 = vrot.slane %v10618, 2
  %v10620 = vmax.f32 %v10618, %v10619
  %v10621 = vrot.slane %v10620, 1
  %v10622 = vmax.f32 %v10620, %v10621
  %v10623 = vsel %vm9650, %v9610, -inf
  %v10624 = vsel %vm9650, %v9611, -inf
  %v10625 = vmax.f32 %v10623, %v10624
  %v10626 = vrot.slane %v10625, 4
  %v10627 = vmax.f32 %v10625, %v10626
  %v10628 = vrot.slane %v10627, 2
  %v10629 = vmax.f32 %v10627, %v10628
  %v10630 = vrot.slane %v10629, 1
  %v10631 = vmax.f32 %v10629, %v10630
  %v10632 = vsel %vm9650, %v9612, -inf
  %v10633 = vsel %vm9650, %v9613, -inf
  %v10634 = vmax.f32 %v10632, %v10633
  %v10635 = vrot.slane %v10634, 4
  %v10636 = vmax.f32 %v10634, %v10635
  %v10637 = vrot.slane %v10636, 2
  %v10638 = vmax.f32 %v10636, %v10637
  %v10639 = vrot.slane %v10638, 1
  %v10640 = vmax.f32 %v10638, %v10639
  %v10641 = vsel %vm9650, %v9614, -inf
  %v10642 = vsel %vm9650, %v9615, -inf
  %v10643 = vmax.f32 %v10641, %v10642
  %v10644 = vrot.slane %v10643, 4
  %v10645 = vmax.f32 %v10643, %v10644
  %v10646 = vrot.slane %v10645, 2
  %v10647 = vmax.f32 %v10645, %v10646
  %v10648 = vrot.slane %v10647, 1
  %v10649 = vmax.f32 %v10647, %v10648
  %v10650 = vsel %vm9650, %v9616, -inf
  %v10651 = vsel %vm9650, %v9617, -inf
  %v10652 = vmax.f32 %v10650, %v10651
  %v10653 = vrot.slane %v10652, 4
  %v10654 = vmax.f32 %v10652, %v10653
  %v10655 = vrot.slane %v10654, 2
  %v10656 = vmax.f32 %v10654, %v10655
  %v10657 = vrot.slane %v10656, 1
  %v10658 = vmax.f32 %v10656, %v10657
  %v10659 = vsel %vm9650, %v9618, -inf
  %v10660 = vsel %vm9650, %v9619, -inf
  %v10661 = vmax.f32 %v10659, %v10660
  %v10662 = vrot.slane %v10661, 4
  %v10663 = vmax.f32 %v10661, %v10662
  %v10664 = vrot.slane %v10663, 2
  %v10665 = vmax.f32 %v10663, %v10664
  %v10666 = vrot.slane %v10665, 1
  %v10667 = vmax.f32 %v10665, %v10666
  %v10668 = vsel %vm9650, %v9620, -inf
  %v10669 = vsel %vm9650, %v9621, -inf
  %v10670 = vmax.f32 %v10668, %v10669
  %v10671 = vrot.slane %v10670, 4
  %v10672 = vmax.f32 %v10670, %v10671
  %v10673 = vrot.slane %v10672, 2
  %v10674 = vmax.f32 %v10672, %v10673
  %v10675 = vrot.slane %v10674, 1
  %v10676 = vmax.f32 %v10674, %v10675
  %v10677 = vsel %vm9650, %v9622, -inf
  %v10678 = vsel %vm9650, %v9623, -inf
  %v10679 = vmax.f32 %v10677, %v10678
  %v10680 = vrot.slane %v10679, 4
  %v10681 = vmax.f32 %v10679, %v10680
  %v10682 = vrot.slane %v10681, 2
  %v10683 = vmax.f32 %v10681, %v10682
  %v10684 = vrot.slane %v10683, 1
  %v10685 = vmax.f32 %v10683, %v10684
  %v10686 = vsel %vm9650, %v9624, -inf
  %v10687 = vsel %vm9650, %v9625, -inf
  %v10688 = vmax.f32 %v10686, %v10687
  %v10689 = vrot.slane %v10688, 4
  %v10690 = vmax.f32 %v10688, %v10689
  %v10691 = vrot.slane %v10690, 2
  %v10692 = vmax.f32 %v10690, %v10691
  %v10693 = vrot.slane %v10692, 1
  %v10694 = vmax.f32 %v10692, %v10693
  %v10695 = vsel %vm9650, %v9626, -inf
  %v10696 = vsel %vm9650, %v9627, -inf
  %v10697 = vmax.f32 %v10695, %v10696
  %v10698 = vrot.slane %v10697, 4
  %v10699 = vmax.f32 %v10697, %v10698
  %v10700 = vrot.slane %v10699, 2
  %v10701 = vmax.f32 %v10699, %v10700
  %v10702 = vrot.slane %v10701, 1
  %v10703 = vmax.f32 %v10701, %v10702
  %v10704 = vsel %vm9650, %v9628, -inf
  %v10705 = vsel %vm9650, %v9629, -inf
  %v10706 = vmax.f32 %v10704, %v10705
  %v10707 = vrot.slane %v10706, 4
  %v10708 = vmax.f32 %v10706, %v10707
  %v10709 = vrot.slane %v10708, 2
  %v10710 = vmax.f32 %v10708, %v10709
  %v10711 = vrot.slane %v10710, 1
  %v10712 = vmax.f32 %v10710, %v10711
  %v10713 = vsel %vm9650, %v9630, -inf
  %v10714 = vsel %vm9650, %v9631, -inf
  %v10715 = vmax.f32 %v10713, %v10714
  %v10716 = vrot.slane %v10715, 4
  %v10717 = vmax.f32 %v10715, %v10716
  %v10718 = vrot.slane %v10717, 2
  %v10719 = vmax.f32 %v10717, %v10718
  %v10720 = vrot.slane %v10719, 1
  %v10721 = vmax.f32 %v10719, %v10720
  %v10722 = vsel %vm9650, %v9632, -inf
  %v10723 = vsel %vm9650, %v9633, -inf
  %v10724 = vmax.f32 %v10722, %v10723
  %v10725 = vrot.slane %v10724, 4
  %v10726 = vmax.f32 %v10724, %v10725
  %v10727 = vrot.slane %v10726, 2
  %v10728 = vmax.f32 %v10726, %v10727
  %v10729 = vrot.slane %v10728, 1
  %v10730 = vmax.f32 %v10728, %v10729
  %v10731 = vsel %vm9650, %v9634, -inf
  %v10732 = vsel %vm9650, %v9635, -inf
  %v10733 = vmax.f32 %v10731, %v10732
  %v10734 = vrot.slane %v10733, 4
  %v10735 = vmax.f32 %v10733, %v10734
  %v10736 = vrot.slane %v10735, 2
  %v10737 = vmax.f32 %v10735, %v10736
  %v10738 = vrot.slane %v10737, 1
  %v10739 = vmax.f32 %v10737, %v10738
  %v10740 = vsel %vm9650, %v9636, -inf
  %v10741 = vsel %vm9650, %v9637, -inf
  %v10742 = vmax.f32 %v10740, %v10741
  %v10743 = vrot.slane %v10742, 4
  %v10744 = vmax.f32 %v10742, %v10743
  %v10745 = vrot.slane %v10744, 2
  %v10746 = vmax.f32 %v10744, %v10745
  %v10747 = vrot.slane %v10746, 1
  %v10748 = vmax.f32 %v10746, %v10747
  %v10749 = vsel %vm9650, %v9638, -inf
  %v10750 = vsel %vm9650, %v9639, -inf
  %v10751 = vmax.f32 %v10749, %v10750
  %v10752 = vrot.slane %v10751, 4
  %v10753 = vmax.f32 %v10751, %v10752
  %v10754 = vrot.slane %v10753, 2
  %v10755 = vmax.f32 %v10753, %v10754
  %v10756 = vrot.slane %v10755, 1
  %v10757 = vmax.f32 %v10755, %v10756
  %v10758 = vsel %vm9650, %v9640, -inf
  %v10759 = vsel %vm9650, %v9641, -inf
  %v10760 = vmax.f32 %v10758, %v10759
  %v10761 = vrot.slane %v10760, 4
  %v10762 = vmax.f32 %v10760, %v10761
  %v10763 = vrot.slane %v10762, 2
  %v10764 = vmax.f32 %v10762, %v10763
  %v10765 = vrot.slane %v10764, 1
  %v10766 = vmax.f32 %v10764, %v10765
  %v10767 = vsel %vm9650, %v9642, -inf
  %v10768 = vsel %vm9650, %v9643, -inf
  %v10769 = vmax.f32 %v10767, %v10768
  %v10770 = vrot.slane %v10769, 4
  %v10771 = vmax.f32 %v10769, %v10770
  %v10772 = vrot.slane %v10771, 2
  %v10773 = vmax.f32 %v10771, %v10772
  %v10774 = vrot.slane %v10773, 1
  %v10775 = vmax.f32 %v10773, %v10774
  %v10776 = vsel %vm9650, %v9644, -inf
  %v10777 = vsel %vm9650, %v9645, -inf
  %v10778 = vmax.f32 %v10776, %v10777
  %v10779 = vrot.slane %v10778, 4
  %v10780 = vmax.f32 %v10778, %v10779
  %v10781 = vrot.slane %v10780, 2
  %v10782 = vmax.f32 %v10780, %v10781
  %v10783 = vrot.slane %v10782, 1
  %v10784 = vmax.f32 %v10782, %v10783
  %v10785 = vsel %vm9650, %v9646, -inf
  %v10786 = vsel %vm9650, %v9647, -inf
  %v10787 = vmax.f32 %v10785, %v10786
  %v10788 = vrot.slane %v10787, 4
  %v10789 = vmax.f32 %v10787, %v10788
  %v10790 = vrot.slane %v10789, 2
  %v10791 = vmax.f32 %v10789, %v10790
  %v10792 = vrot.slane %v10791, 1
  %v10793 = vmax.f32 %v10791, %v10792
  %v10794 = vsel %vm9650, %v9648, -inf
  %v10795 = vsel %vm9650, %v9649, -inf
  %v10796 = vmax.f32 %v10794, %v10795
  %v10797 = vrot.slane %v10796, 4
  %v10798 = vmax.f32 %v10796, %v10797
  %v10799 = vrot.slane %v10798, 2
  %v10800 = vmax.f32 %v10798, %v10799
  %v10801 = vrot.slane %v10800, 1
  %v10802 = vmax.f32 %v10800, %v10801
  %v10803 = vmax.f32 %v9659, 0.0
  %v10804 = vmax.f32 %v9668, 0.0
  %v10805 = vmax.f32 %v9677, 0.0
  %v10806 = vmax.f32 %v9686, 0.0
  %v10807 = vmax.f32 %v9695, 0.0
  %v10808 = vmax.f32 %v9704, 0.0
  %v10809 = vmax.f32 %v9713, 0.0
  %v10810 = vmax.f32 %v9722, 0.0
  %v10811 = vmax.f32 %v9731, 0.0
  %v10812 = vmax.f32 %v9740, 0.0
  %v10813 = vmax.f32 %v9749, 0.0
  %v10814 = vmax.f32 %v9758, 0.0
  %v10815 = vmax.f32 %v9767, 0.0
  %v10816 = vmax.f32 %v9776, 0.0
  %v10817 = vmax.f32 %v9785, 0.0
  %v10818 = vmax.f32 %v9794, 0.0
  %v10819 = vmax.f32 %v9803, 0.0
  %v10820 = vmax.f32 %v9812, 0.0
  %v10821 = vmax.f32 %v9821, 0.0
  %v10822 = vmax.f32 %v9830, 0.0
  %v10823 = vmax.f32 %v9839, 0.0
  %v10824 = vmax.f32 %v9848, 0.0
  %v10825 = vmax.f32 %v9857, 0.0
  %v10826 = vmax.f32 %v9866, 0.0
  %v10827 = vmax.f32 %v9875, 0.0
  %v10828 = vmax.f32 %v9884, 0.0
  %v10829 = vmax.f32 %v9893, 0.0
  %v10830 = vmax.f32 %v9902, 0.0
  %v10831 = vmax.f32 %v9911, 0.0
  %v10832 = vmax.f32 %v9920, 0.0
  %v10833 = vmax.f32 %v9929, 0.0
  %v10834 = vmax.f32 %v9938, 0.0
  %v10835 = vmax.f32 %v9947, 0.0
  %v10836 = vmax.f32 %v9956, 0.0
  %v10837 = vmax.f32 %v9965, 0.0
  %v10838 = vmax.f32 %v9974, 0.0
  %v10839 = vmax.f32 %v9983, 0.0
  %v10840 = vmax.f32 %v9992, 0.0
  %v10841 = vmax.f32 %v10001, 0.0
  %v10842 = vmax.f32 %v10010, 0.0
  %v10843 = vmax.f32 %v10019, 0.0
  %v10844 = vmax.f32 %v10028, 0.0
  %v10845 = vmax.f32 %v10037, 0.0
  %v10846 = vmax.f32 %v10046, 0.0
  %v10847 = vmax.f32 %v10055, 0.0
  %v10848 = vmax.f32 %v10064, 0.0
  %v10849 = vmax.f32 %v10073, 0.0
  %v10850 = vmax.f32 %v10082, 0.0
  %v10851 = vmax.f32 %v10091, 0.0
  %v10852 = vmax.f32 %v10100, 0.0
  %v10853 = vmax.f32 %v10109, 0.0
  %v10854 = vmax.f32 %v10118, 0.0
  %v10855 = vmax.f32 %v10127, 0.0
  %v10856 = vmax.f32 %v10136, 0.0
  %v10857 = vmax.f32 %v10145, 0.0
  %v10858 = vmax.f32 %v10154, 0.0
  %v10859 = vmax.f32 %v10163, 0.0
  %v10860 = vmax.f32 %v10172, 0.0
  %v10861 = vmax.f32 %v10181, 0.0
  %v10862 = vmax.f32 %v10190, 0.0
  %v10863 = vmax.f32 %v10199, 0.0
  %v10864 = vmax.f32 %v10208, 0.0
  %v10865 = vmax.f32 %v10217, 0.0
  %v10866 = vmax.f32 %v10226, 0.0
  %v10867 = vmax.f32 %v10235, 0.0
  %v10868 = vmax.f32 %v10244, 0.0
  %v10869 = vmax.f32 %v10253, 0.0
  %v10870 = vmax.f32 %v10262, 0.0
  %v10871 = vmax.f32 %v10271, 0.0
  %v10872 = vmax.f32 %v10280, 0.0
  %v10873 = vmax.f32 %v10289, 0.0
  %v10874 = vmax.f32 %v10298, 0.0
  %v10875 = vmax.f32 %v10307, 0.0
  %v10876 = vmax.f32 %v10316, 0.0
  %v10877 = vmax.f32 %v10325, 0.0
  %v10878 = vmax.f32 %v10334, 0.0
  %v10879 = vmax.f32 %v10343, 0.0
  %v10880 = vmax.f32 %v10352, 0.0
  %v10881 = vmax.f32 %v10361, 0.0
  %v10882 = vmax.f32 %v10370, 0.0
  %v10883 = vmax.f32 %v10379, 0.0
  %v10884 = vmax.f32 %v10388, 0.0
  %v10885 = vmax.f32 %v10397, 0.0
  %v10886 = vmax.f32 %v10406, 0.0
  %v10887 = vmax.f32 %v10415, 0.0
  %v10888 = vmax.f32 %v10424, 0.0
  %v10889 = vmax.f32 %v10433, 0.0
  %v10890 = vmax.f32 %v10442, 0.0
  %v10891 = vmax.f32 %v10451, 0.0
  %v10892 = vmax.f32 %v10460, 0.0
  %v10893 = vmax.f32 %v10469, 0.0
  %v10894 = vmax.f32 %v10478, 0.0
  %v10895 = vmax.f32 %v10487, 0.0
  %v10896 = vmax.f32 %v10496, 0.0
  %v10897 = vmax.f32 %v10505, 0.0
  %v10898 = vmax.f32 %v10514, 0.0
  %v10899 = vmax.f32 %v10523, 0.0
  %v10900 = vmax.f32 %v10532, 0.0
  %v10901 = vmax.f32 %v10541, 0.0
  %v10902 = vmax.f32 %v10550, 0.0
  %v10903 = vmax.f32 %v10559, 0.0
  %v10904 = vmax.f32 %v10568, 0.0
  %v10905 = vmax.f32 %v10577, 0.0
  %v10906 = vmax.f32 %v10586, 0.0
  %v10907 = vmax.f32 %v10595, 0.0
  %v10908 = vmax.f32 %v10604, 0.0
  %v10909 = vmax.f32 %v10613, 0.0
  %v10910 = vmax.f32 %v10622, 0.0
  %v10911 = vmax.f32 %v10631, 0.0
  %v10912 = vmax.f32 %v10640, 0.0
  %v10913 = vmax.f32 %v10649, 0.0
  %v10914 = vmax.f32 %v10658, 0.0
  %v10915 = vmax.f32 %v10667, 0.0
  %v10916 = vmax.f32 %v10676, 0.0
  %v10917 = vmax.f32 %v10685, 0.0
  %v10918 = vmax.f32 %v10694, 0.0
  %v10919 = vmax.f32 %v10703, 0.0
  %v10920 = vmax.f32 %v10712, 0.0
  %v10921 = vmax.f32 %v10721, 0.0
  %v10922 = vmax.f32 %v10730, 0.0
  %v10923 = vmax.f32 %v10739, 0.0
  %v10924 = vmax.f32 %v10748, 0.0
  %v10925 = vmax.f32 %v10757, 0.0
  %v10926 = vmax.f32 %v10766, 0.0
  %v10927 = vmax.f32 %v10775, 0.0
  %v10928 = vmax.f32 %v10784, 0.0
  %v10929 = vmax.f32 %v10793, 0.0
  %v10930 = vmax.f32 %v10802, 0.0
  %vm11059 = vcmask 1041409
  %v11060 = vsel %vm11059, %v10804, %v10803
  %vm11061 = vcmask 1042434
  %v11062 = vsel %vm11061, %v10805, %v11060
  %vm11063 = vcmask 1043459
  %v11064 = vsel %vm11063, %v10806, %v11062
  %vm11065 = vcmask 1044484
  %v11066 = vsel %vm11065, %v10807, %v11064
  %vm11067 = vcmask 1045509
  %v11068 = vsel %vm11067, %v10808, %v11066
  %vm11069 = vcmask 1046534
  %v11070 = vsel %vm11069, %v10809, %v11068
  %vm11071 = vcmask 1047559
  %v11072 = vsel %vm11071, %v10810, %v11070
  %v11073 = vsel %vm11059, %v10812, %v10811
  %v11074 = vsel %vm11061, %v10813, %v11073
  %v11075 = vsel %vm11063, %v10814, %v11074
  %v11076 = vsel %vm11065, %v10815, %v11075
  %v11077 = vsel %vm11067, %v10816, %v11076
  %v11078 = vsel %vm11069, %v10817, %v11077
  %v11079 = vsel %vm11071, %v10818, %v11078
  %v11080 = vsel %vm11059, %v10820, %v10819
  %v11081 = vsel %vm11061, %v10821, %v11080
  %v11082 = vsel %vm11063, %v10822, %v11081
  %v11083 = vsel %vm11065, %v10823, %v11082
  %v11084 = vsel %vm11067, %v10824, %v11083
  %v11085 = vsel %vm11069, %v10825, %v11084
  %v11086 = vsel %vm11071, %v10826, %v11085
  %v11087 = vsel %vm11059, %v10828, %v10827
  %v11088 = vsel %vm11061, %v10829, %v11087
  %v11089 = vsel %vm11063, %v10830, %v11088
  %v11090 = vsel %vm11065, %v10831, %v11089
  %v11091 = vsel %vm11067, %v10832, %v11090
  %v11092 = vsel %vm11069, %v10833, %v11091
  %v11093 = vsel %vm11071, %v10834, %v11092
  %v11094 = vsel %vm11059, %v10836, %v10835
  %v11095 = vsel %vm11061, %v10837, %v11094
  %v11096 = vsel %vm11063, %v10838, %v11095
  %v11097 = vsel %vm11065, %v10839, %v11096
  %v11098 = vsel %vm11067, %v10840, %v11097
  %v11099 = vsel %vm11069, %v10841, %v11098
  %v11100 = vsel %vm11071, %v10842, %v11099
  %v11101 = vsel %vm11059, %v10844, %v10843
  %v11102 = vsel %vm11061, %v10845, %v11101
  %v11103 = vsel %vm11063, %v10846, %v11102
  %v11104 = vsel %vm11065, %v10847, %v11103
  %v11105 = vsel %vm11067, %v10848, %v11104
  %v11106 = vsel %vm11069, %v10849, %v11105
  %v11107 = vsel %vm11071, %v10850, %v11106
  %v11108 = vsel %vm11059, %v10852, %v10851
  %v11109 = vsel %vm11061, %v10853, %v11108
  %v11110 = vsel %vm11063, %v10854, %v11109
  %v11111 = vsel %vm11065, %v10855, %v11110
  %v11112 = vsel %vm11067, %v10856, %v11111
  %v11113 = vsel %vm11069, %v10857, %v11112
  %v11114 = vsel %vm11071, %v10858, %v11113
  %v11115 = vsel %vm11059, %v10860, %v10859
  %v11116 = vsel %vm11061, %v10861, %v11115
  %v11117 = vsel %vm11063, %v10862, %v11116
  %v11118 = vsel %vm11065, %v10863, %v11117
  %v11119 = vsel %vm11067, %v10864, %v11118
  %v11120 = vsel %vm11069, %v10865, %v11119
  %v11121 = vsel %vm11071, %v10866, %v11120
  %v11122 = vsel %vm11059, %v10868, %v10867
  %v11123 = vsel %vm11061, %v10869, %v11122
  %v11124 = vsel %vm11063, %v10870, %v11123
  %v11125 = vsel %vm11065, %v10871, %v11124
  %v11126 = vsel %vm11067, %v10872, %v11125
  %v11127 = vsel %vm11069, %v10873, %v11126
  %v11128 = vsel %vm11071, %v10874, %v11127
  %v11129 = vsel %vm11059, %v10876, %v10875
  %v11130 = vsel %vm11061, %v10877, %v11129
  %v11131 = vsel %vm11063, %v10878, %v11130
  %v11132 = vsel %vm11065, %v10879, %v11131
  %v11133 = vsel %vm11067, %v10880, %v11132
  %v11134 = vsel %vm11069, %v10881, %v11133
  %v11135 = vsel %vm11071, %v10882, %v11134
  %v11136 = vsel %vm11059, %v10884, %v10883
  %v11137 = vsel %vm11061, %v10885, %v11136
  %v11138 = vsel %vm11063, %v10886, %v11137
  %v11139 = vsel %vm11065, %v10887, %v11138
  %v11140 = vsel %vm11067, %v10888, %v11139
  %v11141 = vsel %vm11069, %v10889, %v11140
  %v11142 = vsel %vm11071, %v10890, %v11141
  %v11143 = vsel %vm11059, %v10892, %v10891
  %v11144 = vsel %vm11061, %v10893, %v11143
  %v11145 = vsel %vm11063, %v10894, %v11144
  %v11146 = vsel %vm11065, %v10895, %v11145
  %v11147 = vsel %vm11067, %v10896, %v11146
  %v11148 = vsel %vm11069, %v10897, %v11147
  %v11149 = vsel %vm11071, %v10898, %v11148
  %v11150 = vsel %vm11059, %v10900, %v10899
  %v11151 = vsel %vm11061, %v10901, %v11150
  %v11152 = vsel %vm11063, %v10902, %v11151
  %v11153 = vsel %vm11065, %v10903, %v11152
  %v11154 = vsel %vm11067, %v10904, %v11153
  %v11155 = vsel %vm11069, %v10905, %v11154
  %v11156 = vsel %vm11071, %v10906, %v11155
  %v11157 = vsel %vm11059, %v10908, %v10907
  %v11158 = vsel %vm11061, %v10909, %v11157
  %v11159 = vsel %vm11063, %v10910, %v11158
  %v11160 = vsel %vm11065, %v10911, %v11159
  %v11161 = vsel %vm11067, %v10912, %v11160
  %v11162 = vsel %vm11069, %v10913, %v11161
  %v11163 = vsel %vm11071, %v10914, %v11162
  %v11164 = vsel %vm11059, %v10916, %v10915
  %v11165 = vsel %vm11061, %v10917, %v11164
  %v11166 = vsel %vm11063, %v10918, %v11165
  %v11167 = vsel %vm11065, %v10919, %v11166
  %v11168 = vsel %vm11067, %v10920, %v11167
  %v11169 = vsel %vm11069, %v10921, %v11168
  %v11170 = vsel %vm11071, %v10922, %v11169
  %v11171 = vsel %vm11059, %v10924, %v10923
  %v11172 = vsel %vm11061, %v10925, %v11171
  %v11173 = vsel %vm11063, %v10926, %v11172
  %v11174 = vsel %vm11065, %v10927, %v11173
  %v11175 = vsel %vm11067, %v10928, %v11174
  %v11176 = vsel %vm11069, %v10929, %v11175
  %v11177 = vsel %vm11071, %v10930, %v11176
  %11194 = vxpose.xlu0.b32.start [1/16] %v11072, 128
  %11195 = vxpose.xlu0.b32.cont [2/16] %v11079, 128
  %11196 = vxpose.xlu0.b32.cont [3/16] %v11086, 128
  %11197 = vxpose.xlu0.b32.cont [4/16] %v11093, 128
  %11198 = vxpose.xlu0.b32.cont [5/16] %v11100, 128
  %11199 = vxpose.xlu0.b32.cont [6/16] %v11107, 128
  %11200 = vxpose.xlu0.b32.cont [7/16] %v11114, 128
  %11201 = vxpose.xlu0.b32.cont [8/16] %v11121, 128
  %11202 = vxpose.xlu0.b32.cont [9/16] %v11128, 128
  %11203 = vxpose.xlu0.b32.cont [10/16] %v11135, 128
  %11204 = vxpose.xlu0.b32.cont [11/16] %v11142, 128
  %11205 = vxpose.xlu0.b32.cont [12/16] %v11149, 128
  %11206 = vxpose.xlu0.b32.cont [13/16] %v11156, 128
  %11207 = vxpose.xlu0.b32.cont [14/16] %v11163, 128
  %11208 = vxpose.xlu0.b32.cont [15/16] %v11170, 128
  %11209 = vxpose.xlu0.b32.end [16/16] %v11177, 128
  %v11210 = vpop.trf.xlu0
  %v11211 = vpop.trf.xlu0
  %v11212 = vpop.trf.xlu0
  %v11213 = vpop.trf.xlu0
  %v11214 = vpop.trf.xlu0
  %v11215 = vpop.trf.xlu0
  %v11216 = vpop.trf.xlu0
  %v11217 = vpop.trf.xlu0
  %v11218 = vpop.trf.xlu0
  %v11219 = vpop.trf.xlu0
  %v11220 = vpop.trf.xlu0
  %v11221 = vpop.trf.xlu0
  %v11222 = vpop.trf.xlu0
  %v11223 = vpop.trf.xlu0
  %v11224 = vpop.trf.xlu0
  %v11225 = vpop.trf.xlu0
  %v11226 = vld [vmem:[%s3] sm:$0xff]
  %v11227 = vld [vmem:[%s3 + $0x8] sm:$0xff]
  %v11228 = vld [vmem:[%s3 + $0x10] sm:$0xff]
  %v11229 = vld [vmem:[%s3 + $0x18] sm:$0xff]
  %11231 = vset.pattern.permute.xlu0 0
  %11232 = vperm.xlu0 %11231, %v11226
  %v11233 = vpop.permute.xlu0 %11232
  %11236 = vset.pattern.permute.xlu0 0
  %11237 = vperm.xlu0 %11236, %v11227
  %v11238 = vpop.permute.xlu0 %11237
  %11241 = vset.pattern.permute.xlu0 0
  %11242 = vperm.xlu0 %11241, %v11228
  %v11243 = vpop.permute.xlu0 %11242
  %11246 = vset.pattern.permute.xlu0 0
  %11247 = vperm.xlu0 %11246, %v11229
  %v11248 = vpop.permute.xlu0 %11247
  %v11250 = vmul.f32 %v11210, %v11233
  %v11251 = vmul.f32 %v11211, %v11238
  %v11252 = vmul.f32 %v11212, %v11243
  %v11253 = vmul.f32 %v11213, %v11248
  %v11254 = vadd.f32 %v11250, %v11251
  %v11255 = vadd.f32 %v11254, %v11252
  %v11256 = vadd.f32 %v11255, %v11253
  %v11257 = vrot.slane %v11256, 4
  %v11258 = vadd.f32 %v11256, %v11257
  %v11259 = vrot.slane %v11258, 2
  %v11260 = vadd.f32 %v11258, %v11259
  %v11261 = vrot.slane %v11260, 1
  %v11262 = vadd.f32 %v11260, %v11261
  %s11263 = sld [smem:[#allocation2]]
  %v11264 = vstv %s11263
  %v11265 = vadd.f32 %v11262, %v11264
  %11266 = vst [vmem:[%s6] sm:$0x1] %v11265
  %v11267 = vld [vmem:[%s5] sm:$0x1]
  %v11268 = vmax.f32 %v11265, 0.0
  %v11269 = vmul.f32 %v11265, %v11267
  %v11270 = vsub.f32 %v11268, %v11269
  %v11271 = vand.u32 2147483647, %v11265
  %v11272 = vsub.f32 0.0, %v11271
  %v11273 = vmul.f32 %v11272, 1.442695
  %v11274 = vpow.pop %v11273
  %v11275 = vadd.f32 %v11274, 1.0
  %v11276 = vlog2.pop %v11275
  %v11277 = vmul.f32 %v11276, 0.6931472
  %v11278 = vmul.f32 -0.5, %v11274
  %v11279 = vadd.f32 %v11278, 1.0
  %v11280 = vmul.f32 %v11279, %v11274
  %v11281 = vand.u32 2147483647, %v11274
  %vm11282 = vcmp.lt.f32.partialorder %v11281, 0.0004427343
  %v11283 = vsel %vm11282, %v11280, %v11277
  %v11284 = vadd.f32 %v11270, %v11283
  %11285 = vst [vmem:[%s7] sm:$0x1] %v11284
  // Predicated region
  $region26: #{cnn_classifier_forward.1} parent=0 // pred_check
    _
  $region27: #{cnn_classifier_forward.1} parent=0 // pred_check_branch
    %11287 = sbr.rel (0) target = $region29
  $region28: #{cnn_classifier_forward.1} parent=0 // pred_region
    _
  $region29: #{cnn_classifier_forward.1} parent=0 // pred_fallthru
    _
  // Predicated region
  $region30: #{cnn_classifier_forward.1} parent=0 // pred_check
    _
  $region31: #{cnn_classifier_forward.1} parent=0 // pred_check_branch
    %11289 = sbr.rel (0) target = $region33
  $region32: #{cnn_classifier_forward.1} parent=0 // pred_region
    _
  $region33: #{cnn_classifier_forward.1} parent=0 // pred_fallthru
    _
  // Predicated region
  $region34: #{cnn_classifier_forward.1} parent=0 // pred_check
    _
  $region35: #{cnn_classifier_forward.1} parent=0 // pred_check_branch
    %11291 = sbr.rel (0) target = $region37
  $region36: #{cnn_classifier_forward.1} parent=0 // pred_region
    _
  $region37: #{cnn_classifier_forward.1} parent=0 // pred_fallthru
    _
  // Predicated region
  $region38: #{cnn_classifier_forward.1} parent=0 // pred_check
    _
  $region39: #{cnn_classifier_forward.1} parent=0 // pred_check_branch
    %11293 = sbr.rel (0) target = $region41
  $region40: #{cnn_classifier_forward.1} parent=0 // pred_region
    _
  $region41: #{cnn_classifier_forward.1} parent=0 // pred_fallthru
    _

</llo_original>
